<compile_context>
chip_gen: v6e
topology: v6e:2x2x1
jax: 0.10.0
libtpu: 0.0.40
codegen_flags: <defaults>
</compile_context>

<pallas_src>
import functools
import math

import jax
import jax.numpy as jnp
from jax.experimental import pallas as pl
from jax.experimental.pallas import tpu as pltpu

NEG_INF = -1e9
F32 = jnp.float32
BF16 = jnp.bfloat16

_VMEM_LIMIT_CACHE = [None]


def _vmem_limit():
    """~96 MiB on 128 MiB parts (v5e/v6e), 48 MiB on 64 MiB parts (v7x)."""
    if _VMEM_LIMIT_CACHE[0] is None:
        cap = 64 * 1024 * 1024
        try:
            if hasattr(pltpu, "get_tpu_info"):
                cap = getattr(pltpu.get_tpu_info(), "vmem_capacity_bytes", cap)
        except Exception:
            pass
        _VMEM_LIMIT_CACHE[0] = (96 * 1024 * 1024 if cap >= 128 * 1024 * 1024
                                else 48 * 1024 * 1024)
    return _VMEM_LIMIT_CACHE[0]


def _pick_tile(n, target, align=8):
    """Largest divisor of n that is <= target and a multiple of `align`
    (falls back to n itself -> single tile, always correct)."""
    if n <= target:
        return n
    t = (max(align, target) // align) * align
    while t >= align:
        if n % t == 0:
            return t
        t -= align
    return n


def bin2inf(mask):
    # 1 -> 0.0 (keep), 0 -> -1e9 (masked)
    return jnp.where(mask > 0, 0.0, NEG_INF).astype(F32)


def _ln(x, g, b, eps):
    mu = jnp.mean(x, axis=-1, keepdims=True)
    var = jnp.mean(jnp.square(x - mu), axis=-1, keepdims=True)
    return (x - mu) * jax.lax.rsqrt(var + eps) * g + b


def _const(shape):
    # grid-invariant (whole-array) block, e.g. weights / biases
    return pl.BlockSpec(shape, lambda *_: tuple(0 for _ in shape))


# ---------------------------------------------------------------------------
# Fused RAT layer, flash-style tiled over the key/relation axis:
#   grid = (B, KT);  per (b): QKV proj once into scratch, then per key tile
#   relation attention with online softmax; at the last tile: out proj +
#   residual + LN -> FFN + residual + LN.
# ---------------------------------------------------------------------------

def _rat_layer_kernel(x_ref, r_ref, mkey_ref,
                      wqkv_ref, bqkv_ref, wo_ref, bo_ref,
                      ln1g_ref, ln1b_ref, w1_ref, b1_ref, w2_ref, b2_ref,
                      ln2g_ref, ln2b_ref,
                      o_ref,
                      q3_scr, kh_scr, vh_scr, m_scr, l_scr, acc_scr,
                      *, num_heads, eps):
    kt = pl.program_id(1)
    nkt = pl.num_programs(1)
    N, D = x_ref.shape[1], x_ref.shape[2]
    H = num_heads
    dk = D // H
    tk = r_ref.shape[2]
    scale = 1.0 / math.sqrt(dk)

    @pl.when(kt == 0)
    def _():
        # Fused Q/K/V projection once per batch block (bf16 weights from host).
        x = x_ref[0]
        qkv = jnp.dot(x.astype(BF16), wqkv_ref[...],
                      preferred_element_type=F32) + bqkv_ref[...]     # (N, 3D)
        q3_scr[...] = jnp.concatenate(
            [qkv[:, h * dk:(h + 1) * dk][:, None, :] for h in range(H)],
            axis=1).astype(BF16)                                      # (N, H, dk)
        kh_scr[...] = jnp.concatenate(
            [qkv[:, D + h * dk:D + (h + 1) * dk][None] for h in range(H)],
            axis=0).astype(BF16)                                      # (H, N, dk)
        vh_scr[...] = jnp.concatenate(
            [qkv[:, 2 * D + h * dk:2 * D + (h + 1) * dk][None] for h in range(H)],
            axis=0).astype(BF16)                                      # (H, N, dk)
        m_scr[...] = jnp.full_like(m_scr, -jnp.inf)
        l_scr[...] = jnp.zeros_like(l_scr)
        acc_scr[...] = jnp.zeros_like(acc_scr)

    start = pl.multiple_of(kt * tk, tk)
    r_t = r_ref[0]                                     # (N, tk, dk) bf16, shared K/V
    q3 = q3_scr[...]                                   # (N, H, dk)  bf16

    # Relation score term for all heads in one batched MXU contraction.
    # TODO(synk): these n-batched matmuls have only H rows each (low MXU row
    # utilization); benchmark a VPU/XLU broadcast-reduce alternative.
    s_rel = jnp.einsum('nhd,nmd->nhm', q3, r_t, preferred_element_type=F32)

    # Main q.k^T per head (2-D MXU dots on scratch-resident head-major K).
    s_parts = []
    for h in range(H):
        k_th = kh_scr[h, pl.ds(start, tk), :]          # (tk, dk) bf16
        s_parts.append(jnp.einsum('nd,md->nm', q3[:, h, :], k_th,
                                  preferred_element_type=F32)[:, None, :])
    s = (jnp.concatenate(s_parts, axis=1) + s_rel) * scale           # (N, H, tk)

    mb = mkey_ref[0, pl.ds(kt, 1), :]                  # (1, tk) additive key bias
    s = s + mb[:, None, :]

    # Online softmax over the key axis.
    m_prev = m_scr[...]                                               # (N, H, 1)
    m_new = jnp.maximum(m_prev, jnp.max(s, axis=-1, keepdims=True))
    alpha = jnp.exp(m_prev - m_new)
    p = jnp.exp(s - m_new)                                            # (N, H, tk) f32
    l_scr[...] = alpha * l_scr[...] + jnp.sum(p, axis=-1, keepdims=True)
    pb = p.astype(BF16)

    # Relation value term (r_v == r_k, k_v_share) batched; p@v per head.
    o_rel = jnp.einsum('nhm,nmd->nhd', pb, r_t, preferred_element_type=F32)
    o_parts = []
    for h in range(H):
        v_th = vh_scr[h, pl.ds(start, tk), :]          # (tk, dk) bf16
        o_parts.append(jnp.dot(pb[:, h, :], v_th,
                               preferred_element_type=F32)[:, None, :])
    acc_scr[...] = alpha * acc_scr[...] + jnp.concatenate(o_parts, axis=1) + o_rel
    m_scr[...] = m_new

    @pl.when(kt == nkt - 1)
    def _():
        x = x_ref[0].astype(F32)
        accn = acc_scr[...] / l_scr[...]
        attn = jnp.concatenate([accn[:, h, :] for h in range(H)], axis=-1)  # (N, D)

        # Attention output projection + residual + LayerNorm (fused).
        proj = jnp.dot(attn.astype(BF16), wo_ref[...],
                       preferred_element_type=F32) + bo_ref[...]
        x1 = _ln(x + proj, ln1g_ref[...], ln1b_ref[...], eps)

        # FFN (w1 -> ReLU -> w2) + residual + LayerNorm (fused).
        h1 = jnp.maximum(jnp.dot(x1.astype(BF16), w1_ref[...],
                                 preferred_element_type=F32) + b1_ref[...], 0.0)
        ff = jnp.dot(h1.astype(BF16), w2_ref[...],
                     preferred_element_type=F32) + b2_ref[...]
        o_ref[0] = _ln(x1 + ff, ln2g_ref[...], ln2b_ref[...], eps).astype(o_ref.dtype)


def rat_layer(x, p, r_bf16, key_mask_bias, num_heads, *, eps=1e-5):
    """x: (B,N,D) f32; r_bf16: (B,N,N,dk) bf16 shared K/V relation;
    key_mask_bias: (B,N) f32 additive key-padding bias."""
    B, N, D = x.shape
    dk = r_bf16.shape[-1]
    H = num_heads
    F = p['w1'].shape[1]

    # Bound the (double-buffered) relation tile to ~8 MiB so the kernel fits a
    # 64 MiB (v7x) VMEM at realistic N; on tiny N the whole axis is one tile.
    max_tk = max(8, (8 * 1024 * 1024) // max(1, N * dk * 2))
    tk = _pick_tile(N, min(512, max_tk))
    n_kt = N // tk
    mask_tiles = key_mask_bias.reshape(B, n_kt, tk)

    kernel = functools.partial(_rat_layer_kernel, num_heads=H, eps=eps)
    cost = pl.CostEstimate(
        flops=int(B * (8 * N * D * D + 8 * N * N * D + 4 * N * D * F)),
        transcendentals=int(B * N * H * N),
        bytes_accessed=int(B * (N * N * dk * 2 + 2 * N * D * 4)
                           + (4 * D * D + 2 * D * F) * 2))

    # TODO(synk): also tile the query axis (extra "parallel" grid dim) so a
    # B=1 call still fills both v7x TensorCores.
    return pl.pallas_call(
        kernel,
        out_shape=jax.ShapeDtypeStruct((B, N, D), jnp.float32),
        grid=(B, n_kt),
        in_specs=[
            pl.BlockSpec((1, N, D), lambda b, k: (b, 0, 0)),
            pl.BlockSpec((1, N, tk, dk), lambda b, k: (b, 0, k, 0)),
            pl.BlockSpec((1, n_kt, tk), lambda b, k: (b, 0, 0)),
            _const((D, 3 * D)), _const((1, 3 * D)),
            _const((D, D)), _const((1, D)),
            _const((1, D)), _const((1, D)),
            _const((D, F)), _const((1, F)),
            _const((F, D)), _const((1, D)),
            _const((1, D)), _const((1, D)),
        ],
        out_specs=pl.BlockSpec((1, N, D), lambda b, k: (b, 0, 0)),
        scratch_shapes=[
            pltpu.VMEM((N, H, dk), BF16),    # q (query-major, relation einsums)
            pltpu.VMEM((H, N, dk), BF16),    # k (head-major)
            pltpu.VMEM((H, N, dk), BF16),    # v (head-major)
            pltpu.VMEM((N, H, 1), F32),      # m (online-softmax max)
            pltpu.VMEM((N, H, 1), F32),      # l (online-softmax denom)
            pltpu.VMEM((N, H, dk), F32),     # output accumulator
        ],
        compiler_params=pltpu.CompilerParams(
            dimension_semantics=("parallel", "arbitrary"),
            vmem_limit_bytes=_vmem_limit()),
        cost_estimate=cost,
    )(x, r_bf16, mask_tiles,
      p['wqkv'], p['bqkv'].reshape(1, -1), p['wo'], p['bo'].reshape(1, -1),
      p['ln1_g'].reshape(1, -1), p['ln1_b'].reshape(1, -1),
      p['w1'], p['b1'].reshape(1, -1), p['w2'], p['b2'].reshape(1, -1),
      p['ln2_g'].reshape(1, -1), p['ln2_b'].reshape(1, -1))


# ---------------------------------------------------------------------------
# Fused Bahdanau cross-attention + down_prj + residual + LayerNorm (AOD path),
# key-tiled with online softmax; score H-reduction on VPU/XLU (no lane-1 MXU).
# ---------------------------------------------------------------------------

def _cross_attn_kernel(up_ref, down_ref, mbT_ref,
                       wq_ref, bq_ref, wk_ref, bk_ref, vw_ref,
                       wp_ref, bp_ref, lng_ref, lnb_ref,
                       o_ref,
                       qp_scr, m_scr, l_scr, acc_scr,
                       *, eps):
    kt = pl.program_id(1)
    nkt = pl.num_programs(1)

    @pl.when(kt == 0)
    def _():
        up = up_ref[0]
        qp_scr[...] = jnp.dot(up.astype(BF16), wq_ref[...],
                              preferred_element_type=F32) + bq_ref[...]   # (Nq, H)
        m_scr[...] = jnp.full_like(m_scr, -jnp.inf)
        l_scr[...] = jnp.zeros_like(l_scr)
        acc_scr[...] = jnp.zeros_like(acc_scr)

    down_t = down_ref[0]                                              # (tk, Dk) f32
    kp = jnp.dot(down_t.astype(BF16), wk_ref[...],
                 preferred_element_type=F32) + bk_ref[...]            # (tk, H)

    # Additive (Bahdanau) scores; tanh kept in f32 (v5e has no bf16 EUP); the
    # H-axis reduction runs on the VPU/XLU next to the MXU matmuls.
    e = jnp.tanh(qp_scr[...][:, None, :] + kp[None, :, :])            # (Nq, tk, H)
    s = jnp.sum(e * vw_ref[...][None, :, :], axis=-1)                 # (Nq, tk)
    s = s + mbT_ref[0].T                                              # mask tile

    # Online softmax over the key axis.
    m_prev = m_scr[...]                                               # (Nq, 1)
    m_new = jnp.maximum(m_prev, jnp.max(s, axis=-1, keepdims=True))
    alpha = jnp.exp(m_prev - m_new)
    p = jnp.exp(s - m_new)
    l_scr[...] = alpha * l_scr[...] + jnp.sum(p, axis=-1, keepdims=True)
    acc_scr[...] = alpha * acc_scr[...] + jnp.dot(
        p.astype(BF16), down_t.astype(BF16), preferred_element_type=F32)
    m_scr[...] = m_new

    @pl.when(kt == nkt - 1)
    def _():
        up = up_ref[0].astype(F32)
        ctx = acc_scr[...] / l_scr[...]                               # (Nq, Dk)
        proj = jnp.dot(ctx.astype(BF16), wp_ref[...],
                       preferred_element_type=F32) + bp_ref[...]      # (Nq, Dq)
        o_ref[0] = _ln(up + proj, lng_ref[...], lnb_ref[...], eps).astype(o_ref.dtype)


def cross_attention_update(up, down, mask_bias_T, attn_p, wp, bp, ln_g, ln_b,
                           *, eps=1e-6):
    """up: (B,Nq,Dq); down: (B,Nk,Dk); mask_bias_T: (B,Nk,Nq) additive mask."""
    B, Nq, Dq = up.shape
    Nk, Dk = down.shape[1], down.shape[2]
    H = attn_p['wq'].shape[1]

    # Bound the per-tile (Nq, tk, H) f32 tanh tensor to ~8 MiB.
    max_tk = max(8, (8 * 1024 * 1024) // max(1, Nq * H * 4))
    tk = _pick_tile(Nk, min(512, max_tk))
    n_kt = Nk // tk

    kernel = functools.partial(_cross_attn_kernel, eps=eps)
    cost = pl.CostEstimate(
        flops=int(B * (2 * Nq * Dq * H + 2 * Nk * Dk * H + 4 * Nq * Nk * H
                       + 2 * Nq * Nk * Dk + 2 * Nq * Dk * Dq)),
        transcendentals=int(B * Nq * Nk * (H + 1)),
        bytes_accessed=int(B * (Nq * Dq + Nk * Dk + Nq * Nk) * 4
                           + (Dq * H + Dk * H + Dk * Dq) * 2))

    return pl.pallas_call(
        kernel,
        out_shape=jax.ShapeDtypeStruct((B, Nq, Dq), jnp.float32),
        grid=(B, n_kt),
        in_specs=[
            pl.BlockSpec((1, Nq, Dq), lambda b, k: (b, 0, 0)),
            pl.BlockSpec((1, tk, Dk), lambda b, k: (b, k, 0)),
            pl.BlockSpec((1, tk, Nq), lambda b, k: (b, k, 0)),
            _const((Dq, H)), _const((1, H)),
            _const((Dk, H)), _const((1, H)),
            _const((1, H)),
            _const((Dk, Dq)), _const((1, Dq)),
            _const((1, Dq)), _const((1, Dq)),
        ],
        out_specs=pl.BlockSpec((1, Nq, Dq), lambda b, k: (b, 0, 0)),
        scratch_shapes=[
            pltpu.VMEM((Nq, H), F32),     # Wq @ up (computed once per block)
            pltpu.VMEM((Nq, 1), F32),     # m
            pltpu.VMEM((Nq, 1), F32),     # l
            pltpu.VMEM((Nq, Dk), F32),    # context accumulator
        ],
        compiler_params=pltpu.CompilerParams(
            dimension_semantics=("parallel", "arbitrary"),
            vmem_limit_bytes=_vmem_limit()),
        cost_estimate=cost,
    )(up, down, mask_bias_T,
      attn_p['wq'], attn_p['bq'].reshape(1, -1),
      attn_p['wk'], attn_p['bk'].reshape(1, -1),
      attn_p['v'].reshape(1, -1),
      wp, bp.reshape(1, -1), ln_g.reshape(1, -1), ln_b.reshape(1, -1))


# ---------------------------------------------------------------------------
# Relation projections (row-tiled over N^2, bf16 in/out so relation traffic
# halves everywhere downstream).
# ---------------------------------------------------------------------------

def _rel_prj_kernel(a_ref, b_ref, wa_ref, wb_ref, bias_ref, o_ref):
    out = (jnp.dot(a_ref[0], wa_ref[...], preferred_element_type=F32)
           + jnp.dot(b_ref[0], wb_ref[...], preferred_element_type=F32)
           + bias_ref[...])
    o_ref[0] = out.astype(o_ref.dtype)


def _rel_projection(a2, b2, wa, wb, bias, *, row_tile_target=2048):
    """concat([a2, b2], -1) @ [wa; wb] + bias with the concat folded into two
    half-weight matmuls; tiled over the N^2 row axis."""
    B, NN, dk = a2.shape
    tile = _pick_tile(NN, row_tile_target)
    return pl.pallas_call(
        _rel_prj_kernel,
        out_shape=jax.ShapeDtypeStruct((B, NN, dk), BF16),
        grid=(B, NN // tile),
        in_specs=[pl.BlockSpec((1, tile, dk), lambda b, t: (b, t, 0)),
                  pl.BlockSpec((1, tile, dk), lambda b, t: (b, t, 0)),
                  _const((dk, dk)), _const((dk, dk)), _const((1, dk))],
        out_specs=pl.BlockSpec((1, tile, dk), lambda b, t: (b, t, 0)),
        compiler_params=pltpu.CompilerParams(
            dimension_semantics=("parallel", "parallel"),
            vmem_limit_bytes=_vmem_limit()),
    )(a2, b2, wa, wb, bias.reshape(1, -1))


def up_rel_projection(depth_bf16, schema_bf16, w_bf16, b):
    """get_up_rel (DRD + DBS concat -> up_r_prj), shared by K and V paths."""
    B, N, _, dk = depth_bf16.shape
    NN = N * N
    out = _rel_projection(depth_bf16.reshape(B, NN, dk),
                          schema_bf16.reshape(B, NN, dk),
                          w_bf16[:dk], w_bf16[dk:], b)
    return out.reshape(B, N, N, dk)


def down_rel_projection(down_dist_bf16, down_lca, up_nodes, wr_bf16, br,
                        wlca, blca):
    """get_down_rel (RPR + LCA).  lca_prj is applied BEFORE the gather (exact:
    the gather commutes with a row-wise linear map), the gather itself is a
    take_along_axis (replaces one_hot + bmm)."""
    B, Nd, _, dk = down_dist_bf16.shape
    NN = Nd * Nd
    lp = (jnp.einsum('bnd,dk->bnk', up_nodes, wlca) + blca).astype(BF16)  # (B,Nup,dk)
    idx = down_lca.reshape(B, NN)[:, :, None]
    lca_emb = jnp.take_along_axis(lp, idx, axis=1)                        # (B,NN,dk)
    out = _rel_projection(down_dist_bf16.reshape(B, NN, dk), lca_emb,
                          wr_bf16[:dk], wr_bf16[dk:], br)
    return out.reshape(B, Nd, Nd, dk)


# ---------------------------------------------------------------------------
# Parameter init + encoder composition
# ---------------------------------------------------------------------------

def _init_linear(key, din, dout, scale=0.05):
    kw, kb = jax.random.split(key)
    return (jax.random.normal(kw, (din, dout), F32) * scale,
            jax.random.normal(kb, (dout,), F32) * scale)


def _init_rat_layer(key, d_model, d_ff):
    ks = jax.random.split(key, 6)
    p = {}
    wq, bq = _init_linear(ks[0], d_model, d_model)
    wk, bk = _init_linear(ks[1], d_model, d_model)
    wv, bv = _init_linear(ks[2], d_model, d_model)
    p['wqkv'] = jnp.concatenate([wq, wk, wv], axis=1).astype(BF16)    # fused (D,3D)
    p['bqkv'] = jnp.concatenate([bq, bk, bv], axis=0)
    wo, p['bo'] = _init_linear(ks[3], d_model, d_model)
    w1, p['b1'] = _init_linear(ks[4], d_model, d_ff)
    w2, p['b2'] = _init_linear(ks[5], d_ff, d_model)
    p['wo'], p['w1'], p['w2'] = wo.astype(BF16), w1.astype(BF16), w2.astype(BF16)
    p['ln1_g'] = jnp.ones((d_model,), F32)
    p['ln1_b'] = jnp.zeros((d_model,), F32)
    p['ln2_g'] = jnp.ones((d_model,), F32)
    p['ln2_b'] = jnp.zeros((d_model,), F32)
    return p


def _init_bahdanau(key, q_dim, k_dim, hidden):
    ks = jax.random.split(key, 3)
    p = {}
    wq, p['bq'] = _init_linear(ks[0], q_dim, hidden)
    wk, p['bk'] = _init_linear(ks[1], k_dim, hidden)
    p['wq'], p['wk'] = wq.astype(BF16), wk.astype(BF16)
    p['v'] = jax.random.normal(ks[2], (hidden,), F32) * 0.05
    return p


class RGTEncoderPallas:
    """mode='concat', rel_share=True, k_v_share=True, cross_atten='AOD+None',
    up_rel={'DRD','DBS'}, down_rel={'RPR','LCA'}, DATA='spider', dropout=0."""

    def __init__(self, key, up_head_num, down_head_num, up_layer_num,
                 down_layer_num, up_d_model, up_d_ff, down_d_model, down_d_ff,
                 dropout=0.0):
        assert dropout == 0.0  # TODO(synk): dropout (eval-mode / deterministic only)
        assert (up_layer_num % down_layer_num == 0
                or down_layer_num % up_layer_num == 0)
        self.up_head_num, self.down_head_num = up_head_num, down_head_num
        self.up_layer_num, self.down_layer_num = up_layer_num, down_layer_num
        self.up_d_k = up_d_model // up_head_num
        self.down_d_k = down_d_model // down_head_num
        self.up_step = up_layer_num // down_layer_num or 1
        self.down_step = down_layer_num // up_layer_num or 1

        ks = jax.random.split(key, 8)
        p = {}
        p['up_rat'] = [_init_rat_layer(jax.random.fold_in(ks[0], i), up_d_model, up_d_ff)
                       for i in range(up_layer_num)]
        p['down_rat'] = [_init_rat_layer(jax.random.fold_in(ks[1], i), down_d_model, down_d_ff)
                         for i in range(down_layer_num)]
        n_aod = up_layer_num // self.up_step
        p['up2down'] = [_init_bahdanau(jax.random.fold_in(ks[2], i),
                                       up_d_model, down_d_model, up_d_model)
                        for i in range(n_aod)]
        dpw, p['down_prj_b'] = _init_linear(ks[3], down_d_model, up_d_model)
        p['down_prj_w'] = dpw.astype(BF16)
        urw, p['up_r_prj_b'] = _init_linear(ks[4], 2 * self.up_d_k, self.up_d_k)
        p['up_r_prj_w'] = urw.astype(BF16)
        drw, p['down_r_prj_b'] = _init_linear(ks[5], 2 * self.down_d_k, self.down_d_k)
        p['down_r_prj_w'] = drw.astype(BF16)
        p['lca_prj_w'], p['lca_prj_b'] = _init_linear(ks[6], up_d_model, self.down_d_k)
        p['up_ln_g'] = jnp.ones((up_d_model,), F32)
        p['up_ln_b'] = jnp.zeros((up_d_model,), F32)
        # NOTE: up_prj / down_layer_norm / AOA layers exist in the torch module
        # but are unused for cross_atten='AOD+None'.
        self.params = p

    def __call__(self, up_nodes, down_nodes, up_depth, up_schema, down_dist,
                 down_lca, AOA_mask=None, AOD_mask=None, up_mask=None,
                 down_mask=None):
        p = self.params

        # get_up_rel: DRD + DBS concat -> project (k_v_share => single shared r)
        up_r = up_rel_projection(up_depth.astype(BF16), up_schema.astype(BF16),
                                 p['up_r_prj_w'], p['up_r_prj_b'])        # bf16
        down_dist_bf16 = down_dist.astype(BF16)

        # Additive mask biases (hoisted out of the layer loop).
        up_mb = bin2inf(up_mask)                                          # (B, N_up)
        down_mb = bin2inf(down_mask)                                      # (B, N_down)
        aod_mb_T = jnp.swapaxes(bin2inf(AOD_mask), 1, 2)                  # (B, N_dn, N_up)

        cur_up, cur_down = 0, 0
        for i in range(self.up_layer_num // self.up_step):
            for step in range(self.up_step):
                up_nodes = rat_layer(up_nodes, p['up_rat'][cur_up + step],
                                     up_r, up_mb, self.up_head_num)
            cur_up += self.up_step

            # down_to_up_atten == 'None' -> skip

            # get_down_rel: RPR + LCA (lca_prj -> gather -> fused projection)
            down_r = down_rel_projection(down_dist_bf16, down_lca, up_nodes,
                                         p['down_r_prj_w'], p['down_r_prj_b'],
                                         p['lca_prj_w'], p['lca_prj_b'])  # bf16
            for step in range(self.down_step):
                down_nodes = rat_layer(down_nodes, p['down_rat'][cur_down + step],
                                       down_r, down_mb, self.down_head_num)
            cur_down += self.down_step

            # up_to_down_atten == 'AOD' (+ down_prj + residual + LN, DATA='spider')
            up_nodes = cross_attention_update(up_nodes, down_nodes, aod_mb_T,
                                              p['up2down'][i],
                                              p['down_prj_w'], p['down_prj_b'],
                                              p['up_ln_g'], p['up_ln_b'],
                                              eps=1e-6)
        return up_nodes, down_nodes


if __name__ == "__main__":
    B, N_up, N_down = 2, 8, 8
    up_d_model = down_d_model = 32
    up_d_ff = down_d_ff = 64
    up_heads = down_heads = 4
    up_d_k = up_d_model // up_heads
    down_d_k = down_d_model // down_heads

    enc = RGTEncoderPallas(jax.random.PRNGKey(1234), up_heads, down_heads,
                           up_layer_num=2, down_layer_num=1,
                           up_d_model=up_d_model, up_d_ff=up_d_ff,
                           down_d_model=down_d_model, down_d_ff=down_d_ff,
                           dropout=0.0)

    ks = jax.random.split(jax.random.PRNGKey(0), 8)
    up_nodes = jax.random.normal(ks[0], (B, N_up, up_d_model), F32)
    down_nodes = jax.random.normal(ks[1], (B, N_down, down_d_model), F32)
    up_depth = jax.random.normal(ks[2], (B, N_up, N_up, up_d_k), F32) * 0.1
    up_schema = jax.random.normal(ks[3], (B, N_up, N_up, up_d_k), F32) * 0.1
    down_dist = jax.random.normal(ks[4], (B, N_down, N_down, down_d_k), F32) * 0.1
    down_lca = jax.random.randint(ks[5], (B, N_down, N_down), 0, N_up)

    up_mask = jnp.ones((B, N_up), jnp.int32).at[:, -1].set(0)
    down_mask = jnp.ones((B, N_down), jnp.int32).at[:, -1].set(0)
    AOD_mask = jnp.ones((B, N_up, N_down), jnp.int32).at[:, :, -1].set(0)

    fwd = jax.jit(enc.__call__)
    up_out, down_out = fwd(up_nodes, down_nodes, up_depth, up_schema,
                           down_dist, down_lca, AOD_mask=AOD_mask,
                           up_mask=up_mask, down_mask=down_mask)
    jax.block_until_ready((up_out, down_out))
    assert up_out.shape == (B, N_up, up_d_model)
    assert down_out.shape == (B, N_down, down_d_model)
    assert bool(jnp.all(jnp.isfinite(up_out))) and bool(jnp.all(jnp.isfinite(down_out)))
    print("KERNEL_OK")
</pallas_src>

<mosaic_0001>
module attributes {stable_mosaic.version = 11 : i64} {
  func.func @_rel_prj_kernel(%arg0: i32, %arg1: i32, %arg2: memref<1x64x8xbf16, #tpu.memory_space<vmem>>, %arg3: memref<1x64x8xbf16, #tpu.memory_space<vmem>>, %arg4: memref<8x8xbf16, #tpu.memory_space<vmem>>, %arg5: memref<8x8xbf16, #tpu.memory_space<vmem>>, %arg6: memref<1x8xf32, #tpu.memory_space<vmem>>, %arg7: memref<1x64x8xbf16, #tpu.memory_space<vmem>>) attributes {dimension_semantics = [#tpu.dimension_semantics<parallel>, #tpu.dimension_semantics<parallel>], iteration_bounds = array<i64: 2, 1>, scalar_prefetch = 0 : i64, scratch_operands = 0 : i64, tpu.core_type = #tpu.core_type<tc>, window_params = [{transform_indices = @transform_0, window_bounds = array<i64: 1, 64, 8>}, {transform_indices = @transform_1, window_bounds = array<i64: 1, 64, 8>}, {pipeline_mode = #tpu.pipeline_mode<synchronous>, transform_indices = @transform_2, window_bounds = array<i64: 8, 8>}, {pipeline_mode = #tpu.pipeline_mode<synchronous>, transform_indices = @transform_3, window_bounds = array<i64: 8, 8>}, {pipeline_mode = #tpu.pipeline_mode<synchronous>, transform_indices = @transform_4, window_bounds = array<i64: 1, 8>}, {transform_indices = @transform_5, window_bounds = array<i64: 1, 64, 8>}]} {
    %c0 = arith.constant 0 : index
    %c0_0 = arith.constant 0 : index
    %c0_1 = arith.constant 0 : index
    %0 = vector.load %arg2[%c0, %c0_0, %c0_1] : memref<1x64x8xbf16, #tpu.memory_space<vmem>>, vector<1x64x8xbf16>
    %1 = vector.shape_cast %0 : vector<1x64x8xbf16> to vector<64x8xbf16>
    %c0_2 = arith.constant 0 : index
    %c0_3 = arith.constant 0 : index
    %2 = vector.load %arg4[%c0_2, %c0_3] : memref<8x8xbf16, #tpu.memory_space<vmem>>, vector<8x8xbf16>
    %cst = arith.constant dense<0.000000e+00> : vector<64x8xf32>
    %3 = tpu.matmul %1, %2, %cst {dimension_numbers = #tpu.dot_dimension_numbers<[1], [0], [0], [1], [0, 0, 1, 1], [], []>} : vector<64x8xbf16>, vector<8x8xbf16>, vector<64x8xf32> -> vector<64x8xf32>
    %c0_4 = arith.constant 0 : index
    %c0_5 = arith.constant 0 : index
    %c0_6 = arith.constant 0 : index
    %4 = vector.load %arg3[%c0_4, %c0_5, %c0_6] : memref<1x64x8xbf16, #tpu.memory_space<vmem>>, vector<1x64x8xbf16>
    %5 = vector.shape_cast %4 : vector<1x64x8xbf16> to vector<64x8xbf16>
    %c0_7 = arith.constant 0 : index
    %c0_8 = arith.constant 0 : index
    %6 = vector.load %arg5[%c0_7, %c0_8] : memref<8x8xbf16, #tpu.memory_space<vmem>>, vector<8x8xbf16>
    %cst_9 = arith.constant dense<0.000000e+00> : vector<64x8xf32>
    %7 = tpu.matmul %5, %6, %cst_9 {dimension_numbers = #tpu.dot_dimension_numbers<[1], [0], [0], [1], [0, 0, 1, 1], [], []>} : vector<64x8xbf16>, vector<8x8xbf16>, vector<64x8xf32> -> vector<64x8xf32>
    %8 = arith.addf %3, %7 : vector<64x8xf32>
    %c0_10 = arith.constant 0 : index
    %c0_11 = arith.constant 0 : index
    %9 = vector.load %arg6[%c0_10, %c0_11] : memref<1x8xf32, #tpu.memory_space<vmem>>, vector<1x8xf32>
    %10 = vector.broadcast %9 : vector<1x8xf32> to vector<64x8xf32>
    %11 = arith.addf %8, %10 : vector<64x8xf32>
    %12 = arith.truncf %11 : vector<64x8xf32> to vector<64x8xbf16>
    %c0_12 = arith.constant 0 : index
    %c0_13 = arith.constant 0 : index
    %c0_14 = arith.constant 0 : index
    %13 = vector.load %arg7[%c0_12, %c0_13, %c0_14] : memref<1x64x8xbf16, #tpu.memory_space<vmem>>, vector<1x64x8xbf16>
    %14 = vector.shape_cast %13 : vector<1x64x8xbf16> to vector<64x8xbf16>
    %15 = vector.shape_cast %12 : vector<64x8xbf16> to vector<1x64x8xbf16>
    tpu.vector_store %arg7[%c0_12, %c0_13, %c0_14], %15 {strides = array<i32>} : memref<1x64x8xbf16, #tpu.memory_space<vmem>>, vector<1x64x8xbf16>,
    return
  }
  func.func @transform_0(%arg0: i32, %arg1: i32) -> (i32, i32, i32) {
    %c0_i32 = arith.constant 0 : i32
    %c0_i32_0 = arith.constant 0 : i32
    return %arg0, %arg1, %c0_i32 : i32, i32, i32
  }
  func.func @transform_1(%arg0: i32, %arg1: i32) -> (i32, i32, i32) {
    %c0_i32 = arith.constant 0 : i32
    %c0_i32_0 = arith.constant 0 : i32
    return %arg0, %arg1, %c0_i32 : i32, i32, i32
  }
  func.func @transform_2(%arg0: i32, %arg1: i32) -> (i32, i32) {
    %c0_i32 = arith.constant 0 : i32
    %c0_i32_0 = arith.constant 0 : i32
    %c0_i32_1 = arith.constant 0 : i32
    return %c0_i32, %c0_i32_0 : i32, i32
  }
  func.func @transform_3(%arg0: i32, %arg1: i32) -> (i32, i32) {
    %c0_i32 = arith.constant 0 : i32
    %c0_i32_0 = arith.constant 0 : i32
    %c0_i32_1 = arith.constant 0 : i32
    return %c0_i32, %c0_i32_0 : i32, i32
  }
  func.func @transform_4(%arg0: i32, %arg1: i32) -> (i32, i32) {
    %c0_i32 = arith.constant 0 : i32
    %c0_i32_0 = arith.constant 0 : i32
    %c0_i32_1 = arith.constant 0 : i32
    return %c0_i32, %c0_i32_0 : i32, i32
  }
  func.func @transform_5(%arg0: i32, %arg1: i32) -> (i32, i32, i32) {
    %c0_i32 = arith.constant 0 : i32
    %c0_i32_0 = arith.constant 0 : i32
    return %arg0, %arg1, %c0_i32 : i32, i32, i32
  }
}

module attributes {stable_mosaic.version = 11 : i64} {
  func.func @_rat_layer_kernel(%arg0: i32, %arg1: i32, %arg2: memref<1x8x32xf32, #tpu.memory_space<vmem>>, %arg3: memref<1x8x8x8xbf16, #tpu.memory_space<vmem>>, %arg4: memref<1x1x8xf32, #tpu.memory_space<vmem>>, %arg5: memref<32x96xbf16, #tpu.memory_space<vmem>>, %arg6: memref<1x96xf32, #tpu.memory_space<vmem>>, %arg7: memref<32x32xbf16, #tpu.memory_space<vmem>>, %arg8: memref<1x32xf32, #tpu.memory_space<vmem>>, %arg9: memref<1x32xf32, #tpu.memory_space<vmem>>, %arg10: memref<1x32xf32, #tpu.memory_space<vmem>>, %arg11: memref<32x64xbf16, #tpu.memory_space<vmem>>, %arg12: memref<1x64xf32, #tpu.memory_space<vmem>>, %arg13: memref<64x32xbf16, #tpu.memory_space<vmem>>, %arg14: memref<1x32xf32, #tpu.memory_space<vmem>>, %arg15: memref<1x32xf32, #tpu.memory_space<vmem>>, %arg16: memref<1x32xf32, #tpu.memory_space<vmem>>, %arg17: memref<1x8x32xf32, #tpu.memory_space<vmem>>, %arg18: memref<8x4x8xbf16, #tpu.memory_space<vmem>>, %arg19: memref<4x8x8xbf16, #tpu.memory_space<vmem>>, %arg20: memref<4x8x8xbf16, #tpu.memory_space<vmem>>, %arg21: memref<8x4x1xf32, #tpu.memory_space<vmem>>, %arg22: memref<8x4x1xf32, #tpu.memory_space<vmem>>, %arg23: memref<8x4x8xf32, #tpu.memory_space<vmem>>) attributes {dimension_semantics = [#tpu.dimension_semantics<parallel>, #tpu.dimension_semantics<arbitrary>], iteration_bounds = array<i64: 2, 1>, scalar_prefetch = 0 : i64, scratch_operands = 6 : i64, tpu.core_type = #tpu.core_type<tc>, window_params = [{transform_indices = @transform_0, window_bounds = array<i64: 1, 8, 32>}, {transform_indices = @transform_1, window_bounds = array<i64: 1, 8, 8, 8>}, {transform_indices = @transform_2, window_bounds = array<i64: 1, 1, 8>}, {pipeline_mode = #tpu.pipeline_mode<synchronous>, transform_indices = @transform_3, window_bounds = array<i64: 32, 96>}, {pipeline_mode = #tpu.pipeline_mode<synchronous>, transform_indices = @transform_4, window_bounds = array<i64: 1, 96>}, {pipeline_mode = #tpu.pipeline_mode<synchronous>, transform_indices = @transform_5, window_bounds = array<i64: 32, 32>}, {pipeline_mode = #tpu.pipeline_mode<synchronous>, transform_indices = @transform_6, window_bounds = array<i64: 1, 32>}, {pipeline_mode = #tpu.pipeline_mode<synchronous>, transform_indices = @transform_7, window_bounds = array<i64: 1, 32>}, {pipeline_mode = #tpu.pipeline_mode<synchronous>, transform_indices = @transform_8, window_bounds = array<i64: 1, 32>}, {pipeline_mode = #tpu.pipeline_mode<synchronous>, transform_indices = @transform_9, window_bounds = array<i64: 32, 64>}, {pipeline_mode = #tpu.pipeline_mode<synchronous>, transform_indices = @transform_10, window_bounds = array<i64: 1, 64>}, {pipeline_mode = #tpu.pipeline_mode<synchronous>, transform_indices = @transform_11, window_bounds = array<i64: 64, 32>}, {pipeline_mode = #tpu.pipeline_mode<synchronous>, transform_indices = @transform_12, window_bounds = array<i64: 1, 32>}, {pipeline_mode = #tpu.pipeline_mode<synchronous>, transform_indices = @transform_13, window_bounds = array<i64: 1, 32>}, {pipeline_mode = #tpu.pipeline_mode<synchronous>, transform_indices = @transform_14, window_bounds = array<i64: 1, 32>}, {transform_indices = @transform_15, window_bounds = array<i64: 1, 8, 32>}]} {
    %c0_i32 = arith.constant 0 : i32
    %0 = arith.cmpi eq, %arg1, %c0_i32 : i32
    %1 = arith.extui %0 : i1 to i32
    %c0_i32_0 = arith.constant 0 : i32
    %2 = arith.cmpi ne, %1, %c0_i32_0 : i32
    scf.if %2 {
      %c0_54 = arith.constant 0 : index
      %c0_55 = arith.constant 0 : index
      %c0_56 = arith.constant 0 : index
      %103 = vector.load %arg2[%c0_54, %c0_55, %c0_56] : memref<1x8x32xf32, #tpu.memory_space<vmem>>, vector<1x8x32xf32>
      %104 = vector.shape_cast %103 : vector<1x8x32xf32> to vector<8x32xf32>
      %105 = arith.truncf %104 : vector<8x32xf32> to vector<8x32xbf16>
      %c0_57 = arith.constant 0 : index
      %c0_58 = arith.constant 0 : index
      %106 = vector.load %arg5[%c0_57, %c0_58] : memref<32x96xbf16, #tpu.memory_space<vmem>>, vector<32x96xbf16>
      %cst_59 = arith.constant dense<0.000000e+00> : vector<8x96xf32>
      %107 = tpu.matmul %105, %106, %cst_59 {dimension_numbers = #tpu.dot_dimension_numbers<[1], [0], [0], [1], [0, 0, 1, 1], [], []>} : vector<8x32xbf16>, vector<32x96xbf16>, vector<8x96xf32> -> vector<8x96xf32>
      %c0_60 = arith.constant 0 : index
      %c0_61 = arith.constant 0 : index
      %108 = vector.load %arg6[%c0_60, %c0_61] : memref<1x96xf32, #tpu.memory_space<vmem>>, vector<1x96xf32>
      %109 = vector.broadcast %108 : vector<1x96xf32> to vector<8x96xf32>
      %110 = arith.addf %107, %109 : vector<8x96xf32>
      %111 = vector.extract_strided_slice %110 {offsets = [0, 0], sizes = [8, 8], strides = [1, 1]} : vector<8x96xf32> to vector<8x8xf32>
      %112 = vector.shape_cast %111 : vector<8x8xf32> to vector<8x1x8xf32>
      %113 = vector.extract_strided_slice %110 {offsets = [0, 8], sizes = [8, 8], strides = [1, 1]} : vector<8x96xf32> to vector<8x8xf32>
      %114 = vector.shape_cast %113 : vector<8x8xf32> to vector<8x1x8xf32>
      %115 = vector.extract_strided_slice %110 {offsets = [0, 16], sizes = [8, 8], strides = [1, 1]} : vector<8x96xf32> to vector<8x8xf32>
      %116 = vector.shape_cast %115 : vector<8x8xf32> to vector<8x1x8xf32>
      %117 = vector.extract_strided_slice %110 {offsets = [0, 24], sizes = [8, 8], strides = [1, 1]} : vector<8x96xf32> to vector<8x8xf32>
      %118 = vector.shape_cast %117 : vector<8x8xf32> to vector<8x1x8xf32>
      %119 = tpu.concatenate %112, %114, %116, %118 in 1 : vector<8x1x8xf32>, vector<8x1x8xf32>, vector<8x1x8xf32>, vector<8x1x8xf32> -> vector<8x4x8xf32>
      %120 = arith.truncf %119 : vector<8x4x8xf32> to vector<8x4x8xbf16>
      %c0_62 = arith.constant 0 : index
      %c0_63 = arith.constant 0 : index
      %c0_64 = arith.constant 0 : index
      %121 = vector.load %arg18[%c0_62, %c0_63, %c0_64] : memref<8x4x8xbf16, #tpu.memory_space<vmem>>, vector<8x4x8xbf16>
      tpu.vector_store %arg18[%c0_62, %c0_63, %c0_64], %120 {strides = array<i32>} : memref<8x4x8xbf16, #tpu.memory_space<vmem>>, vector<8x4x8xbf16>,
      %122 = vector.extract_strided_slice %110 {offsets = [0, 32], sizes = [8, 8], strides = [1, 1]} : vector<8x96xf32> to vector<8x8xf32>
      %123 = vector.shape_cast %122 : vector<8x8xf32> to vector<1x8x8xf32>
      %124 = vector.extract_strided_slice %110 {offsets = [0, 40], sizes = [8, 8], strides = [1, 1]} : vector<8x96xf32> to vector<8x8xf32>
      %125 = vector.shape_cast %124 : vector<8x8xf32> to vector<1x8x8xf32>
      %126 = vector.extract_strided_slice %110 {offsets = [0, 48], sizes = [8, 8], strides = [1, 1]} : vector<8x96xf32> to vector<8x8xf32>
      %127 = vector.shape_cast %126 : vector<8x8xf32> to vector<1x8x8xf32>
      %128 = vector.extract_strided_slice %110 {offsets = [0, 56], sizes = [8, 8], strides = [1, 1]} : vector<8x96xf32> to vector<8x8xf32>
      %129 = vector.shape_cast %128 : vector<8x8xf32> to vector<1x8x8xf32>
      %130 = tpu.concatenate %123, %125, %127, %129 in 0 : vector<1x8x8xf32>, vector<1x8x8xf32>, vector<1x8x8xf32>, vector<1x8x8xf32> -> vector<4x8x8xf32>
      %131 = arith.truncf %130 : vector<4x8x8xf32> to vector<4x8x8xbf16>
      %c0_65 = arith.constant 0 : index
      %c0_66 = arith.constant 0 : index
      %c0_67 = arith.constant 0 : index
      %132 = vector.load %arg19[%c0_65, %c0_66, %c0_67] : memref<4x8x8xbf16, #tpu.memory_space<vmem>>, vector<4x8x8xbf16>
      tpu.vector_store %arg19[%c0_65, %c0_66, %c0_67], %131 {strides = array<i32>} : memref<4x8x8xbf16, #tpu.memory_space<vmem>>, vector<4x8x8xbf16>,
      %133 = vector.extract_strided_slice %110 {offsets = [0, 64], sizes = [8, 8], strides = [1, 1]} : vector<8x96xf32> to vector<8x8xf32>
      %134 = vector.shape_cast %133 : vector<8x8xf32> to vector<1x8x8xf32>
      %135 = vector.extract_strided_slice %110 {offsets = [0, 72], sizes = [8, 8], strides = [1, 1]} : vector<8x96xf32> to vector<8x8xf32>
      %136 = vector.shape_cast %135 : vector<8x8xf32> to vector<1x8x8xf32>
      %137 = vector.extract_strided_slice %110 {offsets = [0, 80], sizes = [8, 8], strides = [1, 1]} : vector<8x96xf32> to vector<8x8xf32>
      %138 = vector.shape_cast %137 : vector<8x8xf32> to vector<1x8x8xf32>
      %139 = vector.extract_strided_slice %110 {offsets = [0, 88], sizes = [8, 8], strides = [1, 1]} : vector<8x96xf32> to vector<8x8xf32>
      %140 = vector.shape_cast %139 : vector<8x8xf32> to vector<1x8x8xf32>
      %141 = tpu.concatenate %134, %136, %138, %140 in 0 : vector<1x8x8xf32>, vector<1x8x8xf32>, vector<1x8x8xf32>, vector<1x8x8xf32> -> vector<4x8x8xf32>
      %142 = arith.truncf %141 : vector<4x8x8xf32> to vector<4x8x8xbf16>
      %c0_68 = arith.constant 0 : index
      %c0_69 = arith.constant 0 : index
      %c0_70 = arith.constant 0 : index
      %143 = vector.load %arg20[%c0_68, %c0_69, %c0_70] : memref<4x8x8xbf16, #tpu.memory_space<vmem>>, vector<4x8x8xbf16>
      tpu.vector_store %arg20[%c0_68, %c0_69, %c0_70], %142 {strides = array<i32>} : memref<4x8x8xbf16, #tpu.memory_space<vmem>>, vector<4x8x8xbf16>,
      %cst_71 = arith.constant 0xFF800000 : f32
      %144 = vector.broadcast %cst_71 : f32 to vector<8x4x1xf32>
      %c0_72 = arith.constant 0 : index
      %c0_73 = arith.constant 0 : index
      %c0_74 = arith.constant 0 : index
      %145 = vector.load %arg21[%c0_72, %c0_73, %c0_74] : memref<8x4x1xf32, #tpu.memory_space<vmem>>, vector<8x4x1xf32>
      tpu.vector_store %arg21[%c0_72, %c0_73, %c0_74], %144 {strides = array<i32>} : memref<8x4x1xf32, #tpu.memory_space<vmem>>, vector<8x4x1xf32>,
      %cst_75 = arith.constant 0.000000e+00 : f32
      %146 = vector.broadcast %cst_75 : f32 to vector<8x4x1xf32>
      %c0_76 = arith.constant 0 : index
      %c0_77 = arith.constant 0 : index
      %c0_78 = arith.constant 0 : index
      %147 = vector.load %arg22[%c0_76, %c0_77, %c0_78] : memref<8x4x1xf32, #tpu.memory_space<vmem>>, vector<8x4x1xf32>
      tpu.vector_store %arg22[%c0_76, %c0_77, %c0_78], %146 {strides = array<i32>} : memref<8x4x1xf32, #tpu.memory_space<vmem>>, vector<8x4x1xf32>,
      %cst_79 = arith.constant 0.000000e+00 : f32
      %148 = vector.broadcast %cst_79 : f32 to vector<8x4x8xf32>
      %c0_80 = arith.constant 0 : index
      %c0_81 = arith.constant 0 : index
      %c0_82 = arith.constant 0 : index
      %149 = vector.load %arg23[%c0_80, %c0_81, %c0_82] : memref<8x4x8xf32, #tpu.memory_space<vmem>>, vector<8x4x8xf32>
      tpu.vector_store %arg23[%c0_80, %c0_81, %c0_82], %148 {strides = array<i32>} : memref<8x4x8xf32, #tpu.memory_space<vmem>>, vector<8x4x8xf32>,
    } else {
    }
    %c8_i32 = arith.constant 8 : i32
    %3 = arith.muli %arg1, %c8_i32 : i32
    %4 = tpu.assume_multiple %3, 8 : i32
    %c0 = arith.constant 0 : index
    %c0_1 = arith.constant 0 : index
    %c0_2 = arith.constant 0 : index
    %c0_3 = arith.constant 0 : index
    %5 = vector.load %arg3[%c0, %c0_1, %c0_2, %c0_3] : memref<1x8x8x8xbf16, #tpu.memory_space<vmem>>, vector<1x8x8x8xbf16>
    %6 = vector.shape_cast %5 : vector<1x8x8x8xbf16> to vector<8x8x8xbf16>
    %c0_4 = arith.constant 0 : index
    %c0_5 = arith.constant 0 : index
    %c0_6 = arith.constant 0 : index
    %7 = vector.load %arg18[%c0_4, %c0_5, %c0_6] : memref<8x4x8xbf16, #tpu.memory_space<vmem>>, vector<8x4x8xbf16>
    "tpu.trace_start"() <{level = 10 : i32, message = "nhd,nmd->nhm"}> : () -> ()
    %cst = arith.constant dense<0.000000e+00> : vector<8x4x8xf32>
    %8 = tpu.matmul %7, %6, %cst {dimension_numbers = #tpu.dot_dimension_numbers<[2], [2], [1], [1], [0, 0, 0, 1, 1, 1], [0], [0]>} : vector<8x4x8xbf16>, vector<8x8x8xbf16>, vector<8x4x8xf32> -> vector<8x4x8xf32>
    "tpu.trace_stop"() : () -> ()
    %c0_7 = arith.constant 0 : index
    %9 = arith.index_cast %4 : i32 to index
    %c0_8 = arith.constant 0 : index
    %10 = vector.load %arg19[%c0_7, %9, %c0_8] : memref<4x8x8xbf16, #tpu.memory_space<vmem>>, vector<1x8x8xbf16>
    %11 = vector.shape_cast %10 : vector<1x8x8xbf16> to vector<8x8xbf16>
    %12 = vector.extract_strided_slice %7 {offsets = [0, 0, 0], sizes = [8, 1, 8], strides = [1, 1, 1]} : vector<8x4x8xbf16> to vector<8x1x8xbf16>
    %13 = vector.shape_cast %12 : vector<8x1x8xbf16> to vector<8x8xbf16>
    "tpu.trace_start"() <{level = 10 : i32, message = "nd,md->nm"}> : () -> ()
    %cst_9 = arith.constant dense<0.000000e+00> : vector<8x8xf32>
    %14 = tpu.matmul %13, %11, %cst_9 {dimension_numbers = #tpu.dot_dimension_numbers<[1], [1], [0], [0], [0, 0, 1, 0], [], []>} : vector<8x8xbf16>, vector<8x8xbf16>, vector<8x8xf32> -> vector<8x8xf32>
    "tpu.trace_stop"() : () -> ()
    %15 = vector.shape_cast %14 : vector<8x8xf32> to vector<8x1x8xf32>
    %c1 = arith.constant 1 : index
    %16 = arith.index_cast %4 : i32 to index
    %c0_10 = arith.constant 0 : index
    %17 = vector.load %arg19[%c1, %16, %c0_10] : memref<4x8x8xbf16, #tpu.memory_space<vmem>>, vector<1x8x8xbf16>
    %18 = vector.shape_cast %17 : vector<1x8x8xbf16> to vector<8x8xbf16>
    %19 = vector.extract_strided_slice %7 {offsets = [0, 1, 0], sizes = [8, 1, 8], strides = [1, 1, 1]} : vector<8x4x8xbf16> to vector<8x1x8xbf16>
    %20 = vector.shape_cast %19 : vector<8x1x8xbf16> to vector<8x8xbf16>
    "tpu.trace_start"() <{level = 10 : i32, message = "nd,md->nm"}> : () -> ()
    %cst_11 = arith.constant dense<0.000000e+00> : vector<8x8xf32>
    %21 = tpu.matmul %20, %18, %cst_11 {dimension_numbers = #tpu.dot_dimension_numbers<[1], [1], [0], [0], [0, 0, 1, 0], [], []>} : vector<8x8xbf16>, vector<8x8xbf16>, vector<8x8xf32> -> vector<8x8xf32>
    "tpu.trace_stop"() : () -> ()
    %22 = vector.shape_cast %21 : vector<8x8xf32> to vector<8x1x8xf32>
    %c2 = arith.constant 2 : index
    %23 = arith.index_cast %4 : i32 to index
    %c0_12 = arith.constant 0 : index
    %24 = vector.load %arg19[%c2, %23, %c0_12] : memref<4x8x8xbf16, #tpu.memory_space<vmem>>, vector<1x8x8xbf16>
    %25 = vector.shape_cast %24 : vector<1x8x8xbf16> to vector<8x8xbf16>
    %26 = vector.extract_strided_slice %7 {offsets = [0, 2, 0], sizes = [8, 1, 8], strides = [1, 1, 1]} : vector<8x4x8xbf16> to vector<8x1x8xbf16>
    %27 = vector.shape_cast %26 : vector<8x1x8xbf16> to vector<8x8xbf16>
    "tpu.trace_start"() <{level = 10 : i32, message = "nd,md->nm"}> : () -> ()
    %cst_13 = arith.constant dense<0.000000e+00> : vector<8x8xf32>
    %28 = tpu.matmul %27, %25, %cst_13 {dimension_numbers = #tpu.dot_dimension_numbers<[1], [1], [0], [0], [0, 0, 1, 0], [], []>} : vector<8x8xbf16>, vector<8x8xbf16>, vector<8x8xf32> -> vector<8x8xf32>
    "tpu.trace_stop"() : () -> ()
    %29 = vector.shape_cast %28 : vector<8x8xf32> to vector<8x1x8xf32>
    %c3 = arith.constant 3 : index
    %30 = arith.index_cast %4 : i32 to index
    %c0_14 = arith.constant 0 : index
    %31 = vector.load %arg19[%c3, %30, %c0_14] : memref<4x8x8xbf16, #tpu.memory_space<vmem>>, vector<1x8x8xbf16>
    %32 = vector.shape_cast %31 : vector<1x8x8xbf16> to vector<8x8xbf16>
    %33 = vector.extract_strided_slice %7 {offsets = [0, 3, 0], sizes = [8, 1, 8], strides = [1, 1, 1]} : vector<8x4x8xbf16> to vector<8x1x8xbf16>
    %34 = vector.shape_cast %33 : vector<8x1x8xbf16> to vector<8x8xbf16>
    "tpu.trace_start"() <{level = 10 : i32, message = "nd,md->nm"}> : () -> ()
    %cst_15 = arith.constant dense<0.000000e+00> : vector<8x8xf32>
    %35 = tpu.matmul %34, %32, %cst_15 {dimension_numbers = #tpu.dot_dimension_numbers<[1], [1], [0], [0], [0, 0, 1, 0], [], []>} : vector<8x8xbf16>, vector<8x8xbf16>, vector<8x8xf32> -> vector<8x8xf32>
    "tpu.trace_stop"() : () -> ()
    %36 = vector.shape_cast %35 : vector<8x8xf32> to vector<8x1x8xf32>
    %37 = tpu.concatenate %15, %22, %29, %36 in 1 : vector<8x1x8xf32>, vector<8x1x8xf32>, vector<8x1x8xf32>, vector<8x1x8xf32> -> vector<8x4x8xf32>
    %38 = arith.addf %37, %8 : vector<8x4x8xf32>
    %cst_16 = arith.constant 0.353553385 : f32
    %39 = vector.broadcast %cst_16 : f32 to vector<8x4x8xf32>
    %40 = arith.mulf %38, %39 : vector<8x4x8xf32>
    %c0_17 = arith.constant 0 : index
    %41 = arith.index_cast %arg1 : i32 to index
    %c0_18 = arith.constant 0 : index
    %42 = vector.load %arg4[%c0_17, %41, %c0_18] : memref<1x1x8xf32, #tpu.memory_space<vmem>>, vector<1x1x8xf32>
    %43 = vector.shape_cast %42 : vector<1x1x8xf32> to vector<1x8xf32>
    %44 = vector.shape_cast %43 : vector<1x8xf32> to vector<1x1x8xf32>
    %45 = vector.broadcast %44 : vector<1x1x8xf32> to vector<8x4x8xf32>
    %46 = arith.addf %40, %45 : vector<8x4x8xf32>
    %c0_19 = arith.constant 0 : index
    %c0_20 = arith.constant 0 : index
    %c0_21 = arith.constant 0 : index
    %47 = vector.load %arg21[%c0_19, %c0_20, %c0_21] : memref<8x4x1xf32, #tpu.memory_space<vmem>>, vector<8x4x1xf32>
    %cst_22 = arith.constant dense<0xFF800000> : vector<8x4xf32>
    %48 = vector.multi_reduction <maximumf>, %46, %cst_22 [2] : vector<8x4x8xf32> to vector<8x4xf32>
    %49 = vector.shape_cast %48 : vector<8x4xf32> to vector<8x4x1xf32>
    %50 = arith.maximumf %47, %49 : vector<8x4x1xf32>
    %51 = arith.subf %47, %50 : vector<8x4x1xf32>
    %52 = math.exp %51 : vector<8x4x1xf32>
    %53 = vector.broadcast %50 : vector<8x4x1xf32> to vector<8x4x8xf32>
    %54 = arith.subf %46, %53 : vector<8x4x8xf32>
    %55 = math.exp %54 : vector<8x4x8xf32>
    %c0_23 = arith.constant 0 : index
    %c0_24 = arith.constant 0 : index
    %c0_25 = arith.constant 0 : index
    %56 = vector.load %arg22[%c0_23, %c0_24, %c0_25] : memref<8x4x1xf32, #tpu.memory_space<vmem>>, vector<8x4x1xf32>
    %57 = arith.mulf %52, %56 : vector<8x4x1xf32>
    %cst_26 = arith.constant dense<0.000000e+00> : vector<8x4xf32>
    %58 = vector.multi_reduction <add>, %55, %cst_26 [2] : vector<8x4x8xf32> to vector<8x4xf32>
    %59 = vector.shape_cast %58 : vector<8x4xf32> to vector<8x4x1xf32>
    %60 = arith.addf %57, %59 : vector<8x4x1xf32>
    %c0_27 = arith.constant 0 : index
    %c0_28 = arith.constant 0 : index
    %c0_29 = arith.constant 0 : index
    %61 = vector.load %arg22[%c0_27, %c0_28, %c0_29] : memref<8x4x1xf32, #tpu.memory_space<vmem>>, vector<8x4x1xf32>
    tpu.vector_store %arg22[%c0_27, %c0_28, %c0_29], %60 {strides = array<i32>} : memref<8x4x1xf32, #tpu.memory_space<vmem>>, vector<8x4x1xf32>,
    %62 = arith.truncf %55 : vector<8x4x8xf32> to vector<8x4x8xbf16>
    "tpu.trace_start"() <{level = 10 : i32, message = "nhm,nmd->nhd"}> : () -> ()
    %cst_30 = arith.constant dense<0.000000e+00> : vector<8x4x8xf32>
    %63 = tpu.matmul %62, %6, %cst_30 {dimension_numbers = #tpu.dot_dimension_numbers<[2], [1], [1], [2], [0, 0, 0, 1, 1, 2], [0], [0]>} : vector<8x4x8xbf16>, vector<8x8x8xbf16>, vector<8x4x8xf32> -> vector<8x4x8xf32>
    "tpu.trace_stop"() : () -> ()
    %c0_31 = arith.constant 0 : index
    %64 = arith.index_cast %4 : i32 to index
    %c0_32 = arith.constant 0 : index
    %65 = vector.load %arg20[%c0_31, %64, %c0_32] : memref<4x8x8xbf16, #tpu.memory_space<vmem>>, vector<1x8x8xbf16>
    %66 = vector.shape_cast %65 : vector<1x8x8xbf16> to vector<8x8xbf16>
    %67 = vector.extract_strided_slice %62 {offsets = [0, 0, 0], sizes = [8, 1, 8], strides = [1, 1, 1]} : vector<8x4x8xbf16> to vector<8x1x8xbf16>
    %68 = vector.shape_cast %67 : vector<8x1x8xbf16> to vector<8x8xbf16>
    %cst_33 = arith.constant dense<0.000000e+00> : vector<8x8xf32>
    %69 = tpu.matmul %68, %66, %cst_33 {dimension_numbers = #tpu.dot_dimension_numbers<[1], [0], [0], [1], [0, 0, 1, 1], [], []>} : vector<8x8xbf16>, vector<8x8xbf16>, vector<8x8xf32> -> vector<8x8xf32>
    %70 = vector.shape_cast %69 : vector<8x8xf32> to vector<8x1x8xf32>
    %c1_34 = arith.constant 1 : index
    %71 = arith.index_cast %4 : i32 to index
    %c0_35 = arith.constant 0 : index
    %72 = vector.load %arg20[%c1_34, %71, %c0_35] : memref<4x8x8xbf16, #tpu.memory_space<vmem>>, vector<1x8x8xbf16>
    %73 = vector.shape_cast %72 : vector<1x8x8xbf16> to vector<8x8xbf16>
    %74 = vector.extract_strided_slice %62 {offsets = [0, 1, 0], sizes = [8, 1, 8], strides = [1, 1, 1]} : vector<8x4x8xbf16> to vector<8x1x8xbf16>
    %75 = vector.shape_cast %74 : vector<8x1x8xbf16> to vector<8x8xbf16>
    %cst_36 = arith.constant dense<0.000000e+00> : vector<8x8xf32>
    %76 = tpu.matmul %75, %73, %cst_36 {dimension_numbers = #tpu.dot_dimension_numbers<[1], [0], [0], [1], [0, 0, 1, 1], [], []>} : vector<8x8xbf16>, vector<8x8xbf16>, vector<8x8xf32> -> vector<8x8xf32>
    %77 = vector.shape_cast %76 : vector<8x8xf32> to vector<8x1x8xf32>
    %c2_37 = arith.constant 2 : index
    %78 = arith.index_cast %4 : i32 to index
    %c0_38 = arith.constant 0 : index
    %79 = vector.load %arg20[%c2_37, %78, %c0_38] : memref<4x8x8xbf16, #tpu.memory_space<vmem>>, vector<1x8x8xbf16>
    %80 = vector.shape_cast %79 : vector<1x8x8xbf16> to vector<8x8xbf16>
    %81 = vector.extract_strided_slice %62 {offsets = [0, 2, 0], sizes = [8, 1, 8], strides = [1, 1, 1]} : vector<8x4x8xbf16> to vector<8x1x8xbf16>
    %82 = vector.shape_cast %81 : vector<8x1x8xbf16> to vector<8x8xbf16>
    %cst_39 = arith.constant dense<0.000000e+00> : vector<8x8xf32>
    %83 = tpu.matmul %82, %80, %cst_39 {dimension_numbers = #tpu.dot_dimension_numbers<[1], [0], [0], [1], [0, 0, 1, 1], [], []>} : vector<8x8xbf16>, vector<8x8xbf16>, vector<8x8xf32> -> vector<8x8xf32>
    %84 = vector.shape_cast %83 : vector<8x8xf32> to vector<8x1x8xf32>
    %c3_40 = arith.constant 3 : index
    %85 = arith.index_cast %4 : i32 to index
    %c0_41 = arith.constant 0 : index
    %86 = vector.load %arg20[%c3_40, %85, %c0_41] : memref<4x8x8xbf16, #tpu.memory_space<vmem>>, vector<1x8x8xbf16>
    %87 = vector.shape_cast %86 : vector<1x8x8xbf16> to vector<8x8xbf16>
    %88 = vector.extract_strided_slice %62 {offsets = [0, 3, 0], sizes = [8, 1, 8], strides = [1, 1, 1]} : vector<8x4x8xbf16> to vector<8x1x8xbf16>
    %89 = vector.shape_cast %88 : vector<8x1x8xbf16> to vector<8x8xbf16>
    %cst_42 = arith.constant dense<0.000000e+00> : vector<8x8xf32>
    %90 = tpu.matmul %89, %87, %cst_42 {dimension_numbers = #tpu.dot_dimension_numbers<[1], [0], [0], [1], [0, 0, 1, 1], [], []>} : vector<8x8xbf16>, vector<8x8xbf16>, vector<8x8xf32> -> vector<8x8xf32>
    %91 = vector.shape_cast %90 : vector<8x8xf32> to vector<8x1x8xf32>
    %c0_43 = arith.constant 0 : index
    %c0_44 = arith.constant 0 : index
    %c0_45 = arith.constant 0 : index
    %92 = vector.load %arg23[%c0_43, %c0_44, %c0_45] : memref<8x4x8xf32, #tpu.memory_space<vmem>>, vector<8x4x8xf32>
    %93 = vector.broadcast %52 : vector<8x4x1xf32> to vector<8x4x8xf32>
    %94 = arith.mulf %93, %92 : vector<8x4x8xf32>
    %95 = tpu.concatenate %70, %77, %84, %91 in 1 : vector<8x1x8xf32>, vector<8x1x8xf32>, vector<8x1x8xf32>, vector<8x1x8xf32> -> vector<8x4x8xf32>
    %96 = arith.addf %94, %95 : vector<8x4x8xf32>
    %97 = arith.addf %96, %63 : vector<8x4x8xf32>
    %c0_46 = arith.constant 0 : index
    %c0_47 = arith.constant 0 : index
    %c0_48 = arith.constant 0 : index
    %98 = vector.load %arg23[%c0_46, %c0_47, %c0_48] : memref<8x4x8xf32, #tpu.memory_space<vmem>>, vector<8x4x8xf32>
    tpu.vector_store %arg23[%c0_46, %c0_47, %c0_48], %97 {strides = array<i32>} : memref<8x4x8xf32, #tpu.memory_space<vmem>>, vector<8x4x8xf32>,
    %c0_49 = arith.constant 0 : index
    %c0_50 = arith.constant 0 : index
    %c0_51 = arith.constant 0 : index
    %99 = vector.load %arg21[%c0_49, %c0_50, %c0_51] : memref<8x4x1xf32, #tpu.memory_space<vmem>>, vector<8x4x1xf32>
    tpu.vector_store %arg21[%c0_49, %c0_50, %c0_51], %50 {strides = array<i32>} : memref<8x4x1xf32, #tpu.memory_space<vmem>>, vector<8x4x1xf32>,
    %c0_i32_52 = arith.constant 0 : i32
    %100 = arith.cmpi eq, %arg1, %c0_i32_52 : i32
    %101 = arith.extui %100 : i1 to i32
    %c0_i32_53 = arith.constant 0 : i32
    %102 = arith.cmpi ne, %101, %c0_i32_53 : i32
    scf.if %102 {
      %c0_54 = arith.constant 0 : index
      %c0_55 = arith.constant 0 : index
      %c0_56 = arith.constant 0 : index
      %103 = vector.load %arg2[%c0_54, %c0_55, %c0_56] : memref<1x8x32xf32, #tpu.memory_space<vmem>>, vector<1x8x32xf32>
      %104 = vector.shape_cast %103 : vector<1x8x32xf32> to vector<8x32xf32>
      %c0_57 = arith.constant 0 : index
      %c0_58 = arith.constant 0 : index
      %c0_59 = arith.constant 0 : index
      %105 = vector.load %arg23[%c0_57, %c0_58, %c0_59] : memref<8x4x8xf32, #tpu.memory_space<vmem>>, vector<8x4x8xf32>
      %c0_60 = arith.constant 0 : index
      %c0_61 = arith.constant 0 : index
      %c0_62 = arith.constant 0 : index
      %106 = vector.load %arg22[%c0_60, %c0_61, %c0_62] : memref<8x4x1xf32, #tpu.memory_space<vmem>>, vector<8x4x1xf32>
      %107 = vector.broadcast %106 : vector<8x4x1xf32> to vector<8x4x8xf32>
      %108 = arith.divf %105, %107 : vector<8x4x8xf32>
      %109 = vector.extract_strided_slice %108 {offsets = [0, 0, 0], sizes = [8, 1, 8], strides = [1, 1, 1]} : vector<8x4x8xf32> to vector<8x1x8xf32>
      %110 = vector.shape_cast %109 : vector<8x1x8xf32> to vector<8x8xf32>
      %111 = vector.extract_strided_slice %108 {offsets = [0, 1, 0], sizes = [8, 1, 8], strides = [1, 1, 1]} : vector<8x4x8xf32> to vector<8x1x8xf32>
      %112 = vector.shape_cast %111 : vector<8x1x8xf32> to vector<8x8xf32>
      %113 = vector.extract_strided_slice %108 {offsets = [0, 2, 0], sizes = [8, 1, 8], strides = [1, 1, 1]} : vector<8x4x8xf32> to vector<8x1x8xf32>
      %114 = vector.shape_cast %113 : vector<8x1x8xf32> to vector<8x8xf32>
      %115 = vector.extract_strided_slice %108 {offsets = [0, 3, 0], sizes = [8, 1, 8], strides = [1, 1, 1]} : vector<8x4x8xf32> to vector<8x1x8xf32>
      %116 = vector.shape_cast %115 : vector<8x1x8xf32> to vector<8x8xf32>
      %117 = tpu.concatenate %110, %112, %114, %116 in 1 : vector<8x8xf32>, vector<8x8xf32>, vector<8x8xf32>, vector<8x8xf32> -> vector<8x32xf32>
      %118 = arith.truncf %117 : vector<8x32xf32> to vector<8x32xbf16>
      %c0_63 = arith.constant 0 : index
      %c0_64 = arith.constant 0 : index
      %119 = vector.load %arg7[%c0_63, %c0_64] : memref<32x32xbf16, #tpu.memory_space<vmem>>, vector<32x32xbf16>
      %cst_65 = arith.constant dense<0.000000e+00> : vector<8x32xf32>
      %120 = tpu.matmul %118, %119, %cst_65 {dimension_numbers = #tpu.dot_dimension_numbers<[1], [0], [0], [1], [0, 0, 1, 1], [], []>} : vector<8x32xbf16>, vector<32x32xbf16>, vector<8x32xf32> -> vector<8x32xf32>
      %c0_66 = arith.constant 0 : index
      %c0_67 = arith.constant 0 : index
      %121 = vector.load %arg8[%c0_66, %c0_67] : memref<1x32xf32, #tpu.memory_space<vmem>>, vector<1x32xf32>
      %122 = vector.broadcast %121 : vector<1x32xf32> to vector<8x32xf32>
      %123 = arith.addf %120, %122 : vector<8x32xf32>
      %124 = arith.addf %104, %123 : vector<8x32xf32>
      %c0_68 = arith.constant 0 : index
      %c0_69 = arith.constant 0 : index
      %125 = vector.load %arg9[%c0_68, %c0_69] : memref<1x32xf32, #tpu.memory_space<vmem>>, vector<1x32xf32>
      %c0_70 = arith.constant 0 : index
      %c0_71 = arith.constant 0 : index
      %126 = vector.load %arg10[%c0_70, %c0_71] : memref<1x32xf32, #tpu.memory_space<vmem>>, vector<1x32xf32>
      %cst_72 = arith.constant dense<0.000000e+00> : vector<8xf32>
      %127 = vector.multi_reduction <add>, %124, %cst_72 [1] : vector<8x32xf32> to vector<8xf32>
      %128 = vector.shape_cast %127 : vector<8xf32> to vector<8x1xf32>
      %cst_73 = arith.constant 3.200000e+01 : f32
      %129 = vector.broadcast %cst_73 : f32 to vector<8x1xf32>
      %130 = arith.divf %128, %129 : vector<8x1xf32>
      %131 = vector.broadcast %130 : vector<8x1xf32> to vector<8x32xf32>
      %132 = arith.subf %124, %131 : vector<8x32xf32>
      %133 = arith.mulf %132, %132 : vector<8x32xf32>
      %cst_74 = arith.constant dense<0.000000e+00> : vector<8xf32>
      %134 = vector.multi_reduction <add>, %133, %cst_74 [1] : vector<8x32xf32> to vector<8xf32>
      %135 = vector.shape_cast %134 : vector<8xf32> to vector<8x1xf32>
      %cst_75 = arith.constant 3.200000e+01 : f32
      %136 = vector.broadcast %cst_75 : f32 to vector<8x1xf32>
      %137 = arith.divf %135, %136 : vector<8x1xf32>
      %138 = vector.broadcast %130 : vector<8x1xf32> to vector<8x32xf32>
      %139 = arith.subf %124, %138 : vector<8x32xf32>
      %cst_76 = arith.constant 9.99999974E-6 : f32
      %140 = vector.broadcast %cst_76 : f32 to vector<8x1xf32>
      %141 = arith.addf %137, %140 : vector<8x1xf32>
      %142 = math.rsqrt %141 : vector<8x1xf32>
      %143 = vector.broadcast %142 : vector<8x1xf32> to vector<8x32xf32>
      %144 = arith.mulf %139, %143 : vector<8x32xf32>
      %145 = vector.broadcast %125 : vector<1x32xf32> to vector<8x32xf32>
      %146 = arith.mulf %144, %145 : vector<8x32xf32>
      %147 = vector.broadcast %126 : vector<1x32xf32> to vector<8x32xf32>
      %148 = arith.addf %146, %147 : vector<8x32xf32>
      %149 = arith.truncf %148 : vector<8x32xf32> to vector<8x32xbf16>
      %c0_77 = arith.constant 0 : index
      %c0_78 = arith.constant 0 : index
      %150 = vector.load %arg11[%c0_77, %c0_78] : memref<32x64xbf16, #tpu.memory_space<vmem>>, vector<32x64xbf16>
      %cst_79 = arith.constant dense<0.000000e+00> : vector<8x64xf32>
      %151 = tpu.matmul %149, %150, %cst_79 {dimension_numbers = #tpu.dot_dimension_numbers<[1], [0], [0], [1], [0, 0, 1, 1], [], []>} : vector<8x32xbf16>, vector<32x64xbf16>, vector<8x64xf32> -> vector<8x64xf32>
      %c0_80 = arith.constant 0 : index
      %c0_81 = arith.constant 0 : index
      %152 = vector.load %arg12[%c0_80, %c0_81] : memref<1x64xf32, #tpu.memory_space<vmem>>, vector<1x64xf32>
      %153 = vector.broadcast %152 : vector<1x64xf32> to vector<8x64xf32>
      %154 = arith.addf %151, %153 : vector<8x64xf32>
      %cst_82 = arith.constant 0.000000e+00 : f32
      %155 = vector.broadcast %cst_82 : f32 to vector<8x64xf32>
      %156 = arith.maximumf %154, %155 : vector<8x64xf32>
      %157 = arith.truncf %156 : vector<8x64xf32> to vector<8x64xbf16>
      %c0_83 = arith.constant 0 : index
      %c0_84 = arith.constant 0 : index
      %158 = vector.load %arg13[%c0_83, %c0_84] : memref<64x32xbf16, #tpu.memory_space<vmem>>, vector<64x32xbf16>
      %cst_85 = arith.constant dense<0.000000e+00> : vector<8x32xf32>
      %159 = tpu.matmul %157, %158, %cst_85 {dimension_numbers = #tpu.dot_dimension_numbers<[1], [0], [0], [1], [0, 0, 1, 1], [], []>} : vector<8x64xbf16>, vector<64x32xbf16>, vector<8x32xf32> -> vector<8x32xf32>
      %c0_86 = arith.constant 0 : index
      %c0_87 = arith.constant 0 : index
      %160 = vector.load %arg14[%c0_86, %c0_87] : memref<1x32xf32, #tpu.memory_space<vmem>>, vector<1x32xf32>
      %161 = vector.broadcast %160 : vector<1x32xf32> to vector<8x32xf32>
      %162 = arith.addf %159, %161 : vector<8x32xf32>
      %163 = arith.addf %148, %162 : vector<8x32xf32>
      %c0_88 = arith.constant 0 : index
      %c0_89 = arith.constant 0 : index
      %164 = vector.load %arg15[%c0_88, %c0_89] : memref<1x32xf32, #tpu.memory_space<vmem>>, vector<1x32xf32>
      %c0_90 = arith.constant 0 : index
      %c0_91 = arith.constant 0 : index
      %165 = vector.load %arg16[%c0_90, %c0_91] : memref<1x32xf32, #tpu.memory_space<vmem>>, vector<1x32xf32>
      %cst_92 = arith.constant dense<0.000000e+00> : vector<8xf32>
      %166 = vector.multi_reduction <add>, %163, %cst_92 [1] : vector<8x32xf32> to vector<8xf32>
      %167 = vector.shape_cast %166 : vector<8xf32> to vector<8x1xf32>
      %cst_93 = arith.constant 3.200000e+01 : f32
      %168 = vector.broadcast %cst_93 : f32 to vector<8x1xf32>
      %169 = arith.divf %167, %168 : vector<8x1xf32>
      %170 = vector.broadcast %169 : vector<8x1xf32> to vector<8x32xf32>
      %171 = arith.subf %163, %170 : vector<8x32xf32>
      %172 = arith.mulf %171, %171 : vector<8x32xf32>
      %cst_94 = arith.constant dense<0.000000e+00> : vector<8xf32>
      %173 = vector.multi_reduction <add>, %172, %cst_94 [1] : vector<8x32xf32> to vector<8xf32>
      %174 = vector.shape_cast %173 : vector<8xf32> to vector<8x1xf32>
      %cst_95 = arith.constant 3.200000e+01 : f32
      %175 = vector.broadcast %cst_95 : f32 to vector<8x1xf32>
      %176 = arith.divf %174, %175 : vector<8x1xf32>
      %177 = vector.broadcast %169 : vector<8x1xf32> to vector<8x32xf32>
      %178 = arith.subf %163, %177 : vector<8x32xf32>
      %cst_96 = arith.constant 9.99999974E-6 : f32
      %179 = vector.broadcast %cst_96 : f32 to vector<8x1xf32>
      %180 = arith.addf %176, %179 : vector<8x1xf32>
      %181 = math.rsqrt %180 : vector<8x1xf32>
      %182 = vector.broadcast %181 : vector<8x1xf32> to vector<8x32xf32>
      %183 = arith.mulf %178, %182 : vector<8x32xf32>
      %184 = vector.broadcast %164 : vector<1x32xf32> to vector<8x32xf32>
      %185 = arith.mulf %183, %184 : vector<8x32xf32>
      %186 = vector.broadcast %165 : vector<1x32xf32> to vector<8x32xf32>
      %187 = arith.addf %185, %186 : vector<8x32xf32>
      %c0_97 = arith.constant 0 : index
      %c0_98 = arith.constant 0 : index
      %c0_99 = arith.constant 0 : index
      %188 = vector.load %arg17[%c0_97, %c0_98, %c0_99] : memref<1x8x32xf32, #tpu.memory_space<vmem>>, vector<1x8x32xf32>
      %189 = vector.shape_cast %188 : vector<1x8x32xf32> to vector<8x32xf32>
      %190 = vector.shape_cast %187 : vector<8x32xf32> to vector<1x8x32xf32>
      tpu.vector_store %arg17[%c0_97, %c0_98, %c0_99], %190 {strides = array<i32>} : memref<1x8x32xf32, #tpu.memory_space<vmem>>, vector<1x8x32xf32>,
    } else {
    }
    return
  }
  func.func @transform_0(%arg0: i32, %arg1: i32) -> (i32, i32, i32) {
    %c0_i32 = arith.constant 0 : i32
    %c0_i32_0 = arith.constant 0 : i32
    %c0_i32_1 = arith.constant 0 : i32
    return %arg0, %c0_i32, %c0_i32_0 : i32, i32, i32
  }
  func.func @transform_1(%arg0: i32, %arg1: i32) -> (i32, i32, i32, i32) {
    %c0_i32 = arith.constant 0 : i32
    %c0_i32_0 = arith.constant 0 : i32
    %c0_i32_1 = arith.constant 0 : i32
    return %arg0, %c0_i32, %arg1, %c0_i32_0 : i32, i32, i32, i32
  }
  func.func @transform_2(%arg0: i32, %arg1: i32) -> (i32, i32, i32) {
    %c0_i32 = arith.constant 0 : i32
    %c0_i32_0 = arith.constant 0 : i32
    %c0_i32_1 = arith.constant 0 : i32
    return %arg0, %c0_i32, %c0_i32_0 : i32, i32, i32
  }
  func.func @transform_3(%arg0: i32, %arg1: i32) -> (i32, i32) {
    %c0_i32 = arith.constant 0 : i32
    %c0_i32_0 = arith.constant 0 : i32
    %c0_i32_1 = arith.constant 0 : i32
    return %c0_i32, %c0_i32_0 : i32, i32
  }
  func.func @transform_4(%arg0: i32, %arg1: i32) -> (i32, i32) {
    %c0_i32 = arith.constant 0 : i32
    %c0_i32_0 = arith.constant 0 : i32
    %c0_i32_1 = arith.constant 0 : i32
    return %c0_i32, %c0_i32_0 : i32, i32
  }
  func.func @transform_5(%arg0: i32, %arg1: i32) -> (i32, i32) {
    %c0_i32 = arith.constant 0 : i32
    %c0_i32_0 = arith.constant 0 : i32
    %c0_i32_1 = arith.constant 0 : i32
    return %c0_i32, %c0_i32_0 : i32, i32
  }
  func.func @transform_6(%arg0: i32, %arg1: i32) -> (i32, i32) {
    %c0_i32 = arith.constant 0 : i32
    %c0_i32_0 = arith.constant 0 : i32
    %c0_i32_1 = arith.constant 0 : i32
    return %c0_i32, %c0_i32_0 : i32, i32
  }
  func.func @transform_7(%arg0: i32, %arg1: i32) -> (i32, i32) {
    %c0_i32 = arith.constant 0 : i32
    %c0_i32_0 = arith.constant 0 : i32
    %c0_i32_1 = arith.constant 0 : i32
    return %c0_i32, %c0_i32_0 : i32, i32
  }
  func.func @transform_8(%arg0: i32, %arg1: i32) -> (i32, i32) {
    %c0_i32 = arith.constant 0 : i32
    %c0_i32_0 = arith.constant 0 : i32
    %c0_i32_1 = arith.constant 0 : i32
    return %c0_i32, %c0_i32_0 : i32, i32
  }
  func.func @transform_9(%arg0: i32, %arg1: i32) -> (i32, i32) {
    %c0_i32 = arith.constant 0 : i32
    %c0_i32_0 = arith.constant 0 : i32
    %c0_i32_1 = arith.constant 0 : i32
    return %c0_i32, %c0_i32_0 : i32, i32
  }
  func.func @transform_10(%arg0: i32, %arg1: i32) -> (i32, i32) {
    %c0_i32 = arith.constant 0 : i32
    %c0_i32_0 = arith.constant 0 : i32
    %c0_i32_1 = arith.constant 0 : i32
    return %c0_i32, %c0_i32_0 : i32, i32
  }
  func.func @transform_11(%arg0: i32, %arg1: i32) -> (i32, i32) {
    %c0_i32 = arith.constant 0 : i32
    %c0_i32_0 = arith.constant 0 : i32
    %c0_i32_1 = arith.constant 0 : i32
    return %c0_i32, %c0_i32_0 : i32, i32
  }
  func.func @transform_12(%arg0: i32, %arg1: i32) -> (i32, i32) {
    %c0_i32 = arith.constant 0 : i32
    %c0_i32_0 = arith.constant 0 : i32
    %c0_i32_1 = arith.constant 0 : i32
    return %c0_i32, %c0_i32_0 : i32, i32
  }
  func.func @transform_13(%arg0: i32, %arg1: i32) -> (i32, i32) {
    %c0_i32 = arith.constant 0 : i32
    %c0_i32_0 = arith.constant 0 : i32
    %c0_i32_1 = arith.constant 0 : i32
    return %c0_i32, %c0_i32_0 : i32, i32
  }
  func.func @transform_14(%arg0: i32, %arg1: i32) -> (i32, i32) {
    %c0_i32 = arith.constant 0 : i32
    %c0_i32_0 = arith.constant 0 : i32
    %c0_i32_1 = arith.constant 0 : i32
    return %c0_i32, %c0_i32_0 : i32, i32
  }
  func.func @transform_15(%arg0: i32, %arg1: i32) -> (i32, i32, i32) {
    %c0_i32 = arith.constant 0 : i32
    %c0_i32_0 = arith.constant 0 : i32
    %c0_i32_1 = arith.constant 0 : i32
    return %arg0, %c0_i32, %c0_i32_0 : i32, i32, i32
  }
}

module attributes {stable_mosaic.version = 11 : i64} {
  func.func @_cross_attn_kernel(%arg0: i32, %arg1: i32, %arg2: memref<1x8x32xf32, #tpu.memory_space<vmem>>, %arg3: memref<1x8x32xf32, #tpu.memory_space<vmem>>, %arg4: memref<1x8x8xf32, #tpu.memory_space<vmem>>, %arg5: memref<32x32xbf16, #tpu.memory_space<vmem>>, %arg6: memref<1x32xf32, #tpu.memory_space<vmem>>, %arg7: memref<32x32xbf16, #tpu.memory_space<vmem>>, %arg8: memref<1x32xf32, #tpu.memory_space<vmem>>, %arg9: memref<1x32xf32, #tpu.memory_space<vmem>>, %arg10: memref<32x32xbf16, #tpu.memory_space<vmem>>, %arg11: memref<1x32xf32, #tpu.memory_space<vmem>>, %arg12: memref<1x32xf32, #tpu.memory_space<vmem>>, %arg13: memref<1x32xf32, #tpu.memory_space<vmem>>, %arg14: memref<1x8x32xf32, #tpu.memory_space<vmem>>, %arg15: memref<8x32xf32, #tpu.memory_space<vmem>>, %arg16: memref<8x1xf32, #tpu.memory_space<vmem>>, %arg17: memref<8x1xf32, #tpu.memory_space<vmem>>, %arg18: memref<8x32xf32, #tpu.memory_space<vmem>>) attributes {dimension_semantics = [#tpu.dimension_semantics<parallel>, #tpu.dimension_semantics<arbitrary>], iteration_bounds = array<i64: 2, 1>, scalar_prefetch = 0 : i64, scratch_operands = 4 : i64, tpu.core_type = #tpu.core_type<tc>, window_params = [{transform_indices = @transform_0, window_bounds = array<i64: 1, 8, 32>}, {transform_indices = @transform_1, window_bounds = array<i64: 1, 8, 32>}, {transform_indices = @transform_2, window_bounds = array<i64: 1, 8, 8>}, {pipeline_mode = #tpu.pipeline_mode<synchronous>, transform_indices = @transform_3, window_bounds = array<i64: 32, 32>}, {pipeline_mode = #tpu.pipeline_mode<synchronous>, transform_indices = @transform_4, window_bounds = array<i64: 1, 32>}, {pipeline_mode = #tpu.pipeline_mode<synchronous>, transform_indices = @transform_5, window_bounds = array<i64: 32, 32>}, {pipeline_mode = #tpu.pipeline_mode<synchronous>, transform_indices = @transform_6, window_bounds = array<i64: 1, 32>}, {pipeline_mode = #tpu.pipeline_mode<synchronous>, transform_indices = @transform_7, window_bounds = array<i64: 1, 32>}, {pipeline_mode = #tpu.pipeline_mode<synchronous>, transform_indices = @transform_8, window_bounds = array<i64: 32, 32>}, {pipeline_mode = #tpu.pipeline_mode<synchronous>, transform_indices = @transform_9, window_bounds = array<i64: 1, 32>}, {pipeline_mode = #tpu.pipeline_mode<synchronous>, transform_indices = @transform_10, window_bounds = array<i64: 1, 32>}, {pipeline_mode = #tpu.pipeline_mode<synchronous>, transform_indices = @transform_11, window_bounds = array<i64: 1, 32>}, {transform_indices = @transform_12, window_bounds = array<i64: 1, 8, 32>}]} {
    %c0_i32 = arith.constant 0 : i32
    %0 = arith.cmpi eq, %arg1, %c0_i32 : i32
    %1 = arith.extui %0 : i1 to i32
    %c0_i32_0 = arith.constant 0 : i32
    %2 = arith.cmpi ne, %1, %c0_i32_0 : i32
    scf.if %2 {
      %c0_32 = arith.constant 0 : index
      %c0_33 = arith.constant 0 : index
      %c0_34 = arith.constant 0 : index
      %54 = vector.load %arg2[%c0_32, %c0_33, %c0_34] : memref<1x8x32xf32, #tpu.memory_space<vmem>>, vector<1x8x32xf32>
      %55 = vector.shape_cast %54 : vector<1x8x32xf32> to vector<8x32xf32>
      %56 = arith.truncf %55 : vector<8x32xf32> to vector<8x32xbf16>
      %c0_35 = arith.constant 0 : index
      %c0_36 = arith.constant 0 : index
      %57 = vector.load %arg5[%c0_35, %c0_36] : memref<32x32xbf16, #tpu.memory_space<vmem>>, vector<32x32xbf16>
      %cst_37 = arith.constant dense<0.000000e+00> : vector<8x32xf32>
      %58 = tpu.matmul %56, %57, %cst_37 {dimension_numbers = #tpu.dot_dimension_numbers<[1], [0], [0], [1], [0, 0, 1, 1], [], []>} : vector<8x32xbf16>, vector<32x32xbf16>, vector<8x32xf32> -> vector<8x32xf32>
      %c0_38 = arith.constant 0 : index
      %c0_39 = arith.constant 0 : index
      %59 = vector.load %arg6[%c0_38, %c0_39] : memref<1x32xf32, #tpu.memory_space<vmem>>, vector<1x32xf32>
      %60 = vector.broadcast %59 : vector<1x32xf32> to vector<8x32xf32>
      %61 = arith.addf %58, %60 : vector<8x32xf32>
      %c0_40 = arith.constant 0 : index
      %c0_41 = arith.constant 0 : index
      %62 = vector.load %arg15[%c0_40, %c0_41] : memref<8x32xf32, #tpu.memory_space<vmem>>, vector<8x32xf32>
      tpu.vector_store %arg15[%c0_40, %c0_41], %61 {strides = array<i32>} : memref<8x32xf32, #tpu.memory_space<vmem>>, vector<8x32xf32>,
      %cst_42 = arith.constant 0xFF800000 : f32
      %63 = vector.broadcast %cst_42 : f32 to vector<8x1xf32>
      %c0_43 = arith.constant 0 : index
      %c0_44 = arith.constant 0 : index
      %64 = vector.load %arg16[%c0_43, %c0_44] : memref<8x1xf32, #tpu.memory_space<vmem>>, vector<8x1xf32>
      tpu.vector_store %arg16[%c0_43, %c0_44], %63 {strides = array<i32>} : memref<8x1xf32, #tpu.memory_space<vmem>>, vector<8x1xf32>,
      %cst_45 = arith.constant 0.000000e+00 : f32
      %65 = vector.broadcast %cst_45 : f32 to vector<8x1xf32>
      %c0_46 = arith.constant 0 : index
      %c0_47 = arith.constant 0 : index
      %66 = vector.load %arg17[%c0_46, %c0_47] : memref<8x1xf32, #tpu.memory_space<vmem>>, vector<8x1xf32>
      tpu.vector_store %arg17[%c0_46, %c0_47], %65 {strides = array<i32>} : memref<8x1xf32, #tpu.memory_space<vmem>>, vector<8x1xf32>,
      %cst_48 = arith.constant 0.000000e+00 : f32
      %67 = vector.broadcast %cst_48 : f32 to vector<8x32xf32>
      %c0_49 = arith.constant 0 : index
      %c0_50 = arith.constant 0 : index
      %68 = vector.load %arg18[%c0_49, %c0_50] : memref<8x32xf32, #tpu.memory_space<vmem>>, vector<8x32xf32>
      tpu.vector_store %arg18[%c0_49, %c0_50], %67 {strides = array<i32>} : memref<8x32xf32, #tpu.memory_space<vmem>>, vector<8x32xf32>,
    } else {
    }
    %c0 = arith.constant 0 : index
    %c0_1 = arith.constant 0 : index
    %c0_2 = arith.constant 0 : index
    %3 = vector.load %arg3[%c0, %c0_1, %c0_2] : memref<1x8x32xf32, #tpu.memory_space<vmem>>, vector<1x8x32xf32>
    %4 = vector.shape_cast %3 : vector<1x8x32xf32> to vector<8x32xf32>
    %5 = arith.truncf %4 : vector<8x32xf32> to vector<8x32xbf16>
    %c0_3 = arith.constant 0 : index
    %c0_4 = arith.constant 0 : index
    %6 = vector.load %arg7[%c0_3, %c0_4] : memref<32x32xbf16, #tpu.memory_space<vmem>>, vector<32x32xbf16>
    %cst = arith.constant dense<0.000000e+00> : vector<8x32xf32>
    %7 = tpu.matmul %5, %6, %cst {dimension_numbers = #tpu.dot_dimension_numbers<[1], [0], [0], [1], [0, 0, 1, 1], [], []>} : vector<8x32xbf16>, vector<32x32xbf16>, vector<8x32xf32> -> vector<8x32xf32>
    %c0_5 = arith.constant 0 : index
    %c0_6 = arith.constant 0 : index
    %8 = vector.load %arg8[%c0_5, %c0_6] : memref<1x32xf32, #tpu.memory_space<vmem>>, vector<1x32xf32>
    %9 = vector.broadcast %8 : vector<1x32xf32> to vector<8x32xf32>
    %10 = arith.addf %7, %9 : vector<8x32xf32>
    %c0_7 = arith.constant 0 : index
    %c0_8 = arith.constant 0 : index
    %11 = vector.load %arg15[%c0_7, %c0_8] : memref<8x32xf32, #tpu.memory_space<vmem>>, vector<8x32xf32>
    %12 = vector.shape_cast %11 : vector<8x32xf32> to vector<8x1x32xf32>
    %13 = vector.shape_cast %10 : vector<8x32xf32> to vector<1x8x32xf32>
    %14 = vector.broadcast %12 : vector<8x1x32xf32> to vector<8x8x32xf32>
    %15 = vector.broadcast %13 : vector<1x8x32xf32> to vector<8x8x32xf32>
    %16 = arith.addf %14, %15 : vector<8x8x32xf32>
    %17 = math.tanh %16 : vector<8x8x32xf32>
    %c0_9 = arith.constant 0 : index
    %c0_10 = arith.constant 0 : index
    %18 = vector.load %arg9[%c0_9, %c0_10] : memref<1x32xf32, #tpu.memory_space<vmem>>, vector<1x32xf32>
    %19 = vector.shape_cast %18 : vector<1x32xf32> to vector<1x1x32xf32>
    %20 = vector.broadcast %19 : vector<1x1x32xf32> to vector<8x8x32xf32>
    %21 = arith.mulf %17, %20 : vector<8x8x32xf32>
    %cst_11 = arith.constant dense<0.000000e+00> : vector<8x8xf32>
    %22 = vector.multi_reduction <add>, %21, %cst_11 [2] : vector<8x8x32xf32> to vector<8x8xf32>
    %c0_12 = arith.constant 0 : index
    %c0_13 = arith.constant 0 : index
    %c0_14 = arith.constant 0 : index
    %23 = vector.load %arg4[%c0_12, %c0_13, %c0_14] : memref<1x8x8xf32, #tpu.memory_space<vmem>>, vector<1x8x8xf32>
    %24 = vector.shape_cast %23 : vector<1x8x8xf32> to vector<8x8xf32>
    %25 = tpu.transpose %24, [1, 0] : vector<8x8xf32> -> vector<8x8xf32>
    %26 = arith.addf %22, %25 : vector<8x8xf32>
    %c0_15 = arith.constant 0 : index
    %c0_16 = arith.constant 0 : index
    %27 = vector.load %arg16[%c0_15, %c0_16] : memref<8x1xf32, #tpu.memory_space<vmem>>, vector<8x1xf32>
    %cst_17 = arith.constant dense<0xFF800000> : vector<8xf32>
    %28 = vector.multi_reduction <maximumf>, %26, %cst_17 [1] : vector<8x8xf32> to vector<8xf32>
    %29 = vector.shape_cast %28 : vector<8xf32> to vector<8x1xf32>
    %30 = arith.maximumf %27, %29 : vector<8x1xf32>
    %31 = arith.subf %27, %30 : vector<8x1xf32>
    %32 = math.exp %31 : vector<8x1xf32>
    %33 = vector.broadcast %30 : vector<8x1xf32> to vector<8x8xf32>
    %34 = arith.subf %26, %33 : vector<8x8xf32>
    %35 = math.exp %34 : vector<8x8xf32>
    %c0_18 = arith.constant 0 : index
    %c0_19 = arith.constant 0 : index
    %36 = vector.load %arg17[%c0_18, %c0_19] : memref<8x1xf32, #tpu.memory_space<vmem>>, vector<8x1xf32>
    %37 = arith.mulf %32, %36 : vector<8x1xf32>
    %cst_20 = arith.constant dense<0.000000e+00> : vector<8xf32>
    %38 = vector.multi_reduction <add>, %35, %cst_20 [1] : vector<8x8xf32> to vector<8xf32>
    %39 = vector.shape_cast %38 : vector<8xf32> to vector<8x1xf32>
    %40 = arith.addf %37, %39 : vector<8x1xf32>
    %c0_21 = arith.constant 0 : index
    %c0_22 = arith.constant 0 : index
    %41 = vector.load %arg17[%c0_21, %c0_22] : memref<8x1xf32, #tpu.memory_space<vmem>>, vector<8x1xf32>
    tpu.vector_store %arg17[%c0_21, %c0_22], %40 {strides = array<i32>} : memref<8x1xf32, #tpu.memory_space<vmem>>, vector<8x1xf32>,
    %c0_23 = arith.constant 0 : index
    %c0_24 = arith.constant 0 : index
    %42 = vector.load %arg18[%c0_23, %c0_24] : memref<8x32xf32, #tpu.memory_space<vmem>>, vector<8x32xf32>
    %43 = vector.broadcast %32 : vector<8x1xf32> to vector<8x32xf32>
    %44 = arith.mulf %43, %42 : vector<8x32xf32>
    %45 = arith.truncf %35 : vector<8x8xf32> to vector<8x8xbf16>
    %46 = arith.truncf %4 : vector<8x32xf32> to vector<8x32xbf16>
    %cst_25 = arith.constant dense<0.000000e+00> : vector<8x32xf32>
    %47 = tpu.matmul %45, %46, %cst_25 {dimension_numbers = #tpu.dot_dimension_numbers<[1], [0], [0], [1], [0, 0, 1, 1], [], []>} : vector<8x8xbf16>, vector<8x32xbf16>, vector<8x32xf32> -> vector<8x32xf32>
    %48 = arith.addf %44, %47 : vector<8x32xf32>
    %c0_26 = arith.constant 0 : index
    %c0_27 = arith.constant 0 : index
    %49 = vector.load %arg18[%c0_26, %c0_27] : memref<8x32xf32, #tpu.memory_space<vmem>>, vector<8x32xf32>
    tpu.vector_store %arg18[%c0_26, %c0_27], %48 {strides = array<i32>} : memref<8x32xf32, #tpu.memory_space<vmem>>, vector<8x32xf32>,
    %c0_28 = arith.constant 0 : index
    %c0_29 = arith.constant 0 : index
    %50 = vector.load %arg16[%c0_28, %c0_29] : memref<8x1xf32, #tpu.memory_space<vmem>>, vector<8x1xf32>
    tpu.vector_store %arg16[%c0_28, %c0_29], %30 {strides = array<i32>} : memref<8x1xf32, #tpu.memory_space<vmem>>, vector<8x1xf32>,
    %c0_i32_30 = arith.constant 0 : i32
    %51 = arith.cmpi eq, %arg1, %c0_i32_30 : i32
    %52 = arith.extui %51 : i1 to i32
    %c0_i32_31 = arith.constant 0 : i32
    %53 = arith.cmpi ne, %52, %c0_i32_31 : i32
    scf.if %53 {
      %c0_32 = arith.constant 0 : index
      %c0_33 = arith.constant 0 : index
      %c0_34 = arith.constant 0 : index
      %54 = vector.load %arg2[%c0_32, %c0_33, %c0_34] : memref<1x8x32xf32, #tpu.memory_space<vmem>>, vector<1x8x32xf32>
      %55 = vector.shape_cast %54 : vector<1x8x32xf32> to vector<8x32xf32>
      %c0_35 = arith.constant 0 : index
      %c0_36 = arith.constant 0 : index
      %56 = vector.load %arg18[%c0_35, %c0_36] : memref<8x32xf32, #tpu.memory_space<vmem>>, vector<8x32xf32>
      %c0_37 = arith.constant 0 : index
      %c0_38 = arith.constant 0 : index
      %57 = vector.load %arg17[%c0_37, %c0_38] : memref<8x1xf32, #tpu.memory_space<vmem>>, vector<8x1xf32>
      %58 = vector.broadcast %57 : vector<8x1xf32> to vector<8x32xf32>
      %59 = arith.divf %56, %58 : vector<8x32xf32>
      %60 = arith.truncf %59 : vector<8x32xf32> to vector<8x32xbf16>
      %c0_39 = arith.constant 0 : index
      %c0_40 = arith.constant 0 : index
      %61 = vector.load %arg10[%c0_39, %c0_40] : memref<32x32xbf16, #tpu.memory_space<vmem>>, vector<32x32xbf16>
      %cst_41 = arith.constant dense<0.000000e+00> : vector<8x32xf32>
      %62 = tpu.matmul %60, %61, %cst_41 {dimension_numbers = #tpu.dot_dimension_numbers<[1], [0], [0], [1], [0, 0, 1, 1], [], []>} : vector<8x32xbf16>, vector<32x32xbf16>, vector<8x32xf32> -> vector<8x32xf32>
      %c0_42 = arith.constant 0 : index
      %c0_43 = arith.constant 0 : index
      %63 = vector.load %arg11[%c0_42, %c0_43] : memref<1x32xf32, #tpu.memory_space<vmem>>, vector<1x32xf32>
      %64 = vector.broadcast %63 : vector<1x32xf32> to vector<8x32xf32>
      %65 = arith.addf %62, %64 : vector<8x32xf32>
      %66 = arith.addf %55, %65 : vector<8x32xf32>
      %c0_44 = arith.constant 0 : index
      %c0_45 = arith.constant 0 : index
      %67 = vector.load %arg12[%c0_44, %c0_45] : memref<1x32xf32, #tpu.memory_space<vmem>>, vector<1x32xf32>
      %c0_46 = arith.constant 0 : index
      %c0_47 = arith.constant 0 : index
      %68 = vector.load %arg13[%c0_46, %c0_47] : memref<1x32xf32, #tpu.memory_space<vmem>>, vector<1x32xf32>
      %cst_48 = arith.constant dense<0.000000e+00> : vector<8xf32>
      %69 = vector.multi_reduction <add>, %66, %cst_48 [1] : vector<8x32xf32> to vector<8xf32>
      %70 = vector.shape_cast %69 : vector<8xf32> to vector<8x1xf32>
      %cst_49 = arith.constant 3.200000e+01 : f32
      %71 = vector.broadcast %cst_49 : f32 to vector<8x1xf32>
      %72 = arith.divf %70, %71 : vector<8x1xf32>
      %73 = vector.broadcast %72 : vector<8x1xf32> to vector<8x32xf32>
      %74 = arith.subf %66, %73 : vector<8x32xf32>
      %75 = arith.mulf %74, %74 : vector<8x32xf32>
      %cst_50 = arith.constant dense<0.000000e+00> : vector<8xf32>
      %76 = vector.multi_reduction <add>, %75, %cst_50 [1] : vector<8x32xf32> to vector<8xf32>
      %77 = vector.shape_cast %76 : vector<8xf32> to vector<8x1xf32>
      %cst_51 = arith.constant 3.200000e+01 : f32
      %78 = vector.broadcast %cst_51 : f32 to vector<8x1xf32>
      %79 = arith.divf %77, %78 : vector<8x1xf32>
      %80 = vector.broadcast %72 : vector<8x1xf32> to vector<8x32xf32>
      %81 = arith.subf %66, %80 : vector<8x32xf32>
      %cst_52 = arith.constant 9.99999997E-7 : f32
      %82 = vector.broadcast %cst_52 : f32 to vector<8x1xf32>
      %83 = arith.addf %79, %82 : vector<8x1xf32>
      %84 = math.rsqrt %83 : vector<8x1xf32>
      %85 = vector.broadcast %84 : vector<8x1xf32> to vector<8x32xf32>
      %86 = arith.mulf %81, %85 : vector<8x32xf32>
      %87 = vector.broadcast %67 : vector<1x32xf32> to vector<8x32xf32>
      %88 = arith.mulf %86, %87 : vector<8x32xf32>
      %89 = vector.broadcast %68 : vector<1x32xf32> to vector<8x32xf32>
      %90 = arith.addf %88, %89 : vector<8x32xf32>
      %c0_53 = arith.constant 0 : index
      %c0_54 = arith.constant 0 : index
      %c0_55 = arith.constant 0 : index
      %91 = vector.load %arg14[%c0_53, %c0_54, %c0_55] : memref<1x8x32xf32, #tpu.memory_space<vmem>>, vector<1x8x32xf32>
      %92 = vector.shape_cast %91 : vector<1x8x32xf32> to vector<8x32xf32>
      %93 = vector.shape_cast %90 : vector<8x32xf32> to vector<1x8x32xf32>
      tpu.vector_store %arg14[%c0_53, %c0_54, %c0_55], %93 {strides = array<i32>} : memref<1x8x32xf32, #tpu.memory_space<vmem>>, vector<1x8x32xf32>,
    } else {
    }
    return
  }
  func.func @transform_0(%arg0: i32, %arg1: i32) -> (i32, i32, i32) {
    %c0_i32 = arith.constant 0 : i32
    %c0_i32_0 = arith.constant 0 : i32
    %c0_i32_1 = arith.constant 0 : i32
    return %arg0, %c0_i32, %c0_i32_0 : i32, i32, i32
  }
  func.func @transform_1(%arg0: i32, %arg1: i32) -> (i32, i32, i32) {
    %c0_i32 = arith.constant 0 : i32
    %c0_i32_0 = arith.constant 0 : i32
    return %arg0, %arg1, %c0_i32 : i32, i32, i32
  }
  func.func @transform_2(%arg0: i32, %arg1: i32) -> (i32, i32, i32) {
    %c0_i32 = arith.constant 0 : i32
    %c0_i32_0 = arith.constant 0 : i32
    return %arg0, %arg1, %c0_i32 : i32, i32, i32
  }
  func.func @transform_3(%arg0: i32, %arg1: i32) -> (i32, i32) {
    %c0_i32 = arith.constant 0 : i32
    %c0_i32_0 = arith.constant 0 : i32
    %c0_i32_1 = arith.constant 0 : i32
    return %c0_i32, %c0_i32_0 : i32, i32
  }
  func.func @transform_4(%arg0: i32, %arg1: i32) -> (i32, i32) {
    %c0_i32 = arith.constant 0 : i32
    %c0_i32_0 = arith.constant 0 : i32
    %c0_i32_1 = arith.constant 0 : i32
    return %c0_i32, %c0_i32_0 : i32, i32
  }
  func.func @transform_5(%arg0: i32, %arg1: i32) -> (i32, i32) {
    %c0_i32 = arith.constant 0 : i32
    %c0_i32_0 = arith.constant 0 : i32
    %c0_i32_1 = arith.constant 0 : i32
    return %c0_i32, %c0_i32_0 : i32, i32
  }
  func.func @transform_6(%arg0: i32, %arg1: i32) -> (i32, i32) {
    %c0_i32 = arith.constant 0 : i32
    %c0_i32_0 = arith.constant 0 : i32
    %c0_i32_1 = arith.constant 0 : i32
    return %c0_i32, %c0_i32_0 : i32, i32
  }
  func.func @transform_7(%arg0: i32, %arg1: i32) -> (i32, i32) {
    %c0_i32 = arith.constant 0 : i32
    %c0_i32_0 = arith.constant 0 : i32
    %c0_i32_1 = arith.constant 0 : i32
    return %c0_i32, %c0_i32_0 : i32, i32
  }
  func.func @transform_8(%arg0: i32, %arg1: i32) -> (i32, i32) {
    %c0_i32 = arith.constant 0 : i32
    %c0_i32_0 = arith.constant 0 : i32
    %c0_i32_1 = arith.constant 0 : i32
    return %c0_i32, %c0_i32_0 : i32, i32
  }
  func.func @transform_9(%arg0: i32, %arg1: i32) -> (i32, i32) {
    %c0_i32 = arith.constant 0 : i32
    %c0_i32_0 = arith.constant 0 : i32
    %c0_i32_1 = arith.constant 0 : i32
    return %c0_i32, %c0_i32_0 : i32, i32
  }
  func.func @transform_10(%arg0: i32, %arg1: i32) -> (i32, i32) {
    %c0_i32 = arith.constant 0 : i32
    %c0_i32_0 = arith.constant 0 : i32
    %c0_i32_1 = arith.constant 0 : i32
    return %c0_i32, %c0_i32_0 : i32, i32
  }
  func.func @transform_11(%arg0: i32, %arg1: i32) -> (i32, i32) {
    %c0_i32 = arith.constant 0 : i32
    %c0_i32_0 = arith.constant 0 : i32
    %c0_i32_1 = arith.constant 0 : i32
    return %c0_i32, %c0_i32_0 : i32, i32
  }
  func.func @transform_12(%arg0: i32, %arg1: i32) -> (i32, i32, i32) {
    %c0_i32 = arith.constant 0 : i32
    %c0_i32_0 = arith.constant 0 : i32
    %c0_i32_1 = arith.constant 0 : i32
    return %arg0, %c0_i32, %c0_i32_0 : i32, i32, i32
  }
}

</mosaic_0001>

<llo_original>
// kernel: a_call__.6
$region0: #{a_call__.6}
  #allocation0 [shape = 'u32[]', space=smem, size = 0x4, offset = 0x4, fixed_abs, tag = 'smem constant byte address 0x4 - core index']
  #allocation1 [shape = 'u32[144,128]{1,0:T(1,128)}', space=vmem, size = 0x12000, scoped, tag = 'internal scratch']
  %s0 = inlined_call_operand.vmem [shape: bf16[2,64,8], index: 0, kind: input, shape index: {}]
  %s1 = inlined_call_operand.vmem [shape: bf16[2,64,8], index: 1, kind: input, shape index: {}]
  %s2 = inlined_call_operand.vmem [shape: bf16[8,8], index: 2, kind: input, shape index: {}]
  %s3 = inlined_call_operand.vmem [shape: bf16[8,8], index: 3, kind: input, shape index: {}]
  %s4 = inlined_call_operand.vmem [shape: f32[1,8], index: 4, kind: input, shape index: {}]
  %s5 = inlined_call_operand.vmem [shape: bf16[2,64,8], index: 5, kind: output, shape index: {}]
  %s6 = sld [smem:[#allocation0]]
  $region53: #{a_call__.6} parent=0
    _
  %s8 = ssub.s32 1, %s6
  %s9 = scalar_select 0, %s8, %s6
  loop: start=0, step=1, limit=4
  $region2: #{a_call__.6} parent=0 // loop_pre_header
    _
  $region3: #{a_call__.6} parent=0 // loop_header
    %s11 = sphi 0, %s15
    %p12 = scmp.ge.s32.totalorder %s11, 4
    %s18 = sphi 0, %s30
    %s19 = sphi 0, %s26
    %s20 = sphi 0, %s18
    %s21 = sphi 0, %s19
    %s22 = sphi 0, %s20
    %s23 = sphi 0, %s21
    %s35 = sphi 0, %s37
    %s38 = sphi 0, %s35
    %s39 = sphi 0, %s38
    %s55 = sphi 0, %s39
    %s63 = sphi 0, %s65
    %s66 = sphi 0, %s63
    %s67 = sphi 0, %s66
    %s83 = sphi 0, %s67
    %s87 = sphi 0, %s87
    %s89 = sphi 0, %s87
    %s90 = sphi 0, %s89
    %s104 = sphi 0, %s90
    %s108 = sphi 0, %s108
    %s110 = sphi 0, %s108
    %s111 = sphi 0, %s110
    %s125 = sphi 0, %s111
    %s129 = sphi 0, %s129
    %s131 = sphi 0, %s129
    %s132 = sphi 0, %s131
    %s146 = sphi 0, %s132
    %s154 = sphi 0, %s156
    %s157 = sphi 0, %s154
    %s158 = sphi 0, %s157
    %s174 = sphi 0, %s158
  $region4: #{a_call__.6} parent=0 // loop_header_branch
    %14 = sbr.rel (%p12) target = $region8
  $region5: #{a_call__.6} parent=0 // loop_body
    %s16 = ssub.s32 %s11, 1
    %s17 = ssub.s32 %s11, 2
    %s24 = sadd.s32 1, %s19
    %p25 = scmp.ge.s32.totalorder %s24, 1
    %s26 = scalar_select %p25, 0, %s24
    %s27 = sadd.s32 1, %s18
    %s28 = scalar_select %p25, %s27, %s18
    %p29 = scmp.ge.s32.totalorder %s28, 2
    %s30 = scalar_select %p29, 0, %s28
    %s31 = ssub.s32 %s18, %s30
    %s32 = ssub.s32 %s19, %s26
    %s33 = sor.u32 %s31, %s32
    %p34 = scmp.eq.s32.totalorder %s33, 0
    %s36 = sadd.s32 %s35, 1
    %s37 = scalar_select %p34, %s35, %s36
    %p40 = pneg %p34
    %p41 = scmp.eq.s32.totalorder %s11, 1
    %p42 = por %p40, %p41
    %p43 = scmp.ne.s32.totalorder %s35, %s38
    %p44 = scmp.eq.s32.totalorder %s11, 0
    %p45 = por %p43, %p44
    %p46 = scmp.ne.s32.totalorder %s35, %s38
    %p47 = scmp.eq.s32.totalorder %s16, 1
    %p48 = por %p46, %p47
    %p49 = scmp.ne.s32.totalorder %s38, %s39
    %p50 = scmp.eq.s32.totalorder %s16, 0
    %p51 = por %p49, %p50
    %p52 = scmp.ne.s32.totalorder %s38, %s39
    %p53 = scmp.eq.s32.totalorder %s17, 1
    %p54 = por %p52, %p53
    %p56 = scmp.ne.s32.totalorder %s39, %s55
    %p57 = scmp.eq.s32.totalorder %s17, 0
    %p58 = por %p56, %p57
    %s59 = ssub.s32 %s18, %s30
    %s60 = ssub.s32 %s19, %s26
    %s61 = sor.u32 %s59, %s60
    %p62 = scmp.eq.s32.totalorder %s61, 0
    %s64 = sadd.s32 %s63, 1
    %s65 = scalar_select %p62, %s63, %s64
    %p68 = pneg %p62
    %p69 = scmp.eq.s32.totalorder %s11, 1
    %p70 = por %p68, %p69
    %p71 = scmp.ne.s32.totalorder %s63, %s66
    %p72 = scmp.eq.s32.totalorder %s11, 0
    %p73 = por %p71, %p72
    %p74 = scmp.ne.s32.totalorder %s63, %s66
    %p75 = scmp.eq.s32.totalorder %s16, 1
    %p76 = por %p74, %p75
    %p77 = scmp.ne.s32.totalorder %s66, %s67
    %p78 = scmp.eq.s32.totalorder %s16, 0
    %p79 = por %p77, %p78
    %p80 = scmp.ne.s32.totalorder %s66, %s67
    %p81 = scmp.eq.s32.totalorder %s17, 1
    %p82 = por %p80, %p81
    %p84 = scmp.ne.s32.totalorder %s67, %s83
    %p85 = scmp.eq.s32.totalorder %s17, 0
    %p86 = por %p84, %p85
    %s88 = sadd.s32 %s87, 1
    %p91 = scmp.eq.s32.totalorder %s11, 1
    %p92 = scmp.ne.s32.totalorder %s87, %s89
    %p93 = scmp.eq.s32.totalorder %s11, 0
    %p94 = por %p92, %p93
    %p95 = scmp.ne.s32.totalorder %s87, %s89
    %p96 = scmp.eq.s32.totalorder %s16, 1
    %p97 = por %p95, %p96
    %p98 = scmp.ne.s32.totalorder %s89, %s90
    %p99 = scmp.eq.s32.totalorder %s16, 0
    %p100 = por %p98, %p99
    %p101 = scmp.ne.s32.totalorder %s89, %s90
    %p102 = scmp.eq.s32.totalorder %s17, 1
    %p103 = por %p101, %p102
    %p105 = scmp.ne.s32.totalorder %s90, %s104
    %p106 = scmp.eq.s32.totalorder %s17, 0
    %p107 = por %p105, %p106
    %s109 = sadd.s32 %s108, 1
    %p112 = scmp.eq.s32.totalorder %s11, 1
    %p113 = scmp.ne.s32.totalorder %s108, %s110
    %p114 = scmp.eq.s32.totalorder %s11, 0
    %p115 = por %p113, %p114
    %p116 = scmp.ne.s32.totalorder %s108, %s110
    %p117 = scmp.eq.s32.totalorder %s16, 1
    %p118 = por %p116, %p117
    %p119 = scmp.ne.s32.totalorder %s110, %s111
    %p120 = scmp.eq.s32.totalorder %s16, 0
    %p121 = por %p119, %p120
    %p122 = scmp.ne.s32.totalorder %s110, %s111
    %p123 = scmp.eq.s32.totalorder %s17, 1
    %p124 = por %p122, %p123
    %p126 = scmp.ne.s32.totalorder %s111, %s125
    %p127 = scmp.eq.s32.totalorder %s17, 0
    %p128 = por %p126, %p127
    %s130 = sadd.s32 %s129, 1
    %p133 = scmp.eq.s32.totalorder %s11, 1
    %p134 = scmp.ne.s32.totalorder %s129, %s131
    %p135 = scmp.eq.s32.totalorder %s11, 0
    %p136 = por %p134, %p135
    %p137 = scmp.ne.s32.totalorder %s129, %s131
    %p138 = scmp.eq.s32.totalorder %s16, 1
    %p139 = por %p137, %p138
    %p140 = scmp.ne.s32.totalorder %s131, %s132
    %p141 = scmp.eq.s32.totalorder %s16, 0
    %p142 = por %p140, %p141
    %p143 = scmp.ne.s32.totalorder %s131, %s132
    %p144 = scmp.eq.s32.totalorder %s17, 1
    %p145 = por %p143, %p144
    %p147 = scmp.ne.s32.totalorder %s132, %s146
    %p148 = scmp.eq.s32.totalorder %s17, 0
    %p149 = por %p147, %p148
    %s150 = ssub.s32 %s18, %s30
    %s151 = ssub.s32 %s19, %s26
    %s152 = sor.u32 %s150, %s151
    %p153 = scmp.eq.s32.totalorder %s152, 0
    %s155 = sadd.s32 %s154, 1
    %s156 = scalar_select %p153, %s154, %s155
    %p159 = pneg %p153
    %p160 = scmp.eq.s32.totalorder %s11, 1
    %p161 = por %p159, %p160
    %p162 = scmp.ne.s32.totalorder %s154, %s157
    %p163 = scmp.eq.s32.totalorder %s11, 0
    %p164 = por %p162, %p163
    %p165 = scmp.ne.s32.totalorder %s154, %s157
    %p166 = scmp.eq.s32.totalorder %s16, 1
    %p167 = por %p165, %p166
    %p168 = scmp.ne.s32.totalorder %s157, %s158
    %p169 = scmp.eq.s32.totalorder %s16, 0
    %p170 = por %p168, %p169
    %p171 = scmp.ne.s32.totalorder %s157, %s158
    %p172 = scmp.eq.s32.totalorder %s17, 1
    %p173 = por %p171, %p172
    %p175 = scmp.ne.s32.totalorder %s158, %s174
    %p176 = scmp.eq.s32.totalorder %s17, 0
    %p177 = por %p175, %p176
    %p178 = scmp.le.s32.totalorder 1, %s11
    %p179 = scmp.lt.s32.totalorder %s11, 3
    %p180 = pnand %p178, %p179
    %p181 = pneg %p180
    // Predicated region
    $region9: #{a_call__.6} parent=5 // pred_check
      _
    $region10: #{a_call__.6} parent=5 // pred_check_branch
      %183 = sbr.rel (%p180) target = $region12
    $region11: #{a_call__.6} parent=5 // pred_region
      %s184 = ssub.s32 %s11, 1
      // Predicated region
      $region13: #{a_call__.6} parent=11 // pred_check
        %p185 = pneg %p100
      $region14: #{a_call__.6} parent=11 // pred_check_branch
        %187 = sbr.rel (%p185) target = $region16
      $region15: #{a_call__.6} parent=11 // pred_region
        _
      $region16: #{a_call__.6} parent=11 // pred_fallthru
        _
      // Predicated region
      $region17: #{a_call__.6} parent=11 // pred_check
        %p188 = pneg %p121
      $region18: #{a_call__.6} parent=11 // pred_check_branch
        %190 = sbr.rel (%p188) target = $region20
      $region19: #{a_call__.6} parent=11 // pred_region
        _
      $region20: #{a_call__.6} parent=11 // pred_fallthru
        _
      // Predicated region
      $region21: #{a_call__.6} parent=11 // pred_check
        %p191 = pneg %p142
      $region22: #{a_call__.6} parent=11 // pred_check_branch
        %193 = sbr.rel (%p191) target = $region24
      $region23: #{a_call__.6} parent=11 // pred_region
        _
      $region24: #{a_call__.6} parent=11 // pred_fallthru
        _
    $region12: #{a_call__.6} parent=5 // pred_fallthru
      _
    %p194 = scmp.lt.s32.totalorder %s11, 2
    // Predicated region
    $region25: #{a_call__.6} parent=5 // pred_check
      %p195 = pneg %p194
    $region26: #{a_call__.6} parent=5 // pred_check_branch
      %197 = sbr.rel (%p195) target = $region28
    $region27: #{a_call__.6} parent=5 // pred_region
      // Predicated region
      $region29: #{a_call__.6} parent=27 // pred_check
        %p198 = pneg %p45
      $region30: #{a_call__.6} parent=27 // pred_check_branch
        %200 = sbr.rel (%p198) target = $region32
      $region31: #{a_call__.6} parent=27 // pred_region
        %s201 = smul.u32 8, %s19
        %p202 = scmp.lt.s32.totalorder %s18, 1
        %s203 = scalar_select %p202, %s18, 1
        %p204 = scmp.lt.s32.totalorder %s201, 7
        %s205 = scalar_select %p204, %s201, 7
        %s206 = smul.addr %s203, 8
        %s207 = sadd.s32 %s205, %s206
        %s208 = smul.addr %s207, 4
        %s209 = scalar_lea.vmem %s0, %s208
        %s210 = smul.u32 8, %s19
      $region32: #{a_call__.6} parent=27 // pred_fallthru
        _
      // Predicated region
      $region33: #{a_call__.6} parent=27 // pred_check
        %p211 = pneg %p73
      $region34: #{a_call__.6} parent=27 // pred_check_branch
        %213 = sbr.rel (%p211) target = $region36
      $region35: #{a_call__.6} parent=27 // pred_region
        %s214 = smul.u32 8, %s19
        %p215 = scmp.lt.s32.totalorder %s18, 1
        %s216 = scalar_select %p215, %s18, 1
        %p217 = scmp.lt.s32.totalorder %s214, 7
        %s218 = scalar_select %p217, %s214, 7
        %s219 = smul.addr %s216, 8
        %s220 = sadd.s32 %s218, %s219
        %s221 = smul.addr %s220, 4
        %s222 = scalar_lea.vmem %s1, %s221
        %s223 = smul.u32 8, %s19
      $region36: #{a_call__.6} parent=27 // pred_fallthru
        _
    $region28: #{a_call__.6} parent=5 // pred_fallthru
      _
    %p224 = scmp.le.s32.totalorder 1, %s11
    %p225 = scmp.lt.s32.totalorder %s11, 3
    %p226 = pnand %p224, %p225
    %p227 = pneg %p226
    // Predicated region
    $region37: #{a_call__.6} parent=5 // pred_check
      _
    $region38: #{a_call__.6} parent=5 // pred_check_branch
      %229 = sbr.rel (%p226) target = $region40
    $region39: #{a_call__.6} parent=5 // pred_region
      %s230 = ssub.s32 %s11, 1
      %s231 = smul.u32 8, %s21
      %p232 = scmp.lt.s32.totalorder %s20, 1
      %s233 = scalar_select %p232, %s20, 1
      %p234 = scmp.lt.s32.totalorder %s231, 7
      %s235 = scalar_select %p234, %s231, 7
      %s236 = smul.addr %s233, 8
      %s237 = sadd.s32 %s235, %s236
      %s238 = smul.addr %s237, 4
      %s239 = scalar_lea.vmem %s0, %s238
      %p240 = pneg %p51
      %p241 = pneg %p48
      %s242 = smul.u32 8, %s21
      %p243 = scmp.lt.s32.totalorder %s20, 1
      %s244 = scalar_select %p243, %s20, 1
      %p245 = scmp.lt.s32.totalorder %s242, 7
      %s246 = scalar_select %p245, %s242, 7
      %s247 = smul.addr %s244, 8
      %s248 = sadd.s32 %s246, %s247
      %s249 = smul.addr %s248, 4
      %s250 = scalar_lea.vmem %s1, %s249
      %p251 = pneg %p79
      %p252 = pneg %p76
      %p253 = pneg %p100
      %p254 = pneg %p97
      %p255 = pneg %p121
      %p256 = pneg %p118
      %p257 = pneg %p142
      %p258 = pneg %p139
      %p259 = pneg %p170
      %p260 = pneg %p167
      %s261 = smul.u32 8, %s21
      %p262 = scmp.lt.s32.totalorder %s20, 1
      %s263 = scalar_select %p262, %s20, 1
      %p264 = scmp.lt.s32.totalorder %s261, 7
      %s265 = scalar_select %p264, %s261, 7
      %s266 = smul.addr %s263, 8
      %s267 = sadd.s32 %s265, %s266
      %s268 = smul.addr %s267, 4
      %s269 = scalar_lea.vmem %s5, %s268
      %s270 = smul.u32 8, %s21
      %p271 = scmp.lt.s32.totalorder %s20, 1
      %s272 = scalar_select %p271, %s20, 1
      %p273 = scmp.lt.s32.totalorder %s270, 7
      %s274 = scalar_select %p273, %s270, 7
      %s275 = smul.addr %s272, 8
      %s276 = sadd.s32 %s274, %s275
      %s277 = smul.addr %s276, 4
      %s278 = scalar_lea.vmem %s0, %s277
      %s279 = smul.u32 8, %s21
      %s280 = smul.u32 8, %s21
      %p281 = scmp.lt.s32.totalorder %s20, 1
      %s282 = scalar_select %p281, %s20, 1
      %p283 = scmp.lt.s32.totalorder %s280, 7
      %s284 = scalar_select %p283, %s280, 7
      %s285 = smul.addr %s282, 8
      %s286 = sadd.s32 %s284, %s285
      %s287 = smul.addr %s286, 4
      %s288 = scalar_lea.vmem %s1, %s287
      %s289 = smul.u32 8, %s21
      %s290 = smul.u32 8, %s21
      %p291 = scmp.lt.s32.totalorder %s20, 1
      %s292 = scalar_select %p291, %s20, 1
      %p293 = scmp.lt.s32.totalorder %s290, 7
      %s294 = scalar_select %p293, %s290, 7
      %s295 = smul.addr %s292, 8
      %s296 = sadd.s32 %s294, %s295
      %s297 = smul.addr %s296, 4
      %s298 = scalar_lea.vmem %s5, %s297
      %s299 = smul.u32 8, %s21
      %v301 = vld [vmem:[%s278] sm:$0xf]
      %v302 = vld [vmem:[%s278 + $0x4] sm:$0xf]
      %v303 = vld [vmem:[%s278 + $0x8] sm:$0xf]
      %v304 = vld [vmem:[%s278 + $0xc] sm:$0xf]
      %v305 = vld [vmem:[%s278 + $0x10] sm:$0xf]
      %v306 = vld [vmem:[%s278 + $0x14] sm:$0xf]
      %v307 = vld [vmem:[%s278 + $0x18] sm:$0xf]
      %v308 = vld [vmem:[%s278 + $0x1c] sm:$0xf]
      %v309 = vld [vmem:[%s2] sm:$0xf]
      %v310 = vld [vmem:[%s288] sm:$0xf]
      %v311 = vld [vmem:[%s288 + $0x4] sm:$0xf]
      %v312 = vld [vmem:[%s288 + $0x8] sm:$0xf]
      %v313 = vld [vmem:[%s288 + $0xc] sm:$0xf]
      %v314 = vld [vmem:[%s288 + $0x10] sm:$0xf]
      %v315 = vld [vmem:[%s288 + $0x14] sm:$0xf]
      %v316 = vld [vmem:[%s288 + $0x18] sm:$0xf]
      %v317 = vld [vmem:[%s288 + $0x1c] sm:$0xf]
      %v318 = vld [vmem:[%s3] sm:$0xf]
      %v327 = vunpack.c.l.b16 %v310
      %v328 = vunpack.c.l.b16 %v311
      %v329 = vunpack.c.l.b16 %v312
      %v330 = vunpack.c.l.b16 %v313
      %v331 = vunpack.c.l.b16 %v314
      %v332 = vunpack.c.l.b16 %v315
      %v333 = vunpack.c.l.b16 %v316
      %v334 = vunpack.c.l.b16 %v317
      %v335 = vpack.c.b16 %v328, %v327
      %v336 = vpack.c.b16 %v330, %v329
      %v337 = vpack.c.b16 %v332, %v331
      %v338 = vpack.c.b16 %v334, %v333
      %vm339 = vcmask 64512
      %v341 = vsel %vm339, %v335, 0
      %v344 = vsel %vm339, %v336, 0
      %v347 = vsel %vm339, %v337, 0
      %v350 = vsel %vm339, %v338, 0
      %vm352 = vcmask 1043456
      %v354 = vsel %vm352, %v318, 0
      %356 = vmatprep.subr.bf16.mxu0 0
      %357 = vmatpush1.bf16.msra.mxu0 0
      %358 = vmatprep.subr.bf16.mxu0 0
      %359 = vmatpush1.bf16.msra.mxu0 0
      %360 = vmatprep.subr.bf16.mxu0 0
      %361 = vmatpush1.bf16.msra.mxu0 0
      %362 = vmatprep.subr.bf16.mxu0 0
      %363 = vmatpush1.bf16.msra.mxu0 0
      %364 = vmatprep.subr.bf16.mxu0 0
      %365 = vmatpush1.bf16.msra.mxu0 0
      %366 = vmatprep.subr.bf16.mxu0 0
      %367 = vmatpush1.bf16.msra.mxu0 0
      %368 = vmatprep.subr.bf16.mxu0 0
      %369 = vmatpush1.bf16.msra.mxu0 0
      %370 = vmatprep.subr.bf16.mxu0 0
      %371 = vmatpush1.bf16.msra.mxu0 %v354
      %372 = vmatprep.subr.bf16.mxu0 0
      %373 = vmatpush2.bf16.msra.mxu0 0
      %374 = vmatprep.subr.bf16.mxu0 0
      %375 = vmatpush2.bf16.msra.mxu0 0
      %376 = vmatprep.subr.bf16.mxu0 0
      %377 = vmatpush2.bf16.msra.mxu0 0
      %378 = vmatprep.subr.bf16.mxu0 0
      %379 = vmatpush2.bf16.msra.mxu0 0
      %380 = vmatprep.subr.bf16.mxu0 0
      %381 = vmatpush2.bf16.msra.mxu0 0
      %382 = vmatprep.subr.bf16.mxu0 0
      %383 = vmatpush2.bf16.msra.mxu0 0
      %384 = vmatprep.subr.bf16.mxu0 0
      %385 = vmatpush2.bf16.msra.mxu0 0
      %386 = vmatprep.subr.bf16.mxu0 0
      %387 = vmatpush2.bf16.msra.mxu0 0
      %388 = vmatprep.mubr.bf16.mxu0 0
      %389 = vmatmul.mubr.bf16.gmra.mxu0 %v341
      %v390 = vpop.f32.mrf.mxu0
      %v391 = vadd.f32 0.0, %v390
      %v392 = vpop.f32.mrf.mxu0
      %v393 = vpop.f32.mrf.mxu0
      %v394 = vadd.f32 0.0, %v393
      %v395 = vpop.f32.mrf.mxu0
      %396 = vmatprep.mubr.bf16.mxu0 0
      %397 = vmatmul.mubr.bf16.gmra.mxu0 %v344
      %v398 = vpop.f32.mrf.mxu0
      %v399 = vadd.f32 0.0, %v398
      %v400 = vpop.f32.mrf.mxu0
      %v401 = vpop.f32.mrf.mxu0
      %v402 = vadd.f32 0.0, %v401
      %v403 = vpop.f32.mrf.mxu0
      %404 = vmatprep.mubr.bf16.mxu0 0
      %405 = vmatmul.mubr.bf16.gmra.mxu0 %v347
      %v406 = vpop.f32.mrf.mxu0
      %v407 = vadd.f32 0.0, %v406
      %v408 = vpop.f32.mrf.mxu0
      %v409 = vpop.f32.mrf.mxu0
      %v410 = vadd.f32 0.0, %v409
      %v411 = vpop.f32.mrf.mxu0
      %412 = vmatprep.mubr.bf16.mxu0 0
      %413 = vmatmul.mubr.bf16.gmra.mxu0 %v350
      %v414 = vpop.f32.mrf.mxu0
      %v415 = vadd.f32 0.0, %v414
      %v416 = vpop.f32.mrf.mxu0
      %v417 = vpop.f32.mrf.mxu0
      %v418 = vadd.f32 0.0, %v417
      %v419 = vpop.f32.mrf.mxu0
      %420 = vdwg.mxu0
      %v429 = vunpack.c.l.b16 %v301
      %v430 = vunpack.c.l.b16 %v302
      %v431 = vunpack.c.l.b16 %v303
      %v432 = vunpack.c.l.b16 %v304
      %v433 = vunpack.c.l.b16 %v305
      %v434 = vunpack.c.l.b16 %v306
      %v435 = vunpack.c.l.b16 %v307
      %v436 = vunpack.c.l.b16 %v308
      %v437 = vpack.c.b16 %v430, %v429
      %v438 = vpack.c.b16 %v432, %v431
      %v439 = vpack.c.b16 %v434, %v433
      %v440 = vpack.c.b16 %v436, %v435
      %v442 = vsel %vm339, %v437, 0
      %v445 = vsel %vm339, %v438, 0
      %v448 = vsel %vm339, %v439, 0
      %v451 = vsel %vm339, %v440, 0
      %v454 = vsel %vm352, %v309, 0
      %456 = vmatprep.subr.bf16.mxu0 0
      %457 = vmatpush1.bf16.msra.mxu0 0
      %458 = vmatprep.subr.bf16.mxu0 0
      %459 = vmatpush1.bf16.msra.mxu0 0
      %460 = vmatprep.subr.bf16.mxu0 0
      %461 = vmatpush1.bf16.msra.mxu0 0
      %462 = vmatprep.subr.bf16.mxu0 0
      %463 = vmatpush1.bf16.msra.mxu0 0
      %464 = vmatprep.subr.bf16.mxu0 0
      %465 = vmatpush1.bf16.msra.mxu0 0
      %466 = vmatprep.subr.bf16.mxu0 0
      %467 = vmatpush1.bf16.msra.mxu0 0
      %468 = vmatprep.subr.bf16.mxu0 0
      %469 = vmatpush1.bf16.msra.mxu0 0
      %470 = vmatprep.subr.bf16.mxu0 0
      %471 = vmatpush1.bf16.msra.mxu0 %v454
      %472 = vmatprep.subr.bf16.mxu0 0
      %473 = vmatpush2.bf16.msra.mxu0 0
      %474 = vmatprep.subr.bf16.mxu0 0
      %475 = vmatpush2.bf16.msra.mxu0 0
      %476 = vmatprep.subr.bf16.mxu0 0
      %477 = vmatpush2.bf16.msra.mxu0 0
      %478 = vmatprep.subr.bf16.mxu0 0
      %479 = vmatpush2.bf16.msra.mxu0 0
      %480 = vmatprep.subr.bf16.mxu0 0
      %481 = vmatpush2.bf16.msra.mxu0 0
      %482 = vmatprep.subr.bf16.mxu0 0
      %483 = vmatpush2.bf16.msra.mxu0 0
      %484 = vmatprep.subr.bf16.mxu0 0
      %485 = vmatpush2.bf16.msra.mxu0 0
      %486 = vmatprep.subr.bf16.mxu0 0
      %487 = vmatpush2.bf16.msra.mxu0 0
      %488 = vmatprep.mubr.bf16.mxu0 0
      %489 = vmatmul.mubr.bf16.gmra.mxu0 %v442
      %v490 = vpop.f32.mrf.mxu0
      %v491 = vadd.f32 %v391, %v490
      %v492 = vpop.f32.mrf.mxu0
      %v493 = vpop.f32.mrf.mxu0
      %v494 = vadd.f32 %v394, %v493
      %v495 = vpop.f32.mrf.mxu0
      %496 = vmatprep.mubr.bf16.mxu0 0
      %497 = vmatmul.mubr.bf16.gmra.mxu0 %v445
      %v498 = vpop.f32.mrf.mxu0
      %v499 = vadd.f32 %v399, %v498
      %v500 = vpop.f32.mrf.mxu0
      %v501 = vpop.f32.mrf.mxu0
      %v502 = vadd.f32 %v402, %v501
      %v503 = vpop.f32.mrf.mxu0
      %504 = vmatprep.mubr.bf16.mxu0 0
      %505 = vmatmul.mubr.bf16.gmra.mxu0 %v448
      %v506 = vpop.f32.mrf.mxu0
      %v507 = vadd.f32 %v407, %v506
      %v508 = vpop.f32.mrf.mxu0
      %v509 = vpop.f32.mrf.mxu0
      %v510 = vadd.f32 %v410, %v509
      %v511 = vpop.f32.mrf.mxu0
      %512 = vmatprep.mubr.bf16.mxu0 0
      %513 = vmatmul.mubr.bf16.gmra.mxu0 %v451
      %v514 = vpop.f32.mrf.mxu0
      %v515 = vadd.f32 %v415, %v514
      %v516 = vpop.f32.mrf.mxu0
      %v517 = vpop.f32.mrf.mxu0
      %v518 = vadd.f32 %v418, %v517
      %v519 = vpop.f32.mrf.mxu0
      %520 = vdwg.mxu0
      %v521 = vld [vmem:[%s4] sm:$0x1]
      %v523 = vlaneseq
      %v524 = vshrl.u32 %v523, 7
      %v525 = vsub.s32 0, %v524
      %v526 = vrot.slane %v521, %v525
      %v528 = vadd.f32 %v491, %v526
      %v529 = vadd.f32 %v494, %v526
      %v530 = vadd.f32 %v499, %v526
      %v531 = vadd.f32 %v502, %v526
      %v532 = vadd.f32 %v507, %v526
      %v533 = vadd.f32 %v510, %v526
      %v534 = vadd.f32 %v515, %v526
      %v535 = vadd.f32 %v518, %v526
      %v536 = vpack.c.bf16 %v529, %v528
      %v537 = vpack.c.bf16 %v531, %v530
      %v538 = vpack.c.bf16 %v533, %v532
      %v539 = vpack.c.bf16 %v535, %v534
      %v544 = vunpack.c.l.b16 %v536
      %v545 = vunpack.c.h.b16 %v536
      %v546 = vunpack.c.l.b16 %v537
      %v547 = vunpack.c.h.b16 %v537
      %v548 = vunpack.c.l.b16 %v538
      %v549 = vunpack.c.h.b16 %v538
      %v550 = vunpack.c.l.b16 %v539
      %v551 = vunpack.c.h.b16 %v539
      %v552 = vpack.c.b16 %v544, %v544
      %v553 = vpack.c.b16 %v545, %v545
      %v554 = vpack.c.b16 %v546, %v546
      %v555 = vpack.c.b16 %v547, %v547
      %v556 = vpack.c.b16 %v548, %v548
      %v557 = vpack.c.b16 %v549, %v549
      %v558 = vpack.c.b16 %v550, %v550
      %v559 = vpack.c.b16 %v551, %v551
      %vm568 = vcmask 60416
      %569 = vst.msk [vmem:[%s298] sm:$0xf] %vm568, %v552
      %570 = vst.msk [vmem:[%s298 + $0x4] sm:$0xf] %vm568, %v553
      %571 = vst.msk [vmem:[%s298 + $0x8] sm:$0xf] %vm568, %v554
      %572 = vst.msk [vmem:[%s298 + $0xc] sm:$0xf] %vm568, %v555
      %573 = vst.msk [vmem:[%s298 + $0x10] sm:$0xf] %vm568, %v556
      %574 = vst.msk [vmem:[%s298 + $0x14] sm:$0xf] %vm568, %v557
      %575 = vst.msk [vmem:[%s298 + $0x18] sm:$0xf] %vm568, %v558
      %576 = vst.msk [vmem:[%s298 + $0x1c] sm:$0xf] %vm568, %v559
      %s577 = smul.u32 8, %s21
      %p578 = scmp.lt.s32.totalorder %s20, 1
      %s579 = scalar_select %p578, %s20, 1
      %p580 = scmp.lt.s32.totalorder %s577, 7
      %s581 = scalar_select %p580, %s577, 7
      %s582 = smul.addr %s579, 8
      %s583 = sadd.s32 %s581, %s582
      %s584 = smul.addr %s583, 4
      %s585 = scalar_lea.vmem %s5, %s584
      // Predicated region
      $region41: #{a_call__.6} parent=39 // pred_check
        %p586 = pneg %p167
      $region42: #{a_call__.6} parent=39 // pred_check_branch
        %588 = sbr.rel (%p586) target = $region44
      $region43: #{a_call__.6} parent=39 // pred_region
        %s589 = smul.u32 8, %s21
      $region44: #{a_call__.6} parent=39 // pred_fallthru
        _
    $region40: #{a_call__.6} parent=5 // pred_fallthru
      _
    %p590 = scmp.le.s32.totalorder 2, %s11
    // Predicated region
    $region45: #{a_call__.6} parent=5 // pred_check
      %p591 = pneg %p590
    $region46: #{a_call__.6} parent=5 // pred_check_branch
      %593 = sbr.rel (%p591) target = $region48
    $region47: #{a_call__.6} parent=5 // pred_region
      %s594 = ssub.s32 %s11, 2
      // Predicated region
      $region49: #{a_call__.6} parent=47 // pred_check
        %p595 = pneg %p173
      $region50: #{a_call__.6} parent=47 // pred_check_branch
        %597 = sbr.rel (%p595) target = $region52
      $region51: #{a_call__.6} parent=47 // pred_region
        %s598 = smul.u32 8, %s23
        %p599 = scmp.lt.s32.totalorder %s22, 1
        %s600 = scalar_select %p599, %s22, 1
        %p601 = scmp.lt.s32.totalorder %s598, 7
        %s602 = scalar_select %p601, %s598, 7
        %s603 = smul.addr %s600, 8
        %s604 = sadd.s32 %s602, %s603
        %s605 = smul.addr %s604, 4
        %s606 = scalar_lea.vmem %s5, %s605
      $region52: #{a_call__.6} parent=47 // pred_fallthru
        _
    $region48: #{a_call__.6} parent=5 // pred_fallthru
      _
  $region6: #{a_call__.6} parent=0 // loop_footer
    %s15 = sadd.s32 1, %s11
  $region7: #{a_call__.6} parent=0 // loop_footer_branch
    %10 = sbr.rel target = $region3
  $region8: #{a_call__.6} parent=0 // loop_exit
    _

// kernel: a_call__.11
$region0: #{a_call__.11}
  #allocation0 [shape = 'u32[]', space=smem, size = 0x4, offset = 0x4, fixed_abs, tag = 'smem constant byte address 0x4 - core index']
  #allocation1 [shape = 'u32[144,128]{1,0:T(1,128)}', space=vmem, size = 0x12000, scoped, tag = 'internal scratch']
  #allocation2 [shape = 'f32[8,32]{1,0:T(8,128)}', space=vmem, size = 0x1000, scoped, tag = 'scratch operand']
  #allocation3 [shape = 'f32[8,1]{1,0:T(8,128)}', space=vmem, size = 0x1000, scoped, tag = 'scratch operand']
  #allocation4 [shape = 'f32[8,1]{1,0:T(8,128)}', space=vmem, size = 0x1000, scoped, tag = 'scratch operand']
  #allocation5 [shape = 'f32[8,32]{1,0:T(8,128)}', space=vmem, size = 0x1000, scoped, tag = 'scratch operand']
  %s0 = inlined_call_operand.vmem [shape: f32[2,8,32], index: 0, kind: input, shape index: {}]
  %s1 = inlined_call_operand.vmem [shape: f32[2,8,32], index: 1, kind: input, shape index: {}]
  %s2 = inlined_call_operand.vmem [shape: f32[2,8,8], index: 2, kind: input, shape index: {}]
  %s3 = inlined_call_operand.vmem [shape: bf16[32,32], index: 3, kind: input, shape index: {}]
  %s4 = inlined_call_operand.vmem [shape: f32[1,32], index: 4, kind: input, shape index: {}]
  %s5 = inlined_call_operand.vmem [shape: bf16[32,32], index: 5, kind: input, shape index: {}]
  %s6 = inlined_call_operand.vmem [shape: f32[1,32], index: 6, kind: input, shape index: {}]
  %s7 = inlined_call_operand.vmem [shape: f32[1,32], index: 7, kind: input, shape index: {}]
  %s8 = inlined_call_operand.vmem [shape: bf16[32,32], index: 8, kind: input, shape index: {}]
  %s9 = inlined_call_operand.vmem [shape: f32[1,32], index: 9, kind: input, shape index: {}]
  %s10 = inlined_call_operand.vmem [shape: f32[1,32], index: 10, kind: input, shape index: {}]
  %s11 = inlined_call_operand.vmem [shape: f32[1,32], index: 11, kind: input, shape index: {}]
  %s12 = inlined_call_operand.hbm [shape: f32[2,8,32], index: 12, kind: output, shape index: {}]
  %s13 = sld [smem:[#allocation0]]
  $region89: #{a_call__.11} parent=0
    _
  %s15 = ssub.s32 1, %s13
  %s16 = scalar_select 0, %s15, %s13
  $region1: #{a_call__.11} parent=0
    #allocation6 [shape = 'u8[8192]{0}', space=vmem, size = 0x2000, scoped, tag = 'output window, operand 0']
    #allocation7 [shape = 's32[2]{0}', space=sflag, size = 0x8, scoped, tag = 'scoped memory for a_call__.11']
    %17 = vsyncpa [#allocation7], 0
    %s18 = scalar_lea.sflag [#allocation7], 1
    %19 = vsyncpa %s18, 0
    loop: start=0, step=1, limit=4
    $region2: #{a_call__.11} parent=1 // loop_pre_header
      _
    $region3: #{a_call__.11} parent=1 // loop_header
      %s21 = sphi 0, %s25
      %p22 = scmp.ge.s32.totalorder %s21, 4
      %s28 = sphi 0, %s40
      %s29 = sphi 0, %s36
      %s30 = sphi 0, %s28
      %s31 = sphi 0, %s29
      %s32 = sphi 0, %s30
      %s33 = sphi 0, %s31
      %s43 = sphi 0, %s45
      %s46 = sphi 0, %s43
      %s47 = sphi 0, %s46
      %s63 = sphi 0, %s47
      %s71 = sphi 0, %s73
      %s74 = sphi 0, %s71
      %s75 = sphi 0, %s74
      %s91 = sphi 0, %s75
      %s99 = sphi 0, %s101
      %s102 = sphi 0, %s99
      %s103 = sphi 0, %s102
      %s119 = sphi 0, %s103
      %s123 = sphi 0, %s123
      %s125 = sphi 0, %s123
      %s126 = sphi 0, %s125
      %s140 = sphi 0, %s126
      %s144 = sphi 0, %s144
      %s146 = sphi 0, %s144
      %s147 = sphi 0, %s146
      %s161 = sphi 0, %s147
      %s165 = sphi 0, %s165
      %s167 = sphi 0, %s165
      %s168 = sphi 0, %s167
      %s182 = sphi 0, %s168
      %s186 = sphi 0, %s186
      %s188 = sphi 0, %s186
      %s189 = sphi 0, %s188
      %s203 = sphi 0, %s189
      %s207 = sphi 0, %s207
      %s209 = sphi 0, %s207
      %s210 = sphi 0, %s209
      %s224 = sphi 0, %s210
      %s228 = sphi 0, %s228
      %s230 = sphi 0, %s228
      %s231 = sphi 0, %s230
      %s245 = sphi 0, %s231
      %s249 = sphi 0, %s249
      %s251 = sphi 0, %s249
      %s252 = sphi 0, %s251
      %s266 = sphi 0, %s252
      %s270 = sphi 0, %s270
      %s272 = sphi 0, %s270
      %s273 = sphi 0, %s272
      %s287 = sphi 0, %s273
      %s291 = sphi 0, %s291
      %s293 = sphi 0, %s291
      %s294 = sphi 0, %s293
      %s308 = sphi 0, %s294
      %s314 = sphi 0, %s316
      %s317 = sphi 0, %s314
      %s318 = sphi 0, %s317
      %s334 = sphi 0, %s318
    $region4: #{a_call__.11} parent=1 // loop_header_branch
      %24 = sbr.rel (%p22) target = $region8
    $region5: #{a_call__.11} parent=1 // loop_body
      %s26 = ssub.s32 %s21, 1
      %s27 = ssub.s32 %s21, 2
      %s34 = sadd.s32 1, %s29
      %p35 = scmp.ge.s32.totalorder %s34, 1
      %s36 = scalar_select %p35, 0, %s34
      %s37 = sadd.s32 1, %s28
      %s38 = scalar_select %p35, %s37, %s28
      %p39 = scmp.ge.s32.totalorder %s38, 2
      %s40 = scalar_select %p39, 0, %s38
      %s41 = ssub.s32 %s28, %s40
      %p42 = scmp.eq.s32.totalorder %s41, 0
      %s44 = sadd.s32 %s43, 1
      %s45 = scalar_select %p42, %s43, %s44
      %p48 = pneg %p42
      %p49 = scmp.eq.s32.totalorder %s21, 1
      %p50 = por %p48, %p49
      %p51 = scmp.ne.s32.totalorder %s43, %s46
      %p52 = scmp.eq.s32.totalorder %s21, 0
      %p53 = por %p51, %p52
      %p54 = scmp.ne.s32.totalorder %s43, %s46
      %p55 = scmp.eq.s32.totalorder %s26, 1
      %p56 = por %p54, %p55
      %p57 = scmp.ne.s32.totalorder %s46, %s47
      %p58 = scmp.eq.s32.totalorder %s26, 0
      %p59 = por %p57, %p58
      %p60 = scmp.ne.s32.totalorder %s46, %s47
      %p61 = scmp.eq.s32.totalorder %s27, 1
      %p62 = por %p60, %p61
      %p64 = scmp.ne.s32.totalorder %s47, %s63
      %p65 = scmp.eq.s32.totalorder %s27, 0
      %p66 = por %p64, %p65
      %s67 = ssub.s32 %s28, %s40
      %s68 = ssub.s32 %s29, %s36
      %s69 = sor.u32 %s67, %s68
      %p70 = scmp.eq.s32.totalorder %s69, 0
      %s72 = sadd.s32 %s71, 1
      %s73 = scalar_select %p70, %s71, %s72
      %p76 = pneg %p70
      %p77 = scmp.eq.s32.totalorder %s21, 1
      %p78 = por %p76, %p77
      %p79 = scmp.ne.s32.totalorder %s71, %s74
      %p80 = scmp.eq.s32.totalorder %s21, 0
      %p81 = por %p79, %p80
      %p82 = scmp.ne.s32.totalorder %s71, %s74
      %p83 = scmp.eq.s32.totalorder %s26, 1
      %p84 = por %p82, %p83
      %p85 = scmp.ne.s32.totalorder %s74, %s75
      %p86 = scmp.eq.s32.totalorder %s26, 0
      %p87 = por %p85, %p86
      %p88 = scmp.ne.s32.totalorder %s74, %s75
      %p89 = scmp.eq.s32.totalorder %s27, 1
      %p90 = por %p88, %p89
      %p92 = scmp.ne.s32.totalorder %s75, %s91
      %p93 = scmp.eq.s32.totalorder %s27, 0
      %p94 = por %p92, %p93
      %s95 = ssub.s32 %s28, %s40
      %s96 = ssub.s32 %s29, %s36
      %s97 = sor.u32 %s95, %s96
      %p98 = scmp.eq.s32.totalorder %s97, 0
      %s100 = sadd.s32 %s99, 1
      %s101 = scalar_select %p98, %s99, %s100
      %p104 = pneg %p98
      %p105 = scmp.eq.s32.totalorder %s21, 1
      %p106 = por %p104, %p105
      %p107 = scmp.ne.s32.totalorder %s99, %s102
      %p108 = scmp.eq.s32.totalorder %s21, 0
      %p109 = por %p107, %p108
      %p110 = scmp.ne.s32.totalorder %s99, %s102
      %p111 = scmp.eq.s32.totalorder %s26, 1
      %p112 = por %p110, %p111
      %p113 = scmp.ne.s32.totalorder %s102, %s103
      %p114 = scmp.eq.s32.totalorder %s26, 0
      %p115 = por %p113, %p114
      %p116 = scmp.ne.s32.totalorder %s102, %s103
      %p117 = scmp.eq.s32.totalorder %s27, 1
      %p118 = por %p116, %p117
      %p120 = scmp.ne.s32.totalorder %s103, %s119
      %p121 = scmp.eq.s32.totalorder %s27, 0
      %p122 = por %p120, %p121
      %s124 = sadd.s32 %s123, 1
      %p127 = scmp.eq.s32.totalorder %s21, 1
      %p128 = scmp.ne.s32.totalorder %s123, %s125
      %p129 = scmp.eq.s32.totalorder %s21, 0
      %p130 = por %p128, %p129
      %p131 = scmp.ne.s32.totalorder %s123, %s125
      %p132 = scmp.eq.s32.totalorder %s26, 1
      %p133 = por %p131, %p132
      %p134 = scmp.ne.s32.totalorder %s125, %s126
      %p135 = scmp.eq.s32.totalorder %s26, 0
      %p136 = por %p134, %p135
      %p137 = scmp.ne.s32.totalorder %s125, %s126
      %p138 = scmp.eq.s32.totalorder %s27, 1
      %p139 = por %p137, %p138
      %p141 = scmp.ne.s32.totalorder %s126, %s140
      %p142 = scmp.eq.s32.totalorder %s27, 0
      %p143 = por %p141, %p142
      %s145 = sadd.s32 %s144, 1
      %p148 = scmp.eq.s32.totalorder %s21, 1
      %p149 = scmp.ne.s32.totalorder %s144, %s146
      %p150 = scmp.eq.s32.totalorder %s21, 0
      %p151 = por %p149, %p150
      %p152 = scmp.ne.s32.totalorder %s144, %s146
      %p153 = scmp.eq.s32.totalorder %s26, 1
      %p154 = por %p152, %p153
      %p155 = scmp.ne.s32.totalorder %s146, %s147
      %p156 = scmp.eq.s32.totalorder %s26, 0
      %p157 = por %p155, %p156
      %p158 = scmp.ne.s32.totalorder %s146, %s147
      %p159 = scmp.eq.s32.totalorder %s27, 1
      %p160 = por %p158, %p159
      %p162 = scmp.ne.s32.totalorder %s147, %s161
      %p163 = scmp.eq.s32.totalorder %s27, 0
      %p164 = por %p162, %p163
      %s166 = sadd.s32 %s165, 1
      %p169 = scmp.eq.s32.totalorder %s21, 1
      %p170 = scmp.ne.s32.totalorder %s165, %s167
      %p171 = scmp.eq.s32.totalorder %s21, 0
      %p172 = por %p170, %p171
      %p173 = scmp.ne.s32.totalorder %s165, %s167
      %p174 = scmp.eq.s32.totalorder %s26, 1
      %p175 = por %p173, %p174
      %p176 = scmp.ne.s32.totalorder %s167, %s168
      %p177 = scmp.eq.s32.totalorder %s26, 0
      %p178 = por %p176, %p177
      %p179 = scmp.ne.s32.totalorder %s167, %s168
      %p180 = scmp.eq.s32.totalorder %s27, 1
      %p181 = por %p179, %p180
      %p183 = scmp.ne.s32.totalorder %s168, %s182
      %p184 = scmp.eq.s32.totalorder %s27, 0
      %p185 = por %p183, %p184
      %s187 = sadd.s32 %s186, 1
      %p190 = scmp.eq.s32.totalorder %s21, 1
      %p191 = scmp.ne.s32.totalorder %s186, %s188
      %p192 = scmp.eq.s32.totalorder %s21, 0
      %p193 = por %p191, %p192
      %p194 = scmp.ne.s32.totalorder %s186, %s188
      %p195 = scmp.eq.s32.totalorder %s26, 1
      %p196 = por %p194, %p195
      %p197 = scmp.ne.s32.totalorder %s188, %s189
      %p198 = scmp.eq.s32.totalorder %s26, 0
      %p199 = por %p197, %p198
      %p200 = scmp.ne.s32.totalorder %s188, %s189
      %p201 = scmp.eq.s32.totalorder %s27, 1
      %p202 = por %p200, %p201
      %p204 = scmp.ne.s32.totalorder %s189, %s203
      %p205 = scmp.eq.s32.totalorder %s27, 0
      %p206 = por %p204, %p205
      %s208 = sadd.s32 %s207, 1
      %p211 = scmp.eq.s32.totalorder %s21, 1
      %p212 = scmp.ne.s32.totalorder %s207, %s209
      %p213 = scmp.eq.s32.totalorder %s21, 0
      %p214 = por %p212, %p213
      %p215 = scmp.ne.s32.totalorder %s207, %s209
      %p216 = scmp.eq.s32.totalorder %s26, 1
      %p217 = por %p215, %p216
      %p218 = scmp.ne.s32.totalorder %s209, %s210
      %p219 = scmp.eq.s32.totalorder %s26, 0
      %p220 = por %p218, %p219
      %p221 = scmp.ne.s32.totalorder %s209, %s210
      %p222 = scmp.eq.s32.totalorder %s27, 1
      %p223 = por %p221, %p222
      %p225 = scmp.ne.s32.totalorder %s210, %s224
      %p226 = scmp.eq.s32.totalorder %s27, 0
      %p227 = por %p225, %p226
      %s229 = sadd.s32 %s228, 1
      %p232 = scmp.eq.s32.totalorder %s21, 1
      %p233 = scmp.ne.s32.totalorder %s228, %s230
      %p234 = scmp.eq.s32.totalorder %s21, 0
      %p235 = por %p233, %p234
      %p236 = scmp.ne.s32.totalorder %s228, %s230
      %p237 = scmp.eq.s32.totalorder %s26, 1
      %p238 = por %p236, %p237
      %p239 = scmp.ne.s32.totalorder %s230, %s231
      %p240 = scmp.eq.s32.totalorder %s26, 0
      %p241 = por %p239, %p240
      %p242 = scmp.ne.s32.totalorder %s230, %s231
      %p243 = scmp.eq.s32.totalorder %s27, 1
      %p244 = por %p242, %p243
      %p246 = scmp.ne.s32.totalorder %s231, %s245
      %p247 = scmp.eq.s32.totalorder %s27, 0
      %p248 = por %p246, %p247
      %s250 = sadd.s32 %s249, 1
      %p253 = scmp.eq.s32.totalorder %s21, 1
      %p254 = scmp.ne.s32.totalorder %s249, %s251
      %p255 = scmp.eq.s32.totalorder %s21, 0
      %p256 = por %p254, %p255
      %p257 = scmp.ne.s32.totalorder %s249, %s251
      %p258 = scmp.eq.s32.totalorder %s26, 1
      %p259 = por %p257, %p258
      %p260 = scmp.ne.s32.totalorder %s251, %s252
      %p261 = scmp.eq.s32.totalorder %s26, 0
      %p262 = por %p260, %p261
      %p263 = scmp.ne.s32.totalorder %s251, %s252
      %p264 = scmp.eq.s32.totalorder %s27, 1
      %p265 = por %p263, %p264
      %p267 = scmp.ne.s32.totalorder %s252, %s266
      %p268 = scmp.eq.s32.totalorder %s27, 0
      %p269 = por %p267, %p268
      %s271 = sadd.s32 %s270, 1
      %p274 = scmp.eq.s32.totalorder %s21, 1
      %p275 = scmp.ne.s32.totalorder %s270, %s272
      %p276 = scmp.eq.s32.totalorder %s21, 0
      %p277 = por %p275, %p276
      %p278 = scmp.ne.s32.totalorder %s270, %s272
      %p279 = scmp.eq.s32.totalorder %s26, 1
      %p280 = por %p278, %p279
      %p281 = scmp.ne.s32.totalorder %s272, %s273
      %p282 = scmp.eq.s32.totalorder %s26, 0
      %p283 = por %p281, %p282
      %p284 = scmp.ne.s32.totalorder %s272, %s273
      %p285 = scmp.eq.s32.totalorder %s27, 1
      %p286 = por %p284, %p285
      %p288 = scmp.ne.s32.totalorder %s273, %s287
      %p289 = scmp.eq.s32.totalorder %s27, 0
      %p290 = por %p288, %p289
      %s292 = sadd.s32 %s291, 1
      %p295 = scmp.eq.s32.totalorder %s21, 1
      %p296 = scmp.ne.s32.totalorder %s291, %s293
      %p297 = scmp.eq.s32.totalorder %s21, 0
      %p298 = por %p296, %p297
      %p299 = scmp.ne.s32.totalorder %s291, %s293
      %p300 = scmp.eq.s32.totalorder %s26, 1
      %p301 = por %p299, %p300
      %p302 = scmp.ne.s32.totalorder %s293, %s294
      %p303 = scmp.eq.s32.totalorder %s26, 0
      %p304 = por %p302, %p303
      %p305 = scmp.ne.s32.totalorder %s293, %s294
      %p306 = scmp.eq.s32.totalorder %s27, 1
      %p307 = por %p305, %p306
      %p309 = scmp.ne.s32.totalorder %s294, %s308
      %p310 = scmp.eq.s32.totalorder %s27, 0
      %p311 = por %p309, %p310
      %s312 = ssub.s32 %s28, %s40
      %p313 = scmp.eq.s32.totalorder %s312, 0
      %s315 = sadd.s32 %s314, 1
      %s316 = scalar_select %p313, %s314, %s315
      %p319 = pneg %p313
      %p320 = scmp.eq.s32.totalorder %s21, 1
      %p321 = por %p319, %p320
      %p322 = scmp.ne.s32.totalorder %s314, %s317
      %p323 = scmp.eq.s32.totalorder %s21, 0
      %p324 = por %p322, %p323
      %p325 = scmp.ne.s32.totalorder %s314, %s317
      %p326 = scmp.eq.s32.totalorder %s26, 1
      %p327 = por %p325, %p326
      %p328 = scmp.ne.s32.totalorder %s317, %s318
      %p329 = scmp.eq.s32.totalorder %s26, 0
      %p330 = por %p328, %p329
      %p331 = scmp.ne.s32.totalorder %s317, %s318
      %p332 = scmp.eq.s32.totalorder %s27, 1
      %p333 = por %p331, %p332
      %p335 = scmp.ne.s32.totalorder %s318, %s334
      %p336 = scmp.eq.s32.totalorder %s27, 0
      %p337 = por %p335, %p336
      %p338 = scmp.le.s32.totalorder 1, %s21
      %p339 = scmp.lt.s32.totalorder %s21, 3
      %p340 = pnand %p338, %p339
      %p341 = pneg %p340
      // Predicated region
      $region9: #{a_call__.11} parent=5 // pred_check
        _
      $region10: #{a_call__.11} parent=5 // pred_check_branch
        %343 = sbr.rel (%p340) target = $region12
      $region11: #{a_call__.11} parent=5 // pred_region
        %s344 = ssub.s32 %s21, 1
        // Predicated region
        $region13: #{a_call__.11} parent=11 // pred_check
          %p345 = pneg %p136
        $region14: #{a_call__.11} parent=11 // pred_check_branch
          %347 = sbr.rel (%p345) target = $region16
        $region15: #{a_call__.11} parent=11 // pred_region
          _
        $region16: #{a_call__.11} parent=11 // pred_fallthru
          _
        // Predicated region
        $region17: #{a_call__.11} parent=11 // pred_check
          %p348 = pneg %p157
        $region18: #{a_call__.11} parent=11 // pred_check_branch
          %350 = sbr.rel (%p348) target = $region20
        $region19: #{a_call__.11} parent=11 // pred_region
          _
        $region20: #{a_call__.11} parent=11 // pred_fallthru
          _
        // Predicated region
        $region21: #{a_call__.11} parent=11 // pred_check
          %p351 = pneg %p178
        $region22: #{a_call__.11} parent=11 // pred_check_branch
          %353 = sbr.rel (%p351) target = $region24
        $region23: #{a_call__.11} parent=11 // pred_region
          _
        $region24: #{a_call__.11} parent=11 // pred_fallthru
          _
        // Predicated region
        $region25: #{a_call__.11} parent=11 // pred_check
          %p354 = pneg %p199
        $region26: #{a_call__.11} parent=11 // pred_check_branch
          %356 = sbr.rel (%p354) target = $region28
        $region27: #{a_call__.11} parent=11 // pred_region
          _
        $region28: #{a_call__.11} parent=11 // pred_fallthru
          _
        // Predicated region
        $region29: #{a_call__.11} parent=11 // pred_check
          %p357 = pneg %p220
        $region30: #{a_call__.11} parent=11 // pred_check_branch
          %359 = sbr.rel (%p357) target = $region32
        $region31: #{a_call__.11} parent=11 // pred_region
          _
        $region32: #{a_call__.11} parent=11 // pred_fallthru
          _
        // Predicated region
        $region33: #{a_call__.11} parent=11 // pred_check
          %p360 = pneg %p241
        $region34: #{a_call__.11} parent=11 // pred_check_branch
          %362 = sbr.rel (%p360) target = $region36
        $region35: #{a_call__.11} parent=11 // pred_region
          _
        $region36: #{a_call__.11} parent=11 // pred_fallthru
          _
        // Predicated region
        $region37: #{a_call__.11} parent=11 // pred_check
          %p363 = pneg %p262
        $region38: #{a_call__.11} parent=11 // pred_check_branch
          %365 = sbr.rel (%p363) target = $region40
        $region39: #{a_call__.11} parent=11 // pred_region
          _
        $region40: #{a_call__.11} parent=11 // pred_fallthru
          _
        // Predicated region
        $region41: #{a_call__.11} parent=11 // pred_check
          %p366 = pneg %p283
        $region42: #{a_call__.11} parent=11 // pred_check_branch
          %368 = sbr.rel (%p366) target = $region44
        $region43: #{a_call__.11} parent=11 // pred_region
          _
        $region44: #{a_call__.11} parent=11 // pred_fallthru
          _
        // Predicated region
        $region45: #{a_call__.11} parent=11 // pred_check
          %p369 = pneg %p304
        $region46: #{a_call__.11} parent=11 // pred_check_branch
          %371 = sbr.rel (%p369) target = $region48
        $region47: #{a_call__.11} parent=11 // pred_region
          _
        $region48: #{a_call__.11} parent=11 // pred_fallthru
          _
      $region12: #{a_call__.11} parent=5 // pred_fallthru
        _
      %p372 = scmp.lt.s32.totalorder %s21, 2
      // Predicated region
      $region49: #{a_call__.11} parent=5 // pred_check
        %p373 = pneg %p372
      $region50: #{a_call__.11} parent=5 // pred_check_branch
        %375 = sbr.rel (%p373) target = $region52
      $region51: #{a_call__.11} parent=5 // pred_region
        // Predicated region
        $region53: #{a_call__.11} parent=51 // pred_check
          %p376 = pneg %p53
        $region54: #{a_call__.11} parent=51 // pred_check_branch
          %378 = sbr.rel (%p376) target = $region56
        $region55: #{a_call__.11} parent=51 // pred_region
          %p379 = scmp.lt.s32.totalorder %s28, 1
          %s380 = scalar_select %p379, %s28, 1
          %s381 = smul.addr %s380, 8
          %s382 = scalar_lea.vmem %s0, %s381
        $region56: #{a_call__.11} parent=51 // pred_fallthru
          _
        // Predicated region
        $region57: #{a_call__.11} parent=51 // pred_check
          %p383 = pneg %p81
        $region58: #{a_call__.11} parent=51 // pred_check_branch
          %385 = sbr.rel (%p383) target = $region60
        $region59: #{a_call__.11} parent=51 // pred_region
          %p386 = scmp.lt.s32.totalorder %s28, 1
          %s387 = scalar_select %p386, %s28, 1
          %p388 = scmp.lt.s32.totalorder %s29, 0
          %s389 = scalar_select %p388, %s29, 0
          %s390 = sadd.s32 %s389, %s387
          %s391 = smul.addr %s390, 8
          %s392 = scalar_lea.vmem %s1, %s391
        $region60: #{a_call__.11} parent=51 // pred_fallthru
          _
        // Predicated region
        $region61: #{a_call__.11} parent=51 // pred_check
          %p393 = pneg %p109
        $region62: #{a_call__.11} parent=51 // pred_check_branch
          %395 = sbr.rel (%p393) target = $region64
        $region63: #{a_call__.11} parent=51 // pred_region
          %p396 = scmp.lt.s32.totalorder %s28, 1
          %s397 = scalar_select %p396, %s28, 1
          %p398 = scmp.lt.s32.totalorder %s29, 0
          %s399 = scalar_select %p398, %s29, 0
          %s400 = sadd.s32 %s399, %s397
          %s401 = smul.addr %s400, 8
          %s402 = scalar_lea.vmem %s2, %s401
        $region64: #{a_call__.11} parent=51 // pred_fallthru
          _
      $region52: #{a_call__.11} parent=5 // pred_fallthru
        _
      %p403 = scmp.le.s32.totalorder 1, %s21
      %p404 = scmp.lt.s32.totalorder %s21, 3
      %p405 = pnand %p403, %p404
      %p406 = pneg %p405
      // Predicated region
      $region65: #{a_call__.11} parent=5 // pred_check
        _
      $region66: #{a_call__.11} parent=5 // pred_check_branch
        %408 = sbr.rel (%p405) target = $region68
      $region67: #{a_call__.11} parent=5 // pred_region
        %s409 = ssub.s32 %s21, 1
        %p410 = scmp.lt.s32.totalorder %s30, 1
        %s411 = scalar_select %p410, %s30, 1
        %s412 = smul.addr %s411, 8
        %s413 = scalar_lea.vmem %s0, %s412
        %p414 = pneg %p59
        %p415 = pneg %p56
        %p416 = scmp.lt.s32.totalorder %s30, 1
        %s417 = scalar_select %p416, %s30, 1
        %p418 = scmp.lt.s32.totalorder %s31, 0
        %s419 = scalar_select %p418, %s31, 0
        %s420 = sadd.s32 %s419, %s417
        %s421 = smul.addr %s420, 8
        %s422 = scalar_lea.vmem %s1, %s421
        %p423 = pneg %p87
        %p424 = pneg %p84
        %p425 = scmp.lt.s32.totalorder %s30, 1
        %s426 = scalar_select %p425, %s30, 1
        %p427 = scmp.lt.s32.totalorder %s31, 0
        %s428 = scalar_select %p427, %s31, 0
        %s429 = sadd.s32 %s428, %s426
        %s430 = smul.addr %s429, 8
        %s431 = scalar_lea.vmem %s2, %s430
        %p432 = pneg %p115
        %p433 = pneg %p112
        %p434 = pneg %p136
        %p435 = pneg %p133
        %p436 = pneg %p157
        %p437 = pneg %p154
        %p438 = pneg %p178
        %p439 = pneg %p175
        %p440 = pneg %p199
        %p441 = pneg %p196
        %p442 = pneg %p220
        %p443 = pneg %p217
        %p444 = pneg %p241
        %p445 = pneg %p238
        %p446 = pneg %p262
        %p447 = pneg %p259
        %p448 = pneg %p283
        %p449 = pneg %p280
        %p450 = pneg %p304
        %p451 = pneg %p301
        %p452 = pneg %p330
        %p453 = pneg %p327
        %s454 = sand.u32 %s317, 1
        %s455 = scalar_lea.sflag [#allocation7], %s454
        %s456 = sand.u32 %s317, 1
        %s457 = smul.addr %s456, 8
        %s458 = scalar_lea.vmem [#allocation6], %s457
        %p459 = scmp.lt.s32.totalorder %s30, 1
        %s460 = scalar_select %p459, %s30, 1
        %s461 = smul.addr %s460, 8
        %s462 = scalar_lea.vmem %s0, %s461
        %p463 = scmp.lt.s32.totalorder %s30, 1
        %s464 = scalar_select %p463, %s30, 1
        %p465 = scmp.lt.s32.totalorder %s31, 0
        %s466 = scalar_select %p465, %s31, 0
        %s467 = sadd.s32 %s466, %s464
        %s468 = smul.addr %s467, 8
        %s469 = scalar_lea.vmem %s1, %s468
        %p470 = scmp.lt.s32.totalorder %s30, 1
        %s471 = scalar_select %p470, %s30, 1
        %p472 = scmp.lt.s32.totalorder %s31, 0
        %s473 = scalar_select %p472, %s31, 0
        %s474 = sadd.s32 %s473, %s471
        %s475 = smul.addr %s474, 8
        %s476 = scalar_lea.vmem %s2, %s475
        %p478 = scmp.eq.s32.totalorder %s31, 0
        // Predicated region
        $region69: #{a_call__.11} parent=67 // pred_check
          %p479 = pneg %p478
        $region70: #{a_call__.11} parent=67 // pred_check_branch
          %481 = sbr.rel (%p479) target = $region72
        $region71: #{a_call__.11} parent=67 // pred_region
          %v482 = vld [vmem:[%s462] sm:$0xff]
          %v483 = vpack.c.bf16 %v482, %v482
          %v484 = vld [vmem:[%s3] sm:$0xf]
          %v485 = vld [vmem:[%s3 + $0x4] sm:$0xf]
          %v486 = vld [vmem:[%s3 + $0x8] sm:$0xf]
          %v487 = vld [vmem:[%s3 + $0xc] sm:$0xf]
          %v488 = vld [vmem:[%s4] sm:$0x1]
          %v490 = vlaneseq
          %v491 = vshrl.u32 %v490, 7
          %v492 = vsub.s32 0, %v491
          %v493 = vrot.slane %v488, %v492
          %v499 = vunpack.c.l.b16 %v484
          %v500 = vunpack.c.l.b16 %v485
          %v501 = vunpack.c.l.b16 %v486
          %v502 = vunpack.c.l.b16 %v487
          %v503 = vpack.c.b16 %v500, %v499
          %v504 = vpack.c.b16 %v502, %v501
          %vm507 = vcmask 261120
          %v509 = vsel %vm507, %v483, 0
          %511 = vmatprep.subr.bf16.mxu0 0
          %512 = vmatpush1.bf16.msra.mxu0 0
          %513 = vmatprep.subr.bf16.mxu0 0
          %514 = vmatpush1.bf16.msra.mxu0 0
          %515 = vmatprep.subr.bf16.mxu0 0
          %516 = vmatpush1.bf16.msra.mxu0 0
          %517 = vmatprep.subr.bf16.mxu0 0
          %518 = vmatpush1.bf16.msra.mxu0 0
          %519 = vmatprep.subr.bf16.mxu0 0
          %520 = vmatpush1.bf16.msra.mxu0 0
          %521 = vmatprep.subr.bf16.mxu0 0
          %522 = vmatpush1.bf16.msra.mxu0 0
          %523 = vmatprep.subr.bf16.mxu0 0
          %524 = vmatpush1.bf16.msra.mxu0 %v504
          %525 = vmatprep.subr.bf16.mxu0 0
          %526 = vmatpush1.bf16.msra.mxu0 %v503
          %527 = vmatprep.subr.bf16.mxu0 0
          %528 = vmatpush2.bf16.msra.mxu0 0
          %529 = vmatprep.subr.bf16.mxu0 0
          %530 = vmatpush2.bf16.msra.mxu0 0
          %531 = vmatprep.subr.bf16.mxu0 0
          %532 = vmatpush2.bf16.msra.mxu0 0
          %533 = vmatprep.subr.bf16.mxu0 0
          %534 = vmatpush2.bf16.msra.mxu0 0
          %535 = vmatprep.subr.bf16.mxu0 0
          %536 = vmatpush2.bf16.msra.mxu0 0
          %537 = vmatprep.subr.bf16.mxu0 0
          %538 = vmatpush2.bf16.msra.mxu0 0
          %539 = vmatprep.subr.bf16.mxu0 0
          %540 = vmatpush2.bf16.msra.mxu0 0
          %541 = vmatprep.subr.bf16.mxu0 0
          %542 = vmatpush2.bf16.msra.mxu0 0
          %543 = vmatprep.mubr.bf16.mxu0 0
          %544 = vmatmul.mubr.bf16.gmra.mxu0 %v509
          %v545 = vpop.f32.mrf.mxu0
          %v546 = vadd.f32 %v493, %v545
          %v547 = vpop.f32.mrf.mxu0
          %v548 = vpop.f32.mrf.mxu0
          %v549 = vpop.f32.mrf.mxu0
          %550 = vdwg.mxu0
          %551 = vst.msk [vmem:[#allocation2] sm:$0xff] %vm507, %v546
          %vm552 = vcmask 7168
          %553 = vst.msk [vmem:[#allocation3] sm:$0xff] %vm552, -inf
          %554 = vst.msk [vmem:[#allocation4] sm:$0xff] %vm552, 0.0
          %555 = vst.msk [vmem:[#allocation5] sm:$0xff] %vm507, 0.0
        $region72: #{a_call__.11} parent=67 // pred_fallthru
          _
        %v556 = vld [vmem:[%s469] sm:$0xff]
        %v557 = vpack.c.bf16 %v556, %v556
        %v558 = vld [vmem:[%s5] sm:$0xf]
        %v559 = vld [vmem:[%s5 + $0x4] sm:$0xf]
        %v560 = vld [vmem:[%s5 + $0x8] sm:$0xf]
        %v561 = vld [vmem:[%s5 + $0xc] sm:$0xf]
        %v562 = vld [vmem:[%s6] sm:$0x1]
        %v564 = vlaneseq
        %v565 = vshrl.u32 %v564, 7
        %v566 = vsub.s32 0, %v565
        %v567 = vrot.slane %v562, %v566
        %v573 = vunpack.c.l.b16 %v558
        %v574 = vunpack.c.l.b16 %v559
        %v575 = vunpack.c.l.b16 %v560
        %v576 = vunpack.c.l.b16 %v561
        %v577 = vpack.c.b16 %v574, %v573
        %v578 = vpack.c.b16 %v576, %v575
        %vm581 = vcmask 261120
        %v583 = vsel %vm581, %v557, 0
        %585 = vmatprep.subr.bf16.mxu0 0
        %586 = vmatpush1.bf16.msra.mxu0 0
        %587 = vmatprep.subr.bf16.mxu0 0
        %588 = vmatpush1.bf16.msra.mxu0 0
        %589 = vmatprep.subr.bf16.mxu0 0
        %590 = vmatpush1.bf16.msra.mxu0 0
        %591 = vmatprep.subr.bf16.mxu0 0
        %592 = vmatpush1.bf16.msra.mxu0 0
        %593 = vmatprep.subr.bf16.mxu0 0
        %594 = vmatpush1.bf16.msra.mxu0 0
        %595 = vmatprep.subr.bf16.mxu0 0
        %596 = vmatpush1.bf16.msra.mxu0 0
        %597 = vmatprep.subr.bf16.mxu0 0
        %598 = vmatpush1.bf16.msra.mxu0 %v578
        %599 = vmatprep.subr.bf16.mxu0 0
        %600 = vmatpush1.bf16.msra.mxu0 %v577
        %601 = vmatprep.subr.bf16.mxu0 0
        %602 = vmatpush2.bf16.msra.mxu0 0
        %603 = vmatprep.subr.bf16.mxu0 0
        %604 = vmatpush2.bf16.msra.mxu0 0
        %605 = vmatprep.subr.bf16.mxu0 0
        %606 = vmatpush2.bf16.msra.mxu0 0
        %607 = vmatprep.subr.bf16.mxu0 0
        %608 = vmatpush2.bf16.msra.mxu0 0
        %609 = vmatprep.subr.bf16.mxu0 0
        %610 = vmatpush2.bf16.msra.mxu0 0
        %611 = vmatprep.subr.bf16.mxu0 0
        %612 = vmatpush2.bf16.msra.mxu0 0
        %613 = vmatprep.subr.bf16.mxu0 0
        %614 = vmatpush2.bf16.msra.mxu0 0
        %615 = vmatprep.subr.bf16.mxu0 0
        %616 = vmatpush2.bf16.msra.mxu0 0
        %617 = vmatprep.mubr.bf16.mxu0 0
        %618 = vmatmul.mubr.bf16.gmra.mxu0 %v583
        %v619 = vpop.f32.mrf.mxu0
        %v620 = vadd.f32 %v567, %v619
        %v621 = vpop.f32.mrf.mxu0
        %v622 = vpop.f32.mrf.mxu0
        %v623 = vpop.f32.mrf.mxu0
        %624 = vdwg.mxu0
        %v625 = vld [vmem:[#allocation2] sm:$0xff]
        %v627 = vcombine.high %v625, %v625
        %v629 = vunpack.c.l.s4 1966171168
        %v630 = vunpack.c.0.s8 %v629
        %v631 = vlaneseq
        %v632 = vshrl.u32 %v631, 7
        %v633 = vsub.s32 %v630, %v632
        %v634 = vrot.slane %v625, %v633
        %v636 = vunpack.c.l.s4 1966171168
        %v637 = vunpack.c.0.s8 %v636
        %v638 = vlaneseq
        %v639 = vshrl.u32 %v638, 7
        %v640 = vsub.s32 %v637, %v639
        %v641 = vrot.slane %v627, %v640
        %v642 = vcombine.high %v634, %v634
        %v643 = vcombine.high %v641, %v641
        %v645 = vunpack.c.l.s4 1966171168
        %v646 = vunpack.c.0.s8 %v645
        %v647 = vlaneseq
        %v648 = vshrl.u32 %v647, 7
        %v649 = vsub.s32 %v646, %v648
        %v650 = vrot.slane %v634, %v649
        %v652 = vunpack.c.l.s4 1966171168
        %v653 = vunpack.c.0.s8 %v652
        %v654 = vlaneseq
        %v655 = vshrl.u32 %v654, 7
        %v656 = vsub.s32 %v653, %v655
        %v657 = vrot.slane %v641, %v656
        %v659 = vunpack.c.l.s4 1966171168
        %v660 = vunpack.c.0.s8 %v659
        %v661 = vlaneseq
        %v662 = vshrl.u32 %v661, 7
        %v663 = vsub.s32 %v660, %v662
        %v664 = vrot.slane %v642, %v663
        %v666 = vunpack.c.l.s4 1966171168
        %v667 = vunpack.c.0.s8 %v666
        %v668 = vlaneseq
        %v669 = vshrl.u32 %v668, 7
        %v670 = vsub.s32 %v667, %v669
        %v671 = vrot.slane %v643, %v670
        %v672 = vcombine.high %v650, %v650
        %v673 = vcombine.high %v657, %v657
        %v674 = vcombine.high %v664, %v664
        %v675 = vcombine.high %v671, %v671
        %v676 = vlaneseq
        %v677 = vshrl.u32 %v676, 7
        %v678 = vsub.s32 0, %v677
        %v679 = vrot.slane %v650, %v678
        %v680 = vlaneseq
        %v681 = vshrl.u32 %v680, 7
        %v682 = vsub.s32 0, %v681
        %v683 = vrot.slane %v664, %v682
        %v684 = vlaneseq
        %v685 = vshrl.u32 %v684, 7
        %v686 = vsub.s32 0, %v685
        %v687 = vrot.slane %v672, %v686
        %v688 = vlaneseq
        %v689 = vshrl.u32 %v688, 7
        %v690 = vsub.s32 0, %v689
        %v691 = vrot.slane %v674, %v690
        %v692 = vlaneseq
        %v693 = vshrl.u32 %v692, 7
        %v694 = vsub.s32 0, %v693
        %v695 = vrot.slane %v657, %v694
        %v696 = vlaneseq
        %v697 = vshrl.u32 %v696, 7
        %v698 = vsub.s32 0, %v697
        %v699 = vrot.slane %v671, %v698
        %v700 = vlaneseq
        %v701 = vshrl.u32 %v700, 7
        %v702 = vsub.s32 0, %v701
        %v703 = vrot.slane %v673, %v702
        %v704 = vlaneseq
        %v705 = vshrl.u32 %v704, 7
        %v706 = vsub.s32 0, %v705
        %v707 = vrot.slane %v675, %v706
        %v716 = vadd.f32 %v679, %v620
        %v717 = vadd.f32 %v683, %v620
        %v718 = vadd.f32 %v687, %v620
        %v719 = vadd.f32 %v691, %v620
        %v720 = vadd.f32 %v695, %v620
        %v721 = vadd.f32 %v699, %v620
        %v722 = vadd.f32 %v703, %v620
        %v723 = vadd.f32 %v707, %v620
        %v724 = vtanh.pop %v716
        %v725 = vtanh.pop %v717
        %v726 = vtanh.pop %v718
        %v727 = vtanh.pop %v719
        %v728 = vtanh.pop %v720
        %v729 = vtanh.pop %v721
        %v730 = vtanh.pop %v722
        %v731 = vtanh.pop %v723
        %v732 = vld [vmem:[%s7] sm:$0x1]
        %v734 = vlaneseq
        %v735 = vshrl.u32 %v734, 7
        %v736 = vsub.s32 0, %v735
        %v737 = vrot.slane %v732, %v736
        %v739 = vmul.f32 %v724, %v737
        %v740 = vmul.f32 %v725, %v737
        %v741 = vmul.f32 %v726, %v737
        %v742 = vmul.f32 %v727, %v737
        %v743 = vmul.f32 %v728, %v737
        %v744 = vmul.f32 %v729, %v737
        %v745 = vmul.f32 %v730, %v737
        %v746 = vmul.f32 %v731, %v737
        %v747 = vsel %vm581, %v739, 0.0
        %748 = vadd.xlane.f32.xlu0 %v747
        %v749 = vpop.xlane.xlu0 %748
        %v750 = vsel %vm581, %v740, 0.0
        %751 = vadd.xlane.f32.xlu0 %v750
        %v752 = vpop.xlane.xlu0 %751
        %v753 = vsel %vm581, %v741, 0.0
        %754 = vadd.xlane.f32.xlu0 %v753
        %v755 = vpop.xlane.xlu0 %754
        %v756 = vsel %vm581, %v742, 0.0
        %757 = vadd.xlane.f32.xlu0 %v756
        %v758 = vpop.xlane.xlu0 %757
        %v759 = vsel %vm581, %v743, 0.0
        %760 = vadd.xlane.f32.xlu0 %v759
        %v761 = vpop.xlane.xlu0 %760
        %v762 = vsel %vm581, %v744, 0.0
        %763 = vadd.xlane.f32.xlu0 %v762
        %v764 = vpop.xlane.xlu0 %763
        %v765 = vsel %vm581, %v745, 0.0
        %766 = vadd.xlane.f32.xlu0 %v765
        %v767 = vpop.xlane.xlu0 %766
        %v768 = vsel %vm581, %v746, 0.0
        %769 = vadd.xlane.f32.xlu0 %v768
        %v770 = vpop.xlane.xlu0 %769
        %v771 = vld [vmem:[%s476] sm:$0xff]
        %772 = vxpose.xlu0.b32.start [1/16] %v771, 128
        %773 = vxpose.xlu0.b32.cont [2/16] 0.0, 128
        %774 = vxpose.xlu0.b32.cont [3/16] 0.0, 128
        %775 = vxpose.xlu0.b32.cont [4/16] 0.0, 128
        %776 = vxpose.xlu0.b32.cont [5/16] 0.0, 128
        %777 = vxpose.xlu0.b32.cont [6/16] 0.0, 128
        %778 = vxpose.xlu0.b32.cont [7/16] 0.0, 128
        %779 = vxpose.xlu0.b32.cont [8/16] 0.0, 128
        %780 = vxpose.xlu0.b32.cont [9/16] 0.0, 128
        %781 = vxpose.xlu0.b32.cont [10/16] 0.0, 128
        %782 = vxpose.xlu0.b32.cont [11/16] 0.0, 128
        %783 = vxpose.xlu0.b32.cont [12/16] 0.0, 128
        %784 = vxpose.xlu0.b32.cont [13/16] 0.0, 128
        %785 = vxpose.xlu0.b32.cont [14/16] 0.0, 128
        %786 = vxpose.xlu0.b32.cont [15/16] 0.0, 128
        %787 = vxpose.xlu0.b32.end [16/16] 0.0, 128
        %v788 = vpop.trf.xlu0
        %v789 = vpop.trf.xlu0
        %v790 = vpop.trf.xlu0
        %v791 = vpop.trf.xlu0
        %v792 = vpop.trf.xlu0
        %v793 = vpop.trf.xlu0
        %v794 = vpop.trf.xlu0
        %v795 = vpop.trf.xlu0
        %v796 = vpop.trf.xlu0
        %v797 = vpop.trf.xlu0
        %v798 = vpop.trf.xlu0
        %v799 = vpop.trf.xlu0
        %v800 = vpop.trf.xlu0
        %v801 = vpop.trf.xlu0
        %v802 = vpop.trf.xlu0
        %v803 = vpop.trf.xlu0
        %v805 = vlaneseq
        %v806 = vshrl.u32 %v805, 7
        %v807 = vsub.s32 0, %v806
        %v808 = vrot.slane %v788, %v807
        %810 = vbcast.lane.b32.xlu0 %v808, 256
        %v811 = vpop.permute.xlu0 %810
        %v812 = vlaneseq
        %v813 = vshrl.u32 %v812, 7
        %v814 = vsub.s32 1, %v813
        %v815 = vrot.slane %v788, %v814
        %817 = vbcast.lane.b32.xlu0 %v815, 256
        %v818 = vpop.permute.xlu0 %817
        %v819 = vlaneseq
        %v820 = vshrl.u32 %v819, 7
        %v821 = vsub.s32 2, %v820
        %v822 = vrot.slane %v788, %v821
        %824 = vbcast.lane.b32.xlu0 %v822, 256
        %v825 = vpop.permute.xlu0 %824
        %v826 = vlaneseq
        %v827 = vshrl.u32 %v826, 7
        %v828 = vsub.s32 3, %v827
        %v829 = vrot.slane %v788, %v828
        %831 = vbcast.lane.b32.xlu0 %v829, 256
        %v832 = vpop.permute.xlu0 %831
        %v833 = vlaneseq
        %v834 = vshrl.u32 %v833, 7
        %v835 = vsub.s32 4, %v834
        %v836 = vrot.slane %v788, %v835
        %838 = vbcast.lane.b32.xlu0 %v836, 256
        %v839 = vpop.permute.xlu0 %838
        %v840 = vlaneseq
        %v841 = vshrl.u32 %v840, 7
        %v842 = vsub.s32 5, %v841
        %v843 = vrot.slane %v788, %v842
        %845 = vbcast.lane.b32.xlu0 %v843, 256
        %v846 = vpop.permute.xlu0 %845
        %v847 = vlaneseq
        %v848 = vshrl.u32 %v847, 7
        %v849 = vsub.s32 6, %v848
        %v850 = vrot.slane %v788, %v849
        %852 = vbcast.lane.b32.xlu0 %v850, 256
        %v853 = vpop.permute.xlu0 %852
        %v854 = vlaneseq
        %v855 = vshrl.u32 %v854, 7
        %v856 = vsub.s32 7, %v855
        %v857 = vrot.slane %v788, %v856
        %859 = vbcast.lane.b32.xlu0 %v857, 256
        %v860 = vpop.permute.xlu0 %859
        %v869 = vadd.f32 %v749, %v811
        %v870 = vadd.f32 %v752, %v818
        %v871 = vadd.f32 %v755, %v825
        %v872 = vadd.f32 %v758, %v832
        %v873 = vadd.f32 %v761, %v839
        %v874 = vadd.f32 %v764, %v846
        %v875 = vadd.f32 %v767, %v853
        %v876 = vadd.f32 %v770, %v860
        %v877 = vld [vmem:[#allocation3] sm:$0xff]
        %886 = vset.pattern.permute.xlu0 0
        %887 = vperm.xlu0 %886, %v869
        %v888 = vpop.permute.xlu0 %887
        %889 = vset.pattern.permute.xlu0 0
        %890 = vperm.xlu0 %889, %v870
        %v891 = vpop.permute.xlu0 %890
        %892 = vset.pattern.permute.xlu0 0
        %893 = vperm.xlu0 %892, %v871
        %v894 = vpop.permute.xlu0 %893
        %895 = vset.pattern.permute.xlu0 0
        %896 = vperm.xlu0 %895, %v872
        %v897 = vpop.permute.xlu0 %896
        %898 = vset.pattern.permute.xlu0 0
        %899 = vperm.xlu0 %898, %v873
        %v900 = vpop.permute.xlu0 %899
        %901 = vset.pattern.permute.xlu0 0
        %902 = vperm.xlu0 %901, %v874
        %v903 = vpop.permute.xlu0 %902
        %904 = vset.pattern.permute.xlu0 0
        %905 = vperm.xlu0 %904, %v875
        %v906 = vpop.permute.xlu0 %905
        %907 = vset.pattern.permute.xlu0 0
        %908 = vperm.xlu0 %907, %v876
        %v909 = vpop.permute.xlu0 %908
        %v910 = vlaneseq
        %v911 = vand.u32 %v910, 127
        %v912 = vlaneseq
        %v913 = vshrl.u32 %v912, 7
        %v914 = vsub.s32 %v911, %v913
        %v915 = vrot.slane %v888, %v914
        %v916 = vlaneseq
        %v917 = vshrl.u32 %v916, 7
        %v918 = vsub.s32 %v911, %v917
        %v919 = vrot.slane %v891, %v918
        %v920 = vlaneseq
        %v921 = vshrl.u32 %v920, 7
        %v922 = vsub.s32 %v911, %v921
        %v923 = vrot.slane %v894, %v922
        %v924 = vlaneseq
        %v925 = vshrl.u32 %v924, 7
        %v926 = vsub.s32 %v911, %v925
        %v927 = vrot.slane %v897, %v926
        %v928 = vlaneseq
        %v929 = vshrl.u32 %v928, 7
        %v930 = vsub.s32 %v911, %v929
        %v931 = vrot.slane %v900, %v930
        %v932 = vlaneseq
        %v933 = vshrl.u32 %v932, 7
        %v934 = vsub.s32 %v911, %v933
        %v935 = vrot.slane %v903, %v934
        %v936 = vlaneseq
        %v937 = vshrl.u32 %v936, 7
        %v938 = vsub.s32 %v911, %v937
        %v939 = vrot.slane %v906, %v938
        %v940 = vlaneseq
        %v941 = vshrl.u32 %v940, 7
        %v942 = vsub.s32 %v911, %v941
        %v943 = vrot.slane %v909, %v942
        %vm944 = vcmask 1041409
        %v945 = vsel %vm944, %v919, %v915
        %vm946 = vcmask 1042434
        %v947 = vsel %vm946, %v923, %v945
        %vm948 = vcmask 1043459
        %v949 = vsel %vm948, %v927, %v947
        %vm950 = vcmask 1044484
        %v951 = vsel %vm950, %v931, %v949
        %vm952 = vcmask 1045509
        %v953 = vsel %vm952, %v935, %v951
        %vm954 = vcmask 1046534
        %v955 = vsel %vm954, %v939, %v953
        %vm956 = vcmask 1047559
        %v957 = vsel %vm956, %v943, %v955
        %vm959 = vcmask 64512
        %v960 = vsel %vm959, %v957, -inf
        %961 = vmax.xlane.f32.xlu0 %v960
        %v962 = vpop.xlane.xlu0 %961
        %v963 = vmax.f32 %v877, %v962
        %v964 = vsub.f32 %v877, %v963
        %v965 = vmul.f32 %v964, 1.442695
        %v966 = vpow.pop %v965
        %968 = vset.pattern.permute.xlu0 0
        %969 = vperm.xlu0 %968, %v963
        %v970 = vpop.permute.xlu0 %969
        %v971 = vlaneseq
        %v972 = vshrl.u32 %v971, 7
        %v973 = vsub.s32 0, %v972
        %v974 = vrot.slane %v970, %v973
        %v975 = vlaneseq
        %v976 = vshrl.u32 %v975, 7
        %v977 = vsub.s32 1, %v976
        %v978 = vrot.slane %v970, %v977
        %v979 = vlaneseq
        %v980 = vshrl.u32 %v979, 7
        %v981 = vsub.s32 2, %v980
        %v982 = vrot.slane %v970, %v981
        %v983 = vlaneseq
        %v984 = vshrl.u32 %v983, 7
        %v985 = vsub.s32 3, %v984
        %v986 = vrot.slane %v970, %v985
        %v987 = vlaneseq
        %v988 = vshrl.u32 %v987, 7
        %v989 = vsub.s32 4, %v988
        %v990 = vrot.slane %v970, %v989
        %v991 = vlaneseq
        %v992 = vshrl.u32 %v991, 7
        %v993 = vsub.s32 5, %v992
        %v994 = vrot.slane %v970, %v993
        %v995 = vlaneseq
        %v996 = vshrl.u32 %v995, 7
        %v997 = vsub.s32 6, %v996
        %v998 = vrot.slane %v970, %v997
        %v999 = vlaneseq
        %v1000 = vshrl.u32 %v999, 7
        %v1001 = vsub.s32 7, %v1000
        %v1002 = vrot.slane %v970, %v1001
        %v1011 = vsub.f32 %v869, %v974
        %v1012 = vsub.f32 %v870, %v978
        %v1013 = vsub.f32 %v871, %v982
        %v1014 = vsub.f32 %v872, %v986
        %v1015 = vsub.f32 %v873, %v990
        %v1016 = vsub.f32 %v874, %v994
        %v1017 = vsub.f32 %v875, %v998
        %v1018 = vsub.f32 %v876, %v1002
        %v1019 = vmul.f32 %v1011, 1.442695
        %v1020 = vpow.pop %v1019
        %v1021 = vmul.f32 %v1012, 1.442695
        %v1022 = vpow.pop %v1021
        %v1023 = vmul.f32 %v1013, 1.442695
        %v1024 = vpow.pop %v1023
        %v1025 = vmul.f32 %v1014, 1.442695
        %v1026 = vpow.pop %v1025
        %v1027 = vmul.f32 %v1015, 1.442695
        %v1028 = vpow.pop %v1027
        %v1029 = vmul.f32 %v1016, 1.442695
        %v1030 = vpow.pop %v1029
        %v1031 = vmul.f32 %v1017, 1.442695
        %v1032 = vpow.pop %v1031
        %v1033 = vmul.f32 %v1018, 1.442695
        %v1034 = vpow.pop %v1033
        %v1035 = vld [vmem:[#allocation4] sm:$0xff]
        %v1036 = vmul.f32 %v966, %v1035
        %1045 = vset.pattern.permute.xlu0 0
        %1046 = vperm.xlu0 %1045, %v1020
        %v1047 = vpop.permute.xlu0 %1046
        %1048 = vset.pattern.permute.xlu0 0
        %1049 = vperm.xlu0 %1048, %v1022
        %v1050 = vpop.permute.xlu0 %1049
        %1051 = vset.pattern.permute.xlu0 0
        %1052 = vperm.xlu0 %1051, %v1024
        %v1053 = vpop.permute.xlu0 %1052
        %1054 = vset.pattern.permute.xlu0 0
        %1055 = vperm.xlu0 %1054, %v1026
        %v1056 = vpop.permute.xlu0 %1055
        %1057 = vset.pattern.permute.xlu0 0
        %1058 = vperm.xlu0 %1057, %v1028
        %v1059 = vpop.permute.xlu0 %1058
        %1060 = vset.pattern.permute.xlu0 0
        %1061 = vperm.xlu0 %1060, %v1030
        %v1062 = vpop.permute.xlu0 %1061
        %1063 = vset.pattern.permute.xlu0 0
        %1064 = vperm.xlu0 %1063, %v1032
        %v1065 = vpop.permute.xlu0 %1064
        %1066 = vset.pattern.permute.xlu0 0
        %1067 = vperm.xlu0 %1066, %v1034
        %v1068 = vpop.permute.xlu0 %1067
        %v1069 = vlaneseq
        %v1070 = vshrl.u32 %v1069, 7
        %v1071 = vsub.s32 %v911, %v1070
        %v1072 = vrot.slane %v1047, %v1071
        %v1073 = vlaneseq
        %v1074 = vshrl.u32 %v1073, 7
        %v1075 = vsub.s32 %v911, %v1074
        %v1076 = vrot.slane %v1050, %v1075
        %v1077 = vlaneseq
        %v1078 = vshrl.u32 %v1077, 7
        %v1079 = vsub.s32 %v911, %v1078
        %v1080 = vrot.slane %v1053, %v1079
        %v1081 = vlaneseq
        %v1082 = vshrl.u32 %v1081, 7
        %v1083 = vsub.s32 %v911, %v1082
        %v1084 = vrot.slane %v1056, %v1083
        %v1085 = vlaneseq
        %v1086 = vshrl.u32 %v1085, 7
        %v1087 = vsub.s32 %v911, %v1086
        %v1088 = vrot.slane %v1059, %v1087
        %v1089 = vlaneseq
        %v1090 = vshrl.u32 %v1089, 7
        %v1091 = vsub.s32 %v911, %v1090
        %v1092 = vrot.slane %v1062, %v1091
        %v1093 = vlaneseq
        %v1094 = vshrl.u32 %v1093, 7
        %v1095 = vsub.s32 %v911, %v1094
        %v1096 = vrot.slane %v1065, %v1095
        %v1097 = vlaneseq
        %v1098 = vshrl.u32 %v1097, 7
        %v1099 = vsub.s32 %v911, %v1098
        %v1100 = vrot.slane %v1068, %v1099
        %v1101 = vsel %vm944, %v1076, %v1072
        %v1102 = vsel %vm946, %v1080, %v1101
        %v1103 = vsel %vm948, %v1084, %v1102
        %v1104 = vsel %vm950, %v1088, %v1103
        %v1105 = vsel %vm952, %v1092, %v1104
        %v1106 = vsel %vm954, %v1096, %v1105
        %v1107 = vsel %vm956, %v1100, %v1106
        %v1109 = vsel %vm959, %v1107, 0.0
        %1110 = vadd.xlane.f32.xlu0 %v1109
        %v1111 = vpop.xlane.xlu0 %1110
        %v1112 = vadd.f32 %v1036, %v1111
        %vm1113 = vcmask 7168
        %1114 = vst.msk [vmem:[#allocation4] sm:$0xff] %vm1113, %v1112
        %v1115 = vld [vmem:[#allocation5] sm:$0xff]
        %1117 = vset.pattern.permute.xlu0 0
        %1118 = vperm.xlu0 %1117, %v966
        %v1119 = vpop.permute.xlu0 %1118
        %v1121 = vmul.f32 %v1119, %v1115
        %v1122 = vpack.c.bf16 %v1020, %v1020
        %v1123 = vpack.c.bf16 %v1022, %v1022
        %v1124 = vpack.c.bf16 %v1024, %v1024
        %v1125 = vpack.c.bf16 %v1026, %v1026
        %v1126 = vpack.c.bf16 %v1028, %v1028
        %v1127 = vpack.c.bf16 %v1030, %v1030
        %v1128 = vpack.c.bf16 %v1032, %v1032
        %v1129 = vpack.c.bf16 %v1034, %v1034
        %v1138 = vunpack.c.l.b16 %v1122
        %v1139 = vunpack.c.l.b16 %v1123
        %v1140 = vunpack.c.l.b16 %v1124
        %v1141 = vunpack.c.l.b16 %v1125
        %v1142 = vunpack.c.l.b16 %v1126
        %v1143 = vunpack.c.l.b16 %v1127
        %v1144 = vunpack.c.l.b16 %v1128
        %v1145 = vunpack.c.l.b16 %v1129
        %1146 = vset.pattern.permute.xlu0 0
        %1147 = vperm.xlu0 %1146, %v1138
        %v1148 = vpop.permute.xlu0 %1147
        %1149 = vset.pattern.permute.xlu0 0
        %1150 = vperm.xlu0 %1149, %v1139
        %v1151 = vpop.permute.xlu0 %1150
        %1152 = vset.pattern.permute.xlu0 0
        %1153 = vperm.xlu0 %1152, %v1140
        %v1154 = vpop.permute.xlu0 %1153
        %1155 = vset.pattern.permute.xlu0 0
        %1156 = vperm.xlu0 %1155, %v1141
        %v1157 = vpop.permute.xlu0 %1156
        %1158 = vset.pattern.permute.xlu0 0
        %1159 = vperm.xlu0 %1158, %v1142
        %v1160 = vpop.permute.xlu0 %1159
        %1161 = vset.pattern.permute.xlu0 0
        %1162 = vperm.xlu0 %1161, %v1143
        %v1163 = vpop.permute.xlu0 %1162
        %1164 = vset.pattern.permute.xlu0 0
        %1165 = vperm.xlu0 %1164, %v1144
        %v1166 = vpop.permute.xlu0 %1165
        %1167 = vset.pattern.permute.xlu0 0
        %1168 = vperm.xlu0 %1167, %v1145
        %v1169 = vpop.permute.xlu0 %1168
        %v1170 = vlaneseq
        %v1171 = vshrl.u32 %v1170, 7
        %v1172 = vsub.s32 %v911, %v1171
        %v1173 = vrot.slane %v1148, %v1172
        %v1174 = vlaneseq
        %v1175 = vshrl.u32 %v1174, 7
        %v1176 = vsub.s32 %v911, %v1175
        %v1177 = vrot.slane %v1151, %v1176
        %v1178 = vlaneseq
        %v1179 = vshrl.u32 %v1178, 7
        %v1180 = vsub.s32 %v911, %v1179
        %v1181 = vrot.slane %v1154, %v1180
        %v1182 = vlaneseq
        %v1183 = vshrl.u32 %v1182, 7
        %v1184 = vsub.s32 %v911, %v1183
        %v1185 = vrot.slane %v1157, %v1184
        %v1186 = vlaneseq
        %v1187 = vshrl.u32 %v1186, 7
        %v1188 = vsub.s32 %v911, %v1187
        %v1189 = vrot.slane %v1160, %v1188
        %v1190 = vlaneseq
        %v1191 = vshrl.u32 %v1190, 7
        %v1192 = vsub.s32 %v911, %v1191
        %v1193 = vrot.slane %v1163, %v1192
        %v1194 = vlaneseq
        %v1195 = vshrl.u32 %v1194, 7
        %v1196 = vsub.s32 %v911, %v1195
        %v1197 = vrot.slane %v1166, %v1196
        %v1198 = vlaneseq
        %v1199 = vshrl.u32 %v1198, 7
        %v1200 = vsub.s32 %v911, %v1199
        %v1201 = vrot.slane %v1169, %v1200
        %v1202 = vsel %vm944, %v1177, %v1173
        %v1203 = vsel %vm946, %v1181, %v1202
        %v1204 = vsel %vm948, %v1185, %v1203
        %v1205 = vsel %vm950, %v1189, %v1204
        %v1206 = vsel %vm952, %v1193, %v1205
        %v1207 = vsel %vm954, %v1197, %v1206
        %v1208 = vsel %vm956, %v1201, %v1207
        %v1209 = vpack.c.b16 %v1208, %v1208
        %v1211 = vsel %vm959, %v1209, 0
        %vm1213 = vcmask 1043456
        %v1214 = vsel %vm1213, %v557, 0
        %1216 = vmatprep.subr.bf16.mxu0 0
        %1217 = vmatpush1.bf16.msra.mxu0 0
        %1218 = vmatprep.subr.bf16.mxu0 0
        %1219 = vmatpush1.bf16.msra.mxu0 0
        %1220 = vmatprep.subr.bf16.mxu0 0
        %1221 = vmatpush1.bf16.msra.mxu0 0
        %1222 = vmatprep.subr.bf16.mxu0 0
        %1223 = vmatpush1.bf16.msra.mxu0 0
        %1224 = vmatprep.subr.bf16.mxu0 0
        %1225 = vmatpush1.bf16.msra.mxu0 0
        %1226 = vmatprep.subr.bf16.mxu0 0
        %1227 = vmatpush1.bf16.msra.mxu0 0
        %1228 = vmatprep.subr.bf16.mxu0 0
        %1229 = vmatpush1.bf16.msra.mxu0 0
        %1230 = vmatprep.subr.bf16.mxu0 0
        %1231 = vmatpush1.bf16.msra.mxu0 %v1214
        %1232 = vmatprep.subr.bf16.mxu0 0
        %1233 = vmatpush2.bf16.msra.mxu0 0
        %1234 = vmatprep.subr.bf16.mxu0 0
        %1235 = vmatpush2.bf16.msra.mxu0 0
        %1236 = vmatprep.subr.bf16.mxu0 0
        %1237 = vmatpush2.bf16.msra.mxu0 0
        %1238 = vmatprep.subr.bf16.mxu0 0
        %1239 = vmatpush2.bf16.msra.mxu0 0
        %1240 = vmatprep.subr.bf16.mxu0 0
        %1241 = vmatpush2.bf16.msra.mxu0 0
        %1242 = vmatprep.subr.bf16.mxu0 0
        %1243 = vmatpush2.bf16.msra.mxu0 0
        %1244 = vmatprep.subr.bf16.mxu0 0
        %1245 = vmatpush2.bf16.msra.mxu0 0
        %1246 = vmatprep.subr.bf16.mxu0 0
        %1247 = vmatpush2.bf16.msra.mxu0 0
        %1248 = vmatprep.mubr.bf16.mxu0 0
        %1249 = vmatmul.mubr.bf16.gmra.mxu0 %v1211
        %v1250 = vpop.f32.mrf.mxu0
        %v1251 = vadd.f32 0.0, %v1250
        %v1252 = vpop.f32.mrf.mxu0
        %v1253 = vpop.f32.mrf.mxu0
        %v1254 = vpop.f32.mrf.mxu0
        %1255 = vdwg.mxu0
        %v1256 = vadd.f32 %v1121, %v1251
        %1257 = vst.msk [vmem:[#allocation5] sm:$0xff] %vm581, %v1256
        %1258 = vst.msk [vmem:[#allocation3] sm:$0xff] %vm1113, %v963
        // Predicated region
        $region73: #{a_call__.11} parent=67 // pred_check
          %p1259 = pneg %p478
        $region74: #{a_call__.11} parent=67 // pred_check_branch
          %1261 = sbr.rel (%p1259) target = $region76
        $region75: #{a_call__.11} parent=67 // pred_region
          %v1262 = vld [vmem:[%s462] sm:$0xff]
          %v1263 = vld [vmem:[#allocation5] sm:$0xff]
          %v1264 = vld [vmem:[#allocation4] sm:$0xff]
          %1266 = vset.pattern.permute.xlu0 0
          %1267 = vperm.xlu0 %1266, %v1264
          %v1268 = vpop.permute.xlu0 %1267
          %v1270 = vrcp.pop %v1268
          %v1271 = vmul.f32 %v1263, %v1270
          %v1272 = vpack.c.bf16 %v1271, %v1271
          %v1273 = vld [vmem:[%s8] sm:$0xf]
          %v1274 = vld [vmem:[%s8 + $0x4] sm:$0xf]
          %v1275 = vld [vmem:[%s8 + $0x8] sm:$0xf]
          %v1276 = vld [vmem:[%s8 + $0xc] sm:$0xf]
          %v1277 = vld [vmem:[%s9] sm:$0x1]
          %v1279 = vlaneseq
          %v1280 = vshrl.u32 %v1279, 7
          %v1281 = vsub.s32 0, %v1280
          %v1282 = vrot.slane %v1277, %v1281
          %v1288 = vunpack.c.l.b16 %v1273
          %v1289 = vunpack.c.l.b16 %v1274
          %v1290 = vunpack.c.l.b16 %v1275
          %v1291 = vunpack.c.l.b16 %v1276
          %v1292 = vpack.c.b16 %v1289, %v1288
          %v1293 = vpack.c.b16 %v1291, %v1290
          %v1297 = vsel %vm581, %v1272, 0
          %1299 = vmatprep.subr.bf16.mxu0 0
          %1300 = vmatpush1.bf16.msra.mxu0 0
          %1301 = vmatprep.subr.bf16.mxu0 0
          %1302 = vmatpush1.bf16.msra.mxu0 0
          %1303 = vmatprep.subr.bf16.mxu0 0
          %1304 = vmatpush1.bf16.msra.mxu0 0
          %1305 = vmatprep.subr.bf16.mxu0 0
          %1306 = vmatpush1.bf16.msra.mxu0 0
          %1307 = vmatprep.subr.bf16.mxu0 0
          %1308 = vmatpush1.bf16.msra.mxu0 0
          %1309 = vmatprep.subr.bf16.mxu0 0
          %1310 = vmatpush1.bf16.msra.mxu0 0
          %1311 = vmatprep.subr.bf16.mxu0 0
          %1312 = vmatpush1.bf16.msra.mxu0 %v1293
          %1313 = vmatprep.subr.bf16.mxu0 0
          %1314 = vmatpush1.bf16.msra.mxu0 %v1292
          %1315 = vmatprep.subr.bf16.mxu0 0
          %1316 = vmatpush2.bf16.msra.mxu0 0
          %1317 = vmatprep.subr.bf16.mxu0 0
          %1318 = vmatpush2.bf16.msra.mxu0 0
          %1319 = vmatprep.subr.bf16.mxu0 0
          %1320 = vmatpush2.bf16.msra.mxu0 0
          %1321 = vmatprep.subr.bf16.mxu0 0
          %1322 = vmatpush2.bf16.msra.mxu0 0
          %1323 = vmatprep.subr.bf16.mxu0 0
          %1324 = vmatpush2.bf16.msra.mxu0 0
          %1325 = vmatprep.subr.bf16.mxu0 0
          %1326 = vmatpush2.bf16.msra.mxu0 0
          %1327 = vmatprep.subr.bf16.mxu0 0
          %1328 = vmatpush2.bf16.msra.mxu0 0
          %1329 = vmatprep.subr.bf16.mxu0 0
          %1330 = vmatpush2.bf16.msra.mxu0 0
          %1331 = vmatprep.mubr.bf16.mxu0 0
          %1332 = vmatmul.mubr.bf16.gmra.mxu0 %v1297
          %v1333 = vpop.f32.mrf.mxu0
          %v1334 = vadd.f32 %v1282, %v1333
          %v1335 = vpop.f32.mrf.mxu0
          %v1336 = vpop.f32.mrf.mxu0
          %v1337 = vpop.f32.mrf.mxu0
          %1338 = vdwg.mxu0
          %v1339 = vadd.f32 %v1262, %v1334
          %v1340 = vld [vmem:[%s10] sm:$0x1]
          %v1341 = vld [vmem:[%s11] sm:$0x1]
          %v1342 = vsel %vm581, %v1339, 0.0
          %1343 = vadd.xlane.f32.xlu0 %v1342
          %v1344 = vpop.xlane.xlu0 %1343
          %v1345 = vrcp.pop 32.0
          %v1346 = vmul.f32 %v1344, %v1345
          %v1347 = vsub.f32 %v1339, %v1346
          %v1348 = vmul.f32 %v1347, %v1347
          %v1349 = vsel %vm581, %v1348, 0.0
          %1350 = vadd.xlane.f32.xlu0 %v1349
          %v1351 = vpop.xlane.xlu0 %1350
          %v1352 = vmul.f32 %v1351, %v1345
          %v1353 = vadd.f32 %v1352, 1e-06
          %v1354 = vrsqrt.pop %v1353
          %v1355 = vmul.f32 %v1347, %v1354
          %v1357 = vlaneseq
          %v1358 = vshrl.u32 %v1357, 7
          %v1359 = vsub.s32 0, %v1358
          %v1360 = vrot.slane %v1340, %v1359
          %v1362 = vmul.f32 %v1355, %v1360
          %v1364 = vlaneseq
          %v1365 = vshrl.u32 %v1364, 7
          %v1366 = vsub.s32 0, %v1365
          %v1367 = vrot.slane %v1341, %v1366
          %v1369 = vadd.f32 %v1362, %v1367
          %1370 = vst.msk [vmem:[%s458] sm:$0xff] %vm581, %v1369
        $region76: #{a_call__.11} parent=67 // pred_fallthru
          _
        %s1371 = sand.u32 %s317, 1
        %s1372 = scalar_lea.sflag [#allocation7], %s1371
        %s1373 = sand.u32 %s317, 1
        %s1374 = smul.addr %s1373, 8
        %s1375 = scalar_lea.vmem [#allocation6], %s1374
        // Predicated region
        $region77: #{a_call__.11} parent=67 // pred_check
          %p1376 = pneg %p327
        $region78: #{a_call__.11} parent=67 // pred_check_branch
          %1378 = sbr.rel (%p1376) target = $region80
        $region79: #{a_call__.11} parent=67 // pred_region
          %s1380 = ssub.s32 128, 128
          %1381 = vsyncadd %s1372, %s1380
          %s1382 = smul.addr %s30, 128
          %s1383 = scalar_lea.hbm %s12, %s1382
          %s1385 = sshll.u32 %s1375, 4
          %s1386 = int_to_ptr.vmem [resolvable:$true] %s1385
          %1388 = dma.vmem_to_hbm [thread:$0]  %s1386, 128, %s1383, %s1372
        $region80: #{a_call__.11} parent=67 // pred_fallthru
          _
      $region68: #{a_call__.11} parent=5 // pred_fallthru
        _
      %p1389 = scmp.le.s32.totalorder 2, %s21
      // Predicated region
      $region81: #{a_call__.11} parent=5 // pred_check
        %p1390 = pneg %p1389
      $region82: #{a_call__.11} parent=5 // pred_check_branch
        %1392 = sbr.rel (%p1390) target = $region84
      $region83: #{a_call__.11} parent=5 // pred_region
        %s1393 = ssub.s32 %s21, 2
        // Predicated region
        $region85: #{a_call__.11} parent=83 // pred_check
          %p1394 = pneg %p333
        $region86: #{a_call__.11} parent=83 // pred_check_branch
          %1396 = sbr.rel (%p1394) target = $region88
        $region87: #{a_call__.11} parent=83 // pred_region
          %s1397 = sand.u32 %s318, 1
          %s1398 = scalar_lea.sflag [#allocation7], %s1397
          %s1399 = sand.u32 %s318, 1
          %s1400 = smul.addr %s1399, 8
          %s1401 = scalar_lea.vmem [#allocation6], %s1400
          %1402 = dma.done %s1398, 128
        $region88: #{a_call__.11} parent=83 // pred_fallthru
          _
      $region84: #{a_call__.11} parent=5 // pred_fallthru
        _
    $region6: #{a_call__.11} parent=1 // loop_footer
      %s25 = sadd.s32 1, %s21
    $region7: #{a_call__.11} parent=1 // loop_footer_branch
      %20 = sbr.rel target = $region3
    $region8: #{a_call__.11} parent=1 // loop_exit
      _
    %1403 = vsyncpa [#allocation7], 1
    %s1404 = scalar_lea.sflag [#allocation7], 1
    %1405 = vsyncpa %s1404, 1

// kernel: a_call__.7
$region0: #{a_call__.7}
  #allocation0 [shape = 'u32[]', space=smem, size = 0x4, offset = 0x4, fixed_abs, tag = 'smem constant byte address 0x4 - core index']
  #allocation1 [shape = 'u32[144,128]{1,0:T(1,128)}', space=vmem, size = 0x12000, scoped, tag = 'internal scratch']
  #allocation2 [shape = 'bf16[8,4,8]{2,1,0:T(4,128)(2,1)}', space=vmem, size = 0x2000, scoped, tag = 'scratch operand']
  #allocation3 [shape = 'bf16[4,8,8]{2,1,0:T(8,128)(2,1)}', space=vmem, size = 0x2000, scoped, tag = 'scratch operand']
  #allocation4 [shape = 'bf16[4,8,8]{2,1,0:T(8,128)(2,1)}', space=vmem, size = 0x2000, scoped, tag = 'scratch operand']
  #allocation5 [shape = 'f32[8,4,1]{2,1,0:T(4,128)}', space=vmem, size = 0x4000, scoped, tag = 'scratch operand']
  #allocation6 [shape = 'f32[8,4,1]{2,1,0:T(4,128)}', space=vmem, size = 0x4000, scoped, tag = 'scratch operand']
  #allocation7 [shape = 'f32[8,4,8]{2,1,0:T(4,128)}', space=vmem, size = 0x4000, scoped, tag = 'scratch operand']
  %s0 = inlined_call_operand.vmem [shape: f32[2,8,32], index: 0, kind: input, shape index: {}]
  %s1 = inlined_call_operand.vmem [shape: bf16[2,8,8,8], index: 1, kind: input, shape index: {}]
  %s2 = inlined_call_operand.vmem [shape: f32[2,1,8], index: 2, kind: input, shape index: {}]
  %s3 = inlined_call_operand.vmem [shape: bf16[32,96], index: 3, kind: input, shape index: {}]
  %s4 = inlined_call_operand.vmem [shape: f32[1,96], index: 4, kind: input, shape index: {}]
  %s5 = inlined_call_operand.vmem [shape: bf16[32,32], index: 5, kind: input, shape index: {}]
  %s6 = inlined_call_operand.vmem [shape: f32[1,32], index: 6, kind: input, shape index: {}]
  %s7 = inlined_call_operand.vmem [shape: f32[1,32], index: 7, kind: input, shape index: {}, may-alias: {7,13}]
  %s8 = inlined_call_operand.vmem [shape: f32[1,32], index: 8, kind: input, shape index: {}, may-alias: {8,14}]
  %s9 = inlined_call_operand.vmem [shape: bf16[32,64], index: 9, kind: input, shape index: {}]
  %s10 = inlined_call_operand.vmem [shape: f32[1,64], index: 10, kind: input, shape index: {}]
  %s11 = inlined_call_operand.vmem [shape: bf16[64,32], index: 11, kind: input, shape index: {}]
  %s12 = inlined_call_operand.vmem [shape: f32[1,32], index: 12, kind: input, shape index: {}]
  %s13 = inlined_call_operand.vmem [shape: f32[1,32], index: 13, kind: input, shape index: {}, may-alias: {7,13}]
  %s14 = inlined_call_operand.vmem [shape: f32[1,32], index: 14, kind: input, shape index: {}, may-alias: {8,14}]
  %s15 = inlined_call_operand.vmem [shape: f32[2,8,32], index: 15, kind: output, shape index: {}]
  %s16 = sld [smem:[#allocation0]]
  $region101: #{a_call__.7} parent=0
    _
  %s18 = ssub.s32 1, %s16
  %s19 = scalar_select 0, %s18, %s16
  loop: start=0, step=1, limit=4
  $region2: #{a_call__.7} parent=0 // loop_pre_header
    _
  $region3: #{a_call__.7} parent=0 // loop_header
    %s21 = sphi 0, %s25
    %p22 = scmp.ge.s32.totalorder %s21, 4
    %s28 = sphi 0, %s40
    %s29 = sphi 0, %s36
    %s30 = sphi 0, %s28
    %s31 = sphi 0, %s29
    %s32 = sphi 0, %s30
    %s33 = sphi 0, %s31
    %s43 = sphi 0, %s45
    %s46 = sphi 0, %s43
    %s47 = sphi 0, %s46
    %s63 = sphi 0, %s47
    %s71 = sphi 0, %s73
    %s74 = sphi 0, %s71
    %s75 = sphi 0, %s74
    %s91 = sphi 0, %s75
    %s97 = sphi 0, %s99
    %s100 = sphi 0, %s97
    %s101 = sphi 0, %s100
    %s117 = sphi 0, %s101
    %s121 = sphi 0, %s121
    %s123 = sphi 0, %s121
    %s124 = sphi 0, %s123
    %s138 = sphi 0, %s124
    %s142 = sphi 0, %s142
    %s144 = sphi 0, %s142
    %s145 = sphi 0, %s144
    %s159 = sphi 0, %s145
    %s163 = sphi 0, %s163
    %s165 = sphi 0, %s163
    %s166 = sphi 0, %s165
    %s180 = sphi 0, %s166
    %s184 = sphi 0, %s184
    %s186 = sphi 0, %s184
    %s187 = sphi 0, %s186
    %s201 = sphi 0, %s187
    %s205 = sphi 0, %s205
    %s207 = sphi 0, %s205
    %s208 = sphi 0, %s207
    %s222 = sphi 0, %s208
    %s226 = sphi 0, %s226
    %s228 = sphi 0, %s226
    %s229 = sphi 0, %s228
    %s243 = sphi 0, %s229
    %s247 = sphi 0, %s247
    %s249 = sphi 0, %s247
    %s250 = sphi 0, %s249
    %s264 = sphi 0, %s250
    %s268 = sphi 0, %s268
    %s270 = sphi 0, %s268
    %s271 = sphi 0, %s270
    %s285 = sphi 0, %s271
    %s289 = sphi 0, %s289
    %s291 = sphi 0, %s289
    %s292 = sphi 0, %s291
    %s306 = sphi 0, %s292
    %s310 = sphi 0, %s310
    %s312 = sphi 0, %s310
    %s313 = sphi 0, %s312
    %s327 = sphi 0, %s313
    %s331 = sphi 0, %s331
    %s333 = sphi 0, %s331
    %s334 = sphi 0, %s333
    %s348 = sphi 0, %s334
    %s352 = sphi 0, %s352
    %s354 = sphi 0, %s352
    %s355 = sphi 0, %s354
    %s369 = sphi 0, %s355
    %s375 = sphi 0, %s377
    %s378 = sphi 0, %s375
    %s379 = sphi 0, %s378
    %s395 = sphi 0, %s379
  $region4: #{a_call__.7} parent=0 // loop_header_branch
    %24 = sbr.rel (%p22) target = $region8
  $region5: #{a_call__.7} parent=0 // loop_body
    %s26 = ssub.s32 %s21, 1
    %s27 = ssub.s32 %s21, 2
    %s34 = sadd.s32 1, %s29
    %p35 = scmp.ge.s32.totalorder %s34, 1
    %s36 = scalar_select %p35, 0, %s34
    %s37 = sadd.s32 1, %s28
    %s38 = scalar_select %p35, %s37, %s28
    %p39 = scmp.ge.s32.totalorder %s38, 2
    %s40 = scalar_select %p39, 0, %s38
    %s41 = ssub.s32 %s28, %s40
    %p42 = scmp.eq.s32.totalorder %s41, 0
    %s44 = sadd.s32 %s43, 1
    %s45 = scalar_select %p42, %s43, %s44
    %p48 = pneg %p42
    %p49 = scmp.eq.s32.totalorder %s21, 1
    %p50 = por %p48, %p49
    %p51 = scmp.ne.s32.totalorder %s43, %s46
    %p52 = scmp.eq.s32.totalorder %s21, 0
    %p53 = por %p51, %p52
    %p54 = scmp.ne.s32.totalorder %s43, %s46
    %p55 = scmp.eq.s32.totalorder %s26, 1
    %p56 = por %p54, %p55
    %p57 = scmp.ne.s32.totalorder %s46, %s47
    %p58 = scmp.eq.s32.totalorder %s26, 0
    %p59 = por %p57, %p58
    %p60 = scmp.ne.s32.totalorder %s46, %s47
    %p61 = scmp.eq.s32.totalorder %s27, 1
    %p62 = por %p60, %p61
    %p64 = scmp.ne.s32.totalorder %s47, %s63
    %p65 = scmp.eq.s32.totalorder %s27, 0
    %p66 = por %p64, %p65
    %s67 = ssub.s32 %s28, %s40
    %s68 = ssub.s32 %s29, %s36
    %s69 = sor.u32 %s67, %s68
    %p70 = scmp.eq.s32.totalorder %s69, 0
    %s72 = sadd.s32 %s71, 1
    %s73 = scalar_select %p70, %s71, %s72
    %p76 = pneg %p70
    %p77 = scmp.eq.s32.totalorder %s21, 1
    %p78 = por %p76, %p77
    %p79 = scmp.ne.s32.totalorder %s71, %s74
    %p80 = scmp.eq.s32.totalorder %s21, 0
    %p81 = por %p79, %p80
    %p82 = scmp.ne.s32.totalorder %s71, %s74
    %p83 = scmp.eq.s32.totalorder %s26, 1
    %p84 = por %p82, %p83
    %p85 = scmp.ne.s32.totalorder %s74, %s75
    %p86 = scmp.eq.s32.totalorder %s26, 0
    %p87 = por %p85, %p86
    %p88 = scmp.ne.s32.totalorder %s74, %s75
    %p89 = scmp.eq.s32.totalorder %s27, 1
    %p90 = por %p88, %p89
    %p92 = scmp.ne.s32.totalorder %s75, %s91
    %p93 = scmp.eq.s32.totalorder %s27, 0
    %p94 = por %p92, %p93
    %s95 = ssub.s32 %s28, %s40
    %p96 = scmp.eq.s32.totalorder %s95, 0
    %s98 = sadd.s32 %s97, 1
    %s99 = scalar_select %p96, %s97, %s98
    %p102 = pneg %p96
    %p103 = scmp.eq.s32.totalorder %s21, 1
    %p104 = por %p102, %p103
    %p105 = scmp.ne.s32.totalorder %s97, %s100
    %p106 = scmp.eq.s32.totalorder %s21, 0
    %p107 = por %p105, %p106
    %p108 = scmp.ne.s32.totalorder %s97, %s100
    %p109 = scmp.eq.s32.totalorder %s26, 1
    %p110 = por %p108, %p109
    %p111 = scmp.ne.s32.totalorder %s100, %s101
    %p112 = scmp.eq.s32.totalorder %s26, 0
    %p113 = por %p111, %p112
    %p114 = scmp.ne.s32.totalorder %s100, %s101
    %p115 = scmp.eq.s32.totalorder %s27, 1
    %p116 = por %p114, %p115
    %p118 = scmp.ne.s32.totalorder %s101, %s117
    %p119 = scmp.eq.s32.totalorder %s27, 0
    %p120 = por %p118, %p119
    %s122 = sadd.s32 %s121, 1
    %p125 = scmp.eq.s32.totalorder %s21, 1
    %p126 = scmp.ne.s32.totalorder %s121, %s123
    %p127 = scmp.eq.s32.totalorder %s21, 0
    %p128 = por %p126, %p127
    %p129 = scmp.ne.s32.totalorder %s121, %s123
    %p130 = scmp.eq.s32.totalorder %s26, 1
    %p131 = por %p129, %p130
    %p132 = scmp.ne.s32.totalorder %s123, %s124
    %p133 = scmp.eq.s32.totalorder %s26, 0
    %p134 = por %p132, %p133
    %p135 = scmp.ne.s32.totalorder %s123, %s124
    %p136 = scmp.eq.s32.totalorder %s27, 1
    %p137 = por %p135, %p136
    %p139 = scmp.ne.s32.totalorder %s124, %s138
    %p140 = scmp.eq.s32.totalorder %s27, 0
    %p141 = por %p139, %p140
    %s143 = sadd.s32 %s142, 1
    %p146 = scmp.eq.s32.totalorder %s21, 1
    %p147 = scmp.ne.s32.totalorder %s142, %s144
    %p148 = scmp.eq.s32.totalorder %s21, 0
    %p149 = por %p147, %p148
    %p150 = scmp.ne.s32.totalorder %s142, %s144
    %p151 = scmp.eq.s32.totalorder %s26, 1
    %p152 = por %p150, %p151
    %p153 = scmp.ne.s32.totalorder %s144, %s145
    %p154 = scmp.eq.s32.totalorder %s26, 0
    %p155 = por %p153, %p154
    %p156 = scmp.ne.s32.totalorder %s144, %s145
    %p157 = scmp.eq.s32.totalorder %s27, 1
    %p158 = por %p156, %p157
    %p160 = scmp.ne.s32.totalorder %s145, %s159
    %p161 = scmp.eq.s32.totalorder %s27, 0
    %p162 = por %p160, %p161
    %s164 = sadd.s32 %s163, 1
    %p167 = scmp.eq.s32.totalorder %s21, 1
    %p168 = scmp.ne.s32.totalorder %s163, %s165
    %p169 = scmp.eq.s32.totalorder %s21, 0
    %p170 = por %p168, %p169
    %p171 = scmp.ne.s32.totalorder %s163, %s165
    %p172 = scmp.eq.s32.totalorder %s26, 1
    %p173 = por %p171, %p172
    %p174 = scmp.ne.s32.totalorder %s165, %s166
    %p175 = scmp.eq.s32.totalorder %s26, 0
    %p176 = por %p174, %p175
    %p177 = scmp.ne.s32.totalorder %s165, %s166
    %p178 = scmp.eq.s32.totalorder %s27, 1
    %p179 = por %p177, %p178
    %p181 = scmp.ne.s32.totalorder %s166, %s180
    %p182 = scmp.eq.s32.totalorder %s27, 0
    %p183 = por %p181, %p182
    %s185 = sadd.s32 %s184, 1
    %p188 = scmp.eq.s32.totalorder %s21, 1
    %p189 = scmp.ne.s32.totalorder %s184, %s186
    %p190 = scmp.eq.s32.totalorder %s21, 0
    %p191 = por %p189, %p190
    %p192 = scmp.ne.s32.totalorder %s184, %s186
    %p193 = scmp.eq.s32.totalorder %s26, 1
    %p194 = por %p192, %p193
    %p195 = scmp.ne.s32.totalorder %s186, %s187
    %p196 = scmp.eq.s32.totalorder %s26, 0
    %p197 = por %p195, %p196
    %p198 = scmp.ne.s32.totalorder %s186, %s187
    %p199 = scmp.eq.s32.totalorder %s27, 1
    %p200 = por %p198, %p199
    %p202 = scmp.ne.s32.totalorder %s187, %s201
    %p203 = scmp.eq.s32.totalorder %s27, 0
    %p204 = por %p202, %p203
    %s206 = sadd.s32 %s205, 1
    %p209 = scmp.eq.s32.totalorder %s21, 1
    %p210 = scmp.ne.s32.totalorder %s205, %s207
    %p211 = scmp.eq.s32.totalorder %s21, 0
    %p212 = por %p210, %p211
    %p213 = scmp.ne.s32.totalorder %s205, %s207
    %p214 = scmp.eq.s32.totalorder %s26, 1
    %p215 = por %p213, %p214
    %p216 = scmp.ne.s32.totalorder %s207, %s208
    %p217 = scmp.eq.s32.totalorder %s26, 0
    %p218 = por %p216, %p217
    %p219 = scmp.ne.s32.totalorder %s207, %s208
    %p220 = scmp.eq.s32.totalorder %s27, 1
    %p221 = por %p219, %p220
    %p223 = scmp.ne.s32.totalorder %s208, %s222
    %p224 = scmp.eq.s32.totalorder %s27, 0
    %p225 = por %p223, %p224
    %s227 = sadd.s32 %s226, 1
    %p230 = scmp.eq.s32.totalorder %s21, 1
    %p231 = scmp.ne.s32.totalorder %s226, %s228
    %p232 = scmp.eq.s32.totalorder %s21, 0
    %p233 = por %p231, %p232
    %p234 = scmp.ne.s32.totalorder %s226, %s228
    %p235 = scmp.eq.s32.totalorder %s26, 1
    %p236 = por %p234, %p235
    %p237 = scmp.ne.s32.totalorder %s228, %s229
    %p238 = scmp.eq.s32.totalorder %s26, 0
    %p239 = por %p237, %p238
    %p240 = scmp.ne.s32.totalorder %s228, %s229
    %p241 = scmp.eq.s32.totalorder %s27, 1
    %p242 = por %p240, %p241
    %p244 = scmp.ne.s32.totalorder %s229, %s243
    %p245 = scmp.eq.s32.totalorder %s27, 0
    %p246 = por %p244, %p245
    %s248 = sadd.s32 %s247, 1
    %p251 = scmp.eq.s32.totalorder %s21, 1
    %p252 = scmp.ne.s32.totalorder %s247, %s249
    %p253 = scmp.eq.s32.totalorder %s21, 0
    %p254 = por %p252, %p253
    %p255 = scmp.ne.s32.totalorder %s247, %s249
    %p256 = scmp.eq.s32.totalorder %s26, 1
    %p257 = por %p255, %p256
    %p258 = scmp.ne.s32.totalorder %s249, %s250
    %p259 = scmp.eq.s32.totalorder %s26, 0
    %p260 = por %p258, %p259
    %p261 = scmp.ne.s32.totalorder %s249, %s250
    %p262 = scmp.eq.s32.totalorder %s27, 1
    %p263 = por %p261, %p262
    %p265 = scmp.ne.s32.totalorder %s250, %s264
    %p266 = scmp.eq.s32.totalorder %s27, 0
    %p267 = por %p265, %p266
    %s269 = sadd.s32 %s268, 1
    %p272 = scmp.eq.s32.totalorder %s21, 1
    %p273 = scmp.ne.s32.totalorder %s268, %s270
    %p274 = scmp.eq.s32.totalorder %s21, 0
    %p275 = por %p273, %p274
    %p276 = scmp.ne.s32.totalorder %s268, %s270
    %p277 = scmp.eq.s32.totalorder %s26, 1
    %p278 = por %p276, %p277
    %p279 = scmp.ne.s32.totalorder %s270, %s271
    %p280 = scmp.eq.s32.totalorder %s26, 0
    %p281 = por %p279, %p280
    %p282 = scmp.ne.s32.totalorder %s270, %s271
    %p283 = scmp.eq.s32.totalorder %s27, 1
    %p284 = por %p282, %p283
    %p286 = scmp.ne.s32.totalorder %s271, %s285
    %p287 = scmp.eq.s32.totalorder %s27, 0
    %p288 = por %p286, %p287
    %s290 = sadd.s32 %s289, 1
    %p293 = scmp.eq.s32.totalorder %s21, 1
    %p294 = scmp.ne.s32.totalorder %s289, %s291
    %p295 = scmp.eq.s32.totalorder %s21, 0
    %p296 = por %p294, %p295
    %p297 = scmp.ne.s32.totalorder %s289, %s291
    %p298 = scmp.eq.s32.totalorder %s26, 1
    %p299 = por %p297, %p298
    %p300 = scmp.ne.s32.totalorder %s291, %s292
    %p301 = scmp.eq.s32.totalorder %s26, 0
    %p302 = por %p300, %p301
    %p303 = scmp.ne.s32.totalorder %s291, %s292
    %p304 = scmp.eq.s32.totalorder %s27, 1
    %p305 = por %p303, %p304
    %p307 = scmp.ne.s32.totalorder %s292, %s306
    %p308 = scmp.eq.s32.totalorder %s27, 0
    %p309 = por %p307, %p308
    %s311 = sadd.s32 %s310, 1
    %p314 = scmp.eq.s32.totalorder %s21, 1
    %p315 = scmp.ne.s32.totalorder %s310, %s312
    %p316 = scmp.eq.s32.totalorder %s21, 0
    %p317 = por %p315, %p316
    %p318 = scmp.ne.s32.totalorder %s310, %s312
    %p319 = scmp.eq.s32.totalorder %s26, 1
    %p320 = por %p318, %p319
    %p321 = scmp.ne.s32.totalorder %s312, %s313
    %p322 = scmp.eq.s32.totalorder %s26, 0
    %p323 = por %p321, %p322
    %p324 = scmp.ne.s32.totalorder %s312, %s313
    %p325 = scmp.eq.s32.totalorder %s27, 1
    %p326 = por %p324, %p325
    %p328 = scmp.ne.s32.totalorder %s313, %s327
    %p329 = scmp.eq.s32.totalorder %s27, 0
    %p330 = por %p328, %p329
    %s332 = sadd.s32 %s331, 1
    %p335 = scmp.eq.s32.totalorder %s21, 1
    %p336 = scmp.ne.s32.totalorder %s331, %s333
    %p337 = scmp.eq.s32.totalorder %s21, 0
    %p338 = por %p336, %p337
    %p339 = scmp.ne.s32.totalorder %s331, %s333
    %p340 = scmp.eq.s32.totalorder %s26, 1
    %p341 = por %p339, %p340
    %p342 = scmp.ne.s32.totalorder %s333, %s334
    %p343 = scmp.eq.s32.totalorder %s26, 0
    %p344 = por %p342, %p343
    %p345 = scmp.ne.s32.totalorder %s333, %s334
    %p346 = scmp.eq.s32.totalorder %s27, 1
    %p347 = por %p345, %p346
    %p349 = scmp.ne.s32.totalorder %s334, %s348
    %p350 = scmp.eq.s32.totalorder %s27, 0
    %p351 = por %p349, %p350
    %s353 = sadd.s32 %s352, 1
    %p356 = scmp.eq.s32.totalorder %s21, 1
    %p357 = scmp.ne.s32.totalorder %s352, %s354
    %p358 = scmp.eq.s32.totalorder %s21, 0
    %p359 = por %p357, %p358
    %p360 = scmp.ne.s32.totalorder %s352, %s354
    %p361 = scmp.eq.s32.totalorder %s26, 1
    %p362 = por %p360, %p361
    %p363 = scmp.ne.s32.totalorder %s354, %s355
    %p364 = scmp.eq.s32.totalorder %s26, 0
    %p365 = por %p363, %p364
    %p366 = scmp.ne.s32.totalorder %s354, %s355
    %p367 = scmp.eq.s32.totalorder %s27, 1
    %p368 = por %p366, %p367
    %p370 = scmp.ne.s32.totalorder %s355, %s369
    %p371 = scmp.eq.s32.totalorder %s27, 0
    %p372 = por %p370, %p371
    %s373 = ssub.s32 %s28, %s40
    %p374 = scmp.eq.s32.totalorder %s373, 0
    %s376 = sadd.s32 %s375, 1
    %s377 = scalar_select %p374, %s375, %s376
    %p380 = pneg %p374
    %p381 = scmp.eq.s32.totalorder %s21, 1
    %p382 = por %p380, %p381
    %p383 = scmp.ne.s32.totalorder %s375, %s378
    %p384 = scmp.eq.s32.totalorder %s21, 0
    %p385 = por %p383, %p384
    %p386 = scmp.ne.s32.totalorder %s375, %s378
    %p387 = scmp.eq.s32.totalorder %s26, 1
    %p388 = por %p386, %p387
    %p389 = scmp.ne.s32.totalorder %s378, %s379
    %p390 = scmp.eq.s32.totalorder %s26, 0
    %p391 = por %p389, %p390
    %p392 = scmp.ne.s32.totalorder %s378, %s379
    %p393 = scmp.eq.s32.totalorder %s27, 1
    %p394 = por %p392, %p393
    %p396 = scmp.ne.s32.totalorder %s379, %s395
    %p397 = scmp.eq.s32.totalorder %s27, 0
    %p398 = por %p396, %p397
    %p399 = scmp.le.s32.totalorder 1, %s21
    %p400 = scmp.lt.s32.totalorder %s21, 3
    %p401 = pnand %p399, %p400
    %p402 = pneg %p401
    // Predicated region
    $region9: #{a_call__.7} parent=5 // pred_check
      _
    $region10: #{a_call__.7} parent=5 // pred_check_branch
      %404 = sbr.rel (%p401) target = $region12
    $region11: #{a_call__.7} parent=5 // pred_region
      %s405 = ssub.s32 %s21, 1
      // Predicated region
      $region13: #{a_call__.7} parent=11 // pred_check
        %p406 = pneg %p134
      $region14: #{a_call__.7} parent=11 // pred_check_branch
        %408 = sbr.rel (%p406) target = $region16
      $region15: #{a_call__.7} parent=11 // pred_region
        _
      $region16: #{a_call__.7} parent=11 // pred_fallthru
        _
      // Predicated region
      $region17: #{a_call__.7} parent=11 // pred_check
        %p409 = pneg %p155
      $region18: #{a_call__.7} parent=11 // pred_check_branch
        %411 = sbr.rel (%p409) target = $region20
      $region19: #{a_call__.7} parent=11 // pred_region
        _
      $region20: #{a_call__.7} parent=11 // pred_fallthru
        _
      // Predicated region
      $region21: #{a_call__.7} parent=11 // pred_check
        %p412 = pneg %p176
      $region22: #{a_call__.7} parent=11 // pred_check_branch
        %414 = sbr.rel (%p412) target = $region24
      $region23: #{a_call__.7} parent=11 // pred_region
        _
      $region24: #{a_call__.7} parent=11 // pred_fallthru
        _
      // Predicated region
      $region25: #{a_call__.7} parent=11 // pred_check
        %p415 = pneg %p197
      $region26: #{a_call__.7} parent=11 // pred_check_branch
        %417 = sbr.rel (%p415) target = $region28
      $region27: #{a_call__.7} parent=11 // pred_region
        _
      $region28: #{a_call__.7} parent=11 // pred_fallthru
        _
      // Predicated region
      $region29: #{a_call__.7} parent=11 // pred_check
        %p418 = pneg %p218
      $region30: #{a_call__.7} parent=11 // pred_check_branch
        %420 = sbr.rel (%p418) target = $region32
      $region31: #{a_call__.7} parent=11 // pred_region
        _
      $region32: #{a_call__.7} parent=11 // pred_fallthru
        _
      // Predicated region
      $region33: #{a_call__.7} parent=11 // pred_check
        %p421 = pneg %p239
      $region34: #{a_call__.7} parent=11 // pred_check_branch
        %423 = sbr.rel (%p421) target = $region36
      $region35: #{a_call__.7} parent=11 // pred_region
        _
      $region36: #{a_call__.7} parent=11 // pred_fallthru
        _
      // Predicated region
      $region37: #{a_call__.7} parent=11 // pred_check
        %p424 = pneg %p260
      $region38: #{a_call__.7} parent=11 // pred_check_branch
        %426 = sbr.rel (%p424) target = $region40
      $region39: #{a_call__.7} parent=11 // pred_region
        _
      $region40: #{a_call__.7} parent=11 // pred_fallthru
        _
      // Predicated region
      $region41: #{a_call__.7} parent=11 // pred_check
        %p427 = pneg %p281
      $region42: #{a_call__.7} parent=11 // pred_check_branch
        %429 = sbr.rel (%p427) target = $region44
      $region43: #{a_call__.7} parent=11 // pred_region
        _
      $region44: #{a_call__.7} parent=11 // pred_fallthru
        _
      // Predicated region
      $region45: #{a_call__.7} parent=11 // pred_check
        %p430 = pneg %p302
      $region46: #{a_call__.7} parent=11 // pred_check_branch
        %432 = sbr.rel (%p430) target = $region48
      $region47: #{a_call__.7} parent=11 // pred_region
        _
      $region48: #{a_call__.7} parent=11 // pred_fallthru
        _
      // Predicated region
      $region49: #{a_call__.7} parent=11 // pred_check
        %p433 = pneg %p323
      $region50: #{a_call__.7} parent=11 // pred_check_branch
        %435 = sbr.rel (%p433) target = $region52
      $region51: #{a_call__.7} parent=11 // pred_region
        _
      $region52: #{a_call__.7} parent=11 // pred_fallthru
        _
      // Predicated region
      $region53: #{a_call__.7} parent=11 // pred_check
        %p436 = pneg %p344
      $region54: #{a_call__.7} parent=11 // pred_check_branch
        %438 = sbr.rel (%p436) target = $region56
      $region55: #{a_call__.7} parent=11 // pred_region
        _
      $region56: #{a_call__.7} parent=11 // pred_fallthru
        _
      // Predicated region
      $region57: #{a_call__.7} parent=11 // pred_check
        %p439 = pneg %p365
      $region58: #{a_call__.7} parent=11 // pred_check_branch
        %441 = sbr.rel (%p439) target = $region60
      $region59: #{a_call__.7} parent=11 // pred_region
        _
      $region60: #{a_call__.7} parent=11 // pred_fallthru
        _
    $region12: #{a_call__.7} parent=5 // pred_fallthru
      _
    %p442 = scmp.lt.s32.totalorder %s21, 2
    // Predicated region
    $region61: #{a_call__.7} parent=5 // pred_check
      %p443 = pneg %p442
    $region62: #{a_call__.7} parent=5 // pred_check_branch
      %445 = sbr.rel (%p443) target = $region64
    $region63: #{a_call__.7} parent=5 // pred_region
      // Predicated region
      $region65: #{a_call__.7} parent=63 // pred_check
        %p446 = pneg %p53
      $region66: #{a_call__.7} parent=63 // pred_check_branch
        %448 = sbr.rel (%p446) target = $region68
      $region67: #{a_call__.7} parent=63 // pred_region
        %p449 = scmp.lt.s32.totalorder %s28, 1
        %s450 = scalar_select %p449, %s28, 1
        %s451 = smul.addr %s450, 8
        %s452 = scalar_lea.vmem %s0, %s451
      $region68: #{a_call__.7} parent=63 // pred_fallthru
        _
      // Predicated region
      $region69: #{a_call__.7} parent=63 // pred_check
        %p453 = pneg %p81
      $region70: #{a_call__.7} parent=63 // pred_check_branch
        %455 = sbr.rel (%p453) target = $region72
      $region71: #{a_call__.7} parent=63 // pred_region
        %p456 = scmp.lt.s32.totalorder %s28, 1
        %s457 = scalar_select %p456, %s28, 1
        %p458 = scmp.lt.s32.totalorder %s29, 0
        %s459 = scalar_select %p458, %s29, 0
        %s460 = smul.addr %s457, 8
        %s461 = sadd.s32 %s459, %s460
        %s462 = smul.addr %s461, 4
        %s463 = scalar_lea.vmem %s1, %s462
      $region72: #{a_call__.7} parent=63 // pred_fallthru
        _
      // Predicated region
      $region73: #{a_call__.7} parent=63 // pred_check
        %p464 = pneg %p107
      $region74: #{a_call__.7} parent=63 // pred_check_branch
        %466 = sbr.rel (%p464) target = $region76
      $region75: #{a_call__.7} parent=63 // pred_region
        %p467 = scmp.lt.s32.totalorder %s28, 1
        %s468 = scalar_select %p467, %s28, 1
        %s469 = scalar_lea.vmem %s2, %s468
      $region76: #{a_call__.7} parent=63 // pred_fallthru
        _
    $region64: #{a_call__.7} parent=5 // pred_fallthru
      _
    %p470 = scmp.le.s32.totalorder 1, %s21
    %p471 = scmp.lt.s32.totalorder %s21, 3
    %p472 = pnand %p470, %p471
    %p473 = pneg %p472
    // Predicated region
    $region77: #{a_call__.7} parent=5 // pred_check
      _
    $region78: #{a_call__.7} parent=5 // pred_check_branch
      %475 = sbr.rel (%p472) target = $region80
    $region79: #{a_call__.7} parent=5 // pred_region
      %s476 = ssub.s32 %s21, 1
      %p477 = scmp.lt.s32.totalorder %s30, 1
      %s478 = scalar_select %p477, %s30, 1
      %s479 = smul.addr %s478, 8
      %s480 = scalar_lea.vmem %s0, %s479
      %p481 = pneg %p59
      %p482 = pneg %p56
      %p483 = scmp.lt.s32.totalorder %s30, 1
      %s484 = scalar_select %p483, %s30, 1
      %p485 = scmp.lt.s32.totalorder %s31, 0
      %s486 = scalar_select %p485, %s31, 0
      %s487 = smul.addr %s484, 8
      %s488 = sadd.s32 %s486, %s487
      %s489 = smul.addr %s488, 4
      %s490 = scalar_lea.vmem %s1, %s489
      %p491 = pneg %p87
      %p492 = pneg %p84
      %p493 = scmp.lt.s32.totalorder %s30, 1
      %s494 = scalar_select %p493, %s30, 1
      %s495 = scalar_lea.vmem %s2, %s494
      %p496 = pneg %p113
      %p497 = pneg %p110
      %p498 = pneg %p134
      %p499 = pneg %p131
      %p500 = pneg %p155
      %p501 = pneg %p152
      %p502 = pneg %p176
      %p503 = pneg %p173
      %p504 = pneg %p197
      %p505 = pneg %p194
      %p506 = pneg %p218
      %p507 = pneg %p215
      %p508 = pneg %p239
      %p509 = pneg %p236
      %p510 = pneg %p260
      %p511 = pneg %p257
      %p512 = pneg %p281
      %p513 = pneg %p278
      %p514 = pneg %p302
      %p515 = pneg %p299
      %p516 = pneg %p323
      %p517 = pneg %p320
      %p518 = pneg %p344
      %p519 = pneg %p341
      %p520 = pneg %p365
      %p521 = pneg %p362
      %p522 = pneg %p391
      %p523 = pneg %p388
      %p524 = scmp.lt.s32.totalorder %s30, 1
      %s525 = scalar_select %p524, %s30, 1
      %s526 = smul.addr %s525, 8
      %s527 = scalar_lea.vmem %s15, %s526
      %p528 = scmp.lt.s32.totalorder %s30, 1
      %s529 = scalar_select %p528, %s30, 1
      %s530 = smul.addr %s529, 8
      %s531 = scalar_lea.vmem %s0, %s530
      %p532 = scmp.lt.s32.totalorder %s30, 1
      %s533 = scalar_select %p532, %s30, 1
      %p534 = scmp.lt.s32.totalorder %s31, 0
      %s535 = scalar_select %p534, %s31, 0
      %s536 = smul.addr %s533, 8
      %s537 = sadd.s32 %s535, %s536
      %s538 = smul.addr %s537, 4
      %s539 = scalar_lea.vmem %s1, %s538
      %p540 = scmp.lt.s32.totalorder %s30, 1
      %s541 = scalar_select %p540, %s30, 1
      %s542 = scalar_lea.vmem %s2, %s541
      %p543 = scmp.lt.s32.totalorder %s30, 1
      %s544 = scalar_select %p543, %s30, 1
      %s545 = smul.addr %s544, 8
      %s546 = scalar_lea.vmem %s15, %s545
      %p548 = scmp.eq.s32.totalorder %s31, 0
      // Predicated region
      $region81: #{a_call__.7} parent=79 // pred_check
        %p549 = pneg %p548
      $region82: #{a_call__.7} parent=79 // pred_check_branch
        %551 = sbr.rel (%p549) target = $region84
      $region83: #{a_call__.7} parent=79 // pred_region
        %v552 = vld [vmem:[%s531] sm:$0xff]
        %v553 = vpack.c.bf16 %v552, %v552
        %v554 = vld [vmem:[%s3] sm:$0xf]
        %v555 = vld [vmem:[%s3 + $0x4] sm:$0xf]
        %v556 = vld [vmem:[%s3 + $0x8] sm:$0xf]
        %v557 = vld [vmem:[%s3 + $0xc] sm:$0xf]
        %v558 = vld [vmem:[%s4] sm:$0x1]
        %v560 = vlaneseq
        %v561 = vshrl.u32 %v560, 7
        %v562 = vsub.s32 0, %v561
        %v563 = vrot.slane %v558, %v562
        %v569 = vunpack.c.l.b16 %v554
        %v570 = vunpack.c.l.b16 %v555
        %v571 = vunpack.c.l.b16 %v556
        %v572 = vunpack.c.l.b16 %v557
        %v573 = vpack.c.b16 %v570, %v569
        %v574 = vpack.c.b16 %v572, %v571
        %vm577 = vcmask 261120
        %v579 = vsel %vm577, %v553, 0
        %581 = vmatprep.subr.bf16.mxu0 0
        %582 = vmatpush1.bf16.msra.mxu0 0
        %583 = vmatprep.subr.bf16.mxu0 0
        %584 = vmatpush1.bf16.msra.mxu0 0
        %585 = vmatprep.subr.bf16.mxu0 0
        %586 = vmatpush1.bf16.msra.mxu0 0
        %587 = vmatprep.subr.bf16.mxu0 0
        %588 = vmatpush1.bf16.msra.mxu0 0
        %589 = vmatprep.subr.bf16.mxu0 0
        %590 = vmatpush1.bf16.msra.mxu0 0
        %591 = vmatprep.subr.bf16.mxu0 0
        %592 = vmatpush1.bf16.msra.mxu0 0
        %593 = vmatprep.subr.bf16.mxu0 0
        %594 = vmatpush1.bf16.msra.mxu0 %v574
        %595 = vmatprep.subr.bf16.mxu0 0
        %596 = vmatpush1.bf16.msra.mxu0 %v573
        %597 = vmatprep.subr.bf16.mxu0 0
        %598 = vmatpush2.bf16.msra.mxu0 0
        %599 = vmatprep.subr.bf16.mxu0 0
        %600 = vmatpush2.bf16.msra.mxu0 0
        %601 = vmatprep.subr.bf16.mxu0 0
        %602 = vmatpush2.bf16.msra.mxu0 0
        %603 = vmatprep.subr.bf16.mxu0 0
        %604 = vmatpush2.bf16.msra.mxu0 0
        %605 = vmatprep.subr.bf16.mxu0 0
        %606 = vmatpush2.bf16.msra.mxu0 0
        %607 = vmatprep.subr.bf16.mxu0 0
        %608 = vmatpush2.bf16.msra.mxu0 0
        %609 = vmatprep.subr.bf16.mxu0 0
        %610 = vmatpush2.bf16.msra.mxu0 0
        %611 = vmatprep.subr.bf16.mxu0 0
        %612 = vmatpush2.bf16.msra.mxu0 0
        %613 = vmatprep.mubr.bf16.mxu0 0
        %614 = vmatmul.mubr.bf16.gmra.mxu0 %v579
        %v615 = vpop.f32.mrf.mxu0
        %v616 = vadd.f32 %v563, %v615
        %v617 = vpop.f32.mrf.mxu0
        %v618 = vpop.f32.mrf.mxu0
        %v619 = vpop.f32.mrf.mxu0
        %620 = vdwg.mxu0
        %v622 = vcombine.high %v616, %v616
        %v624 = vunpack.c.l.s4 1966171168
        %v625 = vunpack.c.0.s8 %v624
        %v626 = vlaneseq
        %v627 = vshrl.u32 %v626, 7
        %v628 = vsub.s32 %v625, %v627
        %v629 = vrot.slane %v616, %v628
        %v631 = vunpack.c.l.s4 1966171168
        %v632 = vunpack.c.0.s8 %v631
        %v633 = vlaneseq
        %v634 = vshrl.u32 %v633, 7
        %v635 = vsub.s32 %v632, %v634
        %v636 = vrot.slane %v622, %v635
        %v637 = vcombine.high %v629, %v629
        %v638 = vcombine.high %v636, %v636
        %v640 = vunpack.c.l.s4 1966171168
        %v641 = vunpack.c.0.s8 %v640
        %v642 = vlaneseq
        %v643 = vshrl.u32 %v642, 7
        %v644 = vsub.s32 %v641, %v643
        %v645 = vrot.slane %v629, %v644
        %v647 = vunpack.c.l.s4 1966171168
        %v648 = vunpack.c.0.s8 %v647
        %v649 = vlaneseq
        %v650 = vshrl.u32 %v649, 7
        %v651 = vsub.s32 %v648, %v650
        %v652 = vrot.slane %v636, %v651
        %v654 = vunpack.c.l.s4 1966171168
        %v655 = vunpack.c.0.s8 %v654
        %v656 = vlaneseq
        %v657 = vshrl.u32 %v656, 7
        %v658 = vsub.s32 %v655, %v657
        %v659 = vrot.slane %v637, %v658
        %v661 = vunpack.c.l.s4 1966171168
        %v662 = vunpack.c.0.s8 %v661
        %v663 = vlaneseq
        %v664 = vshrl.u32 %v663, 7
        %v665 = vsub.s32 %v662, %v664
        %v666 = vrot.slane %v638, %v665
        %v667 = vcombine.high %v645, %v645
        %v668 = vcombine.high %v652, %v652
        %v669 = vcombine.high %v659, %v659
        %v670 = vcombine.high %v666, %v666
        %v679 = vlaneseq
        %v680 = vshrl.u32 %v679, 7
        %v681 = vsub.s32 0, %v680
        %v682 = vrot.slane %v645, %v681
        %v683 = vlaneseq
        %v684 = vshrl.u32 %v683, 7
        %v685 = vsub.s32 0, %v684
        %v686 = vrot.slane %v659, %v685
        %v687 = vlaneseq
        %v688 = vshrl.u32 %v687, 7
        %v689 = vsub.s32 0, %v688
        %v690 = vrot.slane %v667, %v689
        %v691 = vlaneseq
        %v692 = vshrl.u32 %v691, 7
        %v693 = vsub.s32 0, %v692
        %v694 = vrot.slane %v669, %v693
        %v695 = vlaneseq
        %v696 = vshrl.u32 %v695, 7
        %v697 = vsub.s32 0, %v696
        %v698 = vrot.slane %v652, %v697
        %v699 = vlaneseq
        %v700 = vshrl.u32 %v699, 7
        %v701 = vsub.s32 0, %v700
        %v702 = vrot.slane %v666, %v701
        %v703 = vlaneseq
        %v704 = vshrl.u32 %v703, 7
        %v705 = vsub.s32 0, %v704
        %v706 = vrot.slane %v668, %v705
        %v707 = vlaneseq
        %v708 = vshrl.u32 %v707, 7
        %v709 = vsub.s32 0, %v708
        %v710 = vrot.slane %v670, %v709
        %711 = vrot.lane.b32.xlu0 %v682, 120
        %v712 = vpop.permute.xlu0 %711
        %713 = vrot.lane.b32.xlu0 %v686, 120
        %v714 = vpop.permute.xlu0 %713
        %715 = vrot.lane.b32.xlu0 %v690, 120
        %v716 = vpop.permute.xlu0 %715
        %717 = vrot.lane.b32.xlu0 %v694, 120
        %v718 = vpop.permute.xlu0 %717
        %719 = vrot.lane.b32.xlu0 %v698, 120
        %v720 = vpop.permute.xlu0 %719
        %721 = vrot.lane.b32.xlu0 %v702, 120
        %v722 = vpop.permute.xlu0 %721
        %723 = vrot.lane.b32.xlu0 %v706, 120
        %v724 = vpop.permute.xlu0 %723
        %725 = vrot.lane.b32.xlu0 %v710, 120
        %v726 = vpop.permute.xlu0 %725
        %735 = vrot.lane.b32.xlu0 %v682, 112
        %v736 = vpop.permute.xlu0 %735
        %737 = vrot.lane.b32.xlu0 %v686, 112
        %v738 = vpop.permute.xlu0 %737
        %739 = vrot.lane.b32.xlu0 %v690, 112
        %v740 = vpop.permute.xlu0 %739
        %741 = vrot.lane.b32.xlu0 %v694, 112
        %v742 = vpop.permute.xlu0 %741
        %743 = vrot.lane.b32.xlu0 %v698, 112
        %v744 = vpop.permute.xlu0 %743
        %745 = vrot.lane.b32.xlu0 %v702, 112
        %v746 = vpop.permute.xlu0 %745
        %747 = vrot.lane.b32.xlu0 %v706, 112
        %v748 = vpop.permute.xlu0 %747
        %749 = vrot.lane.b32.xlu0 %v710, 112
        %v750 = vpop.permute.xlu0 %749
        %759 = vrot.lane.b32.xlu0 %v682, 104
        %v760 = vpop.permute.xlu0 %759
        %761 = vrot.lane.b32.xlu0 %v686, 104
        %v762 = vpop.permute.xlu0 %761
        %763 = vrot.lane.b32.xlu0 %v690, 104
        %v764 = vpop.permute.xlu0 %763
        %765 = vrot.lane.b32.xlu0 %v694, 104
        %v766 = vpop.permute.xlu0 %765
        %767 = vrot.lane.b32.xlu0 %v698, 104
        %v768 = vpop.permute.xlu0 %767
        %769 = vrot.lane.b32.xlu0 %v702, 104
        %v770 = vpop.permute.xlu0 %769
        %771 = vrot.lane.b32.xlu0 %v706, 104
        %v772 = vpop.permute.xlu0 %771
        %773 = vrot.lane.b32.xlu0 %v710, 104
        %v774 = vpop.permute.xlu0 %773
        %vm783 = vcmask 1040384
        %v784 = vsel %vm783, %v645, %v712
        %v785 = vsel %vm783, %v659, %v714
        %v786 = vsel %vm783, %v667, %v716
        %v787 = vsel %vm783, %v669, %v718
        %v788 = vsel %vm783, %v652, %v720
        %v789 = vsel %vm783, %v666, %v722
        %v790 = vsel %vm783, %v668, %v724
        %v791 = vsel %vm783, %v670, %v726
        %vm792 = vcmask 1041408
        %v793 = vsel %vm792, %v784, %v736
        %v794 = vsel %vm792, %v785, %v738
        %v795 = vsel %vm792, %v786, %v740
        %v796 = vsel %vm792, %v787, %v742
        %v797 = vsel %vm792, %v788, %v744
        %v798 = vsel %vm792, %v789, %v746
        %v799 = vsel %vm792, %v790, %v748
        %v800 = vsel %vm792, %v791, %v750
        %vm801 = vcmask 1042432
        %v802 = vsel %vm801, %v793, %v760
        %v803 = vsel %vm801, %v794, %v762
        %v804 = vsel %vm801, %v795, %v764
        %v805 = vsel %vm801, %v796, %v766
        %v806 = vsel %vm801, %v797, %v768
        %v807 = vsel %vm801, %v798, %v770
        %v808 = vsel %vm801, %v799, %v772
        %v809 = vsel %vm801, %v800, %v774
        %v810 = vpack.c.bf16 %v802, %v802
        %v811 = vpack.c.bf16 %v803, %v803
        %v812 = vpack.c.bf16 %v804, %v804
        %v813 = vpack.c.bf16 %v805, %v805
        %v814 = vpack.c.bf16 %v806, %v806
        %v815 = vpack.c.bf16 %v807, %v807
        %v816 = vpack.c.bf16 %v808, %v808
        %v817 = vpack.c.bf16 %v809, %v809
        %vm818 = vcmask 58368
        %819 = vst.msk [vmem:[#allocation2] sm:$0x3] %vm818, %v810
        %820 = vst.msk [vmem:[#allocation2 + $0x2] sm:$0x3] %vm818, %v811
        %821 = vst.msk [vmem:[#allocation2 + $0x4] sm:$0x3] %vm818, %v812
        %822 = vst.msk [vmem:[#allocation2 + $0x6] sm:$0x3] %vm818, %v813
        %823 = vst.msk [vmem:[#allocation2 + $0x8] sm:$0x3] %vm818, %v814
        %824 = vst.msk [vmem:[#allocation2 + $0xa] sm:$0x3] %vm818, %v815
        %825 = vst.msk [vmem:[#allocation2 + $0xc] sm:$0x3] %vm818, %v816
        %826 = vst.msk [vmem:[#allocation2 + $0xe] sm:$0x3] %vm818, %v817
        %827 = vrot.lane.b32.xlu0 %v616, 120
        %v828 = vpop.permute.xlu0 %827
        %830 = vrot.lane.b32.xlu0 %v616, 112
        %v831 = vpop.permute.xlu0 %830
        %833 = vrot.lane.b32.xlu0 %v616, 104
        %v834 = vpop.permute.xlu0 %833
        %v836 = vpack.c.bf16 %v616, %v616
        %v837 = vpack.c.bf16 %v828, %v828
        %v838 = vpack.c.bf16 %v831, %v831
        %v839 = vpack.c.bf16 %v834, %v834
        %v844 = vunpack.c.l.b16 %v836
        %v845 = vunpack.c.l.b16 %v837
        %v846 = vunpack.c.l.b16 %v838
        %v847 = vunpack.c.l.b16 %v839
        %v848 = vpack.c.b16 %v844, %v844
        %v849 = vpack.c.b16 %v845, %v845
        %v850 = vpack.c.b16 %v846, %v846
        %v851 = vpack.c.b16 %v847, %v847
        %852 = vrot.lane.b32.xlu0 %v848, 96
        %v853 = vpop.permute.xlu0 %852
        %854 = vrot.lane.b32.xlu0 %v849, 96
        %v855 = vpop.permute.xlu0 %854
        %856 = vrot.lane.b32.xlu0 %v850, 96
        %v857 = vpop.permute.xlu0 %856
        %858 = vrot.lane.b32.xlu0 %v851, 96
        %v859 = vpop.permute.xlu0 %858
        %vm864 = vcmask 60416
        %865 = vst.msk [vmem:[#allocation3] sm:$0xf] %vm864, %v853
        %866 = vst.msk [vmem:[#allocation3 + $0x4] sm:$0xf] %vm864, %v855
        %867 = vst.msk [vmem:[#allocation3 + $0x8] sm:$0xf] %vm864, %v857
        %868 = vst.msk [vmem:[#allocation3 + $0xc] sm:$0xf] %vm864, %v859
        %869 = vrot.lane.b32.xlu0 %v848, 64
        %v870 = vpop.permute.xlu0 %869
        %871 = vrot.lane.b32.xlu0 %v849, 64
        %v872 = vpop.permute.xlu0 %871
        %873 = vrot.lane.b32.xlu0 %v850, 64
        %v874 = vpop.permute.xlu0 %873
        %875 = vrot.lane.b32.xlu0 %v851, 64
        %v876 = vpop.permute.xlu0 %875
        %881 = vst.msk [vmem:[#allocation4] sm:$0xf] %vm864, %v870
        %882 = vst.msk [vmem:[#allocation4 + $0x4] sm:$0xf] %vm864, %v872
        %883 = vst.msk [vmem:[#allocation4 + $0x8] sm:$0xf] %vm864, %v874
        %884 = vst.msk [vmem:[#allocation4 + $0xc] sm:$0xf] %vm864, %v876
        %vm885 = vcmask 3072
        %886 = vst.msk [vmem:[#allocation5] sm:$0xf] %vm885, -inf
        %887 = vst.msk [vmem:[#allocation5 + $0x4] sm:$0xf] %vm885, -inf
        %888 = vst.msk [vmem:[#allocation5 + $0x8] sm:$0xf] %vm885, -inf
        %889 = vst.msk [vmem:[#allocation5 + $0xc] sm:$0xf] %vm885, -inf
        %890 = vst.msk [vmem:[#allocation5 + $0x10] sm:$0xf] %vm885, -inf
        %891 = vst.msk [vmem:[#allocation5 + $0x14] sm:$0xf] %vm885, -inf
        %892 = vst.msk [vmem:[#allocation5 + $0x18] sm:$0xf] %vm885, -inf
        %893 = vst.msk [vmem:[#allocation5 + $0x1c] sm:$0xf] %vm885, -inf
        %894 = vst.msk [vmem:[#allocation6] sm:$0xf] %vm885, 0.0
        %895 = vst.msk [vmem:[#allocation6 + $0x4] sm:$0xf] %vm885, 0.0
        %896 = vst.msk [vmem:[#allocation6 + $0x8] sm:$0xf] %vm885, 0.0
        %897 = vst.msk [vmem:[#allocation6 + $0xc] sm:$0xf] %vm885, 0.0
        %898 = vst.msk [vmem:[#allocation6 + $0x10] sm:$0xf] %vm885, 0.0
        %899 = vst.msk [vmem:[#allocation6 + $0x14] sm:$0xf] %vm885, 0.0
        %900 = vst.msk [vmem:[#allocation6 + $0x18] sm:$0xf] %vm885, 0.0
        %901 = vst.msk [vmem:[#allocation6 + $0x1c] sm:$0xf] %vm885, 0.0
        %902 = vst.msk [vmem:[#allocation7] sm:$0xf] %vm864, 0.0
        %903 = vst.msk [vmem:[#allocation7 + $0x4] sm:$0xf] %vm864, 0.0
        %904 = vst.msk [vmem:[#allocation7 + $0x8] sm:$0xf] %vm864, 0.0
        %905 = vst.msk [vmem:[#allocation7 + $0xc] sm:$0xf] %vm864, 0.0
        %906 = vst.msk [vmem:[#allocation7 + $0x10] sm:$0xf] %vm864, 0.0
        %907 = vst.msk [vmem:[#allocation7 + $0x14] sm:$0xf] %vm864, 0.0
        %908 = vst.msk [vmem:[#allocation7 + $0x18] sm:$0xf] %vm864, 0.0
        %909 = vst.msk [vmem:[#allocation7 + $0x1c] sm:$0xf] %vm864, 0.0
      $region84: #{a_call__.7} parent=79 // pred_fallthru
        _
      %s910 = smul.u32 %s31, 8
      %v911 = vld [vmem:[%s539] sm:$0xf]
      %v912 = vld [vmem:[%s539 + $0x4] sm:$0xf]
      %v913 = vld [vmem:[%s539 + $0x8] sm:$0xf]
      %v914 = vld [vmem:[%s539 + $0xc] sm:$0xf]
      %v915 = vld [vmem:[%s539 + $0x10] sm:$0xf]
      %v916 = vld [vmem:[%s539 + $0x14] sm:$0xf]
      %v917 = vld [vmem:[%s539 + $0x18] sm:$0xf]
      %v918 = vld [vmem:[%s539 + $0x1c] sm:$0xf]
      %v919 = vld [vmem:[#allocation2] sm:$0x3]
      %v920 = vld [vmem:[#allocation2 + $0x2] sm:$0x3]
      %v921 = vld [vmem:[#allocation2 + $0x4] sm:$0x3]
      %v922 = vld [vmem:[#allocation2 + $0x6] sm:$0x3]
      %v923 = vld [vmem:[#allocation2 + $0x8] sm:$0x3]
      %v924 = vld [vmem:[#allocation2 + $0xa] sm:$0x3]
      %v925 = vld [vmem:[#allocation2 + $0xc] sm:$0x3]
      %v926 = vld [vmem:[#allocation2 + $0xe] sm:$0x3]
      %vm927 = vcmask 64512
      %v929 = vsel %vm927, %v919, 0
      %v932 = vsel %vm927, %v911, 0
      %934 = vmatprep.subr.bf16.mxu0 0
      %935 = vmatpush1.bf16.xpose.msra.mxu0 0
      %936 = vmatprep.subr.bf16.mxu0 0
      %937 = vmatpush1.bf16.xpose.msra.mxu0 0
      %938 = vmatprep.subr.bf16.mxu0 0
      %939 = vmatpush1.bf16.xpose.msra.mxu0 0
      %940 = vmatprep.subr.bf16.mxu0 0
      %941 = vmatpush1.bf16.xpose.msra.mxu0 0
      %942 = vmatprep.subr.bf16.mxu0 0
      %943 = vmatpush1.bf16.xpose.msra.mxu0 0
      %944 = vmatprep.subr.bf16.mxu0 0
      %945 = vmatpush1.bf16.xpose.msra.mxu0 0
      %946 = vmatprep.subr.bf16.mxu0 0
      %947 = vmatpush1.bf16.xpose.msra.mxu0 0
      %948 = vmatprep.subr.bf16.mxu0 0
      %949 = vmatpush1.bf16.xpose.msra.mxu0 %v932
      %950 = vmatprep.subr.bf16.mxu0 0
      %951 = vmatpush2.bf16.xpose.msra.mxu0 0
      %952 = vmatprep.subr.bf16.mxu0 0
      %953 = vmatpush2.bf16.xpose.msra.mxu0 0
      %954 = vmatprep.subr.bf16.mxu0 0
      %955 = vmatpush2.bf16.xpose.msra.mxu0 0
      %956 = vmatprep.subr.bf16.mxu0 0
      %957 = vmatpush2.bf16.xpose.msra.mxu0 0
      %958 = vmatprep.subr.bf16.mxu0 0
      %959 = vmatpush2.bf16.xpose.msra.mxu0 0
      %960 = vmatprep.subr.bf16.mxu0 0
      %961 = vmatpush2.bf16.xpose.msra.mxu0 0
      %962 = vmatprep.subr.bf16.mxu0 0
      %963 = vmatpush2.bf16.xpose.msra.mxu0 0
      %964 = vmatprep.subr.bf16.mxu0 0
      %965 = vmatpush2.bf16.xpose.msra.mxu0 0
      %966 = vmatprep.mubr.bf16.mxu0 0
      %967 = vmatmul.mubr.bf16.gmra.mxu0 %v929
      %v968 = vpop.f32.mrf.mxu0
      %v969 = vadd.f32 0.0, %v968
      %v970 = vpop.f32.mrf.mxu0
      %v971 = vpop.f32.mrf.mxu0
      %v972 = vpop.f32.mrf.mxu0
      %973 = vdwg.mxu0
      %v975 = vsel %vm927, %v920, 0
      %v978 = vsel %vm927, %v912, 0
      %980 = vmatprep.subr.bf16.mxu0 0
      %981 = vmatpush1.bf16.xpose.msra.mxu0 0
      %982 = vmatprep.subr.bf16.mxu0 0
      %983 = vmatpush1.bf16.xpose.msra.mxu0 0
      %984 = vmatprep.subr.bf16.mxu0 0
      %985 = vmatpush1.bf16.xpose.msra.mxu0 0
      %986 = vmatprep.subr.bf16.mxu0 0
      %987 = vmatpush1.bf16.xpose.msra.mxu0 0
      %988 = vmatprep.subr.bf16.mxu0 0
      %989 = vmatpush1.bf16.xpose.msra.mxu0 0
      %990 = vmatprep.subr.bf16.mxu0 0
      %991 = vmatpush1.bf16.xpose.msra.mxu0 0
      %992 = vmatprep.subr.bf16.mxu0 0
      %993 = vmatpush1.bf16.xpose.msra.mxu0 0
      %994 = vmatprep.subr.bf16.mxu0 0
      %995 = vmatpush1.bf16.xpose.msra.mxu0 %v978
      %996 = vmatprep.subr.bf16.mxu0 0
      %997 = vmatpush2.bf16.xpose.msra.mxu0 0
      %998 = vmatprep.subr.bf16.mxu0 0
      %999 = vmatpush2.bf16.xpose.msra.mxu0 0
      %1000 = vmatprep.subr.bf16.mxu0 0
      %1001 = vmatpush2.bf16.xpose.msra.mxu0 0
      %1002 = vmatprep.subr.bf16.mxu0 0
      %1003 = vmatpush2.bf16.xpose.msra.mxu0 0
      %1004 = vmatprep.subr.bf16.mxu0 0
      %1005 = vmatpush2.bf16.xpose.msra.mxu0 0
      %1006 = vmatprep.subr.bf16.mxu0 0
      %1007 = vmatpush2.bf16.xpose.msra.mxu0 0
      %1008 = vmatprep.subr.bf16.mxu0 0
      %1009 = vmatpush2.bf16.xpose.msra.mxu0 0
      %1010 = vmatprep.subr.bf16.mxu0 0
      %1011 = vmatpush2.bf16.xpose.msra.mxu0 0
      %1012 = vmatprep.mubr.bf16.mxu0 0
      %1013 = vmatmul.mubr.bf16.gmra.mxu0 %v975
      %v1014 = vpop.f32.mrf.mxu0
      %v1015 = vadd.f32 0.0, %v1014
      %v1016 = vpop.f32.mrf.mxu0
      %v1017 = vpop.f32.mrf.mxu0
      %v1018 = vpop.f32.mrf.mxu0
      %1019 = vdwg.mxu0
      %v1021 = vsel %vm927, %v921, 0
      %v1024 = vsel %vm927, %v913, 0
      %1026 = vmatprep.subr.bf16.mxu0 0
      %1027 = vmatpush1.bf16.xpose.msra.mxu0 0
      %1028 = vmatprep.subr.bf16.mxu0 0
      %1029 = vmatpush1.bf16.xpose.msra.mxu0 0
      %1030 = vmatprep.subr.bf16.mxu0 0
      %1031 = vmatpush1.bf16.xpose.msra.mxu0 0
      %1032 = vmatprep.subr.bf16.mxu0 0
      %1033 = vmatpush1.bf16.xpose.msra.mxu0 0
      %1034 = vmatprep.subr.bf16.mxu0 0
      %1035 = vmatpush1.bf16.xpose.msra.mxu0 0
      %1036 = vmatprep.subr.bf16.mxu0 0
      %1037 = vmatpush1.bf16.xpose.msra.mxu0 0
      %1038 = vmatprep.subr.bf16.mxu0 0
      %1039 = vmatpush1.bf16.xpose.msra.mxu0 0
      %1040 = vmatprep.subr.bf16.mxu0 0
      %1041 = vmatpush1.bf16.xpose.msra.mxu0 %v1024
      %1042 = vmatprep.subr.bf16.mxu0 0
      %1043 = vmatpush2.bf16.xpose.msra.mxu0 0
      %1044 = vmatprep.subr.bf16.mxu0 0
      %1045 = vmatpush2.bf16.xpose.msra.mxu0 0
      %1046 = vmatprep.subr.bf16.mxu0 0
      %1047 = vmatpush2.bf16.xpose.msra.mxu0 0
      %1048 = vmatprep.subr.bf16.mxu0 0
      %1049 = vmatpush2.bf16.xpose.msra.mxu0 0
      %1050 = vmatprep.subr.bf16.mxu0 0
      %1051 = vmatpush2.bf16.xpose.msra.mxu0 0
      %1052 = vmatprep.subr.bf16.mxu0 0
      %1053 = vmatpush2.bf16.xpose.msra.mxu0 0
      %1054 = vmatprep.subr.bf16.mxu0 0
      %1055 = vmatpush2.bf16.xpose.msra.mxu0 0
      %1056 = vmatprep.subr.bf16.mxu0 0
      %1057 = vmatpush2.bf16.xpose.msra.mxu0 0
      %1058 = vmatprep.mubr.bf16.mxu0 0
      %1059 = vmatmul.mubr.bf16.gmra.mxu0 %v1021
      %v1060 = vpop.f32.mrf.mxu0
      %v1061 = vadd.f32 0.0, %v1060
      %v1062 = vpop.f32.mrf.mxu0
      %v1063 = vpop.f32.mrf.mxu0
      %v1064 = vpop.f32.mrf.mxu0
      %1065 = vdwg.mxu0
      %v1067 = vsel %vm927, %v922, 0
      %v1070 = vsel %vm927, %v914, 0
      %1072 = vmatprep.subr.bf16.mxu0 0
      %1073 = vmatpush1.bf16.xpose.msra.mxu0 0
      %1074 = vmatprep.subr.bf16.mxu0 0
      %1075 = vmatpush1.bf16.xpose.msra.mxu0 0
      %1076 = vmatprep.subr.bf16.mxu0 0
      %1077 = vmatpush1.bf16.xpose.msra.mxu0 0
      %1078 = vmatprep.subr.bf16.mxu0 0
      %1079 = vmatpush1.bf16.xpose.msra.mxu0 0
      %1080 = vmatprep.subr.bf16.mxu0 0
      %1081 = vmatpush1.bf16.xpose.msra.mxu0 0
      %1082 = vmatprep.subr.bf16.mxu0 0
      %1083 = vmatpush1.bf16.xpose.msra.mxu0 0
      %1084 = vmatprep.subr.bf16.mxu0 0
      %1085 = vmatpush1.bf16.xpose.msra.mxu0 0
      %1086 = vmatprep.subr.bf16.mxu0 0
      %1087 = vmatpush1.bf16.xpose.msra.mxu0 %v1070
      %1088 = vmatprep.subr.bf16.mxu0 0
      %1089 = vmatpush2.bf16.xpose.msra.mxu0 0
      %1090 = vmatprep.subr.bf16.mxu0 0
      %1091 = vmatpush2.bf16.xpose.msra.mxu0 0
      %1092 = vmatprep.subr.bf16.mxu0 0
      %1093 = vmatpush2.bf16.xpose.msra.mxu0 0
      %1094 = vmatprep.subr.bf16.mxu0 0
      %1095 = vmatpush2.bf16.xpose.msra.mxu0 0
      %1096 = vmatprep.subr.bf16.mxu0 0
      %1097 = vmatpush2.bf16.xpose.msra.mxu0 0
      %1098 = vmatprep.subr.bf16.mxu0 0
      %1099 = vmatpush2.bf16.xpose.msra.mxu0 0
      %1100 = vmatprep.subr.bf16.mxu0 0
      %1101 = vmatpush2.bf16.xpose.msra.mxu0 0
      %1102 = vmatprep.subr.bf16.mxu0 0
      %1103 = vmatpush2.bf16.xpose.msra.mxu0 0
      %1104 = vmatprep.mubr.bf16.mxu0 0
      %1105 = vmatmul.mubr.bf16.gmra.mxu0 %v1067
      %v1106 = vpop.f32.mrf.mxu0
      %v1107 = vadd.f32 0.0, %v1106
      %v1108 = vpop.f32.mrf.mxu0
      %v1109 = vpop.f32.mrf.mxu0
      %v1110 = vpop.f32.mrf.mxu0
      %1111 = vdwg.mxu0
      %v1113 = vsel %vm927, %v923, 0
      %v1116 = vsel %vm927, %v915, 0
      %1118 = vmatprep.subr.bf16.mxu0 0
      %1119 = vmatpush1.bf16.xpose.msra.mxu0 0
      %1120 = vmatprep.subr.bf16.mxu0 0
      %1121 = vmatpush1.bf16.xpose.msra.mxu0 0
      %1122 = vmatprep.subr.bf16.mxu0 0
      %1123 = vmatpush1.bf16.xpose.msra.mxu0 0
      %1124 = vmatprep.subr.bf16.mxu0 0
      %1125 = vmatpush1.bf16.xpose.msra.mxu0 0
      %1126 = vmatprep.subr.bf16.mxu0 0
      %1127 = vmatpush1.bf16.xpose.msra.mxu0 0
      %1128 = vmatprep.subr.bf16.mxu0 0
      %1129 = vmatpush1.bf16.xpose.msra.mxu0 0
      %1130 = vmatprep.subr.bf16.mxu0 0
      %1131 = vmatpush1.bf16.xpose.msra.mxu0 0
      %1132 = vmatprep.subr.bf16.mxu0 0
      %1133 = vmatpush1.bf16.xpose.msra.mxu0 %v1116
      %1134 = vmatprep.subr.bf16.mxu0 0
      %1135 = vmatpush2.bf16.xpose.msra.mxu0 0
      %1136 = vmatprep.subr.bf16.mxu0 0
      %1137 = vmatpush2.bf16.xpose.msra.mxu0 0
      %1138 = vmatprep.subr.bf16.mxu0 0
      %1139 = vmatpush2.bf16.xpose.msra.mxu0 0
      %1140 = vmatprep.subr.bf16.mxu0 0
      %1141 = vmatpush2.bf16.xpose.msra.mxu0 0
      %1142 = vmatprep.subr.bf16.mxu0 0
      %1143 = vmatpush2.bf16.xpose.msra.mxu0 0
      %1144 = vmatprep.subr.bf16.mxu0 0
      %1145 = vmatpush2.bf16.xpose.msra.mxu0 0
      %1146 = vmatprep.subr.bf16.mxu0 0
      %1147 = vmatpush2.bf16.xpose.msra.mxu0 0
      %1148 = vmatprep.subr.bf16.mxu0 0
      %1149 = vmatpush2.bf16.xpose.msra.mxu0 0
      %1150 = vmatprep.mubr.bf16.mxu0 0
      %1151 = vmatmul.mubr.bf16.gmra.mxu0 %v1113
      %v1152 = vpop.f32.mrf.mxu0
      %v1153 = vadd.f32 0.0, %v1152
      %v1154 = vpop.f32.mrf.mxu0
      %v1155 = vpop.f32.mrf.mxu0
      %v1156 = vpop.f32.mrf.mxu0
      %1157 = vdwg.mxu0
      %v1159 = vsel %vm927, %v924, 0
      %v1162 = vsel %vm927, %v916, 0
      %1164 = vmatprep.subr.bf16.mxu0 0
      %1165 = vmatpush1.bf16.xpose.msra.mxu0 0
      %1166 = vmatprep.subr.bf16.mxu0 0
      %1167 = vmatpush1.bf16.xpose.msra.mxu0 0
      %1168 = vmatprep.subr.bf16.mxu0 0
      %1169 = vmatpush1.bf16.xpose.msra.mxu0 0
      %1170 = vmatprep.subr.bf16.mxu0 0
      %1171 = vmatpush1.bf16.xpose.msra.mxu0 0
      %1172 = vmatprep.subr.bf16.mxu0 0
      %1173 = vmatpush1.bf16.xpose.msra.mxu0 0
      %1174 = vmatprep.subr.bf16.mxu0 0
      %1175 = vmatpush1.bf16.xpose.msra.mxu0 0
      %1176 = vmatprep.subr.bf16.mxu0 0
      %1177 = vmatpush1.bf16.xpose.msra.mxu0 0
      %1178 = vmatprep.subr.bf16.mxu0 0
      %1179 = vmatpush1.bf16.xpose.msra.mxu0 %v1162
      %1180 = vmatprep.subr.bf16.mxu0 0
      %1181 = vmatpush2.bf16.xpose.msra.mxu0 0
      %1182 = vmatprep.subr.bf16.mxu0 0
      %1183 = vmatpush2.bf16.xpose.msra.mxu0 0
      %1184 = vmatprep.subr.bf16.mxu0 0
      %1185 = vmatpush2.bf16.xpose.msra.mxu0 0
      %1186 = vmatprep.subr.bf16.mxu0 0
      %1187 = vmatpush2.bf16.xpose.msra.mxu0 0
      %1188 = vmatprep.subr.bf16.mxu0 0
      %1189 = vmatpush2.bf16.xpose.msra.mxu0 0
      %1190 = vmatprep.subr.bf16.mxu0 0
      %1191 = vmatpush2.bf16.xpose.msra.mxu0 0
      %1192 = vmatprep.subr.bf16.mxu0 0
      %1193 = vmatpush2.bf16.xpose.msra.mxu0 0
      %1194 = vmatprep.subr.bf16.mxu0 0
      %1195 = vmatpush2.bf16.xpose.msra.mxu0 0
      %1196 = vmatprep.mubr.bf16.mxu0 0
      %1197 = vmatmul.mubr.bf16.gmra.mxu0 %v1159
      %v1198 = vpop.f32.mrf.mxu0
      %v1199 = vadd.f32 0.0, %v1198
      %v1200 = vpop.f32.mrf.mxu0
      %v1201 = vpop.f32.mrf.mxu0
      %v1202 = vpop.f32.mrf.mxu0
      %1203 = vdwg.mxu0
      %v1205 = vsel %vm927, %v925, 0
      %v1208 = vsel %vm927, %v917, 0
      %1210 = vmatprep.subr.bf16.mxu0 0
      %1211 = vmatpush1.bf16.xpose.msra.mxu0 0
      %1212 = vmatprep.subr.bf16.mxu0 0
      %1213 = vmatpush1.bf16.xpose.msra.mxu0 0
      %1214 = vmatprep.subr.bf16.mxu0 0
      %1215 = vmatpush1.bf16.xpose.msra.mxu0 0
      %1216 = vmatprep.subr.bf16.mxu0 0
      %1217 = vmatpush1.bf16.xpose.msra.mxu0 0
      %1218 = vmatprep.subr.bf16.mxu0 0
      %1219 = vmatpush1.bf16.xpose.msra.mxu0 0
      %1220 = vmatprep.subr.bf16.mxu0 0
      %1221 = vmatpush1.bf16.xpose.msra.mxu0 0
      %1222 = vmatprep.subr.bf16.mxu0 0
      %1223 = vmatpush1.bf16.xpose.msra.mxu0 0
      %1224 = vmatprep.subr.bf16.mxu0 0
      %1225 = vmatpush1.bf16.xpose.msra.mxu0 %v1208
      %1226 = vmatprep.subr.bf16.mxu0 0
      %1227 = vmatpush2.bf16.xpose.msra.mxu0 0
      %1228 = vmatprep.subr.bf16.mxu0 0
      %1229 = vmatpush2.bf16.xpose.msra.mxu0 0
      %1230 = vmatprep.subr.bf16.mxu0 0
      %1231 = vmatpush2.bf16.xpose.msra.mxu0 0
      %1232 = vmatprep.subr.bf16.mxu0 0
      %1233 = vmatpush2.bf16.xpose.msra.mxu0 0
      %1234 = vmatprep.subr.bf16.mxu0 0
      %1235 = vmatpush2.bf16.xpose.msra.mxu0 0
      %1236 = vmatprep.subr.bf16.mxu0 0
      %1237 = vmatpush2.bf16.xpose.msra.mxu0 0
      %1238 = vmatprep.subr.bf16.mxu0 0
      %1239 = vmatpush2.bf16.xpose.msra.mxu0 0
      %1240 = vmatprep.subr.bf16.mxu0 0
      %1241 = vmatpush2.bf16.xpose.msra.mxu0 0
      %1242 = vmatprep.mubr.bf16.mxu0 0
      %1243 = vmatmul.mubr.bf16.gmra.mxu0 %v1205
      %v1244 = vpop.f32.mrf.mxu0
      %v1245 = vadd.f32 0.0, %v1244
      %v1246 = vpop.f32.mrf.mxu0
      %v1247 = vpop.f32.mrf.mxu0
      %v1248 = vpop.f32.mrf.mxu0
      %1249 = vdwg.mxu0
      %v1251 = vsel %vm927, %v926, 0
      %v1254 = vsel %vm927, %v918, 0
      %1256 = vmatprep.subr.bf16.mxu0 0
      %1257 = vmatpush1.bf16.xpose.msra.mxu0 0
      %1258 = vmatprep.subr.bf16.mxu0 0
      %1259 = vmatpush1.bf16.xpose.msra.mxu0 0
      %1260 = vmatprep.subr.bf16.mxu0 0
      %1261 = vmatpush1.bf16.xpose.msra.mxu0 0
      %1262 = vmatprep.subr.bf16.mxu0 0
      %1263 = vmatpush1.bf16.xpose.msra.mxu0 0
      %1264 = vmatprep.subr.bf16.mxu0 0
      %1265 = vmatpush1.bf16.xpose.msra.mxu0 0
      %1266 = vmatprep.subr.bf16.mxu0 0
      %1267 = vmatpush1.bf16.xpose.msra.mxu0 0
      %1268 = vmatprep.subr.bf16.mxu0 0
      %1269 = vmatpush1.bf16.xpose.msra.mxu0 0
      %1270 = vmatprep.subr.bf16.mxu0 0
      %1271 = vmatpush1.bf16.xpose.msra.mxu0 %v1254
      %1272 = vmatprep.subr.bf16.mxu0 0
      %1273 = vmatpush2.bf16.xpose.msra.mxu0 0
      %1274 = vmatprep.subr.bf16.mxu0 0
      %1275 = vmatpush2.bf16.xpose.msra.mxu0 0
      %1276 = vmatprep.subr.bf16.mxu0 0
      %1277 = vmatpush2.bf16.xpose.msra.mxu0 0
      %1278 = vmatprep.subr.bf16.mxu0 0
      %1279 = vmatpush2.bf16.xpose.msra.mxu0 0
      %1280 = vmatprep.subr.bf16.mxu0 0
      %1281 = vmatpush2.bf16.xpose.msra.mxu0 0
      %1282 = vmatprep.subr.bf16.mxu0 0
      %1283 = vmatpush2.bf16.xpose.msra.mxu0 0
      %1284 = vmatprep.subr.bf16.mxu0 0
      %1285 = vmatpush2.bf16.xpose.msra.mxu0 0
      %1286 = vmatprep.subr.bf16.mxu0 0
      %1287 = vmatpush2.bf16.xpose.msra.mxu0 0
      %1288 = vmatprep.mubr.bf16.mxu0 0
      %1289 = vmatmul.mubr.bf16.gmra.mxu0 %v1251
      %v1290 = vpop.f32.mrf.mxu0
      %v1291 = vadd.f32 0.0, %v1290
      %v1292 = vpop.f32.mrf.mxu0
      %v1293 = vpop.f32.mrf.mxu0
      %v1294 = vpop.f32.mrf.mxu0
      %1295 = vdwg.mxu0
      %s1296 = sshra.s32 %s910, 3
      %s1297 = sand.u32 %s910, 7
      %s1298 = smul.addr %s1296, 4
      %s1299 = scalar_lea.vmem [#allocation3], %s1298
      %v1300 = vld [vmem:[%s1299] sm:$0xf]
      %v1310 = vunpack.c.l.s4 1983009808
      %v1311 = vunpack.c.0.s8 %v1310
      %v1312 = vlaneseq
      %v1313 = vshrl.u32 %v1312, 7
      %v1314 = vsub.s32 %v1311, %v1313
      %v1315 = vrot.slane %v919, %v1314
      %v1317 = vunpack.c.l.s4 1983009808
      %v1318 = vunpack.c.0.s8 %v1317
      %v1319 = vlaneseq
      %v1320 = vshrl.u32 %v1319, 7
      %v1321 = vsub.s32 %v1318, %v1320
      %v1322 = vrot.slane %v920, %v1321
      %v1324 = vunpack.c.l.s4 1983009808
      %v1325 = vunpack.c.0.s8 %v1324
      %v1326 = vlaneseq
      %v1327 = vshrl.u32 %v1326, 7
      %v1328 = vsub.s32 %v1325, %v1327
      %v1329 = vrot.slane %v921, %v1328
      %v1331 = vunpack.c.l.s4 1983009808
      %v1332 = vunpack.c.0.s8 %v1331
      %v1333 = vlaneseq
      %v1334 = vshrl.u32 %v1333, 7
      %v1335 = vsub.s32 %v1332, %v1334
      %v1336 = vrot.slane %v922, %v1335
      %v1338 = vunpack.c.l.s4 1983009808
      %v1339 = vunpack.c.0.s8 %v1338
      %v1340 = vlaneseq
      %v1341 = vshrl.u32 %v1340, 7
      %v1342 = vsub.s32 %v1339, %v1341
      %v1343 = vrot.slane %v923, %v1342
      %v1345 = vunpack.c.l.s4 1983009808
      %v1346 = vunpack.c.0.s8 %v1345
      %v1347 = vlaneseq
      %v1348 = vshrl.u32 %v1347, 7
      %v1349 = vsub.s32 %v1346, %v1348
      %v1350 = vrot.slane %v924, %v1349
      %v1352 = vunpack.c.l.s4 1983009808
      %v1353 = vunpack.c.0.s8 %v1352
      %v1354 = vlaneseq
      %v1355 = vshrl.u32 %v1354, 7
      %v1356 = vsub.s32 %v1353, %v1355
      %v1357 = vrot.slane %v925, %v1356
      %v1359 = vunpack.c.l.s4 1983009808
      %v1360 = vunpack.c.0.s8 %v1359
      %v1361 = vlaneseq
      %v1362 = vshrl.u32 %v1361, 7
      %v1363 = vsub.s32 %v1360, %v1362
      %v1364 = vrot.slane %v926, %v1363
      %v1365 = vunpack.c.l.b16 %v1315
      %v1366 = vunpack.c.l.b16 %v1322
      %v1367 = vunpack.c.l.b16 %v1329
      %v1368 = vunpack.c.l.b16 %v1336
      %v1369 = vunpack.c.l.b16 %v1343
      %v1370 = vunpack.c.l.b16 %v1350
      %v1371 = vunpack.c.l.b16 %v1357
      %v1372 = vunpack.c.l.b16 %v1364
      %v1373 = vrot.slane %v1366, 7
      %vm1374 = vcmask 1041409
      %v1375 = vsel %vm1374, %v1373, %v1365
      %v1376 = vrot.slane %v1367, 6
      %vm1377 = vcmask 1042434
      %v1378 = vsel %vm1377, %v1376, %v1375
      %v1379 = vrot.slane %v1368, 5
      %vm1380 = vcmask 1043459
      %v1381 = vsel %vm1380, %v1379, %v1378
      %v1382 = vrot.slane %v1369, 4
      %vm1383 = vcmask 1044484
      %v1384 = vsel %vm1383, %v1382, %v1381
      %v1385 = vrot.slane %v1370, 3
      %vm1386 = vcmask 1045509
      %v1387 = vsel %vm1386, %v1385, %v1384
      %v1388 = vrot.slane %v1371, 2
      %vm1389 = vcmask 1046534
      %v1390 = vsel %vm1389, %v1388, %v1387
      %v1391 = vrot.slane %v1372, 1
      %vm1392 = vcmask 1047559
      %v1393 = vsel %vm1392, %v1391, %v1390
      %v1394 = vpack.c.b16 %v1393, %v1393
      %v1396 = vsel %vm927, %v1394, 0
      %v1399 = vsel %vm927, %v1300, 0
      %1401 = vmatprep.subr.bf16.mxu0 0
      %1402 = vmatpush1.bf16.xpose.msra.mxu0 0
      %1403 = vmatprep.subr.bf16.mxu0 0
      %1404 = vmatpush1.bf16.xpose.msra.mxu0 0
      %1405 = vmatprep.subr.bf16.mxu0 0
      %1406 = vmatpush1.bf16.xpose.msra.mxu0 0
      %1407 = vmatprep.subr.bf16.mxu0 0
      %1408 = vmatpush1.bf16.xpose.msra.mxu0 0
      %1409 = vmatprep.subr.bf16.mxu0 0
      %1410 = vmatpush1.bf16.xpose.msra.mxu0 0
      %1411 = vmatprep.subr.bf16.mxu0 0
      %1412 = vmatpush1.bf16.xpose.msra.mxu0 0
      %1413 = vmatprep.subr.bf16.mxu0 0
      %1414 = vmatpush1.bf16.xpose.msra.mxu0 0
      %1415 = vmatprep.subr.bf16.mxu0 0
      %1416 = vmatpush1.bf16.xpose.msra.mxu0 %v1399
      %1417 = vmatprep.subr.bf16.mxu0 0
      %1418 = vmatpush2.bf16.xpose.msra.mxu0 0
      %1419 = vmatprep.subr.bf16.mxu0 0
      %1420 = vmatpush2.bf16.xpose.msra.mxu0 0
      %1421 = vmatprep.subr.bf16.mxu0 0
      %1422 = vmatpush2.bf16.xpose.msra.mxu0 0
      %1423 = vmatprep.subr.bf16.mxu0 0
      %1424 = vmatpush2.bf16.xpose.msra.mxu0 0
      %1425 = vmatprep.subr.bf16.mxu0 0
      %1426 = vmatpush2.bf16.xpose.msra.mxu0 0
      %1427 = vmatprep.subr.bf16.mxu0 0
      %1428 = vmatpush2.bf16.xpose.msra.mxu0 0
      %1429 = vmatprep.subr.bf16.mxu0 0
      %1430 = vmatpush2.bf16.xpose.msra.mxu0 0
      %1431 = vmatprep.subr.bf16.mxu0 0
      %1432 = vmatpush2.bf16.xpose.msra.mxu0 0
      %1433 = vmatprep.mubr.bf16.mxu0 0
      %1434 = vmatmul.mubr.bf16.gmra.mxu0 %v1396
      %v1435 = vpop.f32.mrf.mxu0
      %v1436 = vadd.f32 0.0, %v1435
      %v1437 = vpop.f32.mrf.mxu0
      %v1438 = vpop.f32.mrf.mxu0
      %v1439 = vpop.f32.mrf.mxu0
      %1440 = vdwg.mxu0
      %v1442 = vcombine.high %v1436, %v1436
      %v1444 = vunpack.c.l.s4 1966171168
      %v1445 = vunpack.c.0.s8 %v1444
      %v1446 = vlaneseq
      %v1447 = vshrl.u32 %v1446, 7
      %v1448 = vsub.s32 %v1445, %v1447
      %v1449 = vrot.slane %v1436, %v1448
      %v1451 = vunpack.c.l.s4 1966171168
      %v1452 = vunpack.c.0.s8 %v1451
      %v1453 = vlaneseq
      %v1454 = vshrl.u32 %v1453, 7
      %v1455 = vsub.s32 %v1452, %v1454
      %v1456 = vrot.slane %v1442, %v1455
      %v1457 = vcombine.high %v1449, %v1449
      %v1458 = vcombine.high %v1456, %v1456
      %v1460 = vunpack.c.l.s4 1966171168
      %v1461 = vunpack.c.0.s8 %v1460
      %v1462 = vlaneseq
      %v1463 = vshrl.u32 %v1462, 7
      %v1464 = vsub.s32 %v1461, %v1463
      %v1465 = vrot.slane %v1449, %v1464
      %v1467 = vunpack.c.l.s4 1966171168
      %v1468 = vunpack.c.0.s8 %v1467
      %v1469 = vlaneseq
      %v1470 = vshrl.u32 %v1469, 7
      %v1471 = vsub.s32 %v1468, %v1470
      %v1472 = vrot.slane %v1456, %v1471
      %v1474 = vunpack.c.l.s4 1966171168
      %v1475 = vunpack.c.0.s8 %v1474
      %v1476 = vlaneseq
      %v1477 = vshrl.u32 %v1476, 7
      %v1478 = vsub.s32 %v1475, %v1477
      %v1479 = vrot.slane %v1457, %v1478
      %v1481 = vunpack.c.l.s4 1966171168
      %v1482 = vunpack.c.0.s8 %v1481
      %v1483 = vlaneseq
      %v1484 = vshrl.u32 %v1483, 7
      %v1485 = vsub.s32 %v1482, %v1484
      %v1486 = vrot.slane %v1458, %v1485
      %v1487 = vcombine.high %v1465, %v1465
      %v1488 = vcombine.high %v1472, %v1472
      %v1489 = vcombine.high %v1479, %v1479
      %v1490 = vcombine.high %v1486, %v1486
      %s1499 = sadd.s32 %s1296, 1
      %s1500 = smul.addr %s1499, 4
      %s1501 = scalar_lea.vmem [#allocation3], %s1500
      %v1502 = vld [vmem:[%s1501] sm:$0xf]
      %v1503 = vrot.slane %v1365, 1
      %v1504 = vsel %vm1374, %v1366, %v1503
      %v1505 = vrot.slane %v1367, 7
      %v1506 = vsel %vm1377, %v1505, %v1504
      %v1507 = vrot.slane %v1368, 6
      %v1508 = vsel %vm1380, %v1507, %v1506
      %v1509 = vrot.slane %v1369, 5
      %v1510 = vsel %vm1383, %v1509, %v1508
      %v1511 = vrot.slane %v1370, 4
      %v1512 = vsel %vm1386, %v1511, %v1510
      %v1513 = vrot.slane %v1371, 3
      %v1514 = vsel %vm1389, %v1513, %v1512
      %v1515 = vrot.slane %v1372, 2
      %v1516 = vsel %vm1392, %v1515, %v1514
      %v1517 = vpack.c.b16 %v1516, %v1516
      %v1519 = vsel %vm927, %v1517, 0
      %v1522 = vsel %vm927, %v1502, 0
      %1524 = vmatprep.subr.bf16.mxu0 0
      %1525 = vmatpush1.bf16.xpose.msra.mxu0 0
      %1526 = vmatprep.subr.bf16.mxu0 0
      %1527 = vmatpush1.bf16.xpose.msra.mxu0 0
      %1528 = vmatprep.subr.bf16.mxu0 0
      %1529 = vmatpush1.bf16.xpose.msra.mxu0 0
      %1530 = vmatprep.subr.bf16.mxu0 0
      %1531 = vmatpush1.bf16.xpose.msra.mxu0 0
      %1532 = vmatprep.subr.bf16.mxu0 0
      %1533 = vmatpush1.bf16.xpose.msra.mxu0 0
      %1534 = vmatprep.subr.bf16.mxu0 0
      %1535 = vmatpush1.bf16.xpose.msra.mxu0 0
      %1536 = vmatprep.subr.bf16.mxu0 0
      %1537 = vmatpush1.bf16.xpose.msra.mxu0 0
      %1538 = vmatprep.subr.bf16.mxu0 0
      %1539 = vmatpush1.bf16.xpose.msra.mxu0 %v1522
      %1540 = vmatprep.subr.bf16.mxu0 0
      %1541 = vmatpush2.bf16.xpose.msra.mxu0 0
      %1542 = vmatprep.subr.bf16.mxu0 0
      %1543 = vmatpush2.bf16.xpose.msra.mxu0 0
      %1544 = vmatprep.subr.bf16.mxu0 0
      %1545 = vmatpush2.bf16.xpose.msra.mxu0 0
      %1546 = vmatprep.subr.bf16.mxu0 0
      %1547 = vmatpush2.bf16.xpose.msra.mxu0 0
      %1548 = vmatprep.subr.bf16.mxu0 0
      %1549 = vmatpush2.bf16.xpose.msra.mxu0 0
      %1550 = vmatprep.subr.bf16.mxu0 0
      %1551 = vmatpush2.bf16.xpose.msra.mxu0 0
      %1552 = vmatprep.subr.bf16.mxu0 0
      %1553 = vmatpush2.bf16.xpose.msra.mxu0 0
      %1554 = vmatprep.subr.bf16.mxu0 0
      %1555 = vmatpush2.bf16.xpose.msra.mxu0 0
      %1556 = vmatprep.mubr.bf16.mxu0 0
      %1557 = vmatmul.mubr.bf16.gmra.mxu0 %v1519
      %v1558 = vpop.f32.mrf.mxu0
      %v1559 = vadd.f32 0.0, %v1558
      %v1560 = vpop.f32.mrf.mxu0
      %v1561 = vpop.f32.mrf.mxu0
      %v1562 = vpop.f32.mrf.mxu0
      %1563 = vdwg.mxu0
      %v1565 = vcombine.high %v1559, %v1559
      %v1567 = vunpack.c.l.s4 1966171168
      %v1568 = vunpack.c.0.s8 %v1567
      %v1569 = vlaneseq
      %v1570 = vshrl.u32 %v1569, 7
      %v1571 = vsub.s32 %v1568, %v1570
      %v1572 = vrot.slane %v1559, %v1571
      %v1574 = vunpack.c.l.s4 1966171168
      %v1575 = vunpack.c.0.s8 %v1574
      %v1576 = vlaneseq
      %v1577 = vshrl.u32 %v1576, 7
      %v1578 = vsub.s32 %v1575, %v1577
      %v1579 = vrot.slane %v1565, %v1578
      %v1580 = vcombine.high %v1572, %v1572
      %v1581 = vcombine.high %v1579, %v1579
      %v1583 = vunpack.c.l.s4 1966171168
      %v1584 = vunpack.c.0.s8 %v1583
      %v1585 = vlaneseq
      %v1586 = vshrl.u32 %v1585, 7
      %v1587 = vsub.s32 %v1584, %v1586
      %v1588 = vrot.slane %v1572, %v1587
      %v1590 = vunpack.c.l.s4 1966171168
      %v1591 = vunpack.c.0.s8 %v1590
      %v1592 = vlaneseq
      %v1593 = vshrl.u32 %v1592, 7
      %v1594 = vsub.s32 %v1591, %v1593
      %v1595 = vrot.slane %v1579, %v1594
      %v1597 = vunpack.c.l.s4 1966171168
      %v1598 = vunpack.c.0.s8 %v1597
      %v1599 = vlaneseq
      %v1600 = vshrl.u32 %v1599, 7
      %v1601 = vsub.s32 %v1598, %v1600
      %v1602 = vrot.slane %v1580, %v1601
      %v1604 = vunpack.c.l.s4 1966171168
      %v1605 = vunpack.c.0.s8 %v1604
      %v1606 = vlaneseq
      %v1607 = vshrl.u32 %v1606, 7
      %v1608 = vsub.s32 %v1605, %v1607
      %v1609 = vrot.slane %v1581, %v1608
      %v1610 = vcombine.high %v1588, %v1588
      %v1611 = vcombine.high %v1595, %v1595
      %v1612 = vcombine.high %v1602, %v1602
      %v1613 = vcombine.high %v1609, %v1609
      %s1614 = sadd.s32 %s1296, 2
      %s1615 = smul.addr %s1614, 4
      %s1616 = scalar_lea.vmem [#allocation3], %s1615
      %v1617 = vld [vmem:[%s1616] sm:$0xf]
      %v1618 = vrot.slane %v1365, 2
      %v1619 = vrot.slane %v1366, 1
      %v1620 = vsel %vm1374, %v1619, %v1618
      %v1621 = vsel %vm1377, %v1367, %v1620
      %v1622 = vrot.slane %v1368, 7
      %v1623 = vsel %vm1380, %v1622, %v1621
      %v1624 = vrot.slane %v1369, 6
      %v1625 = vsel %vm1383, %v1624, %v1623
      %v1626 = vrot.slane %v1370, 5
      %v1627 = vsel %vm1386, %v1626, %v1625
      %v1628 = vrot.slane %v1371, 4
      %v1629 = vsel %vm1389, %v1628, %v1627
      %v1630 = vrot.slane %v1372, 3
      %v1631 = vsel %vm1392, %v1630, %v1629
      %v1632 = vpack.c.b16 %v1631, %v1631
      %v1634 = vsel %vm927, %v1632, 0
      %v1637 = vsel %vm927, %v1617, 0
      %1639 = vmatprep.subr.bf16.mxu0 0
      %1640 = vmatpush1.bf16.xpose.msra.mxu0 0
      %1641 = vmatprep.subr.bf16.mxu0 0
      %1642 = vmatpush1.bf16.xpose.msra.mxu0 0
      %1643 = vmatprep.subr.bf16.mxu0 0
      %1644 = vmatpush1.bf16.xpose.msra.mxu0 0
      %1645 = vmatprep.subr.bf16.mxu0 0
      %1646 = vmatpush1.bf16.xpose.msra.mxu0 0
      %1647 = vmatprep.subr.bf16.mxu0 0
      %1648 = vmatpush1.bf16.xpose.msra.mxu0 0
      %1649 = vmatprep.subr.bf16.mxu0 0
      %1650 = vmatpush1.bf16.xpose.msra.mxu0 0
      %1651 = vmatprep.subr.bf16.mxu0 0
      %1652 = vmatpush1.bf16.xpose.msra.mxu0 0
      %1653 = vmatprep.subr.bf16.mxu0 0
      %1654 = vmatpush1.bf16.xpose.msra.mxu0 %v1637
      %1655 = vmatprep.subr.bf16.mxu0 0
      %1656 = vmatpush2.bf16.xpose.msra.mxu0 0
      %1657 = vmatprep.subr.bf16.mxu0 0
      %1658 = vmatpush2.bf16.xpose.msra.mxu0 0
      %1659 = vmatprep.subr.bf16.mxu0 0
      %1660 = vmatpush2.bf16.xpose.msra.mxu0 0
      %1661 = vmatprep.subr.bf16.mxu0 0
      %1662 = vmatpush2.bf16.xpose.msra.mxu0 0
      %1663 = vmatprep.subr.bf16.mxu0 0
      %1664 = vmatpush2.bf16.xpose.msra.mxu0 0
      %1665 = vmatprep.subr.bf16.mxu0 0
      %1666 = vmatpush2.bf16.xpose.msra.mxu0 0
      %1667 = vmatprep.subr.bf16.mxu0 0
      %1668 = vmatpush2.bf16.xpose.msra.mxu0 0
      %1669 = vmatprep.subr.bf16.mxu0 0
      %1670 = vmatpush2.bf16.xpose.msra.mxu0 0
      %1671 = vmatprep.mubr.bf16.mxu0 0
      %1672 = vmatmul.mubr.bf16.gmra.mxu0 %v1634
      %v1673 = vpop.f32.mrf.mxu0
      %v1674 = vadd.f32 0.0, %v1673
      %v1675 = vpop.f32.mrf.mxu0
      %v1676 = vpop.f32.mrf.mxu0
      %v1677 = vpop.f32.mrf.mxu0
      %1678 = vdwg.mxu0
      %v1680 = vcombine.high %v1674, %v1674
      %v1682 = vunpack.c.l.s4 1966171168
      %v1683 = vunpack.c.0.s8 %v1682
      %v1684 = vlaneseq
      %v1685 = vshrl.u32 %v1684, 7
      %v1686 = vsub.s32 %v1683, %v1685
      %v1687 = vrot.slane %v1674, %v1686
      %v1689 = vunpack.c.l.s4 1966171168
      %v1690 = vunpack.c.0.s8 %v1689
      %v1691 = vlaneseq
      %v1692 = vshrl.u32 %v1691, 7
      %v1693 = vsub.s32 %v1690, %v1692
      %v1694 = vrot.slane %v1680, %v1693
      %v1695 = vcombine.high %v1687, %v1687
      %v1696 = vcombine.high %v1694, %v1694
      %v1698 = vunpack.c.l.s4 1966171168
      %v1699 = vunpack.c.0.s8 %v1698
      %v1700 = vlaneseq
      %v1701 = vshrl.u32 %v1700, 7
      %v1702 = vsub.s32 %v1699, %v1701
      %v1703 = vrot.slane %v1687, %v1702
      %v1705 = vunpack.c.l.s4 1966171168
      %v1706 = vunpack.c.0.s8 %v1705
      %v1707 = vlaneseq
      %v1708 = vshrl.u32 %v1707, 7
      %v1709 = vsub.s32 %v1706, %v1708
      %v1710 = vrot.slane %v1694, %v1709
      %v1712 = vunpack.c.l.s4 1966171168
      %v1713 = vunpack.c.0.s8 %v1712
      %v1714 = vlaneseq
      %v1715 = vshrl.u32 %v1714, 7
      %v1716 = vsub.s32 %v1713, %v1715
      %v1717 = vrot.slane %v1695, %v1716
      %v1719 = vunpack.c.l.s4 1966171168
      %v1720 = vunpack.c.0.s8 %v1719
      %v1721 = vlaneseq
      %v1722 = vshrl.u32 %v1721, 7
      %v1723 = vsub.s32 %v1720, %v1722
      %v1724 = vrot.slane %v1696, %v1723
      %v1725 = vcombine.high %v1703, %v1703
      %v1726 = vcombine.high %v1710, %v1710
      %v1727 = vcombine.high %v1717, %v1717
      %v1728 = vcombine.high %v1724, %v1724
      %s1729 = sadd.s32 %s1296, 3
      %s1730 = smul.addr %s1729, 4
      %s1731 = scalar_lea.vmem [#allocation3], %s1730
      %v1732 = vld [vmem:[%s1731] sm:$0xf]
      %v1733 = vrot.slane %v1365, 3
      %v1734 = vrot.slane %v1366, 2
      %v1735 = vsel %vm1374, %v1734, %v1733
      %v1736 = vrot.slane %v1367, 1
      %v1737 = vsel %vm1377, %v1736, %v1735
      %v1738 = vsel %vm1380, %v1368, %v1737
      %v1739 = vrot.slane %v1369, 7
      %v1740 = vsel %vm1383, %v1739, %v1738
      %v1741 = vrot.slane %v1370, 6
      %v1742 = vsel %vm1386, %v1741, %v1740
      %v1743 = vrot.slane %v1371, 5
      %v1744 = vsel %vm1389, %v1743, %v1742
      %v1745 = vrot.slane %v1372, 4
      %v1746 = vsel %vm1392, %v1745, %v1744
      %v1747 = vpack.c.b16 %v1746, %v1746
      %v1749 = vsel %vm927, %v1747, 0
      %v1752 = vsel %vm927, %v1732, 0
      %1754 = vmatprep.subr.bf16.mxu0 0
      %1755 = vmatpush1.bf16.xpose.msra.mxu0 0
      %1756 = vmatprep.subr.bf16.mxu0 0
      %1757 = vmatpush1.bf16.xpose.msra.mxu0 0
      %1758 = vmatprep.subr.bf16.mxu0 0
      %1759 = vmatpush1.bf16.xpose.msra.mxu0 0
      %1760 = vmatprep.subr.bf16.mxu0 0
      %1761 = vmatpush1.bf16.xpose.msra.mxu0 0
      %1762 = vmatprep.subr.bf16.mxu0 0
      %1763 = vmatpush1.bf16.xpose.msra.mxu0 0
      %1764 = vmatprep.subr.bf16.mxu0 0
      %1765 = vmatpush1.bf16.xpose.msra.mxu0 0
      %1766 = vmatprep.subr.bf16.mxu0 0
      %1767 = vmatpush1.bf16.xpose.msra.mxu0 0
      %1768 = vmatprep.subr.bf16.mxu0 0
      %1769 = vmatpush1.bf16.xpose.msra.mxu0 %v1752
      %1770 = vmatprep.subr.bf16.mxu0 0
      %1771 = vmatpush2.bf16.xpose.msra.mxu0 0
      %1772 = vmatprep.subr.bf16.mxu0 0
      %1773 = vmatpush2.bf16.xpose.msra.mxu0 0
      %1774 = vmatprep.subr.bf16.mxu0 0
      %1775 = vmatpush2.bf16.xpose.msra.mxu0 0
      %1776 = vmatprep.subr.bf16.mxu0 0
      %1777 = vmatpush2.bf16.xpose.msra.mxu0 0
      %1778 = vmatprep.subr.bf16.mxu0 0
      %1779 = vmatpush2.bf16.xpose.msra.mxu0 0
      %1780 = vmatprep.subr.bf16.mxu0 0
      %1781 = vmatpush2.bf16.xpose.msra.mxu0 0
      %1782 = vmatprep.subr.bf16.mxu0 0
      %1783 = vmatpush2.bf16.xpose.msra.mxu0 0
      %1784 = vmatprep.subr.bf16.mxu0 0
      %1785 = vmatpush2.bf16.xpose.msra.mxu0 0
      %1786 = vmatprep.mubr.bf16.mxu0 0
      %1787 = vmatmul.mubr.bf16.gmra.mxu0 %v1749
      %v1788 = vpop.f32.mrf.mxu0
      %v1789 = vadd.f32 0.0, %v1788
      %v1790 = vpop.f32.mrf.mxu0
      %v1791 = vpop.f32.mrf.mxu0
      %v1792 = vpop.f32.mrf.mxu0
      %1793 = vdwg.mxu0
      %v1795 = vcombine.high %v1789, %v1789
      %v1797 = vunpack.c.l.s4 1966171168
      %v1798 = vunpack.c.0.s8 %v1797
      %v1799 = vlaneseq
      %v1800 = vshrl.u32 %v1799, 7
      %v1801 = vsub.s32 %v1798, %v1800
      %v1802 = vrot.slane %v1789, %v1801
      %v1804 = vunpack.c.l.s4 1966171168
      %v1805 = vunpack.c.0.s8 %v1804
      %v1806 = vlaneseq
      %v1807 = vshrl.u32 %v1806, 7
      %v1808 = vsub.s32 %v1805, %v1807
      %v1809 = vrot.slane %v1795, %v1808
      %v1810 = vcombine.high %v1802, %v1802
      %v1811 = vcombine.high %v1809, %v1809
      %v1813 = vunpack.c.l.s4 1966171168
      %v1814 = vunpack.c.0.s8 %v1813
      %v1815 = vlaneseq
      %v1816 = vshrl.u32 %v1815, 7
      %v1817 = vsub.s32 %v1814, %v1816
      %v1818 = vrot.slane %v1802, %v1817
      %v1820 = vunpack.c.l.s4 1966171168
      %v1821 = vunpack.c.0.s8 %v1820
      %v1822 = vlaneseq
      %v1823 = vshrl.u32 %v1822, 7
      %v1824 = vsub.s32 %v1821, %v1823
      %v1825 = vrot.slane %v1809, %v1824
      %v1827 = vunpack.c.l.s4 1966171168
      %v1828 = vunpack.c.0.s8 %v1827
      %v1829 = vlaneseq
      %v1830 = vshrl.u32 %v1829, 7
      %v1831 = vsub.s32 %v1828, %v1830
      %v1832 = vrot.slane %v1810, %v1831
      %v1834 = vunpack.c.l.s4 1966171168
      %v1835 = vunpack.c.0.s8 %v1834
      %v1836 = vlaneseq
      %v1837 = vshrl.u32 %v1836, 7
      %v1838 = vsub.s32 %v1835, %v1837
      %v1839 = vrot.slane %v1811, %v1838
      %v1840 = vcombine.high %v1818, %v1818
      %v1841 = vcombine.high %v1825, %v1825
      %v1842 = vcombine.high %v1832, %v1832
      %v1843 = vcombine.high %v1839, %v1839
      %v1844 = vlaneseq
      %v1845 = vshrl.u32 %v1844, 7
      %v1846 = vsub.s32 0, %v1845
      %v1847 = vrot.slane %v1588, %v1846
      %v1848 = vlaneseq
      %v1849 = vshrl.u32 %v1848, 7
      %v1850 = vsub.s32 0, %v1849
      %v1851 = vrot.slane %v1602, %v1850
      %v1852 = vlaneseq
      %v1853 = vshrl.u32 %v1852, 7
      %v1854 = vsub.s32 0, %v1853
      %v1855 = vrot.slane %v1610, %v1854
      %v1856 = vlaneseq
      %v1857 = vshrl.u32 %v1856, 7
      %v1858 = vsub.s32 0, %v1857
      %v1859 = vrot.slane %v1612, %v1858
      %v1860 = vlaneseq
      %v1861 = vshrl.u32 %v1860, 7
      %v1862 = vsub.s32 0, %v1861
      %v1863 = vrot.slane %v1595, %v1862
      %v1864 = vlaneseq
      %v1865 = vshrl.u32 %v1864, 7
      %v1866 = vsub.s32 0, %v1865
      %v1867 = vrot.slane %v1609, %v1866
      %v1868 = vlaneseq
      %v1869 = vshrl.u32 %v1868, 7
      %v1870 = vsub.s32 0, %v1869
      %v1871 = vrot.slane %v1611, %v1870
      %v1872 = vlaneseq
      %v1873 = vshrl.u32 %v1872, 7
      %v1874 = vsub.s32 0, %v1873
      %v1875 = vrot.slane %v1613, %v1874
      %v1884 = vlaneseq
      %v1885 = vshrl.u32 %v1884, 7
      %v1886 = vsub.s32 0, %v1885
      %v1887 = vrot.slane %v1703, %v1886
      %v1888 = vlaneseq
      %v1889 = vshrl.u32 %v1888, 7
      %v1890 = vsub.s32 0, %v1889
      %v1891 = vrot.slane %v1717, %v1890
      %v1892 = vlaneseq
      %v1893 = vshrl.u32 %v1892, 7
      %v1894 = vsub.s32 0, %v1893
      %v1895 = vrot.slane %v1725, %v1894
      %v1896 = vlaneseq
      %v1897 = vshrl.u32 %v1896, 7
      %v1898 = vsub.s32 0, %v1897
      %v1899 = vrot.slane %v1727, %v1898
      %v1900 = vlaneseq
      %v1901 = vshrl.u32 %v1900, 7
      %v1902 = vsub.s32 0, %v1901
      %v1903 = vrot.slane %v1710, %v1902
      %v1904 = vlaneseq
      %v1905 = vshrl.u32 %v1904, 7
      %v1906 = vsub.s32 0, %v1905
      %v1907 = vrot.slane %v1724, %v1906
      %v1908 = vlaneseq
      %v1909 = vshrl.u32 %v1908, 7
      %v1910 = vsub.s32 0, %v1909
      %v1911 = vrot.slane %v1726, %v1910
      %v1912 = vlaneseq
      %v1913 = vshrl.u32 %v1912, 7
      %v1914 = vsub.s32 0, %v1913
      %v1915 = vrot.slane %v1728, %v1914
      %v1924 = vlaneseq
      %v1925 = vshrl.u32 %v1924, 7
      %v1926 = vsub.s32 0, %v1925
      %v1927 = vrot.slane %v1818, %v1926
      %v1928 = vlaneseq
      %v1929 = vshrl.u32 %v1928, 7
      %v1930 = vsub.s32 0, %v1929
      %v1931 = vrot.slane %v1832, %v1930
      %v1932 = vlaneseq
      %v1933 = vshrl.u32 %v1932, 7
      %v1934 = vsub.s32 0, %v1933
      %v1935 = vrot.slane %v1840, %v1934
      %v1936 = vlaneseq
      %v1937 = vshrl.u32 %v1936, 7
      %v1938 = vsub.s32 0, %v1937
      %v1939 = vrot.slane %v1842, %v1938
      %v1940 = vlaneseq
      %v1941 = vshrl.u32 %v1940, 7
      %v1942 = vsub.s32 0, %v1941
      %v1943 = vrot.slane %v1825, %v1942
      %v1944 = vlaneseq
      %v1945 = vshrl.u32 %v1944, 7
      %v1946 = vsub.s32 0, %v1945
      %v1947 = vrot.slane %v1839, %v1946
      %v1948 = vlaneseq
      %v1949 = vshrl.u32 %v1948, 7
      %v1950 = vsub.s32 0, %v1949
      %v1951 = vrot.slane %v1841, %v1950
      %v1952 = vlaneseq
      %v1953 = vshrl.u32 %v1952, 7
      %v1954 = vsub.s32 0, %v1953
      %v1955 = vrot.slane %v1843, %v1954
      %vm1964 = vcmask 1040384
      %v1965 = vsel %vm1964, %v1465, %v1847
      %v1966 = vsel %vm1964, %v1479, %v1851
      %v1967 = vsel %vm1964, %v1487, %v1855
      %v1968 = vsel %vm1964, %v1489, %v1859
      %v1969 = vsel %vm1964, %v1472, %v1863
      %v1970 = vsel %vm1964, %v1486, %v1867
      %v1971 = vsel %vm1964, %v1488, %v1871
      %v1972 = vsel %vm1964, %v1490, %v1875
      %vm1973 = vcmask 1041408
      %v1974 = vsel %vm1973, %v1965, %v1887
      %v1975 = vsel %vm1973, %v1966, %v1891
      %v1976 = vsel %vm1973, %v1967, %v1895
      %v1977 = vsel %vm1973, %v1968, %v1899
      %v1978 = vsel %vm1973, %v1969, %v1903
      %v1979 = vsel %vm1973, %v1970, %v1907
      %v1980 = vsel %vm1973, %v1971, %v1911
      %v1981 = vsel %vm1973, %v1972, %v1915
      %vm1982 = vcmask 1042432
      %v1983 = vsel %vm1982, %v1974, %v1927
      %v1984 = vsel %vm1982, %v1975, %v1931
      %v1985 = vsel %vm1982, %v1976, %v1935
      %v1986 = vsel %vm1982, %v1977, %v1939
      %v1987 = vsel %vm1982, %v1978, %v1943
      %v1988 = vsel %vm1982, %v1979, %v1947
      %v1989 = vsel %vm1982, %v1980, %v1951
      %v1990 = vsel %vm1982, %v1981, %v1955
      %v1991 = vadd.f32 %v1983, %v969
      %v1992 = vadd.f32 %v1984, %v1015
      %v1993 = vadd.f32 %v1985, %v1061
      %v1994 = vadd.f32 %v1986, %v1107
      %v1995 = vadd.f32 %v1987, %v1153
      %v1996 = vadd.f32 %v1988, %v1199
      %v1997 = vadd.f32 %v1989, %v1245
      %v1998 = vadd.f32 %v1990, %v1291
      %v1999 = vmul.f32 %v1991, 0.35355338
      %v2000 = vmul.f32 %v1992, 0.35355338
      %v2001 = vmul.f32 %v1993, 0.35355338
      %v2002 = vmul.f32 %v1994, 0.35355338
      %v2003 = vmul.f32 %v1995, 0.35355338
      %v2004 = vmul.f32 %v1996, 0.35355338
      %v2005 = vmul.f32 %v1997, 0.35355338
      %v2006 = vmul.f32 %v1998, 0.35355338
      %s2007 = scalar_lea.vmem %s542, %s31
      %v2008 = vld [vmem:[%s2007] sm:$0x1]
      %v2010 = vlaneseq
      %v2011 = vshrl.u32 %v2010, 7
      %v2012 = vsub.s32 0, %v2011
      %v2013 = vrot.slane %v2008, %v2012
      %v2015 = vadd.f32 %v1999, %v2013
      %v2016 = vadd.f32 %v2000, %v2013
      %v2017 = vadd.f32 %v2001, %v2013
      %v2018 = vadd.f32 %v2002, %v2013
      %v2019 = vadd.f32 %v2003, %v2013
      %v2020 = vadd.f32 %v2004, %v2013
      %v2021 = vadd.f32 %v2005, %v2013
      %v2022 = vadd.f32 %v2006, %v2013
      %v2023 = vld [vmem:[#allocation5] sm:$0xf]
      %v2024 = vld [vmem:[#allocation5 + $0x4] sm:$0xf]
      %v2025 = vld [vmem:[#allocation5 + $0x8] sm:$0xf]
      %v2026 = vld [vmem:[#allocation5 + $0xc] sm:$0xf]
      %v2027 = vld [vmem:[#allocation5 + $0x10] sm:$0xf]
      %v2028 = vld [vmem:[#allocation5 + $0x14] sm:$0xf]
      %v2029 = vld [vmem:[#allocation5 + $0x18] sm:$0xf]
      %v2030 = vld [vmem:[#allocation5 + $0x1c] sm:$0xf]
      %vm2031 = vcmask 60416
      %v2032 = vsel %vm2031, %v2015, -inf
      %2033 = vmax.xlane.f32.xlu0 %v2032
      %v2034 = vpop.xlane.xlu0 %2033
      %v2035 = vsel %vm2031, %v2016, -inf
      %2036 = vmax.xlane.f32.xlu0 %v2035
      %v2037 = vpop.xlane.xlu0 %2036
      %v2038 = vsel %vm2031, %v2017, -inf
      %2039 = vmax.xlane.f32.xlu0 %v2038
      %v2040 = vpop.xlane.xlu0 %2039
      %v2041 = vsel %vm2031, %v2018, -inf
      %2042 = vmax.xlane.f32.xlu0 %v2041
      %v2043 = vpop.xlane.xlu0 %2042
      %v2044 = vsel %vm2031, %v2019, -inf
      %2045 = vmax.xlane.f32.xlu0 %v2044
      %v2046 = vpop.xlane.xlu0 %2045
      %v2047 = vsel %vm2031, %v2020, -inf
      %2048 = vmax.xlane.f32.xlu0 %v2047
      %v2049 = vpop.xlane.xlu0 %2048
      %v2050 = vsel %vm2031, %v2021, -inf
      %2051 = vmax.xlane.f32.xlu0 %v2050
      %v2052 = vpop.xlane.xlu0 %2051
      %v2053 = vsel %vm2031, %v2022, -inf
      %2054 = vmax.xlane.f32.xlu0 %v2053
      %v2055 = vpop.xlane.xlu0 %2054
      %v2056 = vmax.f32 %v2023, %v2034
      %v2057 = vmax.f32 %v2024, %v2037
      %v2058 = vmax.f32 %v2025, %v2040
      %v2059 = vmax.f32 %v2026, %v2043
      %v2060 = vmax.f32 %v2027, %v2046
      %v2061 = vmax.f32 %v2028, %v2049
      %v2062 = vmax.f32 %v2029, %v2052
      %v2063 = vmax.f32 %v2030, %v2055
      %v2064 = vsub.f32 %v2023, %v2056
      %v2065 = vsub.f32 %v2024, %v2057
      %v2066 = vsub.f32 %v2025, %v2058
      %v2067 = vsub.f32 %v2026, %v2059
      %v2068 = vsub.f32 %v2027, %v2060
      %v2069 = vsub.f32 %v2028, %v2061
      %v2070 = vsub.f32 %v2029, %v2062
      %v2071 = vsub.f32 %v2030, %v2063
      %v2072 = vmul.f32 %v2064, 1.442695
      %v2073 = vpow.pop %v2072
      %v2074 = vmul.f32 %v2065, 1.442695
      %v2075 = vpow.pop %v2074
      %v2076 = vmul.f32 %v2066, 1.442695
      %v2077 = vpow.pop %v2076
      %v2078 = vmul.f32 %v2067, 1.442695
      %v2079 = vpow.pop %v2078
      %v2080 = vmul.f32 %v2068, 1.442695
      %v2081 = vpow.pop %v2080
      %v2082 = vmul.f32 %v2069, 1.442695
      %v2083 = vpow.pop %v2082
      %v2084 = vmul.f32 %v2070, 1.442695
      %v2085 = vpow.pop %v2084
      %v2086 = vmul.f32 %v2071, 1.442695
      %v2087 = vpow.pop %v2086
      %2089 = vset.pattern.permute.xlu0 0
      %2090 = vperm.xlu0 %2089, %v2056
      %v2091 = vpop.permute.xlu0 %2090
      %2094 = vset.pattern.permute.xlu0 0
      %2095 = vperm.xlu0 %2094, %v2057
      %v2096 = vpop.permute.xlu0 %2095
      %2099 = vset.pattern.permute.xlu0 0
      %2100 = vperm.xlu0 %2099, %v2058
      %v2101 = vpop.permute.xlu0 %2100
      %2104 = vset.pattern.permute.xlu0 0
      %2105 = vperm.xlu0 %2104, %v2059
      %v2106 = vpop.permute.xlu0 %2105
      %2109 = vset.pattern.permute.xlu0 0
      %2110 = vperm.xlu0 %2109, %v2060
      %v2111 = vpop.permute.xlu0 %2110
      %2114 = vset.pattern.permute.xlu0 0
      %2115 = vperm.xlu0 %2114, %v2061
      %v2116 = vpop.permute.xlu0 %2115
      %2119 = vset.pattern.permute.xlu0 0
      %2120 = vperm.xlu0 %2119, %v2062
      %v2121 = vpop.permute.xlu0 %2120
      %2124 = vset.pattern.permute.xlu0 0
      %2125 = vperm.xlu0 %2124, %v2063
      %v2126 = vpop.permute.xlu0 %2125
      %v2128 = vsub.f32 %v2015, %v2091
      %v2129 = vsub.f32 %v2016, %v2096
      %v2130 = vsub.f32 %v2017, %v2101
      %v2131 = vsub.f32 %v2018, %v2106
      %v2132 = vsub.f32 %v2019, %v2111
      %v2133 = vsub.f32 %v2020, %v2116
      %v2134 = vsub.f32 %v2021, %v2121
      %v2135 = vsub.f32 %v2022, %v2126
      %v2136 = vmul.f32 %v2128, 1.442695
      %v2137 = vpow.pop %v2136
      %v2138 = vmul.f32 %v2129, 1.442695
      %v2139 = vpow.pop %v2138
      %v2140 = vmul.f32 %v2130, 1.442695
      %v2141 = vpow.pop %v2140
      %v2142 = vmul.f32 %v2131, 1.442695
      %v2143 = vpow.pop %v2142
      %v2144 = vmul.f32 %v2132, 1.442695
      %v2145 = vpow.pop %v2144
      %v2146 = vmul.f32 %v2133, 1.442695
      %v2147 = vpow.pop %v2146
      %v2148 = vmul.f32 %v2134, 1.442695
      %v2149 = vpow.pop %v2148
      %v2150 = vmul.f32 %v2135, 1.442695
      %v2151 = vpow.pop %v2150
      %v2152 = vld [vmem:[#allocation6] sm:$0xf]
      %v2153 = vld [vmem:[#allocation6 + $0x4] sm:$0xf]
      %v2154 = vld [vmem:[#allocation6 + $0x8] sm:$0xf]
      %v2155 = vld [vmem:[#allocation6 + $0xc] sm:$0xf]
      %v2156 = vld [vmem:[#allocation6 + $0x10] sm:$0xf]
      %v2157 = vld [vmem:[#allocation6 + $0x14] sm:$0xf]
      %v2158 = vld [vmem:[#allocation6 + $0x18] sm:$0xf]
      %v2159 = vld [vmem:[#allocation6 + $0x1c] sm:$0xf]
      %v2160 = vmul.f32 %v2073, %v2152
      %v2161 = vmul.f32 %v2075, %v2153
      %v2162 = vmul.f32 %v2077, %v2154
      %v2163 = vmul.f32 %v2079, %v2155
      %v2164 = vmul.f32 %v2081, %v2156
      %v2165 = vmul.f32 %v2083, %v2157
      %v2166 = vmul.f32 %v2085, %v2158
      %v2167 = vmul.f32 %v2087, %v2159
      %v2168 = vsel %vm2031, %v2137, 0.0
      %2169 = vadd.xlane.f32.xlu0 %v2168
      %v2170 = vpop.xlane.xlu0 %2169
      %v2171 = vsel %vm2031, %v2139, 0.0
      %2172 = vadd.xlane.f32.xlu0 %v2171
      %v2173 = vpop.xlane.xlu0 %2172
      %v2174 = vsel %vm2031, %v2141, 0.0
      %2175 = vadd.xlane.f32.xlu0 %v2174
      %v2176 = vpop.xlane.xlu0 %2175
      %v2177 = vsel %vm2031, %v2143, 0.0
      %2178 = vadd.xlane.f32.xlu0 %v2177
      %v2179 = vpop.xlane.xlu0 %2178
      %v2180 = vsel %vm2031, %v2145, 0.0
      %2181 = vadd.xlane.f32.xlu0 %v2180
      %v2182 = vpop.xlane.xlu0 %2181
      %v2183 = vsel %vm2031, %v2147, 0.0
      %2184 = vadd.xlane.f32.xlu0 %v2183
      %v2185 = vpop.xlane.xlu0 %2184
      %v2186 = vsel %vm2031, %v2149, 0.0
      %2187 = vadd.xlane.f32.xlu0 %v2186
      %v2188 = vpop.xlane.xlu0 %2187
      %v2189 = vsel %vm2031, %v2151, 0.0
      %2190 = vadd.xlane.f32.xlu0 %v2189
      %v2191 = vpop.xlane.xlu0 %2190
      %v2192 = vadd.f32 %v2160, %v2170
      %v2193 = vadd.f32 %v2161, %v2173
      %v2194 = vadd.f32 %v2162, %v2176
      %v2195 = vadd.f32 %v2163, %v2179
      %v2196 = vadd.f32 %v2164, %v2182
      %v2197 = vadd.f32 %v2165, %v2185
      %v2198 = vadd.f32 %v2166, %v2188
      %v2199 = vadd.f32 %v2167, %v2191
      %vm2200 = vcmask 3072
      %2201 = vst.msk [vmem:[#allocation6] sm:$0xf] %vm2200, %v2192
      %2202 = vst.msk [vmem:[#allocation6 + $0x4] sm:$0xf] %vm2200, %v2193
      %2203 = vst.msk [vmem:[#allocation6 + $0x8] sm:$0xf] %vm2200, %v2194
      %2204 = vst.msk [vmem:[#allocation6 + $0xc] sm:$0xf] %vm2200, %v2195
      %2205 = vst.msk [vmem:[#allocation6 + $0x10] sm:$0xf] %vm2200, %v2196
      %2206 = vst.msk [vmem:[#allocation6 + $0x14] sm:$0xf] %vm2200, %v2197
      %2207 = vst.msk [vmem:[#allocation6 + $0x18] sm:$0xf] %vm2200, %v2198
      %2208 = vst.msk [vmem:[#allocation6 + $0x1c] sm:$0xf] %vm2200, %v2199
      %v2209 = vpack.c.bf16 %v2137, %v2137
      %v2210 = vpack.c.bf16 %v2139, %v2139
      %v2211 = vpack.c.bf16 %v2141, %v2141
      %v2212 = vpack.c.bf16 %v2143, %v2143
      %v2213 = vpack.c.bf16 %v2145, %v2145
      %v2214 = vpack.c.bf16 %v2147, %v2147
      %v2215 = vpack.c.bf16 %v2149, %v2149
      %v2216 = vpack.c.bf16 %v2151, %v2151
      %v2218 = vsel %vm927, %v2209, 0
      %vm2220 = vcmask 1043456
      %v2221 = vsel %vm2220, %v911, 0
      %2223 = vmatprep.subr.bf16.mxu0 0
      %2224 = vmatpush1.bf16.msra.mxu0 0
      %2225 = vmatprep.subr.bf16.mxu0 0
      %2226 = vmatpush1.bf16.msra.mxu0 0
      %2227 = vmatprep.subr.bf16.mxu0 0
      %2228 = vmatpush1.bf16.msra.mxu0 0
      %2229 = vmatprep.subr.bf16.mxu0 0
      %2230 = vmatpush1.bf16.msra.mxu0 0
      %2231 = vmatprep.subr.bf16.mxu0 0
      %2232 = vmatpush1.bf16.msra.mxu0 0
      %2233 = vmatprep.subr.bf16.mxu0 0
      %2234 = vmatpush1.bf16.msra.mxu0 0
      %2235 = vmatprep.subr.bf16.mxu0 0
      %2236 = vmatpush1.bf16.msra.mxu0 0
      %2237 = vmatprep.subr.bf16.mxu0 0
      %2238 = vmatpush1.bf16.msra.mxu0 %v2221
      %2239 = vmatprep.subr.bf16.mxu0 0
      %2240 = vmatpush2.bf16.msra.mxu0 0
      %2241 = vmatprep.subr.bf16.mxu0 0
      %2242 = vmatpush2.bf16.msra.mxu0 0
      %2243 = vmatprep.subr.bf16.mxu0 0
      %2244 = vmatpush2.bf16.msra.mxu0 0
      %2245 = vmatprep.subr.bf16.mxu0 0
      %2246 = vmatpush2.bf16.msra.mxu0 0
      %2247 = vmatprep.subr.bf16.mxu0 0
      %2248 = vmatpush2.bf16.msra.mxu0 0
      %2249 = vmatprep.subr.bf16.mxu0 0
      %2250 = vmatpush2.bf16.msra.mxu0 0
      %2251 = vmatprep.subr.bf16.mxu0 0
      %2252 = vmatpush2.bf16.msra.mxu0 0
      %2253 = vmatprep.subr.bf16.mxu0 0
      %2254 = vmatpush2.bf16.msra.mxu0 0
      %2255 = vmatprep.mubr.bf16.mxu0 0
      %2256 = vmatmul.mubr.bf16.gmra.mxu0 %v2218
      %v2257 = vpop.f32.mrf.mxu0
      %v2258 = vadd.f32 0.0, %v2257
      %v2259 = vpop.f32.mrf.mxu0
      %v2260 = vpop.f32.mrf.mxu0
      %v2261 = vpop.f32.mrf.mxu0
      %2262 = vdwg.mxu0
      %v2264 = vsel %vm927, %v2210, 0
      %v2266 = vsel %vm2220, %v912, 0
      %2268 = vmatprep.subr.bf16.mxu0 0
      %2269 = vmatpush1.bf16.msra.mxu0 0
      %2270 = vmatprep.subr.bf16.mxu0 0
      %2271 = vmatpush1.bf16.msra.mxu0 0
      %2272 = vmatprep.subr.bf16.mxu0 0
      %2273 = vmatpush1.bf16.msra.mxu0 0
      %2274 = vmatprep.subr.bf16.mxu0 0
      %2275 = vmatpush1.bf16.msra.mxu0 0
      %2276 = vmatprep.subr.bf16.mxu0 0
      %2277 = vmatpush1.bf16.msra.mxu0 0
      %2278 = vmatprep.subr.bf16.mxu0 0
      %2279 = vmatpush1.bf16.msra.mxu0 0
      %2280 = vmatprep.subr.bf16.mxu0 0
      %2281 = vmatpush1.bf16.msra.mxu0 0
      %2282 = vmatprep.subr.bf16.mxu0 0
      %2283 = vmatpush1.bf16.msra.mxu0 %v2266
      %2284 = vmatprep.subr.bf16.mxu0 0
      %2285 = vmatpush2.bf16.msra.mxu0 0
      %2286 = vmatprep.subr.bf16.mxu0 0
      %2287 = vmatpush2.bf16.msra.mxu0 0
      %2288 = vmatprep.subr.bf16.mxu0 0
      %2289 = vmatpush2.bf16.msra.mxu0 0
      %2290 = vmatprep.subr.bf16.mxu0 0
      %2291 = vmatpush2.bf16.msra.mxu0 0
      %2292 = vmatprep.subr.bf16.mxu0 0
      %2293 = vmatpush2.bf16.msra.mxu0 0
      %2294 = vmatprep.subr.bf16.mxu0 0
      %2295 = vmatpush2.bf16.msra.mxu0 0
      %2296 = vmatprep.subr.bf16.mxu0 0
      %2297 = vmatpush2.bf16.msra.mxu0 0
      %2298 = vmatprep.subr.bf16.mxu0 0
      %2299 = vmatpush2.bf16.msra.mxu0 0
      %2300 = vmatprep.mubr.bf16.mxu0 0
      %2301 = vmatmul.mubr.bf16.gmra.mxu0 %v2264
      %v2302 = vpop.f32.mrf.mxu0
      %v2303 = vadd.f32 0.0, %v2302
      %v2304 = vpop.f32.mrf.mxu0
      %v2305 = vpop.f32.mrf.mxu0
      %v2306 = vpop.f32.mrf.mxu0
      %2307 = vdwg.mxu0
      %v2309 = vsel %vm927, %v2211, 0
      %v2311 = vsel %vm2220, %v913, 0
      %2313 = vmatprep.subr.bf16.mxu0 0
      %2314 = vmatpush1.bf16.msra.mxu0 0
      %2315 = vmatprep.subr.bf16.mxu0 0
      %2316 = vmatpush1.bf16.msra.mxu0 0
      %2317 = vmatprep.subr.bf16.mxu0 0
      %2318 = vmatpush1.bf16.msra.mxu0 0
      %2319 = vmatprep.subr.bf16.mxu0 0
      %2320 = vmatpush1.bf16.msra.mxu0 0
      %2321 = vmatprep.subr.bf16.mxu0 0
      %2322 = vmatpush1.bf16.msra.mxu0 0
      %2323 = vmatprep.subr.bf16.mxu0 0
      %2324 = vmatpush1.bf16.msra.mxu0 0
      %2325 = vmatprep.subr.bf16.mxu0 0
      %2326 = vmatpush1.bf16.msra.mxu0 0
      %2327 = vmatprep.subr.bf16.mxu0 0
      %2328 = vmatpush1.bf16.msra.mxu0 %v2311
      %2329 = vmatprep.subr.bf16.mxu0 0
      %2330 = vmatpush2.bf16.msra.mxu0 0
      %2331 = vmatprep.subr.bf16.mxu0 0
      %2332 = vmatpush2.bf16.msra.mxu0 0
      %2333 = vmatprep.subr.bf16.mxu0 0
      %2334 = vmatpush2.bf16.msra.mxu0 0
      %2335 = vmatprep.subr.bf16.mxu0 0
      %2336 = vmatpush2.bf16.msra.mxu0 0
      %2337 = vmatprep.subr.bf16.mxu0 0
      %2338 = vmatpush2.bf16.msra.mxu0 0
      %2339 = vmatprep.subr.bf16.mxu0 0
      %2340 = vmatpush2.bf16.msra.mxu0 0
      %2341 = vmatprep.subr.bf16.mxu0 0
      %2342 = vmatpush2.bf16.msra.mxu0 0
      %2343 = vmatprep.subr.bf16.mxu0 0
      %2344 = vmatpush2.bf16.msra.mxu0 0
      %2345 = vmatprep.mubr.bf16.mxu0 0
      %2346 = vmatmul.mubr.bf16.gmra.mxu0 %v2309
      %v2347 = vpop.f32.mrf.mxu0
      %v2348 = vadd.f32 0.0, %v2347
      %v2349 = vpop.f32.mrf.mxu0
      %v2350 = vpop.f32.mrf.mxu0
      %v2351 = vpop.f32.mrf.mxu0
      %2352 = vdwg.mxu0
      %v2354 = vsel %vm927, %v2212, 0
      %v2356 = vsel %vm2220, %v914, 0
      %2358 = vmatprep.subr.bf16.mxu0 0
      %2359 = vmatpush1.bf16.msra.mxu0 0
      %2360 = vmatprep.subr.bf16.mxu0 0
      %2361 = vmatpush1.bf16.msra.mxu0 0
      %2362 = vmatprep.subr.bf16.mxu0 0
      %2363 = vmatpush1.bf16.msra.mxu0 0
      %2364 = vmatprep.subr.bf16.mxu0 0
      %2365 = vmatpush1.bf16.msra.mxu0 0
      %2366 = vmatprep.subr.bf16.mxu0 0
      %2367 = vmatpush1.bf16.msra.mxu0 0
      %2368 = vmatprep.subr.bf16.mxu0 0
      %2369 = vmatpush1.bf16.msra.mxu0 0
      %2370 = vmatprep.subr.bf16.mxu0 0
      %2371 = vmatpush1.bf16.msra.mxu0 0
      %2372 = vmatprep.subr.bf16.mxu0 0
      %2373 = vmatpush1.bf16.msra.mxu0 %v2356
      %2374 = vmatprep.subr.bf16.mxu0 0
      %2375 = vmatpush2.bf16.msra.mxu0 0
      %2376 = vmatprep.subr.bf16.mxu0 0
      %2377 = vmatpush2.bf16.msra.mxu0 0
      %2378 = vmatprep.subr.bf16.mxu0 0
      %2379 = vmatpush2.bf16.msra.mxu0 0
      %2380 = vmatprep.subr.bf16.mxu0 0
      %2381 = vmatpush2.bf16.msra.mxu0 0
      %2382 = vmatprep.subr.bf16.mxu0 0
      %2383 = vmatpush2.bf16.msra.mxu0 0
      %2384 = vmatprep.subr.bf16.mxu0 0
      %2385 = vmatpush2.bf16.msra.mxu0 0
      %2386 = vmatprep.subr.bf16.mxu0 0
      %2387 = vmatpush2.bf16.msra.mxu0 0
      %2388 = vmatprep.subr.bf16.mxu0 0
      %2389 = vmatpush2.bf16.msra.mxu0 0
      %2390 = vmatprep.mubr.bf16.mxu0 0
      %2391 = vmatmul.mubr.bf16.gmra.mxu0 %v2354
      %v2392 = vpop.f32.mrf.mxu0
      %v2393 = vadd.f32 0.0, %v2392
      %v2394 = vpop.f32.mrf.mxu0
      %v2395 = vpop.f32.mrf.mxu0
      %v2396 = vpop.f32.mrf.mxu0
      %2397 = vdwg.mxu0
      %v2399 = vsel %vm927, %v2213, 0
      %v2401 = vsel %vm2220, %v915, 0
      %2403 = vmatprep.subr.bf16.mxu0 0
      %2404 = vmatpush1.bf16.msra.mxu0 0
      %2405 = vmatprep.subr.bf16.mxu0 0
      %2406 = vmatpush1.bf16.msra.mxu0 0
      %2407 = vmatprep.subr.bf16.mxu0 0
      %2408 = vmatpush1.bf16.msra.mxu0 0
      %2409 = vmatprep.subr.bf16.mxu0 0
      %2410 = vmatpush1.bf16.msra.mxu0 0
      %2411 = vmatprep.subr.bf16.mxu0 0
      %2412 = vmatpush1.bf16.msra.mxu0 0
      %2413 = vmatprep.subr.bf16.mxu0 0
      %2414 = vmatpush1.bf16.msra.mxu0 0
      %2415 = vmatprep.subr.bf16.mxu0 0
      %2416 = vmatpush1.bf16.msra.mxu0 0
      %2417 = vmatprep.subr.bf16.mxu0 0
      %2418 = vmatpush1.bf16.msra.mxu0 %v2401
      %2419 = vmatprep.subr.bf16.mxu0 0
      %2420 = vmatpush2.bf16.msra.mxu0 0
      %2421 = vmatprep.subr.bf16.mxu0 0
      %2422 = vmatpush2.bf16.msra.mxu0 0
      %2423 = vmatprep.subr.bf16.mxu0 0
      %2424 = vmatpush2.bf16.msra.mxu0 0
      %2425 = vmatprep.subr.bf16.mxu0 0
      %2426 = vmatpush2.bf16.msra.mxu0 0
      %2427 = vmatprep.subr.bf16.mxu0 0
      %2428 = vmatpush2.bf16.msra.mxu0 0
      %2429 = vmatprep.subr.bf16.mxu0 0
      %2430 = vmatpush2.bf16.msra.mxu0 0
      %2431 = vmatprep.subr.bf16.mxu0 0
      %2432 = vmatpush2.bf16.msra.mxu0 0
      %2433 = vmatprep.subr.bf16.mxu0 0
      %2434 = vmatpush2.bf16.msra.mxu0 0
      %2435 = vmatprep.mubr.bf16.mxu0 0
      %2436 = vmatmul.mubr.bf16.gmra.mxu0 %v2399
      %v2437 = vpop.f32.mrf.mxu0
      %v2438 = vadd.f32 0.0, %v2437
      %v2439 = vpop.f32.mrf.mxu0
      %v2440 = vpop.f32.mrf.mxu0
      %v2441 = vpop.f32.mrf.mxu0
      %2442 = vdwg.mxu0
      %v2444 = vsel %vm927, %v2214, 0
      %v2446 = vsel %vm2220, %v916, 0
      %2448 = vmatprep.subr.bf16.mxu0 0
      %2449 = vmatpush1.bf16.msra.mxu0 0
      %2450 = vmatprep.subr.bf16.mxu0 0
      %2451 = vmatpush1.bf16.msra.mxu0 0
      %2452 = vmatprep.subr.bf16.mxu0 0
      %2453 = vmatpush1.bf16.msra.mxu0 0
      %2454 = vmatprep.subr.bf16.mxu0 0
      %2455 = vmatpush1.bf16.msra.mxu0 0
      %2456 = vmatprep.subr.bf16.mxu0 0
      %2457 = vmatpush1.bf16.msra.mxu0 0
      %2458 = vmatprep.subr.bf16.mxu0 0
      %2459 = vmatpush1.bf16.msra.mxu0 0
      %2460 = vmatprep.subr.bf16.mxu0 0
      %2461 = vmatpush1.bf16.msra.mxu0 0
      %2462 = vmatprep.subr.bf16.mxu0 0
      %2463 = vmatpush1.bf16.msra.mxu0 %v2446
      %2464 = vmatprep.subr.bf16.mxu0 0
      %2465 = vmatpush2.bf16.msra.mxu0 0
      %2466 = vmatprep.subr.bf16.mxu0 0
      %2467 = vmatpush2.bf16.msra.mxu0 0
      %2468 = vmatprep.subr.bf16.mxu0 0
      %2469 = vmatpush2.bf16.msra.mxu0 0
      %2470 = vmatprep.subr.bf16.mxu0 0
      %2471 = vmatpush2.bf16.msra.mxu0 0
      %2472 = vmatprep.subr.bf16.mxu0 0
      %2473 = vmatpush2.bf16.msra.mxu0 0
      %2474 = vmatprep.subr.bf16.mxu0 0
      %2475 = vmatpush2.bf16.msra.mxu0 0
      %2476 = vmatprep.subr.bf16.mxu0 0
      %2477 = vmatpush2.bf16.msra.mxu0 0
      %2478 = vmatprep.subr.bf16.mxu0 0
      %2479 = vmatpush2.bf16.msra.mxu0 0
      %2480 = vmatprep.mubr.bf16.mxu0 0
      %2481 = vmatmul.mubr.bf16.gmra.mxu0 %v2444
      %v2482 = vpop.f32.mrf.mxu0
      %v2483 = vadd.f32 0.0, %v2482
      %v2484 = vpop.f32.mrf.mxu0
      %v2485 = vpop.f32.mrf.mxu0
      %v2486 = vpop.f32.mrf.mxu0
      %2487 = vdwg.mxu0
      %v2489 = vsel %vm927, %v2215, 0
      %v2491 = vsel %vm2220, %v917, 0
      %2493 = vmatprep.subr.bf16.mxu0 0
      %2494 = vmatpush1.bf16.msra.mxu0 0
      %2495 = vmatprep.subr.bf16.mxu0 0
      %2496 = vmatpush1.bf16.msra.mxu0 0
      %2497 = vmatprep.subr.bf16.mxu0 0
      %2498 = vmatpush1.bf16.msra.mxu0 0
      %2499 = vmatprep.subr.bf16.mxu0 0
      %2500 = vmatpush1.bf16.msra.mxu0 0
      %2501 = vmatprep.subr.bf16.mxu0 0
      %2502 = vmatpush1.bf16.msra.mxu0 0
      %2503 = vmatprep.subr.bf16.mxu0 0
      %2504 = vmatpush1.bf16.msra.mxu0 0
      %2505 = vmatprep.subr.bf16.mxu0 0
      %2506 = vmatpush1.bf16.msra.mxu0 0
      %2507 = vmatprep.subr.bf16.mxu0 0
      %2508 = vmatpush1.bf16.msra.mxu0 %v2491
      %2509 = vmatprep.subr.bf16.mxu0 0
      %2510 = vmatpush2.bf16.msra.mxu0 0
      %2511 = vmatprep.subr.bf16.mxu0 0
      %2512 = vmatpush2.bf16.msra.mxu0 0
      %2513 = vmatprep.subr.bf16.mxu0 0
      %2514 = vmatpush2.bf16.msra.mxu0 0
      %2515 = vmatprep.subr.bf16.mxu0 0
      %2516 = vmatpush2.bf16.msra.mxu0 0
      %2517 = vmatprep.subr.bf16.mxu0 0
      %2518 = vmatpush2.bf16.msra.mxu0 0
      %2519 = vmatprep.subr.bf16.mxu0 0
      %2520 = vmatpush2.bf16.msra.mxu0 0
      %2521 = vmatprep.subr.bf16.mxu0 0
      %2522 = vmatpush2.bf16.msra.mxu0 0
      %2523 = vmatprep.subr.bf16.mxu0 0
      %2524 = vmatpush2.bf16.msra.mxu0 0
      %2525 = vmatprep.mubr.bf16.mxu0 0
      %2526 = vmatmul.mubr.bf16.gmra.mxu0 %v2489
      %v2527 = vpop.f32.mrf.mxu0
      %v2528 = vadd.f32 0.0, %v2527
      %v2529 = vpop.f32.mrf.mxu0
      %v2530 = vpop.f32.mrf.mxu0
      %v2531 = vpop.f32.mrf.mxu0
      %2532 = vdwg.mxu0
      %v2534 = vsel %vm927, %v2216, 0
      %v2536 = vsel %vm2220, %v918, 0
      %2538 = vmatprep.subr.bf16.mxu0 0
      %2539 = vmatpush1.bf16.msra.mxu0 0
      %2540 = vmatprep.subr.bf16.mxu0 0
      %2541 = vmatpush1.bf16.msra.mxu0 0
      %2542 = vmatprep.subr.bf16.mxu0 0
      %2543 = vmatpush1.bf16.msra.mxu0 0
      %2544 = vmatprep.subr.bf16.mxu0 0
      %2545 = vmatpush1.bf16.msra.mxu0 0
      %2546 = vmatprep.subr.bf16.mxu0 0
      %2547 = vmatpush1.bf16.msra.mxu0 0
      %2548 = vmatprep.subr.bf16.mxu0 0
      %2549 = vmatpush1.bf16.msra.mxu0 0
      %2550 = vmatprep.subr.bf16.mxu0 0
      %2551 = vmatpush1.bf16.msra.mxu0 0
      %2552 = vmatprep.subr.bf16.mxu0 0
      %2553 = vmatpush1.bf16.msra.mxu0 %v2536
      %2554 = vmatprep.subr.bf16.mxu0 0
      %2555 = vmatpush2.bf16.msra.mxu0 0
      %2556 = vmatprep.subr.bf16.mxu0 0
      %2557 = vmatpush2.bf16.msra.mxu0 0
      %2558 = vmatprep.subr.bf16.mxu0 0
      %2559 = vmatpush2.bf16.msra.mxu0 0
      %2560 = vmatprep.subr.bf16.mxu0 0
      %2561 = vmatpush2.bf16.msra.mxu0 0
      %2562 = vmatprep.subr.bf16.mxu0 0
      %2563 = vmatpush2.bf16.msra.mxu0 0
      %2564 = vmatprep.subr.bf16.mxu0 0
      %2565 = vmatpush2.bf16.msra.mxu0 0
      %2566 = vmatprep.subr.bf16.mxu0 0
      %2567 = vmatpush2.bf16.msra.mxu0 0
      %2568 = vmatprep.subr.bf16.mxu0 0
      %2569 = vmatpush2.bf16.msra.mxu0 0
      %2570 = vmatprep.mubr.bf16.mxu0 0
      %2571 = vmatmul.mubr.bf16.gmra.mxu0 %v2534
      %v2572 = vpop.f32.mrf.mxu0
      %v2573 = vadd.f32 0.0, %v2572
      %v2574 = vpop.f32.mrf.mxu0
      %v2575 = vpop.f32.mrf.mxu0
      %v2576 = vpop.f32.mrf.mxu0
      %2577 = vdwg.mxu0
      %s2578 = smul.addr %s1296, 4
      %s2579 = scalar_lea.vmem [#allocation4], %s2578
      %v2580 = vld [vmem:[%s2579] sm:$0xf]
      %v2589 = vunpack.c.l.b16 %v2209
      %v2590 = vunpack.c.l.b16 %v2210
      %v2591 = vunpack.c.l.b16 %v2211
      %v2592 = vunpack.c.l.b16 %v2212
      %v2593 = vunpack.c.l.b16 %v2213
      %v2594 = vunpack.c.l.b16 %v2214
      %v2595 = vunpack.c.l.b16 %v2215
      %v2596 = vunpack.c.l.b16 %v2216
      %v2597 = vrot.slane %v2590, 7
      %v2598 = vsel %vm1374, %v2597, %v2589
      %v2599 = vrot.slane %v2591, 6
      %v2600 = vsel %vm1377, %v2599, %v2598
      %v2601 = vrot.slane %v2592, 5
      %v2602 = vsel %vm1380, %v2601, %v2600
      %v2603 = vrot.slane %v2593, 4
      %v2604 = vsel %vm1383, %v2603, %v2602
      %v2605 = vrot.slane %v2594, 3
      %v2606 = vsel %vm1386, %v2605, %v2604
      %v2607 = vrot.slane %v2595, 2
      %v2608 = vsel %vm1389, %v2607, %v2606
      %v2609 = vrot.slane %v2596, 1
      %v2610 = vsel %vm1392, %v2609, %v2608
      %v2611 = vpack.c.b16 %v2610, %v2610
      %v2613 = vsel %vm927, %v2611, 0
      %v2616 = vsel %vm2220, %v2580, 0
      %2618 = vmatprep.subr.bf16.mxu0 0
      %2619 = vmatpush1.bf16.msra.mxu0 0
      %2620 = vmatprep.subr.bf16.mxu0 0
      %2621 = vmatpush1.bf16.msra.mxu0 0
      %2622 = vmatprep.subr.bf16.mxu0 0
      %2623 = vmatpush1.bf16.msra.mxu0 0
      %2624 = vmatprep.subr.bf16.mxu0 0
      %2625 = vmatpush1.bf16.msra.mxu0 0
      %2626 = vmatprep.subr.bf16.mxu0 0
      %2627 = vmatpush1.bf16.msra.mxu0 0
      %2628 = vmatprep.subr.bf16.mxu0 0
      %2629 = vmatpush1.bf16.msra.mxu0 0
      %2630 = vmatprep.subr.bf16.mxu0 0
      %2631 = vmatpush1.bf16.msra.mxu0 0
      %2632 = vmatprep.subr.bf16.mxu0 0
      %2633 = vmatpush1.bf16.msra.mxu0 %v2616
      %2634 = vmatprep.subr.bf16.mxu0 0
      %2635 = vmatpush2.bf16.msra.mxu0 0
      %2636 = vmatprep.subr.bf16.mxu0 0
      %2637 = vmatpush2.bf16.msra.mxu0 0
      %2638 = vmatprep.subr.bf16.mxu0 0
      %2639 = vmatpush2.bf16.msra.mxu0 0
      %2640 = vmatprep.subr.bf16.mxu0 0
      %2641 = vmatpush2.bf16.msra.mxu0 0
      %2642 = vmatprep.subr.bf16.mxu0 0
      %2643 = vmatpush2.bf16.msra.mxu0 0
      %2644 = vmatprep.subr.bf16.mxu0 0
      %2645 = vmatpush2.bf16.msra.mxu0 0
      %2646 = vmatprep.subr.bf16.mxu0 0
      %2647 = vmatpush2.bf16.msra.mxu0 0
      %2648 = vmatprep.subr.bf16.mxu0 0
      %2649 = vmatpush2.bf16.msra.mxu0 0
      %2650 = vmatprep.mubr.bf16.mxu0 0
      %2651 = vmatmul.mubr.bf16.gmra.mxu0 %v2613
      %v2652 = vpop.f32.mrf.mxu0
      %v2653 = vadd.f32 0.0, %v2652
      %v2654 = vpop.f32.mrf.mxu0
      %v2655 = vpop.f32.mrf.mxu0
      %v2656 = vpop.f32.mrf.mxu0
      %2657 = vdwg.mxu0
      %v2659 = vcombine.high %v2653, %v2653
      %v2661 = vunpack.c.l.s4 1966171168
      %v2662 = vunpack.c.0.s8 %v2661
      %v2663 = vlaneseq
      %v2664 = vshrl.u32 %v2663, 7
      %v2665 = vsub.s32 %v2662, %v2664
      %v2666 = vrot.slane %v2653, %v2665
      %v2668 = vunpack.c.l.s4 1966171168
      %v2669 = vunpack.c.0.s8 %v2668
      %v2670 = vlaneseq
      %v2671 = vshrl.u32 %v2670, 7
      %v2672 = vsub.s32 %v2669, %v2671
      %v2673 = vrot.slane %v2659, %v2672
      %v2674 = vcombine.high %v2666, %v2666
      %v2675 = vcombine.high %v2673, %v2673
      %v2677 = vunpack.c.l.s4 1966171168
      %v2678 = vunpack.c.0.s8 %v2677
      %v2679 = vlaneseq
      %v2680 = vshrl.u32 %v2679, 7
      %v2681 = vsub.s32 %v2678, %v2680
      %v2682 = vrot.slane %v2666, %v2681
      %v2684 = vunpack.c.l.s4 1966171168
      %v2685 = vunpack.c.0.s8 %v2684
      %v2686 = vlaneseq
      %v2687 = vshrl.u32 %v2686, 7
      %v2688 = vsub.s32 %v2685, %v2687
      %v2689 = vrot.slane %v2673, %v2688
      %v2691 = vunpack.c.l.s4 1966171168
      %v2692 = vunpack.c.0.s8 %v2691
      %v2693 = vlaneseq
      %v2694 = vshrl.u32 %v2693, 7
      %v2695 = vsub.s32 %v2692, %v2694
      %v2696 = vrot.slane %v2674, %v2695
      %v2698 = vunpack.c.l.s4 1966171168
      %v2699 = vunpack.c.0.s8 %v2698
      %v2700 = vlaneseq
      %v2701 = vshrl.u32 %v2700, 7
      %v2702 = vsub.s32 %v2699, %v2701
      %v2703 = vrot.slane %v2675, %v2702
      %v2704 = vcombine.high %v2682, %v2682
      %v2705 = vcombine.high %v2689, %v2689
      %v2706 = vcombine.high %v2696, %v2696
      %v2707 = vcombine.high %v2703, %v2703
      %s2716 = smul.addr %s1499, 4
      %s2717 = scalar_lea.vmem [#allocation4], %s2716
      %v2718 = vld [vmem:[%s2717] sm:$0xf]
      %v2719 = vrot.slane %v2589, 1
      %v2720 = vsel %vm1374, %v2590, %v2719
      %v2721 = vrot.slane %v2591, 7
      %v2722 = vsel %vm1377, %v2721, %v2720
      %v2723 = vrot.slane %v2592, 6
      %v2724 = vsel %vm1380, %v2723, %v2722
      %v2725 = vrot.slane %v2593, 5
      %v2726 = vsel %vm1383, %v2725, %v2724
      %v2727 = vrot.slane %v2594, 4
      %v2728 = vsel %vm1386, %v2727, %v2726
      %v2729 = vrot.slane %v2595, 3
      %v2730 = vsel %vm1389, %v2729, %v2728
      %v2731 = vrot.slane %v2596, 2
      %v2732 = vsel %vm1392, %v2731, %v2730
      %v2733 = vpack.c.b16 %v2732, %v2732
      %v2735 = vsel %vm927, %v2733, 0
      %v2738 = vsel %vm2220, %v2718, 0
      %2740 = vmatprep.subr.bf16.mxu0 0
      %2741 = vmatpush1.bf16.msra.mxu0 0
      %2742 = vmatprep.subr.bf16.mxu0 0
      %2743 = vmatpush1.bf16.msra.mxu0 0
      %2744 = vmatprep.subr.bf16.mxu0 0
      %2745 = vmatpush1.bf16.msra.mxu0 0
      %2746 = vmatprep.subr.bf16.mxu0 0
      %2747 = vmatpush1.bf16.msra.mxu0 0
      %2748 = vmatprep.subr.bf16.mxu0 0
      %2749 = vmatpush1.bf16.msra.mxu0 0
      %2750 = vmatprep.subr.bf16.mxu0 0
      %2751 = vmatpush1.bf16.msra.mxu0 0
      %2752 = vmatprep.subr.bf16.mxu0 0
      %2753 = vmatpush1.bf16.msra.mxu0 0
      %2754 = vmatprep.subr.bf16.mxu0 0
      %2755 = vmatpush1.bf16.msra.mxu0 %v2738
      %2756 = vmatprep.subr.bf16.mxu0 0
      %2757 = vmatpush2.bf16.msra.mxu0 0
      %2758 = vmatprep.subr.bf16.mxu0 0
      %2759 = vmatpush2.bf16.msra.mxu0 0
      %2760 = vmatprep.subr.bf16.mxu0 0
      %2761 = vmatpush2.bf16.msra.mxu0 0
      %2762 = vmatprep.subr.bf16.mxu0 0
      %2763 = vmatpush2.bf16.msra.mxu0 0
      %2764 = vmatprep.subr.bf16.mxu0 0
      %2765 = vmatpush2.bf16.msra.mxu0 0
      %2766 = vmatprep.subr.bf16.mxu0 0
      %2767 = vmatpush2.bf16.msra.mxu0 0
      %2768 = vmatprep.subr.bf16.mxu0 0
      %2769 = vmatpush2.bf16.msra.mxu0 0
      %2770 = vmatprep.subr.bf16.mxu0 0
      %2771 = vmatpush2.bf16.msra.mxu0 0
      %2772 = vmatprep.mubr.bf16.mxu0 0
      %2773 = vmatmul.mubr.bf16.gmra.mxu0 %v2735
      %v2774 = vpop.f32.mrf.mxu0
      %v2775 = vadd.f32 0.0, %v2774
      %v2776 = vpop.f32.mrf.mxu0
      %v2777 = vpop.f32.mrf.mxu0
      %v2778 = vpop.f32.mrf.mxu0
      %2779 = vdwg.mxu0
      %v2781 = vcombine.high %v2775, %v2775
      %v2783 = vunpack.c.l.s4 1966171168
      %v2784 = vunpack.c.0.s8 %v2783
      %v2785 = vlaneseq
      %v2786 = vshrl.u32 %v2785, 7
      %v2787 = vsub.s32 %v2784, %v2786
      %v2788 = vrot.slane %v2775, %v2787
      %v2790 = vunpack.c.l.s4 1966171168
      %v2791 = vunpack.c.0.s8 %v2790
      %v2792 = vlaneseq
      %v2793 = vshrl.u32 %v2792, 7
      %v2794 = vsub.s32 %v2791, %v2793
      %v2795 = vrot.slane %v2781, %v2794
      %v2796 = vcombine.high %v2788, %v2788
      %v2797 = vcombine.high %v2795, %v2795
      %v2799 = vunpack.c.l.s4 1966171168
      %v2800 = vunpack.c.0.s8 %v2799
      %v2801 = vlaneseq
      %v2802 = vshrl.u32 %v2801, 7
      %v2803 = vsub.s32 %v2800, %v2802
      %v2804 = vrot.slane %v2788, %v2803
      %v2806 = vunpack.c.l.s4 1966171168
      %v2807 = vunpack.c.0.s8 %v2806
      %v2808 = vlaneseq
      %v2809 = vshrl.u32 %v2808, 7
      %v2810 = vsub.s32 %v2807, %v2809
      %v2811 = vrot.slane %v2795, %v2810
      %v2813 = vunpack.c.l.s4 1966171168
      %v2814 = vunpack.c.0.s8 %v2813
      %v2815 = vlaneseq
      %v2816 = vshrl.u32 %v2815, 7
      %v2817 = vsub.s32 %v2814, %v2816
      %v2818 = vrot.slane %v2796, %v2817
      %v2820 = vunpack.c.l.s4 1966171168
      %v2821 = vunpack.c.0.s8 %v2820
      %v2822 = vlaneseq
      %v2823 = vshrl.u32 %v2822, 7
      %v2824 = vsub.s32 %v2821, %v2823
      %v2825 = vrot.slane %v2797, %v2824
      %v2826 = vcombine.high %v2804, %v2804
      %v2827 = vcombine.high %v2811, %v2811
      %v2828 = vcombine.high %v2818, %v2818
      %v2829 = vcombine.high %v2825, %v2825
      %s2830 = smul.addr %s1614, 4
      %s2831 = scalar_lea.vmem [#allocation4], %s2830
      %v2832 = vld [vmem:[%s2831] sm:$0xf]
      %v2833 = vrot.slane %v2589, 2
      %v2834 = vrot.slane %v2590, 1
      %v2835 = vsel %vm1374, %v2834, %v2833
      %v2836 = vsel %vm1377, %v2591, %v2835
      %v2837 = vrot.slane %v2592, 7
      %v2838 = vsel %vm1380, %v2837, %v2836
      %v2839 = vrot.slane %v2593, 6
      %v2840 = vsel %vm1383, %v2839, %v2838
      %v2841 = vrot.slane %v2594, 5
      %v2842 = vsel %vm1386, %v2841, %v2840
      %v2843 = vrot.slane %v2595, 4
      %v2844 = vsel %vm1389, %v2843, %v2842
      %v2845 = vrot.slane %v2596, 3
      %v2846 = vsel %vm1392, %v2845, %v2844
      %v2847 = vpack.c.b16 %v2846, %v2846
      %v2849 = vsel %vm927, %v2847, 0
      %v2852 = vsel %vm2220, %v2832, 0
      %2854 = vmatprep.subr.bf16.mxu0 0
      %2855 = vmatpush1.bf16.msra.mxu0 0
      %2856 = vmatprep.subr.bf16.mxu0 0
      %2857 = vmatpush1.bf16.msra.mxu0 0
      %2858 = vmatprep.subr.bf16.mxu0 0
      %2859 = vmatpush1.bf16.msra.mxu0 0
      %2860 = vmatprep.subr.bf16.mxu0 0
      %2861 = vmatpush1.bf16.msra.mxu0 0
      %2862 = vmatprep.subr.bf16.mxu0 0
      %2863 = vmatpush1.bf16.msra.mxu0 0
      %2864 = vmatprep.subr.bf16.mxu0 0
      %2865 = vmatpush1.bf16.msra.mxu0 0
      %2866 = vmatprep.subr.bf16.mxu0 0
      %2867 = vmatpush1.bf16.msra.mxu0 0
      %2868 = vmatprep.subr.bf16.mxu0 0
      %2869 = vmatpush1.bf16.msra.mxu0 %v2852
      %2870 = vmatprep.subr.bf16.mxu0 0
      %2871 = vmatpush2.bf16.msra.mxu0 0
      %2872 = vmatprep.subr.bf16.mxu0 0
      %2873 = vmatpush2.bf16.msra.mxu0 0
      %2874 = vmatprep.subr.bf16.mxu0 0
      %2875 = vmatpush2.bf16.msra.mxu0 0
      %2876 = vmatprep.subr.bf16.mxu0 0
      %2877 = vmatpush2.bf16.msra.mxu0 0
      %2878 = vmatprep.subr.bf16.mxu0 0
      %2879 = vmatpush2.bf16.msra.mxu0 0
      %2880 = vmatprep.subr.bf16.mxu0 0
      %2881 = vmatpush2.bf16.msra.mxu0 0
      %2882 = vmatprep.subr.bf16.mxu0 0
      %2883 = vmatpush2.bf16.msra.mxu0 0
      %2884 = vmatprep.subr.bf16.mxu0 0
      %2885 = vmatpush2.bf16.msra.mxu0 0
      %2886 = vmatprep.mubr.bf16.mxu0 0
      %2887 = vmatmul.mubr.bf16.gmra.mxu0 %v2849
      %v2888 = vpop.f32.mrf.mxu0
      %v2889 = vadd.f32 0.0, %v2888
      %v2890 = vpop.f32.mrf.mxu0
      %v2891 = vpop.f32.mrf.mxu0
      %v2892 = vpop.f32.mrf.mxu0
      %2893 = vdwg.mxu0
      %v2895 = vcombine.high %v2889, %v2889
      %v2897 = vunpack.c.l.s4 1966171168
      %v2898 = vunpack.c.0.s8 %v2897
      %v2899 = vlaneseq
      %v2900 = vshrl.u32 %v2899, 7
      %v2901 = vsub.s32 %v2898, %v2900
      %v2902 = vrot.slane %v2889, %v2901
      %v2904 = vunpack.c.l.s4 1966171168
      %v2905 = vunpack.c.0.s8 %v2904
      %v2906 = vlaneseq
      %v2907 = vshrl.u32 %v2906, 7
      %v2908 = vsub.s32 %v2905, %v2907
      %v2909 = vrot.slane %v2895, %v2908
      %v2910 = vcombine.high %v2902, %v2902
      %v2911 = vcombine.high %v2909, %v2909
      %v2913 = vunpack.c.l.s4 1966171168
      %v2914 = vunpack.c.0.s8 %v2913
      %v2915 = vlaneseq
      %v2916 = vshrl.u32 %v2915, 7
      %v2917 = vsub.s32 %v2914, %v2916
      %v2918 = vrot.slane %v2902, %v2917
      %v2920 = vunpack.c.l.s4 1966171168
      %v2921 = vunpack.c.0.s8 %v2920
      %v2922 = vlaneseq
      %v2923 = vshrl.u32 %v2922, 7
      %v2924 = vsub.s32 %v2921, %v2923
      %v2925 = vrot.slane %v2909, %v2924
      %v2927 = vunpack.c.l.s4 1966171168
      %v2928 = vunpack.c.0.s8 %v2927
      %v2929 = vlaneseq
      %v2930 = vshrl.u32 %v2929, 7
      %v2931 = vsub.s32 %v2928, %v2930
      %v2932 = vrot.slane %v2910, %v2931
      %v2934 = vunpack.c.l.s4 1966171168
      %v2935 = vunpack.c.0.s8 %v2934
      %v2936 = vlaneseq
      %v2937 = vshrl.u32 %v2936, 7
      %v2938 = vsub.s32 %v2935, %v2937
      %v2939 = vrot.slane %v2911, %v2938
      %v2940 = vcombine.high %v2918, %v2918
      %v2941 = vcombine.high %v2925, %v2925
      %v2942 = vcombine.high %v2932, %v2932
      %v2943 = vcombine.high %v2939, %v2939
      %s2944 = smul.addr %s1729, 4
      %s2945 = scalar_lea.vmem [#allocation4], %s2944
      %v2946 = vld [vmem:[%s2945] sm:$0xf]
      %v2947 = vrot.slane %v2589, 3
      %v2948 = vrot.slane %v2590, 2
      %v2949 = vsel %vm1374, %v2948, %v2947
      %v2950 = vrot.slane %v2591, 1
      %v2951 = vsel %vm1377, %v2950, %v2949
      %v2952 = vsel %vm1380, %v2592, %v2951
      %v2953 = vrot.slane %v2593, 7
      %v2954 = vsel %vm1383, %v2953, %v2952
      %v2955 = vrot.slane %v2594, 6
      %v2956 = vsel %vm1386, %v2955, %v2954
      %v2957 = vrot.slane %v2595, 5
      %v2958 = vsel %vm1389, %v2957, %v2956
      %v2959 = vrot.slane %v2596, 4
      %v2960 = vsel %vm1392, %v2959, %v2958
      %v2961 = vpack.c.b16 %v2960, %v2960
      %v2963 = vsel %vm927, %v2961, 0
      %v2966 = vsel %vm2220, %v2946, 0
      %2968 = vmatprep.subr.bf16.mxu0 0
      %2969 = vmatpush1.bf16.msra.mxu0 0
      %2970 = vmatprep.subr.bf16.mxu0 0
      %2971 = vmatpush1.bf16.msra.mxu0 0
      %2972 = vmatprep.subr.bf16.mxu0 0
      %2973 = vmatpush1.bf16.msra.mxu0 0
      %2974 = vmatprep.subr.bf16.mxu0 0
      %2975 = vmatpush1.bf16.msra.mxu0 0
      %2976 = vmatprep.subr.bf16.mxu0 0
      %2977 = vmatpush1.bf16.msra.mxu0 0
      %2978 = vmatprep.subr.bf16.mxu0 0
      %2979 = vmatpush1.bf16.msra.mxu0 0
      %2980 = vmatprep.subr.bf16.mxu0 0
      %2981 = vmatpush1.bf16.msra.mxu0 0
      %2982 = vmatprep.subr.bf16.mxu0 0
      %2983 = vmatpush1.bf16.msra.mxu0 %v2966
      %2984 = vmatprep.subr.bf16.mxu0 0
      %2985 = vmatpush2.bf16.msra.mxu0 0
      %2986 = vmatprep.subr.bf16.mxu0 0
      %2987 = vmatpush2.bf16.msra.mxu0 0
      %2988 = vmatprep.subr.bf16.mxu0 0
      %2989 = vmatpush2.bf16.msra.mxu0 0
      %2990 = vmatprep.subr.bf16.mxu0 0
      %2991 = vmatpush2.bf16.msra.mxu0 0
      %2992 = vmatprep.subr.bf16.mxu0 0
      %2993 = vmatpush2.bf16.msra.mxu0 0
      %2994 = vmatprep.subr.bf16.mxu0 0
      %2995 = vmatpush2.bf16.msra.mxu0 0
      %2996 = vmatprep.subr.bf16.mxu0 0
      %2997 = vmatpush2.bf16.msra.mxu0 0
      %2998 = vmatprep.subr.bf16.mxu0 0
      %2999 = vmatpush2.bf16.msra.mxu0 0
      %3000 = vmatprep.mubr.bf16.mxu0 0
      %3001 = vmatmul.mubr.bf16.gmra.mxu0 %v2963
      %v3002 = vpop.f32.mrf.mxu0
      %v3003 = vadd.f32 0.0, %v3002
      %v3004 = vpop.f32.mrf.mxu0
      %v3005 = vpop.f32.mrf.mxu0
      %v3006 = vpop.f32.mrf.mxu0
      %3007 = vdwg.mxu0
      %v3009 = vcombine.high %v3003, %v3003
      %v3011 = vunpack.c.l.s4 1966171168
      %v3012 = vunpack.c.0.s8 %v3011
      %v3013 = vlaneseq
      %v3014 = vshrl.u32 %v3013, 7
      %v3015 = vsub.s32 %v3012, %v3014
      %v3016 = vrot.slane %v3003, %v3015
      %v3018 = vunpack.c.l.s4 1966171168
      %v3019 = vunpack.c.0.s8 %v3018
      %v3020 = vlaneseq
      %v3021 = vshrl.u32 %v3020, 7
      %v3022 = vsub.s32 %v3019, %v3021
      %v3023 = vrot.slane %v3009, %v3022
      %v3024 = vcombine.high %v3016, %v3016
      %v3025 = vcombine.high %v3023, %v3023
      %v3027 = vunpack.c.l.s4 1966171168
      %v3028 = vunpack.c.0.s8 %v3027
      %v3029 = vlaneseq
      %v3030 = vshrl.u32 %v3029, 7
      %v3031 = vsub.s32 %v3028, %v3030
      %v3032 = vrot.slane %v3016, %v3031
      %v3034 = vunpack.c.l.s4 1966171168
      %v3035 = vunpack.c.0.s8 %v3034
      %v3036 = vlaneseq
      %v3037 = vshrl.u32 %v3036, 7
      %v3038 = vsub.s32 %v3035, %v3037
      %v3039 = vrot.slane %v3023, %v3038
      %v3041 = vunpack.c.l.s4 1966171168
      %v3042 = vunpack.c.0.s8 %v3041
      %v3043 = vlaneseq
      %v3044 = vshrl.u32 %v3043, 7
      %v3045 = vsub.s32 %v3042, %v3044
      %v3046 = vrot.slane %v3024, %v3045
      %v3048 = vunpack.c.l.s4 1966171168
      %v3049 = vunpack.c.0.s8 %v3048
      %v3050 = vlaneseq
      %v3051 = vshrl.u32 %v3050, 7
      %v3052 = vsub.s32 %v3049, %v3051
      %v3053 = vrot.slane %v3025, %v3052
      %v3054 = vcombine.high %v3032, %v3032
      %v3055 = vcombine.high %v3039, %v3039
      %v3056 = vcombine.high %v3046, %v3046
      %v3057 = vcombine.high %v3053, %v3053
      %v3058 = vld [vmem:[#allocation7] sm:$0xf]
      %v3059 = vld [vmem:[#allocation7 + $0x4] sm:$0xf]
      %v3060 = vld [vmem:[#allocation7 + $0x8] sm:$0xf]
      %v3061 = vld [vmem:[#allocation7 + $0xc] sm:$0xf]
      %v3062 = vld [vmem:[#allocation7 + $0x10] sm:$0xf]
      %v3063 = vld [vmem:[#allocation7 + $0x14] sm:$0xf]
      %v3064 = vld [vmem:[#allocation7 + $0x18] sm:$0xf]
      %v3065 = vld [vmem:[#allocation7 + $0x1c] sm:$0xf]
      %3067 = vset.pattern.permute.xlu0 0
      %3068 = vperm.xlu0 %3067, %v2073
      %v3069 = vpop.permute.xlu0 %3068
      %3072 = vset.pattern.permute.xlu0 0
      %3073 = vperm.xlu0 %3072, %v2075
      %v3074 = vpop.permute.xlu0 %3073
      %3077 = vset.pattern.permute.xlu0 0
      %3078 = vperm.xlu0 %3077, %v2077
      %v3079 = vpop.permute.xlu0 %3078
      %3082 = vset.pattern.permute.xlu0 0
      %3083 = vperm.xlu0 %3082, %v2079
      %v3084 = vpop.permute.xlu0 %3083
      %3087 = vset.pattern.permute.xlu0 0
      %3088 = vperm.xlu0 %3087, %v2081
      %v3089 = vpop.permute.xlu0 %3088
      %3092 = vset.pattern.permute.xlu0 0
      %3093 = vperm.xlu0 %3092, %v2083
      %v3094 = vpop.permute.xlu0 %3093
      %3097 = vset.pattern.permute.xlu0 0
      %3098 = vperm.xlu0 %3097, %v2085
      %v3099 = vpop.permute.xlu0 %3098
      %3102 = vset.pattern.permute.xlu0 0
      %3103 = vperm.xlu0 %3102, %v2087
      %v3104 = vpop.permute.xlu0 %3103
      %v3106 = vmul.f32 %v3069, %v3058
      %v3107 = vmul.f32 %v3074, %v3059
      %v3108 = vmul.f32 %v3079, %v3060
      %v3109 = vmul.f32 %v3084, %v3061
      %v3110 = vmul.f32 %v3089, %v3062
      %v3111 = vmul.f32 %v3094, %v3063
      %v3112 = vmul.f32 %v3099, %v3064
      %v3113 = vmul.f32 %v3104, %v3065
      %v3114 = vlaneseq
      %v3115 = vshrl.u32 %v3114, 7
      %v3116 = vsub.s32 0, %v3115
      %v3117 = vrot.slane %v2804, %v3116
      %v3118 = vlaneseq
      %v3119 = vshrl.u32 %v3118, 7
      %v3120 = vsub.s32 0, %v3119
      %v3121 = vrot.slane %v2818, %v3120
      %v3122 = vlaneseq
      %v3123 = vshrl.u32 %v3122, 7
      %v3124 = vsub.s32 0, %v3123
      %v3125 = vrot.slane %v2826, %v3124
      %v3126 = vlaneseq
      %v3127 = vshrl.u32 %v3126, 7
      %v3128 = vsub.s32 0, %v3127
      %v3129 = vrot.slane %v2828, %v3128
      %v3130 = vlaneseq
      %v3131 = vshrl.u32 %v3130, 7
      %v3132 = vsub.s32 0, %v3131
      %v3133 = vrot.slane %v2811, %v3132
      %v3134 = vlaneseq
      %v3135 = vshrl.u32 %v3134, 7
      %v3136 = vsub.s32 0, %v3135
      %v3137 = vrot.slane %v2825, %v3136
      %v3138 = vlaneseq
      %v3139 = vshrl.u32 %v3138, 7
      %v3140 = vsub.s32 0, %v3139
      %v3141 = vrot.slane %v2827, %v3140
      %v3142 = vlaneseq
      %v3143 = vshrl.u32 %v3142, 7
      %v3144 = vsub.s32 0, %v3143
      %v3145 = vrot.slane %v2829, %v3144
      %v3154 = vlaneseq
      %v3155 = vshrl.u32 %v3154, 7
      %v3156 = vsub.s32 0, %v3155
      %v3157 = vrot.slane %v2918, %v3156
      %v3158 = vlaneseq
      %v3159 = vshrl.u32 %v3158, 7
      %v3160 = vsub.s32 0, %v3159
      %v3161 = vrot.slane %v2932, %v3160
      %v3162 = vlaneseq
      %v3163 = vshrl.u32 %v3162, 7
      %v3164 = vsub.s32 0, %v3163
      %v3165 = vrot.slane %v2940, %v3164
      %v3166 = vlaneseq
      %v3167 = vshrl.u32 %v3166, 7
      %v3168 = vsub.s32 0, %v3167
      %v3169 = vrot.slane %v2942, %v3168
      %v3170 = vlaneseq
      %v3171 = vshrl.u32 %v3170, 7
      %v3172 = vsub.s32 0, %v3171
      %v3173 = vrot.slane %v2925, %v3172
      %v3174 = vlaneseq
      %v3175 = vshrl.u32 %v3174, 7
      %v3176 = vsub.s32 0, %v3175
      %v3177 = vrot.slane %v2939, %v3176
      %v3178 = vlaneseq
      %v3179 = vshrl.u32 %v3178, 7
      %v3180 = vsub.s32 0, %v3179
      %v3181 = vrot.slane %v2941, %v3180
      %v3182 = vlaneseq
      %v3183 = vshrl.u32 %v3182, 7
      %v3184 = vsub.s32 0, %v3183
      %v3185 = vrot.slane %v2943, %v3184
      %v3194 = vlaneseq
      %v3195 = vshrl.u32 %v3194, 7
      %v3196 = vsub.s32 0, %v3195
      %v3197 = vrot.slane %v3032, %v3196
      %v3198 = vlaneseq
      %v3199 = vshrl.u32 %v3198, 7
      %v3200 = vsub.s32 0, %v3199
      %v3201 = vrot.slane %v3046, %v3200
      %v3202 = vlaneseq
      %v3203 = vshrl.u32 %v3202, 7
      %v3204 = vsub.s32 0, %v3203
      %v3205 = vrot.slane %v3054, %v3204
      %v3206 = vlaneseq
      %v3207 = vshrl.u32 %v3206, 7
      %v3208 = vsub.s32 0, %v3207
      %v3209 = vrot.slane %v3056, %v3208
      %v3210 = vlaneseq
      %v3211 = vshrl.u32 %v3210, 7
      %v3212 = vsub.s32 0, %v3211
      %v3213 = vrot.slane %v3039, %v3212
      %v3214 = vlaneseq
      %v3215 = vshrl.u32 %v3214, 7
      %v3216 = vsub.s32 0, %v3215
      %v3217 = vrot.slane %v3053, %v3216
      %v3218 = vlaneseq
      %v3219 = vshrl.u32 %v3218, 7
      %v3220 = vsub.s32 0, %v3219
      %v3221 = vrot.slane %v3055, %v3220
      %v3222 = vlaneseq
      %v3223 = vshrl.u32 %v3222, 7
      %v3224 = vsub.s32 0, %v3223
      %v3225 = vrot.slane %v3057, %v3224
      %v3234 = vsel %vm1964, %v2682, %v3117
      %v3235 = vsel %vm1964, %v2696, %v3121
      %v3236 = vsel %vm1964, %v2704, %v3125
      %v3237 = vsel %vm1964, %v2706, %v3129
      %v3238 = vsel %vm1964, %v2689, %v3133
      %v3239 = vsel %vm1964, %v2703, %v3137
      %v3240 = vsel %vm1964, %v2705, %v3141
      %v3241 = vsel %vm1964, %v2707, %v3145
      %v3242 = vsel %vm1973, %v3234, %v3157
      %v3243 = vsel %vm1973, %v3235, %v3161
      %v3244 = vsel %vm1973, %v3236, %v3165
      %v3245 = vsel %vm1973, %v3237, %v3169
      %v3246 = vsel %vm1973, %v3238, %v3173
      %v3247 = vsel %vm1973, %v3239, %v3177
      %v3248 = vsel %vm1973, %v3240, %v3181
      %v3249 = vsel %vm1973, %v3241, %v3185
      %v3250 = vsel %vm1982, %v3242, %v3197
      %v3251 = vsel %vm1982, %v3243, %v3201
      %v3252 = vsel %vm1982, %v3244, %v3205
      %v3253 = vsel %vm1982, %v3245, %v3209
      %v3254 = vsel %vm1982, %v3246, %v3213
      %v3255 = vsel %vm1982, %v3247, %v3217
      %v3256 = vsel %vm1982, %v3248, %v3221
      %v3257 = vsel %vm1982, %v3249, %v3225
      %v3258 = vadd.f32 %v3106, %v3250
      %v3259 = vadd.f32 %v3107, %v3251
      %v3260 = vadd.f32 %v3108, %v3252
      %v3261 = vadd.f32 %v3109, %v3253
      %v3262 = vadd.f32 %v3110, %v3254
      %v3263 = vadd.f32 %v3111, %v3255
      %v3264 = vadd.f32 %v3112, %v3256
      %v3265 = vadd.f32 %v3113, %v3257
      %v3266 = vadd.f32 %v3258, %v2258
      %v3267 = vadd.f32 %v3259, %v2303
      %v3268 = vadd.f32 %v3260, %v2348
      %v3269 = vadd.f32 %v3261, %v2393
      %v3270 = vadd.f32 %v3262, %v2438
      %v3271 = vadd.f32 %v3263, %v2483
      %v3272 = vadd.f32 %v3264, %v2528
      %v3273 = vadd.f32 %v3265, %v2573
      %3274 = vst.msk [vmem:[#allocation7] sm:$0xf] %vm2031, %v3266
      %3275 = vst.msk [vmem:[#allocation7 + $0x4] sm:$0xf] %vm2031, %v3267
      %3276 = vst.msk [vmem:[#allocation7 + $0x8] sm:$0xf] %vm2031, %v3268
      %3277 = vst.msk [vmem:[#allocation7 + $0xc] sm:$0xf] %vm2031, %v3269
      %3278 = vst.msk [vmem:[#allocation7 + $0x10] sm:$0xf] %vm2031, %v3270
      %3279 = vst.msk [vmem:[#allocation7 + $0x14] sm:$0xf] %vm2031, %v3271
      %3280 = vst.msk [vmem:[#allocation7 + $0x18] sm:$0xf] %vm2031, %v3272
      %3281 = vst.msk [vmem:[#allocation7 + $0x1c] sm:$0xf] %vm2031, %v3273
      %3282 = vst.msk [vmem:[#allocation5] sm:$0xf] %vm2200, %v2056
      %3283 = vst.msk [vmem:[#allocation5 + $0x4] sm:$0xf] %vm2200, %v2057
      %3284 = vst.msk [vmem:[#allocation5 + $0x8] sm:$0xf] %vm2200, %v2058
      %3285 = vst.msk [vmem:[#allocation5 + $0xc] sm:$0xf] %vm2200, %v2059
      %3286 = vst.msk [vmem:[#allocation5 + $0x10] sm:$0xf] %vm2200, %v2060
      %3287 = vst.msk [vmem:[#allocation5 + $0x14] sm:$0xf] %vm2200, %v2061
      %3288 = vst.msk [vmem:[#allocation5 + $0x18] sm:$0xf] %vm2200, %v2062
      %3289 = vst.msk [vmem:[#allocation5 + $0x1c] sm:$0xf] %vm2200, %v2063
      // Predicated region
      $region85: #{a_call__.7} parent=79 // pred_check
        %p3290 = pneg %p548
      $region86: #{a_call__.7} parent=79 // pred_check_branch
        %3292 = sbr.rel (%p3290) target = $region88
      $region87: #{a_call__.7} parent=79 // pred_region
        %v3293 = vld [vmem:[%s531] sm:$0xff]
        %v3294 = vld [vmem:[#allocation7] sm:$0xf]
        %v3295 = vld [vmem:[#allocation7 + $0x4] sm:$0xf]
        %v3296 = vld [vmem:[#allocation7 + $0x8] sm:$0xf]
        %v3297 = vld [vmem:[#allocation7 + $0xc] sm:$0xf]
        %v3298 = vld [vmem:[#allocation7 + $0x10] sm:$0xf]
        %v3299 = vld [vmem:[#allocation7 + $0x14] sm:$0xf]
        %v3300 = vld [vmem:[#allocation7 + $0x18] sm:$0xf]
        %v3301 = vld [vmem:[#allocation7 + $0x1c] sm:$0xf]
        %v3302 = vld [vmem:[#allocation6] sm:$0xf]
        %v3303 = vld [vmem:[#allocation6 + $0x4] sm:$0xf]
        %v3304 = vld [vmem:[#allocation6 + $0x8] sm:$0xf]
        %v3305 = vld [vmem:[#allocation6 + $0xc] sm:$0xf]
        %v3306 = vld [vmem:[#allocation6 + $0x10] sm:$0xf]
        %v3307 = vld [vmem:[#allocation6 + $0x14] sm:$0xf]
        %v3308 = vld [vmem:[#allocation6 + $0x18] sm:$0xf]
        %v3309 = vld [vmem:[#allocation6 + $0x1c] sm:$0xf]
        %3311 = vset.pattern.permute.xlu0 0
        %3312 = vperm.xlu0 %3311, %v3302
        %v3313 = vpop.permute.xlu0 %3312
        %3316 = vset.pattern.permute.xlu0 0
        %3317 = vperm.xlu0 %3316, %v3303
        %v3318 = vpop.permute.xlu0 %3317
        %3321 = vset.pattern.permute.xlu0 0
        %3322 = vperm.xlu0 %3321, %v3304
        %v3323 = vpop.permute.xlu0 %3322
        %3326 = vset.pattern.permute.xlu0 0
        %3327 = vperm.xlu0 %3326, %v3305
        %v3328 = vpop.permute.xlu0 %3327
        %3331 = vset.pattern.permute.xlu0 0
        %3332 = vperm.xlu0 %3331, %v3306
        %v3333 = vpop.permute.xlu0 %3332
        %3336 = vset.pattern.permute.xlu0 0
        %3337 = vperm.xlu0 %3336, %v3307
        %v3338 = vpop.permute.xlu0 %3337
        %3341 = vset.pattern.permute.xlu0 0
        %3342 = vperm.xlu0 %3341, %v3308
        %v3343 = vpop.permute.xlu0 %3342
        %3346 = vset.pattern.permute.xlu0 0
        %3347 = vperm.xlu0 %3346, %v3309
        %v3348 = vpop.permute.xlu0 %3347
        %v3350 = vrcp.pop %v3313
        %v3351 = vmul.f32 %v3294, %v3350
        %v3352 = vrcp.pop %v3318
        %v3353 = vmul.f32 %v3295, %v3352
        %v3354 = vrcp.pop %v3323
        %v3355 = vmul.f32 %v3296, %v3354
        %v3356 = vrcp.pop %v3328
        %v3357 = vmul.f32 %v3297, %v3356
        %v3358 = vrcp.pop %v3333
        %v3359 = vmul.f32 %v3298, %v3358
        %v3360 = vrcp.pop %v3338
        %v3361 = vmul.f32 %v3299, %v3360
        %v3362 = vrcp.pop %v3343
        %v3363 = vmul.f32 %v3300, %v3362
        %v3364 = vrcp.pop %v3348
        %v3365 = vmul.f32 %v3301, %v3364
        %v3374 = vrot.slane %v3353, 7
        %v3375 = vsel %vm1374, %v3374, %v3351
        %v3376 = vrot.slane %v3355, 6
        %v3377 = vsel %vm1377, %v3376, %v3375
        %v3378 = vrot.slane %v3357, 5
        %v3379 = vsel %vm1380, %v3378, %v3377
        %v3380 = vrot.slane %v3359, 4
        %v3381 = vsel %vm1383, %v3380, %v3379
        %v3382 = vrot.slane %v3361, 3
        %v3383 = vsel %vm1386, %v3382, %v3381
        %v3384 = vrot.slane %v3363, 2
        %v3385 = vsel %vm1389, %v3384, %v3383
        %v3386 = vrot.slane %v3365, 1
        %v3387 = vsel %vm1392, %v3386, %v3385
        %v3389 = vrot.slane %v3351, 1
        %v3390 = vsel %vm1374, %v3353, %v3389
        %v3391 = vrot.slane %v3355, 7
        %v3392 = vsel %vm1377, %v3391, %v3390
        %v3393 = vrot.slane %v3357, 6
        %v3394 = vsel %vm1380, %v3393, %v3392
        %v3395 = vrot.slane %v3359, 5
        %v3396 = vsel %vm1383, %v3395, %v3394
        %v3397 = vrot.slane %v3361, 4
        %v3398 = vsel %vm1386, %v3397, %v3396
        %v3399 = vrot.slane %v3363, 3
        %v3400 = vsel %vm1389, %v3399, %v3398
        %v3401 = vrot.slane %v3365, 2
        %v3402 = vsel %vm1392, %v3401, %v3400
        %3403 = vrot.lane.b32.xlu0 %v3402, 8
        %v3404 = vpop.permute.xlu0 %3403
        %v3406 = vrot.slane %v3351, 2
        %v3407 = vrot.slane %v3353, 1
        %v3408 = vsel %vm1374, %v3407, %v3406
        %v3409 = vsel %vm1377, %v3355, %v3408
        %v3410 = vrot.slane %v3357, 7
        %v3411 = vsel %vm1380, %v3410, %v3409
        %v3412 = vrot.slane %v3359, 6
        %v3413 = vsel %vm1383, %v3412, %v3411
        %v3414 = vrot.slane %v3361, 5
        %v3415 = vsel %vm1386, %v3414, %v3413
        %v3416 = vrot.slane %v3363, 4
        %v3417 = vsel %vm1389, %v3416, %v3415
        %v3418 = vrot.slane %v3365, 3
        %v3419 = vsel %vm1392, %v3418, %v3417
        %3420 = vrot.lane.b32.xlu0 %v3419, 16
        %v3421 = vpop.permute.xlu0 %3420
        %v3423 = vrot.slane %v3351, 3
        %v3424 = vrot.slane %v3353, 2
        %v3425 = vsel %vm1374, %v3424, %v3423
        %v3426 = vrot.slane %v3355, 1
        %v3427 = vsel %vm1377, %v3426, %v3425
        %v3428 = vsel %vm1380, %v3357, %v3427
        %v3429 = vrot.slane %v3359, 7
        %v3430 = vsel %vm1383, %v3429, %v3428
        %v3431 = vrot.slane %v3361, 6
        %v3432 = vsel %vm1386, %v3431, %v3430
        %v3433 = vrot.slane %v3363, 5
        %v3434 = vsel %vm1389, %v3433, %v3432
        %v3435 = vrot.slane %v3365, 4
        %v3436 = vsel %vm1392, %v3435, %v3434
        %3437 = vrot.lane.b32.xlu0 %v3436, 24
        %v3438 = vpop.permute.xlu0 %3437
        %v3440 = vsel %vm927, %v3387, %v3404
        %vm3441 = vcmask 130048
        %v3442 = vsel %vm3441, %v3440, %v3421
        %vm3443 = vcmask 195584
        %v3444 = vsel %vm3443, %v3442, %v3438
        %v3445 = vpack.c.bf16 %v3444, %v3444
        %v3446 = vld [vmem:[%s5] sm:$0xf]
        %v3447 = vld [vmem:[%s5 + $0x4] sm:$0xf]
        %v3448 = vld [vmem:[%s5 + $0x8] sm:$0xf]
        %v3449 = vld [vmem:[%s5 + $0xc] sm:$0xf]
        %v3450 = vld [vmem:[%s6] sm:$0x1]
        %v3452 = vlaneseq
        %v3453 = vshrl.u32 %v3452, 7
        %v3454 = vsub.s32 0, %v3453
        %v3455 = vrot.slane %v3450, %v3454
        %v3461 = vunpack.c.l.b16 %v3446
        %v3462 = vunpack.c.l.b16 %v3447
        %v3463 = vunpack.c.l.b16 %v3448
        %v3464 = vunpack.c.l.b16 %v3449
        %v3465 = vpack.c.b16 %v3462, %v3461
        %v3466 = vpack.c.b16 %v3464, %v3463
        %vm3469 = vcmask 261120
        %v3471 = vsel %vm3469, %v3445, 0
        %3473 = vmatprep.subr.bf16.mxu0 0
        %3474 = vmatpush1.bf16.msra.mxu0 0
        %3475 = vmatprep.subr.bf16.mxu0 0
        %3476 = vmatpush1.bf16.msra.mxu0 0
        %3477 = vmatprep.subr.bf16.mxu0 0
        %3478 = vmatpush1.bf16.msra.mxu0 0
        %3479 = vmatprep.subr.bf16.mxu0 0
        %3480 = vmatpush1.bf16.msra.mxu0 0
        %3481 = vmatprep.subr.bf16.mxu0 0
        %3482 = vmatpush1.bf16.msra.mxu0 0
        %3483 = vmatprep.subr.bf16.mxu0 0
        %3484 = vmatpush1.bf16.msra.mxu0 0
        %3485 = vmatprep.subr.bf16.mxu0 0
        %3486 = vmatpush1.bf16.msra.mxu0 %v3466
        %3487 = vmatprep.subr.bf16.mxu0 0
        %3488 = vmatpush1.bf16.msra.mxu0 %v3465
        %3489 = vmatprep.subr.bf16.mxu0 0
        %3490 = vmatpush2.bf16.msra.mxu0 0
        %3491 = vmatprep.subr.bf16.mxu0 0
        %3492 = vmatpush2.bf16.msra.mxu0 0
        %3493 = vmatprep.subr.bf16.mxu0 0
        %3494 = vmatpush2.bf16.msra.mxu0 0
        %3495 = vmatprep.subr.bf16.mxu0 0
        %3496 = vmatpush2.bf16.msra.mxu0 0
        %3497 = vmatprep.subr.bf16.mxu0 0
        %3498 = vmatpush2.bf16.msra.mxu0 0
        %3499 = vmatprep.subr.bf16.mxu0 0
        %3500 = vmatpush2.bf16.msra.mxu0 0
        %3501 = vmatprep.subr.bf16.mxu0 0
        %3502 = vmatpush2.bf16.msra.mxu0 0
        %3503 = vmatprep.subr.bf16.mxu0 0
        %3504 = vmatpush2.bf16.msra.mxu0 0
        %3505 = vmatprep.mubr.bf16.mxu0 0
        %3506 = vmatmul.mubr.bf16.gmra.mxu0 %v3471
        %v3507 = vpop.f32.mrf.mxu0
        %v3508 = vadd.f32 %v3455, %v3507
        %v3509 = vpop.f32.mrf.mxu0
        %v3510 = vpop.f32.mrf.mxu0
        %v3511 = vpop.f32.mrf.mxu0
        %3512 = vdwg.mxu0
        %v3513 = vadd.f32 %v3293, %v3508
        %v3514 = vld [vmem:[%s7] sm:$0x1]
        %v3515 = vld [vmem:[%s8] sm:$0x1]
        %v3516 = vsel %vm3469, %v3513, 0.0
        %3517 = vadd.xlane.f32.xlu0 %v3516
        %v3518 = vpop.xlane.xlu0 %3517
        %v3519 = vrcp.pop 32.0
        %v3520 = vmul.f32 %v3518, %v3519
        %v3521 = vsub.f32 %v3513, %v3520
        %v3522 = vmul.f32 %v3521, %v3521
        %v3523 = vsel %vm3469, %v3522, 0.0
        %3524 = vadd.xlane.f32.xlu0 %v3523
        %v3525 = vpop.xlane.xlu0 %3524
        %v3526 = vmul.f32 %v3525, %v3519
        %v3527 = vadd.f32 %v3526, 1e-05
        %v3528 = vrsqrt.pop %v3527
        %v3529 = vmul.f32 %v3521, %v3528
        %v3531 = vlaneseq
        %v3532 = vshrl.u32 %v3531, 7
        %v3533 = vsub.s32 0, %v3532
        %v3534 = vrot.slane %v3514, %v3533
        %v3536 = vmul.f32 %v3529, %v3534
        %v3538 = vlaneseq
        %v3539 = vshrl.u32 %v3538, 7
        %v3540 = vsub.s32 0, %v3539
        %v3541 = vrot.slane %v3515, %v3540
        %v3543 = vadd.f32 %v3536, %v3541
        %v3544 = vpack.c.bf16 %v3543, %v3543
        %v3545 = vld [vmem:[%s9] sm:$0xf]
        %v3546 = vld [vmem:[%s9 + $0x4] sm:$0xf]
        %v3547 = vld [vmem:[%s9 + $0x8] sm:$0xf]
        %v3548 = vld [vmem:[%s9 + $0xc] sm:$0xf]
        %v3549 = vld [vmem:[%s10] sm:$0x1]
        %v3551 = vlaneseq
        %v3552 = vshrl.u32 %v3551, 7
        %v3553 = vsub.s32 0, %v3552
        %v3554 = vrot.slane %v3549, %v3553
        %v3560 = vunpack.c.l.b16 %v3545
        %v3561 = vunpack.c.l.b16 %v3546
        %v3562 = vunpack.c.l.b16 %v3547
        %v3563 = vunpack.c.l.b16 %v3548
        %v3564 = vpack.c.b16 %v3561, %v3560
        %v3565 = vpack.c.b16 %v3563, %v3562
        %v3569 = vsel %vm3469, %v3544, 0
        %3571 = vmatprep.subr.bf16.mxu0 0
        %3572 = vmatpush1.bf16.msra.mxu0 0
        %3573 = vmatprep.subr.bf16.mxu0 0
        %3574 = vmatpush1.bf16.msra.mxu0 0
        %3575 = vmatprep.subr.bf16.mxu0 0
        %3576 = vmatpush1.bf16.msra.mxu0 0
        %3577 = vmatprep.subr.bf16.mxu0 0
        %3578 = vmatpush1.bf16.msra.mxu0 0
        %3579 = vmatprep.subr.bf16.mxu0 0
        %3580 = vmatpush1.bf16.msra.mxu0 0
        %3581 = vmatprep.subr.bf16.mxu0 0
        %3582 = vmatpush1.bf16.msra.mxu0 0
        %3583 = vmatprep.subr.bf16.mxu0 0
        %3584 = vmatpush1.bf16.msra.mxu0 %v3565
        %3585 = vmatprep.subr.bf16.mxu0 0
        %3586 = vmatpush1.bf16.msra.mxu0 %v3564
        %3587 = vmatprep.subr.bf16.mxu0 0
        %3588 = vmatpush2.bf16.msra.mxu0 0
        %3589 = vmatprep.subr.bf16.mxu0 0
        %3590 = vmatpush2.bf16.msra.mxu0 0
        %3591 = vmatprep.subr.bf16.mxu0 0
        %3592 = vmatpush2.bf16.msra.mxu0 0
        %3593 = vmatprep.subr.bf16.mxu0 0
        %3594 = vmatpush2.bf16.msra.mxu0 0
        %3595 = vmatprep.subr.bf16.mxu0 0
        %3596 = vmatpush2.bf16.msra.mxu0 0
        %3597 = vmatprep.subr.bf16.mxu0 0
        %3598 = vmatpush2.bf16.msra.mxu0 0
        %3599 = vmatprep.subr.bf16.mxu0 0
        %3600 = vmatpush2.bf16.msra.mxu0 0
        %3601 = vmatprep.subr.bf16.mxu0 0
        %3602 = vmatpush2.bf16.msra.mxu0 0
        %3603 = vmatprep.mubr.bf16.mxu0 0
        %3604 = vmatmul.mubr.bf16.gmra.mxu0 %v3569
        %v3605 = vpop.f32.mrf.mxu0
        %v3606 = vadd.f32 %v3554, %v3605
        %v3607 = vpop.f32.mrf.mxu0
        %v3608 = vpop.f32.mrf.mxu0
        %v3609 = vpop.f32.mrf.mxu0
        %3610 = vdwg.mxu0
        %v3611 = vmax.f32 %v3606, 0.0
        %v3612 = vpack.c.bf16 %v3611, %v3611
        %v3613 = vld [vmem:[%s11] sm:$0xf]
        %v3614 = vld [vmem:[%s11 + $0x4] sm:$0xf]
        %v3615 = vld [vmem:[%s11 + $0x8] sm:$0xf]
        %v3616 = vld [vmem:[%s11 + $0xc] sm:$0xf]
        %v3617 = vld [vmem:[%s11 + $0x10] sm:$0xf]
        %v3618 = vld [vmem:[%s11 + $0x14] sm:$0xf]
        %v3619 = vld [vmem:[%s11 + $0x18] sm:$0xf]
        %v3620 = vld [vmem:[%s11 + $0x1c] sm:$0xf]
        %v3621 = vld [vmem:[%s12] sm:$0x1]
        %v3623 = vlaneseq
        %v3624 = vshrl.u32 %v3623, 7
        %v3625 = vsub.s32 0, %v3624
        %v3626 = vrot.slane %v3621, %v3625
        %v3636 = vunpack.c.l.b16 %v3613
        %v3637 = vunpack.c.l.b16 %v3614
        %v3638 = vunpack.c.l.b16 %v3615
        %v3639 = vunpack.c.l.b16 %v3616
        %v3640 = vunpack.c.l.b16 %v3617
        %v3641 = vunpack.c.l.b16 %v3618
        %v3642 = vunpack.c.l.b16 %v3619
        %v3643 = vunpack.c.l.b16 %v3620
        %v3644 = vpack.c.b16 %v3637, %v3636
        %v3645 = vpack.c.b16 %v3639, %v3638
        %v3646 = vpack.c.b16 %v3641, %v3640
        %v3647 = vpack.c.b16 %v3643, %v3642
        %vm3652 = vcmask 523264
        %v3654 = vsel %vm3652, %v3612, 0
        %3656 = vmatprep.subr.bf16.mxu0 0
        %3657 = vmatpush1.bf16.msra.mxu0 0
        %3658 = vmatprep.subr.bf16.mxu0 0
        %3659 = vmatpush1.bf16.msra.mxu0 0
        %3660 = vmatprep.subr.bf16.mxu0 0
        %3661 = vmatpush1.bf16.msra.mxu0 0
        %3662 = vmatprep.subr.bf16.mxu0 0
        %3663 = vmatpush1.bf16.msra.mxu0 0
        %3664 = vmatprep.subr.bf16.mxu0 0
        %3665 = vmatpush1.bf16.msra.mxu0 %v3647
        %3666 = vmatprep.subr.bf16.mxu0 0
        %3667 = vmatpush1.bf16.msra.mxu0 %v3646
        %3668 = vmatprep.subr.bf16.mxu0 0
        %3669 = vmatpush1.bf16.msra.mxu0 %v3645
        %3670 = vmatprep.subr.bf16.mxu0 0
        %3671 = vmatpush1.bf16.msra.mxu0 %v3644
        %3672 = vmatprep.subr.bf16.mxu0 0
        %3673 = vmatpush2.bf16.msra.mxu0 0
        %3674 = vmatprep.subr.bf16.mxu0 0
        %3675 = vmatpush2.bf16.msra.mxu0 0
        %3676 = vmatprep.subr.bf16.mxu0 0
        %3677 = vmatpush2.bf16.msra.mxu0 0
        %3678 = vmatprep.subr.bf16.mxu0 0
        %3679 = vmatpush2.bf16.msra.mxu0 0
        %3680 = vmatprep.subr.bf16.mxu0 0
        %3681 = vmatpush2.bf16.msra.mxu0 0
        %3682 = vmatprep.subr.bf16.mxu0 0
        %3683 = vmatpush2.bf16.msra.mxu0 0
        %3684 = vmatprep.subr.bf16.mxu0 0
        %3685 = vmatpush2.bf16.msra.mxu0 0
        %3686 = vmatprep.subr.bf16.mxu0 0
        %3687 = vmatpush2.bf16.msra.mxu0 0
        %3688 = vmatprep.mubr.bf16.mxu0 0
        %3689 = vmatmul.mubr.bf16.gmra.mxu0 %v3654
        %v3690 = vpop.f32.mrf.mxu0
        %v3691 = vadd.f32 %v3626, %v3690
        %v3692 = vpop.f32.mrf.mxu0
        %v3693 = vpop.f32.mrf.mxu0
        %v3694 = vpop.f32.mrf.mxu0
        %3695 = vdwg.mxu0
        %v3696 = vadd.f32 %v3543, %v3691
        %v3697 = vld [vmem:[%s13] sm:$0x1]
        %v3698 = vld [vmem:[%s14] sm:$0x1]
        %v3699 = vsel %vm3469, %v3696, 0.0
        %3700 = vadd.xlane.f32.xlu0 %v3699
        %v3701 = vpop.xlane.xlu0 %3700
        %v3702 = vmul.f32 %v3701, %v3519
        %v3703 = vsub.f32 %v3696, %v3702
        %v3704 = vmul.f32 %v3703, %v3703
        %v3705 = vsel %vm3469, %v3704, 0.0
        %3706 = vadd.xlane.f32.xlu0 %v3705
        %v3707 = vpop.xlane.xlu0 %3706
        %v3708 = vmul.f32 %v3707, %v3519
        %v3709 = vadd.f32 %v3708, 1e-05
        %v3710 = vrsqrt.pop %v3709
        %v3711 = vmul.f32 %v3703, %v3710
        %v3713 = vlaneseq
        %v3714 = vshrl.u32 %v3713, 7
        %v3715 = vsub.s32 0, %v3714
        %v3716 = vrot.slane %v3697, %v3715
        %v3718 = vmul.f32 %v3711, %v3716
        %v3720 = vlaneseq
        %v3721 = vshrl.u32 %v3720, 7
        %v3722 = vsub.s32 0, %v3721
        %v3723 = vrot.slane %v3698, %v3722
        %v3725 = vadd.f32 %v3718, %v3723
        %3726 = vst.msk [vmem:[%s546] sm:$0xff] %vm3469, %v3725
      $region88: #{a_call__.7} parent=79 // pred_fallthru
        _
      %p3727 = scmp.lt.s32.totalorder %s30, 1
      %s3728 = scalar_select %p3727, %s30, 1
      %s3729 = smul.addr %s3728, 8
      %s3730 = scalar_lea.vmem %s15, %s3729
      // Predicated region
      $region89: #{a_call__.7} parent=79 // pred_check
        %p3731 = pneg %p388
      $region90: #{a_call__.7} parent=79 // pred_check_branch
        %3733 = sbr.rel (%p3731) target = $region92
      $region91: #{a_call__.7} parent=79 // pred_region
        _
      $region92: #{a_call__.7} parent=79 // pred_fallthru
        _
    $region80: #{a_call__.7} parent=5 // pred_fallthru
      _
    %p3734 = scmp.le.s32.totalorder 2, %s21
    // Predicated region
    $region93: #{a_call__.7} parent=5 // pred_check
      %p3735 = pneg %p3734
    $region94: #{a_call__.7} parent=5 // pred_check_branch
      %3737 = sbr.rel (%p3735) target = $region96
    $region95: #{a_call__.7} parent=5 // pred_region
      %s3738 = ssub.s32 %s21, 2
      // Predicated region
      $region97: #{a_call__.7} parent=95 // pred_check
        %p3739 = pneg %p394
      $region98: #{a_call__.7} parent=95 // pred_check_branch
        %3741 = sbr.rel (%p3739) target = $region100
      $region99: #{a_call__.7} parent=95 // pred_region
        %p3742 = scmp.lt.s32.totalorder %s32, 1
        %s3743 = scalar_select %p3742, %s32, 1
        %s3744 = smul.addr %s3743, 8
        %s3745 = scalar_lea.vmem %s15, %s3744
      $region100: #{a_call__.7} parent=95 // pred_fallthru
        _
    $region96: #{a_call__.7} parent=5 // pred_fallthru
      _
  $region6: #{a_call__.7} parent=0 // loop_footer
    %s25 = sadd.s32 1, %s21
  $region7: #{a_call__.7} parent=0 // loop_footer_branch
    %20 = sbr.rel target = $region3
  $region8: #{a_call__.7} parent=0 // loop_exit
    _

</llo_original>
